<compile_context>
chip_gen: v7x
topology: tpu7x:2x2x1
jax: 0.10.0
libtpu: 0.0.40
codegen_flags: <defaults>
</compile_context>

<pallas_src>
import functools

import jax
import jax.numpy as jnp
from jax.experimental import pallas as pl
from jax.experimental.pallas import tpu as pltpu


COUT_PAD = 128   # layer-4 Cout (1) padded to a lane-dense store width
K1_PAD = 32      # layer-1 contraction 9*3 = 27 padded to 32


# -----------------------------------------------------------------------------
# In-kernel helpers (value ops only; every reshape keeps the lane dim fixed)
# -----------------------------------------------------------------------------
def _parity_planes(y):
    """y: (2*ho, 2*wo, c) value.  Returns planes[pr][pc], each (ho+1, wo+1, c),
    with planes[pr][pc][a, b, :] == y_pad[2a+pr, 2b+pc, :] where y_pad is y
    zero-padded by 1 on every spatial side.  Built from a lane-preserving
    reshape, static slices and zero concatenations only (no strided loads,
    no transposes)."""
    hin, win, c = y.shape
    ho, wo = hin // 2, win // 2
    q = y.reshape(ho, 2, wo, 2, c)                 # row-major split; lane dim kept
    zrow = jnp.zeros((1, wo, c), y.dtype)
    zcol = jnp.zeros((ho + 1, 1, c), y.dtype)
    planes = [[None, None], [None, None]]
    for pr in range(2):
        for pc in range(2):
            # rows/cols of y with parity (1-pr)/(1-pc): y[(1-pr)::2, (1-pc)::2]
            core = q[:, 1 - pr, :, 1 - pc, :]                       # (ho, wo, c)
            t = (jnp.concatenate([zrow, core], axis=0) if pr == 0
                 else jnp.concatenate([core, zrow], axis=0))        # (ho+1, wo, c)
            t = (jnp.concatenate([zcol, t], axis=1) if pc == 0
                 else jnp.concatenate([t, zcol], axis=1))           # (ho+1, wo+1, c)
            planes[pr][pc] = t
    return planes


def _conv3x3_s2(y, w_ref, b_ref):
    """3x3 / stride-2 / pad-1 conv + folded-BN shift + ReLU on a VMEM-resident
    value.  y: (2*ho, 2*wo, cin).  w_ref: (9*cin, cout), (kh, kw, cin)-major,
    BN scale folded.  b_ref: (1, cout) f32.  Returns (ho*wo, cout) f32.
    Uses 9 accumulate-dots (per-tap K = cin >= 64 is already a full MXU pass),
    avoiding a lane-axis im2col concat."""
    hin, win, cin = y.shape
    ho, wo = hin // 2, win // 2
    m = ho * wo
    cout = w_ref.shape[-1]
    planes = _parity_planes(y)
    acc = jnp.zeros((m, cout), jnp.float32)
    k = 0
    for kh in range(3):
        for kw in range(3):
            p = planes[kh % 2][kw % 2]
            tap = p[kh // 2:kh // 2 + ho, kw // 2:kw // 2 + wo, :].reshape(m, cin)
            acc = acc + jnp.dot(tap, w_ref[k * cin:(k + 1) * cin, :],
                                preferred_element_type=jnp.float32)
            k += 1
    return jnp.maximum(acc + b_ref[...], 0.0)


def _conv3x3_s1(y, w_ref):
    """3x3 / stride-1 / pad-1 conv + ReLU (no BN, bias=False).
    y: (ho, wo, cin).  w_ref: (9*cin, cout_pad).  Returns (ho*wo, cout_pad) f32."""
    ho, wo, cin = y.shape
    m = ho * wo
    cout = w_ref.shape[-1]
    zrow = jnp.zeros((1, wo + 2, cin), y.dtype)
    zcol = jnp.zeros((ho, 1, cin), y.dtype)
    yp = jnp.concatenate([zcol, y, zcol], axis=1)
    yp = jnp.concatenate([zrow, yp, zrow], axis=0)      # (ho+2, wo+2, cin)
    acc = jnp.zeros((m, cout), jnp.float32)
    k = 0
    for kh in range(3):
        for kw in range(3):
            tap = yp[kh:kh + ho, kw:kw + wo, :].reshape(m, cin)
            acc = acc + jnp.dot(tap, w_ref[k * cin:(k + 1) * cin, :],
                                preferred_element_type=jnp.float32)
            k += 1
    return jnp.maximum(acc, 0.0)


# -----------------------------------------------------------------------------
# Fused T_Net kernel: one grid step = one batch element, all layers in VMEM
# -----------------------------------------------------------------------------
def _tnet_kernel(x1_ref, w1_ref, b1_ref, w2_ref, b2_ref, w3_ref, b3_ref,
                 w4_ref, o_ref, *, ho1, wo1, act_dtype):
    c1 = w1_ref.shape[-1]
    c2 = w2_ref.shape[-1]
    c3 = w3_ref.shape[-1]

    # --- layer 1 (conv1, stride 2): one matmul on prebuilt im2col patches.
    acc1 = jnp.dot(x1_ref[0], w1_ref[...], preferred_element_type=jnp.float32)
    y1 = jnp.maximum(acc1 + b1_ref[...], 0.0).astype(act_dtype)
    y1 = y1.reshape(ho1, wo1, c1)

    # --- layer 2 (lastconv1, stride 2), input resident in VMEM.
    y2 = _conv3x3_s2(y1, w2_ref, b2_ref).astype(act_dtype)
    y2 = y2.reshape(ho1 // 2, wo1 // 2, c2)

    # --- layer 3 (lastconv2, stride 2).
    y3 = _conv3x3_s2(y2, w3_ref, b3_ref).astype(act_dtype)
    y3 = y3.reshape(ho1 // 4, wo1 // 4, c3)

    # --- layer 4 (lastconv3, stride 1, no BN); Cout padded to 128 lanes so the
    # only HBM store of the whole network is lane-dense.
    y4 = _conv3x3_s1(y3, w4_ref)                        # (m4, COUT_PAD) f32
    o_ref[...] = y4.reshape(1, y4.shape[0], y4.shape[1])


# -----------------------------------------------------------------------------
# Wrapper-side preprocessing (layout plumbing only) and the pallas_call
# -----------------------------------------------------------------------------
def _bn_fold(gamma, beta, mean, var, eps=1e-5):
    scale = gamma * jax.lax.rsqrt(var + eps)
    shift = beta - mean * scale
    return scale, shift


def _fold_weight(w_oihw, scale, dtype, k_pad=0, cout_pad=0):
    """(Cout, Cin, 3, 3) -> (9*Cin [+pad], Cout [+pad]) im2col weight matrix,
    BN scale folded in, rows (kh, kw, cin)-major (matches the kernel taps)."""
    cout, cin = w_oihw.shape[0], w_oihw.shape[1]
    wf = w_oihw * scale[:, None, None, None]
    wm = jnp.transpose(wf, (2, 3, 1, 0)).reshape(9 * cin, cout)
    if k_pad > 9 * cin:
        wm = jnp.pad(wm, ((0, k_pad - 9 * cin), (0, 0)))
    if cout_pad > cout:
        wm = jnp.pad(wm, ((0, 0), (0, cout_pad - cout)))
    return wm.astype(dtype)


def _im2col_stride2_rgb(x_nhwc, k_pad, dtype):
    """Layer-1 im2col in plain JAX (Cin=3 is too narrow to be worth building
    in-kernel).  Returns (N, (H/2)*(W/2), k_pad) patches, rows in output raster
    order, columns (kh, kw, cin)-major, zero-padded from 9*Cin to k_pad."""
    n, h, w, c = x_nhwc.shape
    ho, wo = h // 2, w // 2
    xp = jnp.pad(x_nhwc, ((0, 0), (1, 1), (1, 1), (0, 0)))
    cols = []
    for kh in range(3):
        for kw in range(3):
            tap = xp[:, kh:kh + 2 * ho:2, kw:kw + 2 * wo:2, :]
            cols.append(tap.reshape(n, ho * wo, c))
    pat = jnp.concatenate(cols, axis=-1)                       # (N, ho*wo, 9c)
    pat = jnp.pad(pat, ((0, 0), (0, 0), (0, k_pad - 9 * c)))
    return pat.astype(dtype)


def _vmem_limit_bytes():
    # Generation-aware: ~3/4 of physical VMEM (v5e/v6e 128 MiB, v7x 64 MiB),
    # capped at 100 MiB.  The fused kernel itself needs well under 2 MiB here.
    try:
        cap = int(pltpu.get_tpu_info().vmem_capacity_bytes)
    except Exception:
        cap = 64 * 1024 * 1024
    return min(3 * cap // 4, 100 * 1024 * 1024)


def t_net_forward(x_nchw, params, *, use_bf16=True):
    """PyTorch-style input (N, 3, H, W) -> coarse map (N, 1, H/8, W/8)."""
    n, cin, h, w = x_nchw.shape
    assert cin == 3 and h % 8 == 0 and w % 8 == 0, (
        "fused T_Net kernel expects RGB input with H, W divisible by 8")
    cdt = jnp.bfloat16 if use_bf16 else jnp.float32

    ho1, wo1 = h // 2, w // 2
    ho3, wo3 = h // 8, w // 8
    m4 = ho3 * wo3

    x = jnp.transpose(x_nchw, (0, 2, 3, 1)).astype(jnp.float32)     # NHWC
    patches = _im2col_stride2_rgb(x, K1_PAD, cdt)                   # (N, ho1*wo1, 32)

    s1, b1 = _bn_fold(*params["bn1"])
    s2, b2 = _bn_fold(*params["bn2"])
    s3, b3 = _bn_fold(*params["bn3"])
    c1 = params["w1"].shape[0]          # 64
    c2 = params["w2"].shape[0]          # 128
    c3 = params["w3"].shape[0]          # 64

    w1m = _fold_weight(params["w1"], s1, cdt, k_pad=K1_PAD)
    w2m = _fold_weight(params["w2"], s2, cdt)
    w3m = _fold_weight(params["w3"], s3, cdt)
    w4m = _fold_weight(params["w4"], jnp.ones((1,), jnp.float32), cdt,
                       cout_pad=COUT_PAD)
    b1v = b1.reshape(1, c1).astype(jnp.float32)
    b2v = b2.reshape(1, c2).astype(jnp.float32)
    b3v = b3.reshape(1, c3).astype(jnp.float32)

    kernel = functools.partial(_tnet_kernel, ho1=ho1, wo1=wo1, act_dtype=cdt)
    const = lambda b: (0, 0)

    out = pl.pallas_call(
        kernel,
        out_shape=jax.ShapeDtypeStruct((n, m4, COUT_PAD), jnp.float32),
        grid_spec=pltpu.PrefetchScalarGridSpec(
            num_scalar_prefetch=0,
            grid=(n,),
            in_specs=[
                pl.BlockSpec((1, ho1 * wo1, K1_PAD), lambda b: (b, 0, 0)),
                pl.BlockSpec((K1_PAD, c1), const),
                pl.BlockSpec((1, c1), const),
                pl.BlockSpec((9 * c1, c2), const),
                pl.BlockSpec((1, c2), const),
                pl.BlockSpec((9 * c2, c3), const),
                pl.BlockSpec((1, c3), const),
                pl.BlockSpec((9 * c3, COUT_PAD), const),
            ],
            out_specs=pl.BlockSpec((1, m4, COUT_PAD), lambda b: (b, 0, 0)),
        ),
        compiler_params=pltpu.CompilerParams(
            dimension_semantics=("parallel",),
            vmem_limit_bytes=_vmem_limit_bytes()),
    )(patches, w1m, b1v, w2m, b2v, w3m, b3v, w4m)

    maps = out[:, :, 0].reshape(n, ho3, wo3, 1)                 # real channel 0
    return jnp.transpose(maps, (0, 3, 1, 2))                    # NCHW


# -----------------------------------------------------------------------------
# Pure-JAX reference (eval-mode BN), mirroring the PyTorch forward
# -----------------------------------------------------------------------------
def t_net_reference(x_nchw, params, *, use_bf16=True):
    def layer(x, w, scale, shift, stride):
        wf = w * scale[:, None, None, None]
        if use_bf16:
            x = x.astype(jnp.bfloat16).astype(jnp.float32)
            wf = wf.astype(jnp.bfloat16).astype(jnp.float32)
        dn = jax.lax.conv_dimension_numbers(x.shape, wf.shape,
                                            ("NCHW", "OIHW", "NCHW"))
        y = jax.lax.conv_general_dilated(
            x, wf, window_strides=(stride, stride),
            padding=[(1, 1), (1, 1)], dimension_numbers=dn)
        y = y + shift[None, :, None, None]
        return jnp.maximum(y, 0.0)

    s1, b1 = _bn_fold(*params["bn1"])
    s2, b2 = _bn_fold(*params["bn2"])
    s3, b3 = _bn_fold(*params["bn3"])
    one = jnp.ones((1,), jnp.float32)
    zero = jnp.zeros((1,), jnp.float32)
    x = layer(x_nchw, params["w1"], s1, b1, 2)
    x = layer(x, params["w2"], s2, b2, 2)
    x = layer(x, params["w3"], s3, b3, 2)
    x = layer(x, params["w4"], one, zero, 1)
    return x


if __name__ == "__main__":
    key = jax.random.PRNGKey(0)
    ks = jax.random.split(key, 8)

    # Small shapes: batch=2, RGB, 32x32 -> 16 -> 8 -> 4 -> 4.
    N, H, W = 2, 32, 32
    x = jax.random.normal(ks[0], (N, 3, H, W), dtype=jnp.float32)

    def he_weight(k, shape):
        fan_in = shape[1] * shape[2] * shape[3]
        return jax.random.normal(k, shape, jnp.float32) * (2.0 / fan_in) ** 0.5

    def bn_params(k, c):
        k1, k2, k3, k4 = jax.random.split(k, 4)
        gamma = 1.0 + 0.2 * jax.random.normal(k1, (c,), jnp.float32)
        beta = 0.1 * jax.random.normal(k2, (c,), jnp.float32)
        mean = 0.1 * jax.random.normal(k3, (c,), jnp.float32)
        var = 0.5 + jax.random.uniform(k4, (c,), jnp.float32)
        return (gamma, beta, mean, var)

    params = {
        "w1": he_weight(ks[1], (64, 3, 3, 3)),   "bn1": bn_params(ks[2], 64),
        "w2": he_weight(ks[3], (128, 64, 3, 3)), "bn2": bn_params(ks[4], 128),
        "w3": he_weight(ks[5], (64, 128, 3, 3)), "bn3": bn_params(ks[6], 64),
        "w4": he_weight(ks[7], (1, 64, 3, 3)),
    }

    forward = jax.jit(functools.partial(t_net_forward, use_bf16=True))
    out = jax.block_until_ready(forward(x, params))
    assert out.shape == (N, 1, H // 8, W // 8), out.shape

    ref = t_net_reference(x, params, use_bf16=True)
    max_diff = float(jnp.max(jnp.abs(out - ref)))
    assert jnp.allclose(out, ref, atol=5e-3, rtol=5e-3), f"mismatch: {max_diff}"

    print("KERNEL_OK")
</pallas_src>

<mosaic_0001>
module attributes {stable_mosaic.version = 11 : i64} {
  func.func @_tnet_kernel(%arg0: i32, %arg1: memref<1x256x32xbf16, #tpu.memory_space<vmem>>, %arg2: memref<32x64xbf16, #tpu.memory_space<vmem>>, %arg3: memref<1x64xf32, #tpu.memory_space<vmem>>, %arg4: memref<576x128xbf16, #tpu.memory_space<vmem>>, %arg5: memref<1x128xf32, #tpu.memory_space<vmem>>, %arg6: memref<1152x64xbf16, #tpu.memory_space<vmem>>, %arg7: memref<1x64xf32, #tpu.memory_space<vmem>>, %arg8: memref<576x128xbf16, #tpu.memory_space<vmem>>, %arg9: memref<1x16x128xf32, #tpu.memory_space<vmem>>) attributes {dimension_semantics = [#tpu.dimension_semantics<parallel>], iteration_bounds = array<i64: 2>, scalar_prefetch = 0 : i64, scratch_operands = 0 : i64, tpu.core_type = #tpu.core_type<tc>, window_params = [{transform_indices = @transform_0, window_bounds = array<i64: 1, 256, 32>}, {pipeline_mode = #tpu.pipeline_mode<synchronous>, transform_indices = @transform_1, window_bounds = array<i64: 32, 64>}, {pipeline_mode = #tpu.pipeline_mode<synchronous>, transform_indices = @transform_2, window_bounds = array<i64: 1, 64>}, {pipeline_mode = #tpu.pipeline_mode<synchronous>, transform_indices = @transform_3, window_bounds = array<i64: 576, 128>}, {pipeline_mode = #tpu.pipeline_mode<synchronous>, transform_indices = @transform_4, window_bounds = array<i64: 1, 128>}, {pipeline_mode = #tpu.pipeline_mode<synchronous>, transform_indices = @transform_5, window_bounds = array<i64: 1152, 64>}, {pipeline_mode = #tpu.pipeline_mode<synchronous>, transform_indices = @transform_6, window_bounds = array<i64: 1, 64>}, {pipeline_mode = #tpu.pipeline_mode<synchronous>, transform_indices = @transform_7, window_bounds = array<i64: 576, 128>}, {transform_indices = @transform_8, window_bounds = array<i64: 1, 16, 128>}]} {
    %c0 = arith.constant 0 : index
    %c0_0 = arith.constant 0 : index
    %c0_1 = arith.constant 0 : index
    %0 = vector.load %arg1[%c0, %c0_0, %c0_1] : memref<1x256x32xbf16, #tpu.memory_space<vmem>>, vector<1x256x32xbf16>
    %1 = vector.shape_cast %0 : vector<1x256x32xbf16> to vector<256x32xbf16>
    %c0_2 = arith.constant 0 : index
    %c0_3 = arith.constant 0 : index
    %2 = vector.load %arg2[%c0_2, %c0_3] : memref<32x64xbf16, #tpu.memory_space<vmem>>, vector<32x64xbf16>
    %cst = arith.constant dense<0.000000e+00> : vector<256x64xf32>
    %3 = tpu.matmul %1, %2, %cst {dimension_numbers = #tpu.dot_dimension_numbers<[1], [0], [0], [1], [0, 0, 1, 1], [], []>} : vector<256x32xbf16>, vector<32x64xbf16>, vector<256x64xf32> -> vector<256x64xf32>
    %c0_4 = arith.constant 0 : index
    %c0_5 = arith.constant 0 : index
    %4 = vector.load %arg3[%c0_4, %c0_5] : memref<1x64xf32, #tpu.memory_space<vmem>>, vector<1x64xf32>
    %5 = vector.broadcast %4 : vector<1x64xf32> to vector<256x64xf32>
    %6 = arith.addf %3, %5 : vector<256x64xf32>
    %cst_6 = arith.constant 0.000000e+00 : f32
    %7 = vector.broadcast %cst_6 : f32 to vector<256x64xf32>
    %8 = arith.maximumf %6, %7 : vector<256x64xf32>
    %9 = arith.truncf %8 : vector<256x64xf32> to vector<256x64xbf16>
    %10 = vector.shape_cast %9 : vector<256x64xbf16> to vector<16x16x64xbf16>
    %11 = vector.shape_cast %10 : vector<16x16x64xbf16> to vector<8x2x8x2x64xbf16>
    %cst_7 = arith.constant 0.000000e+00 : bf16
    %12 = vector.broadcast %cst_7 : bf16 to vector<1x8x64xbf16>
    %cst_8 = arith.constant 0.000000e+00 : bf16
    %13 = vector.broadcast %cst_8 : bf16 to vector<9x1x64xbf16>
    %14 = vector.extract_strided_slice %11 {offsets = [0, 1, 0, 1, 0], sizes = [8, 1, 8, 1, 64], strides = [1, 1, 1, 1, 1]} : vector<8x2x8x2x64xbf16> to vector<8x1x8x1x64xbf16>
    %15 = vector.shape_cast %14 : vector<8x1x8x1x64xbf16> to vector<8x8x64xbf16>
    %16 = tpu.concatenate %12, %15 in 0 : vector<1x8x64xbf16>, vector<8x8x64xbf16> -> vector<9x8x64xbf16>
    %17 = tpu.concatenate %13, %16 in 1 : vector<9x1x64xbf16>, vector<9x8x64xbf16> -> vector<9x9x64xbf16>
    %18 = vector.extract_strided_slice %11 {offsets = [0, 1, 0, 0, 0], sizes = [8, 1, 8, 1, 64], strides = [1, 1, 1, 1, 1]} : vector<8x2x8x2x64xbf16> to vector<8x1x8x1x64xbf16>
    %19 = vector.shape_cast %18 : vector<8x1x8x1x64xbf16> to vector<8x8x64xbf16>
    %20 = tpu.concatenate %12, %19 in 0 : vector<1x8x64xbf16>, vector<8x8x64xbf16> -> vector<9x8x64xbf16>
    %21 = tpu.concatenate %20, %13 in 1 : vector<9x8x64xbf16>, vector<9x1x64xbf16> -> vector<9x9x64xbf16>
    %22 = vector.extract_strided_slice %11 {offsets = [0, 0, 0, 1, 0], sizes = [8, 1, 8, 1, 64], strides = [1, 1, 1, 1, 1]} : vector<8x2x8x2x64xbf16> to vector<8x1x8x1x64xbf16>
    %23 = vector.shape_cast %22 : vector<8x1x8x1x64xbf16> to vector<8x8x64xbf16>
    %24 = tpu.concatenate %23, %12 in 0 : vector<8x8x64xbf16>, vector<1x8x64xbf16> -> vector<9x8x64xbf16>
    %25 = tpu.concatenate %13, %24 in 1 : vector<9x1x64xbf16>, vector<9x8x64xbf16> -> vector<9x9x64xbf16>
    %26 = vector.extract_strided_slice %11 {offsets = [0, 0, 0, 0, 0], sizes = [8, 1, 8, 1, 64], strides = [1, 1, 1, 1, 1]} : vector<8x2x8x2x64xbf16> to vector<8x1x8x1x64xbf16>
    %27 = vector.shape_cast %26 : vector<8x1x8x1x64xbf16> to vector<8x8x64xbf16>
    %28 = tpu.concatenate %27, %12 in 0 : vector<8x8x64xbf16>, vector<1x8x64xbf16> -> vector<9x8x64xbf16>
    %29 = tpu.concatenate %28, %13 in 1 : vector<9x8x64xbf16>, vector<9x1x64xbf16> -> vector<9x9x64xbf16>
    %cst_9 = arith.constant 0.000000e+00 : f32
    %30 = vector.broadcast %cst_9 : f32 to vector<64x128xf32>
    %31 = vector.extract_strided_slice %17 {offsets = [0, 0, 0], sizes = [8, 8, 64], strides = [1, 1, 1]} : vector<9x9x64xbf16> to vector<8x8x64xbf16>
    %32 = vector.shape_cast %31 : vector<8x8x64xbf16> to vector<64x64xbf16>
    %c0_10 = arith.constant 0 : index
    %c0_11 = arith.constant 0 : index
    %33 = vector.load %arg4[%c0_10, %c0_11] : memref<576x128xbf16, #tpu.memory_space<vmem>>, vector<64x128xbf16>
    %cst_12 = arith.constant dense<0.000000e+00> : vector<64x128xf32>
    %34 = tpu.matmul %32, %33, %cst_12 {dimension_numbers = #tpu.dot_dimension_numbers<[1], [0], [0], [1], [0, 0, 1, 1], [], []>} : vector<64x64xbf16>, vector<64x128xbf16>, vector<64x128xf32> -> vector<64x128xf32>
    %35 = arith.addf %30, %34 : vector<64x128xf32>
    %36 = vector.extract_strided_slice %21 {offsets = [0, 0, 0], sizes = [8, 8, 64], strides = [1, 1, 1]} : vector<9x9x64xbf16> to vector<8x8x64xbf16>
    %37 = vector.shape_cast %36 : vector<8x8x64xbf16> to vector<64x64xbf16>
    %c64 = arith.constant 64 : index
    %c0_13 = arith.constant 0 : index
    %38 = vector.load %arg4[%c64, %c0_13] : memref<576x128xbf16, #tpu.memory_space<vmem>>, vector<64x128xbf16>
    %cst_14 = arith.constant dense<0.000000e+00> : vector<64x128xf32>
    %39 = tpu.matmul %37, %38, %cst_14 {dimension_numbers = #tpu.dot_dimension_numbers<[1], [0], [0], [1], [0, 0, 1, 1], [], []>} : vector<64x64xbf16>, vector<64x128xbf16>, vector<64x128xf32> -> vector<64x128xf32>
    %40 = arith.addf %35, %39 : vector<64x128xf32>
    %41 = vector.extract_strided_slice %17 {offsets = [0, 1, 0], sizes = [8, 8, 64], strides = [1, 1, 1]} : vector<9x9x64xbf16> to vector<8x8x64xbf16>
    %42 = vector.shape_cast %41 : vector<8x8x64xbf16> to vector<64x64xbf16>
    %c128 = arith.constant 128 : index
    %c0_15 = arith.constant 0 : index
    %43 = vector.load %arg4[%c128, %c0_15] : memref<576x128xbf16, #tpu.memory_space<vmem>>, vector<64x128xbf16>
    %cst_16 = arith.constant dense<0.000000e+00> : vector<64x128xf32>
    %44 = tpu.matmul %42, %43, %cst_16 {dimension_numbers = #tpu.dot_dimension_numbers<[1], [0], [0], [1], [0, 0, 1, 1], [], []>} : vector<64x64xbf16>, vector<64x128xbf16>, vector<64x128xf32> -> vector<64x128xf32>
    %45 = arith.addf %40, %44 : vector<64x128xf32>
    %46 = vector.extract_strided_slice %25 {offsets = [0, 0, 0], sizes = [8, 8, 64], strides = [1, 1, 1]} : vector<9x9x64xbf16> to vector<8x8x64xbf16>
    %47 = vector.shape_cast %46 : vector<8x8x64xbf16> to vector<64x64xbf16>
    %c192 = arith.constant 192 : index
    %c0_17 = arith.constant 0 : index
    %48 = vector.load %arg4[%c192, %c0_17] : memref<576x128xbf16, #tpu.memory_space<vmem>>, vector<64x128xbf16>
    %cst_18 = arith.constant dense<0.000000e+00> : vector<64x128xf32>
    %49 = tpu.matmul %47, %48, %cst_18 {dimension_numbers = #tpu.dot_dimension_numbers<[1], [0], [0], [1], [0, 0, 1, 1], [], []>} : vector<64x64xbf16>, vector<64x128xbf16>, vector<64x128xf32> -> vector<64x128xf32>
    %50 = arith.addf %45, %49 : vector<64x128xf32>
    %51 = vector.extract_strided_slice %29 {offsets = [0, 0, 0], sizes = [8, 8, 64], strides = [1, 1, 1]} : vector<9x9x64xbf16> to vector<8x8x64xbf16>
    %52 = vector.shape_cast %51 : vector<8x8x64xbf16> to vector<64x64xbf16>
    %c256 = arith.constant 256 : index
    %c0_19 = arith.constant 0 : index
    %53 = vector.load %arg4[%c256, %c0_19] : memref<576x128xbf16, #tpu.memory_space<vmem>>, vector<64x128xbf16>
    %cst_20 = arith.constant dense<0.000000e+00> : vector<64x128xf32>
    %54 = tpu.matmul %52, %53, %cst_20 {dimension_numbers = #tpu.dot_dimension_numbers<[1], [0], [0], [1], [0, 0, 1, 1], [], []>} : vector<64x64xbf16>, vector<64x128xbf16>, vector<64x128xf32> -> vector<64x128xf32>
    %55 = arith.addf %50, %54 : vector<64x128xf32>
    %56 = vector.extract_strided_slice %25 {offsets = [0, 1, 0], sizes = [8, 8, 64], strides = [1, 1, 1]} : vector<9x9x64xbf16> to vector<8x8x64xbf16>
    %57 = vector.shape_cast %56 : vector<8x8x64xbf16> to vector<64x64xbf16>
    %c320 = arith.constant 320 : index
    %c0_21 = arith.constant 0 : index
    %58 = vector.load %arg4[%c320, %c0_21] : memref<576x128xbf16, #tpu.memory_space<vmem>>, vector<64x128xbf16>
    %cst_22 = arith.constant dense<0.000000e+00> : vector<64x128xf32>
    %59 = tpu.matmul %57, %58, %cst_22 {dimension_numbers = #tpu.dot_dimension_numbers<[1], [0], [0], [1], [0, 0, 1, 1], [], []>} : vector<64x64xbf16>, vector<64x128xbf16>, vector<64x128xf32> -> vector<64x128xf32>
    %60 = arith.addf %55, %59 : vector<64x128xf32>
    %61 = vector.extract_strided_slice %17 {offsets = [1, 0, 0], sizes = [8, 8, 64], strides = [1, 1, 1]} : vector<9x9x64xbf16> to vector<8x8x64xbf16>
    %62 = vector.shape_cast %61 : vector<8x8x64xbf16> to vector<64x64xbf16>
    %c384 = arith.constant 384 : index
    %c0_23 = arith.constant 0 : index
    %63 = vector.load %arg4[%c384, %c0_23] : memref<576x128xbf16, #tpu.memory_space<vmem>>, vector<64x128xbf16>
    %cst_24 = arith.constant dense<0.000000e+00> : vector<64x128xf32>
    %64 = tpu.matmul %62, %63, %cst_24 {dimension_numbers = #tpu.dot_dimension_numbers<[1], [0], [0], [1], [0, 0, 1, 1], [], []>} : vector<64x64xbf16>, vector<64x128xbf16>, vector<64x128xf32> -> vector<64x128xf32>
    %65 = arith.addf %60, %64 : vector<64x128xf32>
    %66 = vector.extract_strided_slice %21 {offsets = [1, 0, 0], sizes = [8, 8, 64], strides = [1, 1, 1]} : vector<9x9x64xbf16> to vector<8x8x64xbf16>
    %67 = vector.shape_cast %66 : vector<8x8x64xbf16> to vector<64x64xbf16>
    %c448 = arith.constant 448 : index
    %c0_25 = arith.constant 0 : index
    %68 = vector.load %arg4[%c448, %c0_25] : memref<576x128xbf16, #tpu.memory_space<vmem>>, vector<64x128xbf16>
    %cst_26 = arith.constant dense<0.000000e+00> : vector<64x128xf32>
    %69 = tpu.matmul %67, %68, %cst_26 {dimension_numbers = #tpu.dot_dimension_numbers<[1], [0], [0], [1], [0, 0, 1, 1], [], []>} : vector<64x64xbf16>, vector<64x128xbf16>, vector<64x128xf32> -> vector<64x128xf32>
    %70 = arith.addf %65, %69 : vector<64x128xf32>
    %71 = vector.extract_strided_slice %17 {offsets = [1, 1, 0], sizes = [8, 8, 64], strides = [1, 1, 1]} : vector<9x9x64xbf16> to vector<8x8x64xbf16>
    %72 = vector.shape_cast %71 : vector<8x8x64xbf16> to vector<64x64xbf16>
    %c512 = arith.constant 512 : index
    %c0_27 = arith.constant 0 : index
    %73 = vector.load %arg4[%c512, %c0_27] : memref<576x128xbf16, #tpu.memory_space<vmem>>, vector<64x128xbf16>
    %cst_28 = arith.constant dense<0.000000e+00> : vector<64x128xf32>
    %74 = tpu.matmul %72, %73, %cst_28 {dimension_numbers = #tpu.dot_dimension_numbers<[1], [0], [0], [1], [0, 0, 1, 1], [], []>} : vector<64x64xbf16>, vector<64x128xbf16>, vector<64x128xf32> -> vector<64x128xf32>
    %75 = arith.addf %70, %74 : vector<64x128xf32>
    %c0_29 = arith.constant 0 : index
    %c0_30 = arith.constant 0 : index
    %76 = vector.load %arg5[%c0_29, %c0_30] : memref<1x128xf32, #tpu.memory_space<vmem>>, vector<1x128xf32>
    %77 = vector.broadcast %76 : vector<1x128xf32> to vector<64x128xf32>
    %78 = arith.addf %75, %77 : vector<64x128xf32>
    %cst_31 = arith.constant 0.000000e+00 : f32
    %79 = vector.broadcast %cst_31 : f32 to vector<64x128xf32>
    %80 = arith.maximumf %78, %79 : vector<64x128xf32>
    %81 = arith.truncf %80 : vector<64x128xf32> to vector<64x128xbf16>
    %82 = vector.shape_cast %81 : vector<64x128xbf16> to vector<8x8x128xbf16>
    %83 = vector.shape_cast %82 : vector<8x8x128xbf16> to vector<4x2x4x2x128xbf16>
    %cst_32 = arith.constant 0.000000e+00 : bf16
    %84 = vector.broadcast %cst_32 : bf16 to vector<1x4x128xbf16>
    %cst_33 = arith.constant 0.000000e+00 : bf16
    %85 = vector.broadcast %cst_33 : bf16 to vector<5x1x128xbf16>
    %86 = vector.extract_strided_slice %83 {offsets = [0, 1, 0, 1, 0], sizes = [4, 1, 4, 1, 128], strides = [1, 1, 1, 1, 1]} : vector<4x2x4x2x128xbf16> to vector<4x1x4x1x128xbf16>
    %87 = vector.shape_cast %86 : vector<4x1x4x1x128xbf16> to vector<4x4x128xbf16>
    %88 = tpu.concatenate %84, %87 in 0 : vector<1x4x128xbf16>, vector<4x4x128xbf16> -> vector<5x4x128xbf16>
    %89 = tpu.concatenate %85, %88 in 1 : vector<5x1x128xbf16>, vector<5x4x128xbf16> -> vector<5x5x128xbf16>
    %90 = vector.extract_strided_slice %83 {offsets = [0, 1, 0, 0, 0], sizes = [4, 1, 4, 1, 128], strides = [1, 1, 1, 1, 1]} : vector<4x2x4x2x128xbf16> to vector<4x1x4x1x128xbf16>
    %91 = vector.shape_cast %90 : vector<4x1x4x1x128xbf16> to vector<4x4x128xbf16>
    %92 = tpu.concatenate %84, %91 in 0 : vector<1x4x128xbf16>, vector<4x4x128xbf16> -> vector<5x4x128xbf16>
    %93 = tpu.concatenate %92, %85 in 1 : vector<5x4x128xbf16>, vector<5x1x128xbf16> -> vector<5x5x128xbf16>
    %94 = vector.extract_strided_slice %83 {offsets = [0, 0, 0, 1, 0], sizes = [4, 1, 4, 1, 128], strides = [1, 1, 1, 1, 1]} : vector<4x2x4x2x128xbf16> to vector<4x1x4x1x128xbf16>
    %95 = vector.shape_cast %94 : vector<4x1x4x1x128xbf16> to vector<4x4x128xbf16>
    %96 = tpu.concatenate %95, %84 in 0 : vector<4x4x128xbf16>, vector<1x4x128xbf16> -> vector<5x4x128xbf16>
    %97 = tpu.concatenate %85, %96 in 1 : vector<5x1x128xbf16>, vector<5x4x128xbf16> -> vector<5x5x128xbf16>
    %98 = vector.extract_strided_slice %83 {offsets = [0, 0, 0, 0, 0], sizes = [4, 1, 4, 1, 128], strides = [1, 1, 1, 1, 1]} : vector<4x2x4x2x128xbf16> to vector<4x1x4x1x128xbf16>
    %99 = vector.shape_cast %98 : vector<4x1x4x1x128xbf16> to vector<4x4x128xbf16>
    %100 = tpu.concatenate %99, %84 in 0 : vector<4x4x128xbf16>, vector<1x4x128xbf16> -> vector<5x4x128xbf16>
    %101 = tpu.concatenate %100, %85 in 1 : vector<5x4x128xbf16>, vector<5x1x128xbf16> -> vector<5x5x128xbf16>
    %cst_34 = arith.constant 0.000000e+00 : f32
    %102 = vector.broadcast %cst_34 : f32 to vector<16x64xf32>
    %103 = vector.extract_strided_slice %89 {offsets = [0, 0, 0], sizes = [4, 4, 128], strides = [1, 1, 1]} : vector<5x5x128xbf16> to vector<4x4x128xbf16>
    %104 = vector.shape_cast %103 : vector<4x4x128xbf16> to vector<16x128xbf16>
    %c0_35 = arith.constant 0 : index
    %c0_36 = arith.constant 0 : index
    %105 = vector.load %arg6[%c0_35, %c0_36] : memref<1152x64xbf16, #tpu.memory_space<vmem>>, vector<128x64xbf16>
    %cst_37 = arith.constant dense<0.000000e+00> : vector<16x64xf32>
    %106 = tpu.matmul %104, %105, %cst_37 {dimension_numbers = #tpu.dot_dimension_numbers<[1], [0], [0], [1], [0, 0, 1, 1], [], []>} : vector<16x128xbf16>, vector<128x64xbf16>, vector<16x64xf32> -> vector<16x64xf32>
    %107 = arith.addf %102, %106 : vector<16x64xf32>
    %108 = vector.extract_strided_slice %93 {offsets = [0, 0, 0], sizes = [4, 4, 128], strides = [1, 1, 1]} : vector<5x5x128xbf16> to vector<4x4x128xbf16>
    %109 = vector.shape_cast %108 : vector<4x4x128xbf16> to vector<16x128xbf16>
    %c128_38 = arith.constant 128 : index
    %c0_39 = arith.constant 0 : index
    %110 = vector.load %arg6[%c128_38, %c0_39] : memref<1152x64xbf16, #tpu.memory_space<vmem>>, vector<128x64xbf16>
    %cst_40 = arith.constant dense<0.000000e+00> : vector<16x64xf32>
    %111 = tpu.matmul %109, %110, %cst_40 {dimension_numbers = #tpu.dot_dimension_numbers<[1], [0], [0], [1], [0, 0, 1, 1], [], []>} : vector<16x128xbf16>, vector<128x64xbf16>, vector<16x64xf32> -> vector<16x64xf32>
    %112 = arith.addf %107, %111 : vector<16x64xf32>
    %113 = vector.extract_strided_slice %89 {offsets = [0, 1, 0], sizes = [4, 4, 128], strides = [1, 1, 1]} : vector<5x5x128xbf16> to vector<4x4x128xbf16>
    %114 = vector.shape_cast %113 : vector<4x4x128xbf16> to vector<16x128xbf16>
    %c256_41 = arith.constant 256 : index
    %c0_42 = arith.constant 0 : index
    %115 = vector.load %arg6[%c256_41, %c0_42] : memref<1152x64xbf16, #tpu.memory_space<vmem>>, vector<128x64xbf16>
    %cst_43 = arith.constant dense<0.000000e+00> : vector<16x64xf32>
    %116 = tpu.matmul %114, %115, %cst_43 {dimension_numbers = #tpu.dot_dimension_numbers<[1], [0], [0], [1], [0, 0, 1, 1], [], []>} : vector<16x128xbf16>, vector<128x64xbf16>, vector<16x64xf32> -> vector<16x64xf32>
    %117 = arith.addf %112, %116 : vector<16x64xf32>
    %118 = vector.extract_strided_slice %97 {offsets = [0, 0, 0], sizes = [4, 4, 128], strides = [1, 1, 1]} : vector<5x5x128xbf16> to vector<4x4x128xbf16>
    %119 = vector.shape_cast %118 : vector<4x4x128xbf16> to vector<16x128xbf16>
    %c384_44 = arith.constant 384 : index
    %c0_45 = arith.constant 0 : index
    %120 = vector.load %arg6[%c384_44, %c0_45] : memref<1152x64xbf16, #tpu.memory_space<vmem>>, vector<128x64xbf16>
    %cst_46 = arith.constant dense<0.000000e+00> : vector<16x64xf32>
    %121 = tpu.matmul %119, %120, %cst_46 {dimension_numbers = #tpu.dot_dimension_numbers<[1], [0], [0], [1], [0, 0, 1, 1], [], []>} : vector<16x128xbf16>, vector<128x64xbf16>, vector<16x64xf32> -> vector<16x64xf32>
    %122 = arith.addf %117, %121 : vector<16x64xf32>
    %123 = vector.extract_strided_slice %101 {offsets = [0, 0, 0], sizes = [4, 4, 128], strides = [1, 1, 1]} : vector<5x5x128xbf16> to vector<4x4x128xbf16>
    %124 = vector.shape_cast %123 : vector<4x4x128xbf16> to vector<16x128xbf16>
    %c512_47 = arith.constant 512 : index
    %c0_48 = arith.constant 0 : index
    %125 = vector.load %arg6[%c512_47, %c0_48] : memref<1152x64xbf16, #tpu.memory_space<vmem>>, vector<128x64xbf16>
    %cst_49 = arith.constant dense<0.000000e+00> : vector<16x64xf32>
    %126 = tpu.matmul %124, %125, %cst_49 {dimension_numbers = #tpu.dot_dimension_numbers<[1], [0], [0], [1], [0, 0, 1, 1], [], []>} : vector<16x128xbf16>, vector<128x64xbf16>, vector<16x64xf32> -> vector<16x64xf32>
    %127 = arith.addf %122, %126 : vector<16x64xf32>
    %128 = vector.extract_strided_slice %97 {offsets = [0, 1, 0], sizes = [4, 4, 128], strides = [1, 1, 1]} : vector<5x5x128xbf16> to vector<4x4x128xbf16>
    %129 = vector.shape_cast %128 : vector<4x4x128xbf16> to vector<16x128xbf16>
    %c640 = arith.constant 640 : index
    %c0_50 = arith.constant 0 : index
    %130 = vector.load %arg6[%c640, %c0_50] : memref<1152x64xbf16, #tpu.memory_space<vmem>>, vector<128x64xbf16>
    %cst_51 = arith.constant dense<0.000000e+00> : vector<16x64xf32>
    %131 = tpu.matmul %129, %130, %cst_51 {dimension_numbers = #tpu.dot_dimension_numbers<[1], [0], [0], [1], [0, 0, 1, 1], [], []>} : vector<16x128xbf16>, vector<128x64xbf16>, vector<16x64xf32> -> vector<16x64xf32>
    %132 = arith.addf %127, %131 : vector<16x64xf32>
    %133 = vector.extract_strided_slice %89 {offsets = [1, 0, 0], sizes = [4, 4, 128], strides = [1, 1, 1]} : vector<5x5x128xbf16> to vector<4x4x128xbf16>
    %134 = vector.shape_cast %133 : vector<4x4x128xbf16> to vector<16x128xbf16>
    %c768 = arith.constant 768 : index
    %c0_52 = arith.constant 0 : index
    %135 = vector.load %arg6[%c768, %c0_52] : memref<1152x64xbf16, #tpu.memory_space<vmem>>, vector<128x64xbf16>
    %cst_53 = arith.constant dense<0.000000e+00> : vector<16x64xf32>
    %136 = tpu.matmul %134, %135, %cst_53 {dimension_numbers = #tpu.dot_dimension_numbers<[1], [0], [0], [1], [0, 0, 1, 1], [], []>} : vector<16x128xbf16>, vector<128x64xbf16>, vector<16x64xf32> -> vector<16x64xf32>
    %137 = arith.addf %132, %136 : vector<16x64xf32>
    %138 = vector.extract_strided_slice %93 {offsets = [1, 0, 0], sizes = [4, 4, 128], strides = [1, 1, 1]} : vector<5x5x128xbf16> to vector<4x4x128xbf16>
    %139 = vector.shape_cast %138 : vector<4x4x128xbf16> to vector<16x128xbf16>
    %c896 = arith.constant 896 : index
    %c0_54 = arith.constant 0 : index
    %140 = vector.load %arg6[%c896, %c0_54] : memref<1152x64xbf16, #tpu.memory_space<vmem>>, vector<128x64xbf16>
    %cst_55 = arith.constant dense<0.000000e+00> : vector<16x64xf32>
    %141 = tpu.matmul %139, %140, %cst_55 {dimension_numbers = #tpu.dot_dimension_numbers<[1], [0], [0], [1], [0, 0, 1, 1], [], []>} : vector<16x128xbf16>, vector<128x64xbf16>, vector<16x64xf32> -> vector<16x64xf32>
    %142 = arith.addf %137, %141 : vector<16x64xf32>
    %143 = vector.extract_strided_slice %89 {offsets = [1, 1, 0], sizes = [4, 4, 128], strides = [1, 1, 1]} : vector<5x5x128xbf16> to vector<4x4x128xbf16>
    %144 = vector.shape_cast %143 : vector<4x4x128xbf16> to vector<16x128xbf16>
    %c1024 = arith.constant 1024 : index
    %c0_56 = arith.constant 0 : index
    %145 = vector.load %arg6[%c1024, %c0_56] : memref<1152x64xbf16, #tpu.memory_space<vmem>>, vector<128x64xbf16>
    %cst_57 = arith.constant dense<0.000000e+00> : vector<16x64xf32>
    %146 = tpu.matmul %144, %145, %cst_57 {dimension_numbers = #tpu.dot_dimension_numbers<[1], [0], [0], [1], [0, 0, 1, 1], [], []>} : vector<16x128xbf16>, vector<128x64xbf16>, vector<16x64xf32> -> vector<16x64xf32>
    %147 = arith.addf %142, %146 : vector<16x64xf32>
    %c0_58 = arith.constant 0 : index
    %c0_59 = arith.constant 0 : index
    %148 = vector.load %arg7[%c0_58, %c0_59] : memref<1x64xf32, #tpu.memory_space<vmem>>, vector<1x64xf32>
    %149 = vector.broadcast %148 : vector<1x64xf32> to vector<16x64xf32>
    %150 = arith.addf %147, %149 : vector<16x64xf32>
    %cst_60 = arith.constant 0.000000e+00 : f32
    %151 = vector.broadcast %cst_60 : f32 to vector<16x64xf32>
    %152 = arith.maximumf %150, %151 : vector<16x64xf32>
    %153 = arith.truncf %152 : vector<16x64xf32> to vector<16x64xbf16>
    %154 = vector.shape_cast %153 : vector<16x64xbf16> to vector<4x4x64xbf16>
    %cst_61 = arith.constant 0.000000e+00 : bf16
    %155 = vector.broadcast %cst_61 : bf16 to vector<1x6x64xbf16>
    %cst_62 = arith.constant 0.000000e+00 : bf16
    %156 = vector.broadcast %cst_62 : bf16 to vector<4x1x64xbf16>
    %157 = tpu.concatenate %156, %154, %156 in 1 : vector<4x1x64xbf16>, vector<4x4x64xbf16>, vector<4x1x64xbf16> -> vector<4x6x64xbf16>
    %158 = tpu.concatenate %155, %157, %155 in 0 : vector<1x6x64xbf16>, vector<4x6x64xbf16>, vector<1x6x64xbf16> -> vector<6x6x64xbf16>
    %cst_63 = arith.constant 0.000000e+00 : f32
    %159 = vector.broadcast %cst_63 : f32 to vector<16x128xf32>
    %160 = vector.extract_strided_slice %158 {offsets = [0, 0, 0], sizes = [4, 4, 64], strides = [1, 1, 1]} : vector<6x6x64xbf16> to vector<4x4x64xbf16>
    %161 = vector.shape_cast %160 : vector<4x4x64xbf16> to vector<16x64xbf16>
    %c0_64 = arith.constant 0 : index
    %c0_65 = arith.constant 0 : index
    %162 = vector.load %arg8[%c0_64, %c0_65] : memref<576x128xbf16, #tpu.memory_space<vmem>>, vector<64x128xbf16>
    %cst_66 = arith.constant dense<0.000000e+00> : vector<16x128xf32>
    %163 = tpu.matmul %161, %162, %cst_66 {dimension_numbers = #tpu.dot_dimension_numbers<[1], [0], [0], [1], [0, 0, 1, 1], [], []>} : vector<16x64xbf16>, vector<64x128xbf16>, vector<16x128xf32> -> vector<16x128xf32>
    %164 = arith.addf %159, %163 : vector<16x128xf32>
    %165 = vector.extract_strided_slice %158 {offsets = [0, 1, 0], sizes = [4, 4, 64], strides = [1, 1, 1]} : vector<6x6x64xbf16> to vector<4x4x64xbf16>
    %166 = vector.shape_cast %165 : vector<4x4x64xbf16> to vector<16x64xbf16>
    %c64_67 = arith.constant 64 : index
    %c0_68 = arith.constant 0 : index
    %167 = vector.load %arg8[%c64_67, %c0_68] : memref<576x128xbf16, #tpu.memory_space<vmem>>, vector<64x128xbf16>
    %cst_69 = arith.constant dense<0.000000e+00> : vector<16x128xf32>
    %168 = tpu.matmul %166, %167, %cst_69 {dimension_numbers = #tpu.dot_dimension_numbers<[1], [0], [0], [1], [0, 0, 1, 1], [], []>} : vector<16x64xbf16>, vector<64x128xbf16>, vector<16x128xf32> -> vector<16x128xf32>
    %169 = arith.addf %164, %168 : vector<16x128xf32>
    %170 = vector.extract_strided_slice %158 {offsets = [0, 2, 0], sizes = [4, 4, 64], strides = [1, 1, 1]} : vector<6x6x64xbf16> to vector<4x4x64xbf16>
    %171 = vector.shape_cast %170 : vector<4x4x64xbf16> to vector<16x64xbf16>
    %c128_70 = arith.constant 128 : index
    %c0_71 = arith.constant 0 : index
    %172 = vector.load %arg8[%c128_70, %c0_71] : memref<576x128xbf16, #tpu.memory_space<vmem>>, vector<64x128xbf16>
    %cst_72 = arith.constant dense<0.000000e+00> : vector<16x128xf32>
    %173 = tpu.matmul %171, %172, %cst_72 {dimension_numbers = #tpu.dot_dimension_numbers<[1], [0], [0], [1], [0, 0, 1, 1], [], []>} : vector<16x64xbf16>, vector<64x128xbf16>, vector<16x128xf32> -> vector<16x128xf32>
    %174 = arith.addf %169, %173 : vector<16x128xf32>
    %175 = vector.extract_strided_slice %158 {offsets = [1, 0, 0], sizes = [4, 4, 64], strides = [1, 1, 1]} : vector<6x6x64xbf16> to vector<4x4x64xbf16>
    %176 = vector.shape_cast %175 : vector<4x4x64xbf16> to vector<16x64xbf16>
    %c192_73 = arith.constant 192 : index
    %c0_74 = arith.constant 0 : index
    %177 = vector.load %arg8[%c192_73, %c0_74] : memref<576x128xbf16, #tpu.memory_space<vmem>>, vector<64x128xbf16>
    %cst_75 = arith.constant dense<0.000000e+00> : vector<16x128xf32>
    %178 = tpu.matmul %176, %177, %cst_75 {dimension_numbers = #tpu.dot_dimension_numbers<[1], [0], [0], [1], [0, 0, 1, 1], [], []>} : vector<16x64xbf16>, vector<64x128xbf16>, vector<16x128xf32> -> vector<16x128xf32>
    %179 = arith.addf %174, %178 : vector<16x128xf32>
    %180 = vector.extract_strided_slice %158 {offsets = [1, 1, 0], sizes = [4, 4, 64], strides = [1, 1, 1]} : vector<6x6x64xbf16> to vector<4x4x64xbf16>
    %181 = vector.shape_cast %180 : vector<4x4x64xbf16> to vector<16x64xbf16>
    %c256_76 = arith.constant 256 : index
    %c0_77 = arith.constant 0 : index
    %182 = vector.load %arg8[%c256_76, %c0_77] : memref<576x128xbf16, #tpu.memory_space<vmem>>, vector<64x128xbf16>
    %cst_78 = arith.constant dense<0.000000e+00> : vector<16x128xf32>
    %183 = tpu.matmul %181, %182, %cst_78 {dimension_numbers = #tpu.dot_dimension_numbers<[1], [0], [0], [1], [0, 0, 1, 1], [], []>} : vector<16x64xbf16>, vector<64x128xbf16>, vector<16x128xf32> -> vector<16x128xf32>
    %184 = arith.addf %179, %183 : vector<16x128xf32>
    %185 = vector.extract_strided_slice %158 {offsets = [1, 2, 0], sizes = [4, 4, 64], strides = [1, 1, 1]} : vector<6x6x64xbf16> to vector<4x4x64xbf16>
    %186 = vector.shape_cast %185 : vector<4x4x64xbf16> to vector<16x64xbf16>
    %c320_79 = arith.constant 320 : index
    %c0_80 = arith.constant 0 : index
    %187 = vector.load %arg8[%c320_79, %c0_80] : memref<576x128xbf16, #tpu.memory_space<vmem>>, vector<64x128xbf16>
    %cst_81 = arith.constant dense<0.000000e+00> : vector<16x128xf32>
    %188 = tpu.matmul %186, %187, %cst_81 {dimension_numbers = #tpu.dot_dimension_numbers<[1], [0], [0], [1], [0, 0, 1, 1], [], []>} : vector<16x64xbf16>, vector<64x128xbf16>, vector<16x128xf32> -> vector<16x128xf32>
    %189 = arith.addf %184, %188 : vector<16x128xf32>
    %190 = vector.extract_strided_slice %158 {offsets = [2, 0, 0], sizes = [4, 4, 64], strides = [1, 1, 1]} : vector<6x6x64xbf16> to vector<4x4x64xbf16>
    %191 = vector.shape_cast %190 : vector<4x4x64xbf16> to vector<16x64xbf16>
    %c384_82 = arith.constant 384 : index
    %c0_83 = arith.constant 0 : index
    %192 = vector.load %arg8[%c384_82, %c0_83] : memref<576x128xbf16, #tpu.memory_space<vmem>>, vector<64x128xbf16>
    %cst_84 = arith.constant dense<0.000000e+00> : vector<16x128xf32>
    %193 = tpu.matmul %191, %192, %cst_84 {dimension_numbers = #tpu.dot_dimension_numbers<[1], [0], [0], [1], [0, 0, 1, 1], [], []>} : vector<16x64xbf16>, vector<64x128xbf16>, vector<16x128xf32> -> vector<16x128xf32>
    %194 = arith.addf %189, %193 : vector<16x128xf32>
    %195 = vector.extract_strided_slice %158 {offsets = [2, 1, 0], sizes = [4, 4, 64], strides = [1, 1, 1]} : vector<6x6x64xbf16> to vector<4x4x64xbf16>
    %196 = vector.shape_cast %195 : vector<4x4x64xbf16> to vector<16x64xbf16>
    %c448_85 = arith.constant 448 : index
    %c0_86 = arith.constant 0 : index
    %197 = vector.load %arg8[%c448_85, %c0_86] : memref<576x128xbf16, #tpu.memory_space<vmem>>, vector<64x128xbf16>
    %cst_87 = arith.constant dense<0.000000e+00> : vector<16x128xf32>
    %198 = tpu.matmul %196, %197, %cst_87 {dimension_numbers = #tpu.dot_dimension_numbers<[1], [0], [0], [1], [0, 0, 1, 1], [], []>} : vector<16x64xbf16>, vector<64x128xbf16>, vector<16x128xf32> -> vector<16x128xf32>
    %199 = arith.addf %194, %198 : vector<16x128xf32>
    %200 = vector.extract_strided_slice %158 {offsets = [2, 2, 0], sizes = [4, 4, 64], strides = [1, 1, 1]} : vector<6x6x64xbf16> to vector<4x4x64xbf16>
    %201 = vector.shape_cast %200 : vector<4x4x64xbf16> to vector<16x64xbf16>
    %c512_88 = arith.constant 512 : index
    %c0_89 = arith.constant 0 : index
    %202 = vector.load %arg8[%c512_88, %c0_89] : memref<576x128xbf16, #tpu.memory_space<vmem>>, vector<64x128xbf16>
    %cst_90 = arith.constant dense<0.000000e+00> : vector<16x128xf32>
    %203 = tpu.matmul %201, %202, %cst_90 {dimension_numbers = #tpu.dot_dimension_numbers<[1], [0], [0], [1], [0, 0, 1, 1], [], []>} : vector<16x64xbf16>, vector<64x128xbf16>, vector<16x128xf32> -> vector<16x128xf32>
    %204 = arith.addf %199, %203 : vector<16x128xf32>
    %cst_91 = arith.constant 0.000000e+00 : f32
    %205 = vector.broadcast %cst_91 : f32 to vector<16x128xf32>
    %206 = arith.maximumf %204, %205 : vector<16x128xf32>
    %207 = vector.shape_cast %206 : vector<16x128xf32> to vector<1x16x128xf32>
    %c0_92 = arith.constant 0 : index
    %c0_93 = arith.constant 0 : index
    %c0_94 = arith.constant 0 : index
    %208 = vector.load %arg9[%c0_92, %c0_93, %c0_94] : memref<1x16x128xf32, #tpu.memory_space<vmem>>, vector<1x16x128xf32>
    tpu.vector_store %arg9[%c0_92, %c0_93, %c0_94], %207 {strides = array<i32>} : memref<1x16x128xf32, #tpu.memory_space<vmem>>, vector<1x16x128xf32>,
    return
  }
  func.func @transform_0(%arg0: i32) -> (i32, i32, i32) {
    %c0_i32 = arith.constant 0 : i32
    %c0_i32_0 = arith.constant 0 : i32
    %c0_i32_1 = arith.constant 0 : i32
    return %arg0, %c0_i32, %c0_i32_0 : i32, i32, i32
  }
  func.func @transform_1(%arg0: i32) -> (i32, i32) {
    %c0_i32 = arith.constant 0 : i32
    %c0_i32_0 = arith.constant 0 : i32
    %c0_i32_1 = arith.constant 0 : i32
    return %c0_i32, %c0_i32_0 : i32, i32
  }
  func.func @transform_2(%arg0: i32) -> (i32, i32) {
    %c0_i32 = arith.constant 0 : i32
    %c0_i32_0 = arith.constant 0 : i32
    %c0_i32_1 = arith.constant 0 : i32
    return %c0_i32, %c0_i32_0 : i32, i32
  }
  func.func @transform_3(%arg0: i32) -> (i32, i32) {
    %c0_i32 = arith.constant 0 : i32
    %c0_i32_0 = arith.constant 0 : i32
    %c0_i32_1 = arith.constant 0 : i32
    return %c0_i32, %c0_i32_0 : i32, i32
  }
  func.func @transform_4(%arg0: i32) -> (i32, i32) {
    %c0_i32 = arith.constant 0 : i32
    %c0_i32_0 = arith.constant 0 : i32
    %c0_i32_1 = arith.constant 0 : i32
    return %c0_i32, %c0_i32_0 : i32, i32
  }
  func.func @transform_5(%arg0: i32) -> (i32, i32) {
    %c0_i32 = arith.constant 0 : i32
    %c0_i32_0 = arith.constant 0 : i32
    %c0_i32_1 = arith.constant 0 : i32
    return %c0_i32, %c0_i32_0 : i32, i32
  }
  func.func @transform_6(%arg0: i32) -> (i32, i32) {
    %c0_i32 = arith.constant 0 : i32
    %c0_i32_0 = arith.constant 0 : i32
    %c0_i32_1 = arith.constant 0 : i32
    return %c0_i32, %c0_i32_0 : i32, i32
  }
  func.func @transform_7(%arg0: i32) -> (i32, i32) {
    %c0_i32 = arith.constant 0 : i32
    %c0_i32_0 = arith.constant 0 : i32
    %c0_i32_1 = arith.constant 0 : i32
    return %c0_i32, %c0_i32_0 : i32, i32
  }
  func.func @transform_8(%arg0: i32) -> (i32, i32, i32) {
    %c0_i32 = arith.constant 0 : i32
    %c0_i32_0 = arith.constant 0 : i32
    %c0_i32_1 = arith.constant 0 : i32
    return %arg0, %c0_i32, %c0_i32_0 : i32, i32, i32
  }
}

</mosaic_0001>

<llo_original>
// kernel: squeeze.1
$region0: #{squeeze.1}
  %s0 = inlined_call_operand.vmem [shape: f32[2,16], index: 0, kind: input, shape index: {}]
  %s1 = inlined_call_operand.hbm [shape: f32[2,1,4,4], index: 1, kind: output, shape index: {}]
  $region1: #{squeeze.1} parent=0
    #allocation0 [shape = 'u8[4096]{0}', space=vmem, size = 0x1000, scoped, tag = 'operand span for operand 1']
    #allocation1 [shape = 's32[1]{0}', space=sflag, size = 0x4, scoped, tag = 'scoped memory for squeeze.1']
    #allocation2 [shape = 'u8[8192]{0}', space=vmem, size = 0x2000, scoped, tag = 'scoped mem for output reshape']
    #allocation3 [shape = 'u8[4096]{0}', space=vmem, size = 0x1000, scoped, tag = 'scoped mem for input reshape']
    %2 = vsyncpa [#allocation1], 0
    %s4 = sshllo.u32 0, 2
    %v5 = vld [vmem:[%s0] sm:%s4]
    %6 = vst [vmem:[#allocation3] sm:%s4] %v5
    %v7 = vld [vmem:[#allocation3] sm:$0x3]
    %vm8 = vcmask 31744
    %9 = vst.msk [vmem:[#allocation2] ss:$8 sm:$0x3] %vm8, %v7
    %v10 = vld [vmem:[#allocation3] sm:$0x3]
    %11 = vrot.lane.b32.xlu0 %v10, 124
    %v12 = vpop.permute.xlu0 %11
    %vm13 = vcmask 31744
    %s14 = scalar_lea.vmem [#allocation2], 1
    %15 = vst.msk [vmem:[%s14] ss:$8 sm:$0x3] %vm13, %v12
    %v16 = vld [vmem:[#allocation3] sm:$0x3]
    %17 = vrot.lane.b32.xlu0 %v16, 120
    %v18 = vpop.permute.xlu0 %17
    %vm19 = vcmask 31744
    %s20 = scalar_lea.vmem [#allocation2], 2
    %21 = vst.msk [vmem:[%s20] ss:$8 sm:$0x3] %vm19, %v18
    %v22 = vld [vmem:[#allocation3] sm:$0x3]
    %23 = vrot.lane.b32.xlu0 %v22, 116
    %v24 = vpop.permute.xlu0 %23
    %vm25 = vcmask 31744
    %s26 = scalar_lea.vmem [#allocation2], 3
    %27 = vst.msk [vmem:[%s26] ss:$8 sm:$0x3] %vm25, %v24
    %s29 = sshllo.u32 0, 4
    %v31 = vld [vmem:[#allocation2] sm:%s29]
    %s32 = sshllo.u32 0, 4
    %33 = vst [vmem:[#allocation0] sm:%s32] %v31
    %s34 = scalar_lea.vmem [#allocation2], 8
    %v35 = vld [vmem:[%s34] sm:%s29]
    %s36 = sshllo.u32 0, 4
    %s37 = scalar_lea.vmem [#allocation0], 4
    %38 = vst [vmem:[%s37] sm:%s36] %v35
    %s40 = ssub.s32 128, 128
    %41 = vsyncadd [#allocation1], %s40
    %s43 = sshll.u32 [#allocation0], 4
    %s44 = int_to_ptr.vmem [resolvable:$true] %s43
    %46 = dma.vmem_to_hbm [thread:$0]  %s44, 128, %s1, [#allocation1]
    %47 = dma.done [#allocation1], 128
    %48 = vsyncpa [#allocation1], 1

// kernel: t_net_forward.1
$region0: #{t_net_forward.1}
  #allocation0 [shape = 'u32[]', space=smem, size = 0x4, offset = 0x4, fixed_abs, tag = 'smem constant byte address 0x4 - core index']
  #allocation1 [shape = 'u32[144,128]{1,0:T(1,128)}', space=vmem, size = 0x12000, scoped, tag = 'internal scratch']
  %s0 = inlined_call_operand.vmem [shape: bf16[2,256,32], index: 0, kind: input, shape index: {}]
  %s1 = inlined_call_operand.vmem [shape: bf16[32,64], index: 1, kind: input, shape index: {}]
  %s2 = inlined_call_operand.vmem [shape: f32[1,64], index: 2, kind: input, shape index: {}]
  %s3 = inlined_call_operand.vmem [shape: bf16[576,128], index: 3, kind: input, shape index: {}]
  %s4 = inlined_call_operand.vmem [shape: f32[1,128], index: 4, kind: input, shape index: {}]
  %s5 = inlined_call_operand.vmem [shape: bf16[1152,64], index: 5, kind: input, shape index: {}]
  %s6 = inlined_call_operand.vmem [shape: f32[1,64], index: 6, kind: input, shape index: {}]
  %s7 = inlined_call_operand.vmem [shape: bf16[576,128], index: 7, kind: input, shape index: {}]
  %s8 = inlined_call_operand.vmem [shape: f32[2,16,128], index: 8, kind: output, shape index: {}]
  %s9 = sld [smem:[#allocation0]]
  $region65: #{t_net_forward.1} parent=0
    _
  %s11 = ssub.s32 1, %s9
  %s12 = scalar_select 0, %s11, %s9
  loop: start=0, step=1, limit=4
  $region2: #{t_net_forward.1} parent=0 // loop_pre_header
    _
  $region3: #{t_net_forward.1} parent=0 // loop_header
    %s14 = sphi 0, %s18
    %p15 = scmp.ge.s32.totalorder %s14, 4
    %s24 = sphi 0, %s26
    %s27 = sphi 0, %s24
    %s28 = sphi 0, %s27
    %s44 = sphi 0, %s28
    %s48 = sphi 0, %s48
    %s50 = sphi 0, %s48
    %s51 = sphi 0, %s50
    %s65 = sphi 0, %s51
    %s69 = sphi 0, %s69
    %s71 = sphi 0, %s69
    %s72 = sphi 0, %s71
    %s86 = sphi 0, %s72
    %s90 = sphi 0, %s90
    %s92 = sphi 0, %s90
    %s93 = sphi 0, %s92
    %s107 = sphi 0, %s93
    %s111 = sphi 0, %s111
    %s113 = sphi 0, %s111
    %s114 = sphi 0, %s113
    %s128 = sphi 0, %s114
    %s132 = sphi 0, %s132
    %s134 = sphi 0, %s132
    %s135 = sphi 0, %s134
    %s149 = sphi 0, %s135
    %s153 = sphi 0, %s153
    %s155 = sphi 0, %s153
    %s156 = sphi 0, %s155
    %s170 = sphi 0, %s156
    %s174 = sphi 0, %s174
    %s176 = sphi 0, %s174
    %s177 = sphi 0, %s176
    %s191 = sphi 0, %s177
    %s197 = sphi 0, %s199
    %s200 = sphi 0, %s197
    %s201 = sphi 0, %s200
    %s217 = sphi 0, %s201
  $region4: #{t_net_forward.1} parent=0 // loop_header_branch
    %17 = sbr.rel (%p15) target = $region8
  $region5: #{t_net_forward.1} parent=0 // loop_body
    %s19 = ssub.s32 %s14, 1
    %s20 = ssub.s32 %s14, 2
    %s21 = sadd.s32 %s14, 1
    %s22 = ssub.s32 %s14, %s21
    %p23 = scmp.eq.s32.totalorder %s22, 0
    %s25 = sadd.s32 %s24, 1
    %s26 = scalar_select %p23, %s24, %s25
    %p29 = pneg %p23
    %p30 = scmp.eq.s32.totalorder %s14, 1
    %p31 = por %p29, %p30
    %p32 = scmp.ne.s32.totalorder %s24, %s27
    %p33 = scmp.eq.s32.totalorder %s14, 0
    %p34 = por %p32, %p33
    %p35 = scmp.ne.s32.totalorder %s24, %s27
    %p36 = scmp.eq.s32.totalorder %s19, 1
    %p37 = por %p35, %p36
    %p38 = scmp.ne.s32.totalorder %s27, %s28
    %p39 = scmp.eq.s32.totalorder %s19, 0
    %p40 = por %p38, %p39
    %p41 = scmp.ne.s32.totalorder %s27, %s28
    %p42 = scmp.eq.s32.totalorder %s20, 1
    %p43 = por %p41, %p42
    %p45 = scmp.ne.s32.totalorder %s28, %s44
    %p46 = scmp.eq.s32.totalorder %s20, 0
    %p47 = por %p45, %p46
    %s49 = sadd.s32 %s48, 1
    %p52 = scmp.eq.s32.totalorder %s14, 1
    %p53 = scmp.ne.s32.totalorder %s48, %s50
    %p54 = scmp.eq.s32.totalorder %s14, 0
    %p55 = por %p53, %p54
    %p56 = scmp.ne.s32.totalorder %s48, %s50
    %p57 = scmp.eq.s32.totalorder %s19, 1
    %p58 = por %p56, %p57
    %p59 = scmp.ne.s32.totalorder %s50, %s51
    %p60 = scmp.eq.s32.totalorder %s19, 0
    %p61 = por %p59, %p60
    %p62 = scmp.ne.s32.totalorder %s50, %s51
    %p63 = scmp.eq.s32.totalorder %s20, 1
    %p64 = por %p62, %p63
    %p66 = scmp.ne.s32.totalorder %s51, %s65
    %p67 = scmp.eq.s32.totalorder %s20, 0
    %p68 = por %p66, %p67
    %s70 = sadd.s32 %s69, 1
    %p73 = scmp.eq.s32.totalorder %s14, 1
    %p74 = scmp.ne.s32.totalorder %s69, %s71
    %p75 = scmp.eq.s32.totalorder %s14, 0
    %p76 = por %p74, %p75
    %p77 = scmp.ne.s32.totalorder %s69, %s71
    %p78 = scmp.eq.s32.totalorder %s19, 1
    %p79 = por %p77, %p78
    %p80 = scmp.ne.s32.totalorder %s71, %s72
    %p81 = scmp.eq.s32.totalorder %s19, 0
    %p82 = por %p80, %p81
    %p83 = scmp.ne.s32.totalorder %s71, %s72
    %p84 = scmp.eq.s32.totalorder %s20, 1
    %p85 = por %p83, %p84
    %p87 = scmp.ne.s32.totalorder %s72, %s86
    %p88 = scmp.eq.s32.totalorder %s20, 0
    %p89 = por %p87, %p88
    %s91 = sadd.s32 %s90, 1
    %p94 = scmp.eq.s32.totalorder %s14, 1
    %p95 = scmp.ne.s32.totalorder %s90, %s92
    %p96 = scmp.eq.s32.totalorder %s14, 0
    %p97 = por %p95, %p96
    %p98 = scmp.ne.s32.totalorder %s90, %s92
    %p99 = scmp.eq.s32.totalorder %s19, 1
    %p100 = por %p98, %p99
    %p101 = scmp.ne.s32.totalorder %s92, %s93
    %p102 = scmp.eq.s32.totalorder %s19, 0
    %p103 = por %p101, %p102
    %p104 = scmp.ne.s32.totalorder %s92, %s93
    %p105 = scmp.eq.s32.totalorder %s20, 1
    %p106 = por %p104, %p105
    %p108 = scmp.ne.s32.totalorder %s93, %s107
    %p109 = scmp.eq.s32.totalorder %s20, 0
    %p110 = por %p108, %p109
    %s112 = sadd.s32 %s111, 1
    %p115 = scmp.eq.s32.totalorder %s14, 1
    %p116 = scmp.ne.s32.totalorder %s111, %s113
    %p117 = scmp.eq.s32.totalorder %s14, 0
    %p118 = por %p116, %p117
    %p119 = scmp.ne.s32.totalorder %s111, %s113
    %p120 = scmp.eq.s32.totalorder %s19, 1
    %p121 = por %p119, %p120
    %p122 = scmp.ne.s32.totalorder %s113, %s114
    %p123 = scmp.eq.s32.totalorder %s19, 0
    %p124 = por %p122, %p123
    %p125 = scmp.ne.s32.totalorder %s113, %s114
    %p126 = scmp.eq.s32.totalorder %s20, 1
    %p127 = por %p125, %p126
    %p129 = scmp.ne.s32.totalorder %s114, %s128
    %p130 = scmp.eq.s32.totalorder %s20, 0
    %p131 = por %p129, %p130
    %s133 = sadd.s32 %s132, 1
    %p136 = scmp.eq.s32.totalorder %s14, 1
    %p137 = scmp.ne.s32.totalorder %s132, %s134
    %p138 = scmp.eq.s32.totalorder %s14, 0
    %p139 = por %p137, %p138
    %p140 = scmp.ne.s32.totalorder %s132, %s134
    %p141 = scmp.eq.s32.totalorder %s19, 1
    %p142 = por %p140, %p141
    %p143 = scmp.ne.s32.totalorder %s134, %s135
    %p144 = scmp.eq.s32.totalorder %s19, 0
    %p145 = por %p143, %p144
    %p146 = scmp.ne.s32.totalorder %s134, %s135
    %p147 = scmp.eq.s32.totalorder %s20, 1
    %p148 = por %p146, %p147
    %p150 = scmp.ne.s32.totalorder %s135, %s149
    %p151 = scmp.eq.s32.totalorder %s20, 0
    %p152 = por %p150, %p151
    %s154 = sadd.s32 %s153, 1
    %p157 = scmp.eq.s32.totalorder %s14, 1
    %p158 = scmp.ne.s32.totalorder %s153, %s155
    %p159 = scmp.eq.s32.totalorder %s14, 0
    %p160 = por %p158, %p159
    %p161 = scmp.ne.s32.totalorder %s153, %s155
    %p162 = scmp.eq.s32.totalorder %s19, 1
    %p163 = por %p161, %p162
    %p164 = scmp.ne.s32.totalorder %s155, %s156
    %p165 = scmp.eq.s32.totalorder %s19, 0
    %p166 = por %p164, %p165
    %p167 = scmp.ne.s32.totalorder %s155, %s156
    %p168 = scmp.eq.s32.totalorder %s20, 1
    %p169 = por %p167, %p168
    %p171 = scmp.ne.s32.totalorder %s156, %s170
    %p172 = scmp.eq.s32.totalorder %s20, 0
    %p173 = por %p171, %p172
    %s175 = sadd.s32 %s174, 1
    %p178 = scmp.eq.s32.totalorder %s14, 1
    %p179 = scmp.ne.s32.totalorder %s174, %s176
    %p180 = scmp.eq.s32.totalorder %s14, 0
    %p181 = por %p179, %p180
    %p182 = scmp.ne.s32.totalorder %s174, %s176
    %p183 = scmp.eq.s32.totalorder %s19, 1
    %p184 = por %p182, %p183
    %p185 = scmp.ne.s32.totalorder %s176, %s177
    %p186 = scmp.eq.s32.totalorder %s19, 0
    %p187 = por %p185, %p186
    %p188 = scmp.ne.s32.totalorder %s176, %s177
    %p189 = scmp.eq.s32.totalorder %s20, 1
    %p190 = por %p188, %p189
    %p192 = scmp.ne.s32.totalorder %s177, %s191
    %p193 = scmp.eq.s32.totalorder %s20, 0
    %p194 = por %p192, %p193
    %s195 = ssub.s32 %s14, %s21
    %p196 = scmp.eq.s32.totalorder %s195, 0
    %s198 = sadd.s32 %s197, 1
    %s199 = scalar_select %p196, %s197, %s198
    %p202 = pneg %p196
    %p203 = scmp.eq.s32.totalorder %s14, 1
    %p204 = por %p202, %p203
    %p205 = scmp.ne.s32.totalorder %s197, %s200
    %p206 = scmp.eq.s32.totalorder %s14, 0
    %p207 = por %p205, %p206
    %p208 = scmp.ne.s32.totalorder %s197, %s200
    %p209 = scmp.eq.s32.totalorder %s19, 1
    %p210 = por %p208, %p209
    %p211 = scmp.ne.s32.totalorder %s200, %s201
    %p212 = scmp.eq.s32.totalorder %s19, 0
    %p213 = por %p211, %p212
    %p214 = scmp.ne.s32.totalorder %s200, %s201
    %p215 = scmp.eq.s32.totalorder %s20, 1
    %p216 = por %p214, %p215
    %p218 = scmp.ne.s32.totalorder %s201, %s217
    %p219 = scmp.eq.s32.totalorder %s20, 0
    %p220 = por %p218, %p219
    %p221 = scmp.le.s32.totalorder 1, %s14
    %p222 = scmp.lt.s32.totalorder %s14, 3
    %p223 = pnand %p221, %p222
    %p224 = pneg %p223
    // Predicated region
    $region9: #{t_net_forward.1} parent=5 // pred_check
      _
    $region10: #{t_net_forward.1} parent=5 // pred_check_branch
      %226 = sbr.rel (%p223) target = $region12
    $region11: #{t_net_forward.1} parent=5 // pred_region
      %s227 = ssub.s32 %s14, 1
      // Predicated region
      $region13: #{t_net_forward.1} parent=11 // pred_check
        %p228 = pneg %p61
      $region14: #{t_net_forward.1} parent=11 // pred_check_branch
        %230 = sbr.rel (%p228) target = $region16
      $region15: #{t_net_forward.1} parent=11 // pred_region
        _
      $region16: #{t_net_forward.1} parent=11 // pred_fallthru
        _
      // Predicated region
      $region17: #{t_net_forward.1} parent=11 // pred_check
        %p231 = pneg %p82
      $region18: #{t_net_forward.1} parent=11 // pred_check_branch
        %233 = sbr.rel (%p231) target = $region20
      $region19: #{t_net_forward.1} parent=11 // pred_region
        _
      $region20: #{t_net_forward.1} parent=11 // pred_fallthru
        _
      // Predicated region
      $region21: #{t_net_forward.1} parent=11 // pred_check
        %p234 = pneg %p103
      $region22: #{t_net_forward.1} parent=11 // pred_check_branch
        %236 = sbr.rel (%p234) target = $region24
      $region23: #{t_net_forward.1} parent=11 // pred_region
        _
      $region24: #{t_net_forward.1} parent=11 // pred_fallthru
        _
      // Predicated region
      $region25: #{t_net_forward.1} parent=11 // pred_check
        %p237 = pneg %p124
      $region26: #{t_net_forward.1} parent=11 // pred_check_branch
        %239 = sbr.rel (%p237) target = $region28
      $region27: #{t_net_forward.1} parent=11 // pred_region
        _
      $region28: #{t_net_forward.1} parent=11 // pred_fallthru
        _
      // Predicated region
      $region29: #{t_net_forward.1} parent=11 // pred_check
        %p240 = pneg %p145
      $region30: #{t_net_forward.1} parent=11 // pred_check_branch
        %242 = sbr.rel (%p240) target = $region32
      $region31: #{t_net_forward.1} parent=11 // pred_region
        _
      $region32: #{t_net_forward.1} parent=11 // pred_fallthru
        _
      // Predicated region
      $region33: #{t_net_forward.1} parent=11 // pred_check
        %p243 = pneg %p166
      $region34: #{t_net_forward.1} parent=11 // pred_check_branch
        %245 = sbr.rel (%p243) target = $region36
      $region35: #{t_net_forward.1} parent=11 // pred_region
        _
      $region36: #{t_net_forward.1} parent=11 // pred_fallthru
        _
      // Predicated region
      $region37: #{t_net_forward.1} parent=11 // pred_check
        %p246 = pneg %p187
      $region38: #{t_net_forward.1} parent=11 // pred_check_branch
        %248 = sbr.rel (%p246) target = $region40
      $region39: #{t_net_forward.1} parent=11 // pred_region
        _
      $region40: #{t_net_forward.1} parent=11 // pred_fallthru
        _
    $region12: #{t_net_forward.1} parent=5 // pred_fallthru
      _
    %p249 = scmp.lt.s32.totalorder %s14, 2
    // Predicated region
    $region41: #{t_net_forward.1} parent=5 // pred_check
      %p250 = pneg %p249
    $region42: #{t_net_forward.1} parent=5 // pred_check_branch
      %252 = sbr.rel (%p250) target = $region44
    $region43: #{t_net_forward.1} parent=5 // pred_region
      // Predicated region
      $region45: #{t_net_forward.1} parent=43 // pred_check
        %p253 = pneg %p34
      $region46: #{t_net_forward.1} parent=43 // pred_check_branch
        %255 = sbr.rel (%p253) target = $region48
      $region47: #{t_net_forward.1} parent=43 // pred_region
        %p256 = scmp.lt.s32.totalorder %s14, 1
        %s257 = scalar_select %p256, %s14, 1
        %s258 = smul.addr %s257, 32
        %s259 = smul.addr %s258, 4
        %s260 = scalar_lea.vmem %s0, %s259
      $region48: #{t_net_forward.1} parent=43 // pred_fallthru
        _
    $region44: #{t_net_forward.1} parent=5 // pred_fallthru
      _
    %p261 = scmp.le.s32.totalorder 1, %s14
    %p262 = scmp.lt.s32.totalorder %s14, 3
    %p263 = pnand %p261, %p262
    %p264 = pneg %p263
    // Predicated region
    $region49: #{t_net_forward.1} parent=5 // pred_check
      _
    $region50: #{t_net_forward.1} parent=5 // pred_check_branch
      %266 = sbr.rel (%p263) target = $region52
    $region51: #{t_net_forward.1} parent=5 // pred_region
      %s267 = ssub.s32 %s14, 1
      %p268 = scmp.lt.s32.totalorder %s19, 1
      %s269 = scalar_select %p268, %s19, 1
      %s270 = smul.addr %s269, 32
      %s271 = smul.addr %s270, 4
      %s272 = scalar_lea.vmem %s0, %s271
      %p273 = pneg %p40
      %p274 = pneg %p37
      %p275 = pneg %p61
      %p276 = pneg %p58
      %p277 = pneg %p82
      %p278 = pneg %p79
      %p279 = pneg %p103
      %p280 = pneg %p100
      %p281 = pneg %p124
      %p282 = pneg %p121
      %p283 = pneg %p145
      %p284 = pneg %p142
      %p285 = pneg %p166
      %p286 = pneg %p163
      %p287 = pneg %p187
      %p288 = pneg %p184
      %p289 = pneg %p213
      %p290 = pneg %p210
      %p291 = scmp.lt.s32.totalorder %s19, 1
      %s292 = scalar_select %p291, %s19, 1
      %s293 = smul.addr %s292, 2
      %s294 = smul.addr %s293, 8
      %s295 = scalar_lea.vmem %s8, %s294
      %p296 = scmp.lt.s32.totalorder %s19, 1
      %s297 = scalar_select %p296, %s19, 1
      %s298 = smul.addr %s297, 32
      %s299 = smul.addr %s298, 4
      %s300 = scalar_lea.vmem %s0, %s299
      %p301 = scmp.lt.s32.totalorder %s19, 1
      %s302 = scalar_select %p301, %s19, 1
      %s303 = smul.addr %s302, 2
      %s304 = smul.addr %s303, 8
      %s305 = scalar_lea.vmem %s8, %s304
      %v307 = vld [vmem:[%s300] sm:$0xf]
      %v308 = vld [vmem:[%s300 + $0x4] sm:$0xf]
      %v309 = vld [vmem:[%s300 + $0x8] sm:$0xf]
      %v310 = vld [vmem:[%s300 + $0xc] sm:$0xf]
      %v311 = vld [vmem:[%s300 + $0x10] sm:$0xf]
      %v312 = vld [vmem:[%s300 + $0x14] sm:$0xf]
      %v313 = vld [vmem:[%s300 + $0x18] sm:$0xf]
      %v314 = vld [vmem:[%s300 + $0x1c] sm:$0xf]
      %v315 = vld [vmem:[%s300 + $0x20] sm:$0xf]
      %v316 = vld [vmem:[%s300 + $0x24] sm:$0xf]
      %v317 = vld [vmem:[%s300 + $0x28] sm:$0xf]
      %v318 = vld [vmem:[%s300 + $0x2c] sm:$0xf]
      %v319 = vld [vmem:[%s300 + $0x30] sm:$0xf]
      %v320 = vld [vmem:[%s300 + $0x34] sm:$0xf]
      %v321 = vld [vmem:[%s300 + $0x38] sm:$0xf]
      %v322 = vld [vmem:[%s300 + $0x3c] sm:$0xf]
      %v323 = vld [vmem:[%s300 + $0x40] sm:$0xf]
      %v324 = vld [vmem:[%s300 + $0x44] sm:$0xf]
      %v325 = vld [vmem:[%s300 + $0x48] sm:$0xf]
      %v326 = vld [vmem:[%s300 + $0x4c] sm:$0xf]
      %v327 = vld [vmem:[%s300 + $0x50] sm:$0xf]
      %v328 = vld [vmem:[%s300 + $0x54] sm:$0xf]
      %v329 = vld [vmem:[%s300 + $0x58] sm:$0xf]
      %v330 = vld [vmem:[%s300 + $0x5c] sm:$0xf]
      %v331 = vld [vmem:[%s300 + $0x60] sm:$0xf]
      %v332 = vld [vmem:[%s300 + $0x64] sm:$0xf]
      %v333 = vld [vmem:[%s300 + $0x68] sm:$0xf]
      %v334 = vld [vmem:[%s300 + $0x6c] sm:$0xf]
      %v335 = vld [vmem:[%s300 + $0x70] sm:$0xf]
      %v336 = vld [vmem:[%s300 + $0x74] sm:$0xf]
      %v337 = vld [vmem:[%s300 + $0x78] sm:$0xf]
      %v338 = vld [vmem:[%s300 + $0x7c] sm:$0xf]
      %v339 = vld [vmem:[%s1] sm:$0xf]
      %v340 = vld [vmem:[%s1 + $0x4] sm:$0xf]
      %v341 = vld [vmem:[%s1 + $0x8] sm:$0xf]
      %v342 = vld [vmem:[%s1 + $0xc] sm:$0xf]
      %v343 = vld [vmem:[%s2] sm:$0x1]
      %v345 = vlaneseq
      %v346 = vshrl.u32 %v345, 7
      %v347 = vsub.s32 0, %v346
      %v348 = vrot.slane %v343, %v347
      %v382 = vunpack.c.l.b16 %v307
      %v383 = vunpack.c.l.b16 %v308
      %v384 = vunpack.c.l.b16 %v309
      %v385 = vunpack.c.l.b16 %v310
      %v386 = vunpack.c.l.b16 %v311
      %v387 = vunpack.c.l.b16 %v312
      %v388 = vunpack.c.l.b16 %v313
      %v389 = vunpack.c.l.b16 %v314
      %v390 = vunpack.c.l.b16 %v315
      %v391 = vunpack.c.l.b16 %v316
      %v392 = vunpack.c.l.b16 %v317
      %v393 = vunpack.c.l.b16 %v318
      %v394 = vunpack.c.l.b16 %v319
      %v395 = vunpack.c.l.b16 %v320
      %v396 = vunpack.c.l.b16 %v321
      %v397 = vunpack.c.l.b16 %v322
      %v398 = vunpack.c.l.b16 %v323
      %v399 = vunpack.c.l.b16 %v324
      %v400 = vunpack.c.l.b16 %v325
      %v401 = vunpack.c.l.b16 %v326
      %v402 = vunpack.c.l.b16 %v327
      %v403 = vunpack.c.l.b16 %v328
      %v404 = vunpack.c.l.b16 %v329
      %v405 = vunpack.c.l.b16 %v330
      %v406 = vunpack.c.l.b16 %v331
      %v407 = vunpack.c.l.b16 %v332
      %v408 = vunpack.c.l.b16 %v333
      %v409 = vunpack.c.l.b16 %v334
      %v410 = vunpack.c.l.b16 %v335
      %v411 = vunpack.c.l.b16 %v336
      %v412 = vunpack.c.l.b16 %v337
      %v413 = vunpack.c.l.b16 %v338
      %v414 = vpack.c.b16 %v383, %v382
      %v415 = vpack.c.b16 %v385, %v384
      %v416 = vpack.c.b16 %v387, %v386
      %v417 = vpack.c.b16 %v389, %v388
      %v418 = vpack.c.b16 %v391, %v390
      %v419 = vpack.c.b16 %v393, %v392
      %v420 = vpack.c.b16 %v395, %v394
      %v421 = vpack.c.b16 %v397, %v396
      %v422 = vpack.c.b16 %v399, %v398
      %v423 = vpack.c.b16 %v401, %v400
      %v424 = vpack.c.b16 %v403, %v402
      %v425 = vpack.c.b16 %v405, %v404
      %v426 = vpack.c.b16 %v407, %v406
      %v427 = vpack.c.b16 %v409, %v408
      %v428 = vpack.c.b16 %v411, %v410
      %v429 = vpack.c.b16 %v413, %v412
      %v434 = vunpack.c.l.b16 %v339
      %v435 = vunpack.c.l.b16 %v340
      %v436 = vunpack.c.l.b16 %v341
      %v437 = vunpack.c.l.b16 %v342
      %v438 = vpack.c.b16 %v435, %v434
      %v439 = vpack.c.b16 %v437, %v436
      %vm442 = vcmask 261120
      %v444 = vsel %vm442, %v414, 0
      %v447 = vsel %vm442, %v415, 0
      %v450 = vsel %vm442, %v416, 0
      %v453 = vsel %vm442, %v417, 0
      %v456 = vsel %vm442, %v418, 0
      %v459 = vsel %vm442, %v419, 0
      %v462 = vsel %vm442, %v420, 0
      %v465 = vsel %vm442, %v421, 0
      %v468 = vsel %vm442, %v422, 0
      %v471 = vsel %vm442, %v423, 0
      %v474 = vsel %vm442, %v424, 0
      %v477 = vsel %vm442, %v425, 0
      %v480 = vsel %vm442, %v426, 0
      %v483 = vsel %vm442, %v427, 0
      %v486 = vsel %vm442, %v428, 0
      %v489 = vsel %vm442, %v429, 0
      %491 = vmatprep.subr.bf16.mxu0 0
      %492 = vmatpush1.bf16.msra.mxu0 %v438
      %493 = vmatprep.subr.bf16.mxu0 0
      %494 = vmatpush1.bf16.msra.mxu0 %v439
      %495 = vmatprep.subr.bf16.mxu0 0
      %496 = vmatpush1.bf16.msra.mxu0 0
      %497 = vmatprep.subr.bf16.mxu0 0
      %498 = vmatpush1.bf16.msra.mxu0 0
      %499 = vmatprep.subr.bf16.mxu0 0
      %500 = vmatpush1.bf16.msra.mxu0 0
      %501 = vmatprep.subr.bf16.mxu0 0
      %502 = vmatpush1.bf16.msra.mxu0 0
      %503 = vmatprep.subr.bf16.mxu0 0
      %504 = vmatpush1.bf16.msra.mxu0 0
      %505 = vmatprep.subr.bf16.mxu0 0
      %506 = vmatpush1.bf16.msra.mxu0 0
      %507 = vmatprep.subr.bf16.mxu0 0
      %508 = vmatpush1.bf16.msra.mxu0 0
      %509 = vmatprep.subr.bf16.mxu0 0
      %510 = vmatpush1.bf16.msra.mxu0 0
      %511 = vmatprep.subr.bf16.mxu0 0
      %512 = vmatpush1.bf16.msra.mxu0 0
      %513 = vmatprep.subr.bf16.mxu0 0
      %514 = vmatpush1.bf16.msra.mxu0 0
      %515 = vmatprep.subr.bf16.mxu0 0
      %516 = vmatpush1.bf16.msra.mxu0 0
      %517 = vmatprep.subr.bf16.mxu0 0
      %518 = vmatpush1.bf16.msra.mxu0 0
      %519 = vmatprep.subr.bf16.mxu0 0
      %520 = vmatpush1.bf16.msra.mxu0 0
      %521 = vmatprep.subr.bf16.mxu0 0
      %522 = vmatpush1.bf16.msra.mxu0 0
      %523 = vmatprep.mubr.bf16.mxu0 0
      %524 = vmatmul.mubr.bf16.gmra.mrb[0].mxu0 %v444
      %v525 = vpop.f32.mrb[0].mxu0
      %v526 = vadd.f32 %v348, %v525
      %v527 = vpop.f32.mrb[0].mxu0
      %v528 = vpop.f32.mrb[0].mxu0
      %v529 = vadd.f32 %v348, %v528
      %v530 = vpop.f32.mrb[0].mxu0
      %531 = vmatprep.mubr.bf16.mxu0 0
      %532 = vmatmul.mubr.bf16.gmra.mrb[0].mxu0 %v447
      %v533 = vpop.f32.mrb[0].mxu0
      %v534 = vadd.f32 %v348, %v533
      %v535 = vpop.f32.mrb[0].mxu0
      %v536 = vpop.f32.mrb[0].mxu0
      %v537 = vadd.f32 %v348, %v536
      %v538 = vpop.f32.mrb[0].mxu0
      %539 = vmatprep.mubr.bf16.mxu0 0
      %540 = vmatmul.mubr.bf16.gmra.mrb[0].mxu0 %v450
      %v541 = vpop.f32.mrb[0].mxu0
      %v542 = vadd.f32 %v348, %v541
      %v543 = vpop.f32.mrb[0].mxu0
      %v544 = vpop.f32.mrb[0].mxu0
      %v545 = vadd.f32 %v348, %v544
      %v546 = vpop.f32.mrb[0].mxu0
      %547 = vmatprep.mubr.bf16.mxu0 0
      %548 = vmatmul.mubr.bf16.gmra.mrb[0].mxu0 %v453
      %v549 = vpop.f32.mrb[0].mxu0
      %v550 = vadd.f32 %v348, %v549
      %v551 = vpop.f32.mrb[0].mxu0
      %v552 = vpop.f32.mrb[0].mxu0
      %v553 = vadd.f32 %v348, %v552
      %v554 = vpop.f32.mrb[0].mxu0
      %555 = vmatprep.mubr.bf16.mxu0 0
      %556 = vmatmul.mubr.bf16.gmra.mrb[0].mxu0 %v456
      %v557 = vpop.f32.mrb[0].mxu0
      %v558 = vadd.f32 %v348, %v557
      %v559 = vpop.f32.mrb[0].mxu0
      %v560 = vpop.f32.mrb[0].mxu0
      %v561 = vadd.f32 %v348, %v560
      %v562 = vpop.f32.mrb[0].mxu0
      %563 = vmatprep.mubr.bf16.mxu0 0
      %564 = vmatmul.mubr.bf16.gmra.mrb[0].mxu0 %v459
      %v565 = vpop.f32.mrb[0].mxu0
      %v566 = vadd.f32 %v348, %v565
      %v567 = vpop.f32.mrb[0].mxu0
      %v568 = vpop.f32.mrb[0].mxu0
      %v569 = vadd.f32 %v348, %v568
      %v570 = vpop.f32.mrb[0].mxu0
      %571 = vmatprep.mubr.bf16.mxu0 0
      %572 = vmatmul.mubr.bf16.gmra.mrb[0].mxu0 %v462
      %v573 = vpop.f32.mrb[0].mxu0
      %v574 = vadd.f32 %v348, %v573
      %v575 = vpop.f32.mrb[0].mxu0
      %v576 = vpop.f32.mrb[0].mxu0
      %v577 = vadd.f32 %v348, %v576
      %v578 = vpop.f32.mrb[0].mxu0
      %579 = vmatprep.mubr.bf16.mxu0 0
      %580 = vmatmul.mubr.bf16.gmra.mrb[0].mxu0 %v465
      %v581 = vpop.f32.mrb[0].mxu0
      %v582 = vadd.f32 %v348, %v581
      %v583 = vpop.f32.mrb[0].mxu0
      %v584 = vpop.f32.mrb[0].mxu0
      %v585 = vadd.f32 %v348, %v584
      %v586 = vpop.f32.mrb[0].mxu0
      %587 = vmatprep.mubr.bf16.mxu0 0
      %588 = vmatmul.mubr.bf16.gmra.mrb[0].mxu0 %v468
      %v589 = vpop.f32.mrb[0].mxu0
      %v590 = vadd.f32 %v348, %v589
      %v591 = vpop.f32.mrb[0].mxu0
      %v592 = vpop.f32.mrb[0].mxu0
      %v593 = vadd.f32 %v348, %v592
      %v594 = vpop.f32.mrb[0].mxu0
      %595 = vmatprep.mubr.bf16.mxu0 0
      %596 = vmatmul.mubr.bf16.gmra.mrb[0].mxu0 %v471
      %v597 = vpop.f32.mrb[0].mxu0
      %v598 = vadd.f32 %v348, %v597
      %v599 = vpop.f32.mrb[0].mxu0
      %v600 = vpop.f32.mrb[0].mxu0
      %v601 = vadd.f32 %v348, %v600
      %v602 = vpop.f32.mrb[0].mxu0
      %603 = vmatprep.mubr.bf16.mxu0 0
      %604 = vmatmul.mubr.bf16.gmra.mrb[0].mxu0 %v474
      %v605 = vpop.f32.mrb[0].mxu0
      %v606 = vadd.f32 %v348, %v605
      %v607 = vpop.f32.mrb[0].mxu0
      %v608 = vpop.f32.mrb[0].mxu0
      %v609 = vadd.f32 %v348, %v608
      %v610 = vpop.f32.mrb[0].mxu0
      %611 = vmatprep.mubr.bf16.mxu0 0
      %612 = vmatmul.mubr.bf16.gmra.mrb[0].mxu0 %v477
      %v613 = vpop.f32.mrb[0].mxu0
      %v614 = vadd.f32 %v348, %v613
      %v615 = vpop.f32.mrb[0].mxu0
      %v616 = vpop.f32.mrb[0].mxu0
      %v617 = vadd.f32 %v348, %v616
      %v618 = vpop.f32.mrb[0].mxu0
      %619 = vmatprep.mubr.bf16.mxu0 0
      %620 = vmatmul.mubr.bf16.gmra.mrb[0].mxu0 %v480
      %v621 = vpop.f32.mrb[0].mxu0
      %v622 = vadd.f32 %v348, %v621
      %v623 = vpop.f32.mrb[0].mxu0
      %v624 = vpop.f32.mrb[0].mxu0
      %v625 = vadd.f32 %v348, %v624
      %v626 = vpop.f32.mrb[0].mxu0
      %627 = vmatprep.mubr.bf16.mxu0 0
      %628 = vmatmul.mubr.bf16.gmra.mrb[0].mxu0 %v483
      %v629 = vpop.f32.mrb[0].mxu0
      %v630 = vadd.f32 %v348, %v629
      %v631 = vpop.f32.mrb[0].mxu0
      %v632 = vpop.f32.mrb[0].mxu0
      %v633 = vadd.f32 %v348, %v632
      %v634 = vpop.f32.mrb[0].mxu0
      %635 = vmatprep.mubr.bf16.mxu0 0
      %636 = vmatmul.mubr.bf16.gmra.mrb[0].mxu0 %v486
      %v637 = vpop.f32.mrb[0].mxu0
      %v638 = vadd.f32 %v348, %v637
      %v639 = vpop.f32.mrb[0].mxu0
      %v640 = vpop.f32.mrb[0].mxu0
      %v641 = vadd.f32 %v348, %v640
      %v642 = vpop.f32.mrb[0].mxu0
      %643 = vmatprep.mubr.bf16.mxu0 0
      %644 = vmatmul.mubr.bf16.gmra.mrb[0].mxu0 %v489
      %v645 = vpop.f32.mrb[0].mxu0
      %v646 = vadd.f32 %v348, %v645
      %v647 = vpop.f32.mrb[0].mxu0
      %v648 = vpop.f32.mrb[0].mxu0
      %v649 = vadd.f32 %v348, %v648
      %v650 = vpop.f32.mrb[0].mxu0
      %651 = vdwg.mxu0
      %v652 = vmax.f32 %v526, 0.0
      %v653 = vmax.f32 %v529, 0.0
      %v654 = vmax.f32 %v534, 0.0
      %v655 = vmax.f32 %v537, 0.0
      %v656 = vmax.f32 %v542, 0.0
      %v657 = vmax.f32 %v545, 0.0
      %v658 = vmax.f32 %v550, 0.0
      %v659 = vmax.f32 %v553, 0.0
      %v660 = vmax.f32 %v558, 0.0
      %v661 = vmax.f32 %v561, 0.0
      %v662 = vmax.f32 %v566, 0.0
      %v663 = vmax.f32 %v569, 0.0
      %v664 = vmax.f32 %v574, 0.0
      %v665 = vmax.f32 %v577, 0.0
      %v666 = vmax.f32 %v582, 0.0
      %v667 = vmax.f32 %v585, 0.0
      %v668 = vmax.f32 %v590, 0.0
      %v669 = vmax.f32 %v593, 0.0
      %v670 = vmax.f32 %v598, 0.0
      %v671 = vmax.f32 %v601, 0.0
      %v672 = vmax.f32 %v606, 0.0
      %v673 = vmax.f32 %v609, 0.0
      %v674 = vmax.f32 %v614, 0.0
      %v675 = vmax.f32 %v617, 0.0
      %v676 = vmax.f32 %v622, 0.0
      %v677 = vmax.f32 %v625, 0.0
      %v678 = vmax.f32 %v630, 0.0
      %v679 = vmax.f32 %v633, 0.0
      %v680 = vmax.f32 %v638, 0.0
      %v681 = vmax.f32 %v641, 0.0
      %v682 = vmax.f32 %v646, 0.0
      %v683 = vmax.f32 %v649, 0.0
      %v684 = vpack.c.bf16 %v653, %v652
      %v685 = vpack.c.bf16 %v655, %v654
      %v686 = vpack.c.bf16 %v657, %v656
      %v687 = vpack.c.bf16 %v659, %v658
      %v688 = vpack.c.bf16 %v661, %v660
      %v689 = vpack.c.bf16 %v663, %v662
      %v690 = vpack.c.bf16 %v665, %v664
      %v691 = vpack.c.bf16 %v667, %v666
      %v692 = vpack.c.bf16 %v669, %v668
      %v693 = vpack.c.bf16 %v671, %v670
      %v694 = vpack.c.bf16 %v673, %v672
      %v695 = vpack.c.bf16 %v675, %v674
      %v696 = vpack.c.bf16 %v677, %v676
      %v697 = vpack.c.bf16 %v679, %v678
      %v698 = vpack.c.bf16 %v681, %v680
      %v699 = vpack.c.bf16 %v683, %v682
      %v716 = vcombine.high %v684, %v684
      %v718 = vunpack.c.l.s4 1966171168
      %v719 = vunpack.c.0.s8 %v718
      %v720 = vlaneseq
      %v721 = vshrl.u32 %v720, 7
      %v722 = vsub.s32 %v719, %v721
      %v723 = vrot.slane %v684, %v722
      %v725 = vunpack.c.l.s4 1966171168
      %v726 = vunpack.c.0.s8 %v725
      %v727 = vlaneseq
      %v728 = vshrl.u32 %v727, 7
      %v729 = vsub.s32 %v726, %v728
      %v730 = vrot.slane %v716, %v729
      %v731 = vcombine.high %v723, %v723
      %v732 = vcombine.high %v730, %v730
      %v734 = vunpack.c.l.s4 1966171168
      %v735 = vunpack.c.0.s8 %v734
      %v736 = vlaneseq
      %v737 = vshrl.u32 %v736, 7
      %v738 = vsub.s32 %v735, %v737
      %v739 = vrot.slane %v723, %v738
      %v741 = vunpack.c.l.s4 1966171168
      %v742 = vunpack.c.0.s8 %v741
      %v743 = vlaneseq
      %v744 = vshrl.u32 %v743, 7
      %v745 = vsub.s32 %v742, %v744
      %v746 = vrot.slane %v730, %v745
      %v748 = vunpack.c.l.s4 1966171168
      %v749 = vunpack.c.0.s8 %v748
      %v750 = vlaneseq
      %v751 = vshrl.u32 %v750, 7
      %v752 = vsub.s32 %v749, %v751
      %v753 = vrot.slane %v731, %v752
      %v755 = vunpack.c.l.s4 1966171168
      %v756 = vunpack.c.0.s8 %v755
      %v757 = vlaneseq
      %v758 = vshrl.u32 %v757, 7
      %v759 = vsub.s32 %v756, %v758
      %v760 = vrot.slane %v732, %v759
      %v761 = vcombine.high %v739, %v739
      %v762 = vcombine.high %v746, %v746
      %v763 = vcombine.high %v753, %v753
      %v764 = vcombine.high %v760, %v760
      %v765 = vcombine.high %v685, %v685
      %v767 = vunpack.c.l.s4 1966171168
      %v768 = vunpack.c.0.s8 %v767
      %v769 = vlaneseq
      %v770 = vshrl.u32 %v769, 7
      %v771 = vsub.s32 %v768, %v770
      %v772 = vrot.slane %v685, %v771
      %v774 = vunpack.c.l.s4 1966171168
      %v775 = vunpack.c.0.s8 %v774
      %v776 = vlaneseq
      %v777 = vshrl.u32 %v776, 7
      %v778 = vsub.s32 %v775, %v777
      %v779 = vrot.slane %v765, %v778
      %v780 = vcombine.high %v772, %v772
      %v781 = vcombine.high %v779, %v779
      %v783 = vunpack.c.l.s4 1966171168
      %v784 = vunpack.c.0.s8 %v783
      %v785 = vlaneseq
      %v786 = vshrl.u32 %v785, 7
      %v787 = vsub.s32 %v784, %v786
      %v788 = vrot.slane %v772, %v787
      %v790 = vunpack.c.l.s4 1966171168
      %v791 = vunpack.c.0.s8 %v790
      %v792 = vlaneseq
      %v793 = vshrl.u32 %v792, 7
      %v794 = vsub.s32 %v791, %v793
      %v795 = vrot.slane %v779, %v794
      %v797 = vunpack.c.l.s4 1966171168
      %v798 = vunpack.c.0.s8 %v797
      %v799 = vlaneseq
      %v800 = vshrl.u32 %v799, 7
      %v801 = vsub.s32 %v798, %v800
      %v802 = vrot.slane %v780, %v801
      %v804 = vunpack.c.l.s4 1966171168
      %v805 = vunpack.c.0.s8 %v804
      %v806 = vlaneseq
      %v807 = vshrl.u32 %v806, 7
      %v808 = vsub.s32 %v805, %v807
      %v809 = vrot.slane %v781, %v808
      %v810 = vcombine.high %v788, %v788
      %v811 = vcombine.high %v795, %v795
      %v812 = vcombine.high %v802, %v802
      %v813 = vcombine.high %v809, %v809
      %v814 = vcombine.high %v686, %v686
      %v816 = vunpack.c.l.s4 1966171168
      %v817 = vunpack.c.0.s8 %v816
      %v818 = vlaneseq
      %v819 = vshrl.u32 %v818, 7
      %v820 = vsub.s32 %v817, %v819
      %v821 = vrot.slane %v686, %v820
      %v823 = vunpack.c.l.s4 1966171168
      %v824 = vunpack.c.0.s8 %v823
      %v825 = vlaneseq
      %v826 = vshrl.u32 %v825, 7
      %v827 = vsub.s32 %v824, %v826
      %v828 = vrot.slane %v814, %v827
      %v829 = vcombine.high %v821, %v821
      %v830 = vcombine.high %v828, %v828
      %v832 = vunpack.c.l.s4 1966171168
      %v833 = vunpack.c.0.s8 %v832
      %v834 = vlaneseq
      %v835 = vshrl.u32 %v834, 7
      %v836 = vsub.s32 %v833, %v835
      %v837 = vrot.slane %v821, %v836
      %v839 = vunpack.c.l.s4 1966171168
      %v840 = vunpack.c.0.s8 %v839
      %v841 = vlaneseq
      %v842 = vshrl.u32 %v841, 7
      %v843 = vsub.s32 %v840, %v842
      %v844 = vrot.slane %v828, %v843
      %v846 = vunpack.c.l.s4 1966171168
      %v847 = vunpack.c.0.s8 %v846
      %v848 = vlaneseq
      %v849 = vshrl.u32 %v848, 7
      %v850 = vsub.s32 %v847, %v849
      %v851 = vrot.slane %v829, %v850
      %v853 = vunpack.c.l.s4 1966171168
      %v854 = vunpack.c.0.s8 %v853
      %v855 = vlaneseq
      %v856 = vshrl.u32 %v855, 7
      %v857 = vsub.s32 %v854, %v856
      %v858 = vrot.slane %v830, %v857
      %v859 = vcombine.high %v837, %v837
      %v860 = vcombine.high %v844, %v844
      %v861 = vcombine.high %v851, %v851
      %v862 = vcombine.high %v858, %v858
      %v863 = vcombine.high %v687, %v687
      %v865 = vunpack.c.l.s4 1966171168
      %v866 = vunpack.c.0.s8 %v865
      %v867 = vlaneseq
      %v868 = vshrl.u32 %v867, 7
      %v869 = vsub.s32 %v866, %v868
      %v870 = vrot.slane %v687, %v869
      %v872 = vunpack.c.l.s4 1966171168
      %v873 = vunpack.c.0.s8 %v872
      %v874 = vlaneseq
      %v875 = vshrl.u32 %v874, 7
      %v876 = vsub.s32 %v873, %v875
      %v877 = vrot.slane %v863, %v876
      %v878 = vcombine.high %v870, %v870
      %v879 = vcombine.high %v877, %v877
      %v881 = vunpack.c.l.s4 1966171168
      %v882 = vunpack.c.0.s8 %v881
      %v883 = vlaneseq
      %v884 = vshrl.u32 %v883, 7
      %v885 = vsub.s32 %v882, %v884
      %v886 = vrot.slane %v870, %v885
      %v888 = vunpack.c.l.s4 1966171168
      %v889 = vunpack.c.0.s8 %v888
      %v890 = vlaneseq
      %v891 = vshrl.u32 %v890, 7
      %v892 = vsub.s32 %v889, %v891
      %v893 = vrot.slane %v877, %v892
      %v895 = vunpack.c.l.s4 1966171168
      %v896 = vunpack.c.0.s8 %v895
      %v897 = vlaneseq
      %v898 = vshrl.u32 %v897, 7
      %v899 = vsub.s32 %v896, %v898
      %v900 = vrot.slane %v878, %v899
      %v902 = vunpack.c.l.s4 1966171168
      %v903 = vunpack.c.0.s8 %v902
      %v904 = vlaneseq
      %v905 = vshrl.u32 %v904, 7
      %v906 = vsub.s32 %v903, %v905
      %v907 = vrot.slane %v879, %v906
      %v908 = vcombine.high %v886, %v886
      %v909 = vcombine.high %v893, %v893
      %v910 = vcombine.high %v900, %v900
      %v911 = vcombine.high %v907, %v907
      %v912 = vcombine.high %v688, %v688
      %v914 = vunpack.c.l.s4 1966171168
      %v915 = vunpack.c.0.s8 %v914
      %v916 = vlaneseq
      %v917 = vshrl.u32 %v916, 7
      %v918 = vsub.s32 %v915, %v917
      %v919 = vrot.slane %v688, %v918
      %v921 = vunpack.c.l.s4 1966171168
      %v922 = vunpack.c.0.s8 %v921
      %v923 = vlaneseq
      %v924 = vshrl.u32 %v923, 7
      %v925 = vsub.s32 %v922, %v924
      %v926 = vrot.slane %v912, %v925
      %v927 = vcombine.high %v919, %v919
      %v928 = vcombine.high %v926, %v926
      %v930 = vunpack.c.l.s4 1966171168
      %v931 = vunpack.c.0.s8 %v930
      %v932 = vlaneseq
      %v933 = vshrl.u32 %v932, 7
      %v934 = vsub.s32 %v931, %v933
      %v935 = vrot.slane %v919, %v934
      %v937 = vunpack.c.l.s4 1966171168
      %v938 = vunpack.c.0.s8 %v937
      %v939 = vlaneseq
      %v940 = vshrl.u32 %v939, 7
      %v941 = vsub.s32 %v938, %v940
      %v942 = vrot.slane %v926, %v941
      %v944 = vunpack.c.l.s4 1966171168
      %v945 = vunpack.c.0.s8 %v944
      %v946 = vlaneseq
      %v947 = vshrl.u32 %v946, 7
      %v948 = vsub.s32 %v945, %v947
      %v949 = vrot.slane %v927, %v948
      %v951 = vunpack.c.l.s4 1966171168
      %v952 = vunpack.c.0.s8 %v951
      %v953 = vlaneseq
      %v954 = vshrl.u32 %v953, 7
      %v955 = vsub.s32 %v952, %v954
      %v956 = vrot.slane %v928, %v955
      %v957 = vcombine.high %v935, %v935
      %v958 = vcombine.high %v942, %v942
      %v959 = vcombine.high %v949, %v949
      %v960 = vcombine.high %v956, %v956
      %v961 = vcombine.high %v689, %v689
      %v963 = vunpack.c.l.s4 1966171168
      %v964 = vunpack.c.0.s8 %v963
      %v965 = vlaneseq
      %v966 = vshrl.u32 %v965, 7
      %v967 = vsub.s32 %v964, %v966
      %v968 = vrot.slane %v689, %v967
      %v970 = vunpack.c.l.s4 1966171168
      %v971 = vunpack.c.0.s8 %v970
      %v972 = vlaneseq
      %v973 = vshrl.u32 %v972, 7
      %v974 = vsub.s32 %v971, %v973
      %v975 = vrot.slane %v961, %v974
      %v976 = vcombine.high %v968, %v968
      %v977 = vcombine.high %v975, %v975
      %v979 = vunpack.c.l.s4 1966171168
      %v980 = vunpack.c.0.s8 %v979
      %v981 = vlaneseq
      %v982 = vshrl.u32 %v981, 7
      %v983 = vsub.s32 %v980, %v982
      %v984 = vrot.slane %v968, %v983
      %v986 = vunpack.c.l.s4 1966171168
      %v987 = vunpack.c.0.s8 %v986
      %v988 = vlaneseq
      %v989 = vshrl.u32 %v988, 7
      %v990 = vsub.s32 %v987, %v989
      %v991 = vrot.slane %v975, %v990
      %v993 = vunpack.c.l.s4 1966171168
      %v994 = vunpack.c.0.s8 %v993
      %v995 = vlaneseq
      %v996 = vshrl.u32 %v995, 7
      %v997 = vsub.s32 %v994, %v996
      %v998 = vrot.slane %v976, %v997
      %v1000 = vunpack.c.l.s4 1966171168
      %v1001 = vunpack.c.0.s8 %v1000
      %v1002 = vlaneseq
      %v1003 = vshrl.u32 %v1002, 7
      %v1004 = vsub.s32 %v1001, %v1003
      %v1005 = vrot.slane %v977, %v1004
      %v1006 = vcombine.high %v984, %v984
      %v1007 = vcombine.high %v991, %v991
      %v1008 = vcombine.high %v998, %v998
      %v1009 = vcombine.high %v1005, %v1005
      %v1010 = vcombine.high %v690, %v690
      %v1012 = vunpack.c.l.s4 1966171168
      %v1013 = vunpack.c.0.s8 %v1012
      %v1014 = vlaneseq
      %v1015 = vshrl.u32 %v1014, 7
      %v1016 = vsub.s32 %v1013, %v1015
      %v1017 = vrot.slane %v690, %v1016
      %v1019 = vunpack.c.l.s4 1966171168
      %v1020 = vunpack.c.0.s8 %v1019
      %v1021 = vlaneseq
      %v1022 = vshrl.u32 %v1021, 7
      %v1023 = vsub.s32 %v1020, %v1022
      %v1024 = vrot.slane %v1010, %v1023
      %v1025 = vcombine.high %v1017, %v1017
      %v1026 = vcombine.high %v1024, %v1024
      %v1028 = vunpack.c.l.s4 1966171168
      %v1029 = vunpack.c.0.s8 %v1028
      %v1030 = vlaneseq
      %v1031 = vshrl.u32 %v1030, 7
      %v1032 = vsub.s32 %v1029, %v1031
      %v1033 = vrot.slane %v1017, %v1032
      %v1035 = vunpack.c.l.s4 1966171168
      %v1036 = vunpack.c.0.s8 %v1035
      %v1037 = vlaneseq
      %v1038 = vshrl.u32 %v1037, 7
      %v1039 = vsub.s32 %v1036, %v1038
      %v1040 = vrot.slane %v1024, %v1039
      %v1042 = vunpack.c.l.s4 1966171168
      %v1043 = vunpack.c.0.s8 %v1042
      %v1044 = vlaneseq
      %v1045 = vshrl.u32 %v1044, 7
      %v1046 = vsub.s32 %v1043, %v1045
      %v1047 = vrot.slane %v1025, %v1046
      %v1049 = vunpack.c.l.s4 1966171168
      %v1050 = vunpack.c.0.s8 %v1049
      %v1051 = vlaneseq
      %v1052 = vshrl.u32 %v1051, 7
      %v1053 = vsub.s32 %v1050, %v1052
      %v1054 = vrot.slane %v1026, %v1053
      %v1055 = vcombine.high %v1033, %v1033
      %v1056 = vcombine.high %v1040, %v1040
      %v1057 = vcombine.high %v1047, %v1047
      %v1058 = vcombine.high %v1054, %v1054
      %v1059 = vcombine.high %v691, %v691
      %v1061 = vunpack.c.l.s4 1966171168
      %v1062 = vunpack.c.0.s8 %v1061
      %v1063 = vlaneseq
      %v1064 = vshrl.u32 %v1063, 7
      %v1065 = vsub.s32 %v1062, %v1064
      %v1066 = vrot.slane %v691, %v1065
      %v1068 = vunpack.c.l.s4 1966171168
      %v1069 = vunpack.c.0.s8 %v1068
      %v1070 = vlaneseq
      %v1071 = vshrl.u32 %v1070, 7
      %v1072 = vsub.s32 %v1069, %v1071
      %v1073 = vrot.slane %v1059, %v1072
      %v1074 = vcombine.high %v1066, %v1066
      %v1075 = vcombine.high %v1073, %v1073
      %v1077 = vunpack.c.l.s4 1966171168
      %v1078 = vunpack.c.0.s8 %v1077
      %v1079 = vlaneseq
      %v1080 = vshrl.u32 %v1079, 7
      %v1081 = vsub.s32 %v1078, %v1080
      %v1082 = vrot.slane %v1066, %v1081
      %v1084 = vunpack.c.l.s4 1966171168
      %v1085 = vunpack.c.0.s8 %v1084
      %v1086 = vlaneseq
      %v1087 = vshrl.u32 %v1086, 7
      %v1088 = vsub.s32 %v1085, %v1087
      %v1089 = vrot.slane %v1073, %v1088
      %v1091 = vunpack.c.l.s4 1966171168
      %v1092 = vunpack.c.0.s8 %v1091
      %v1093 = vlaneseq
      %v1094 = vshrl.u32 %v1093, 7
      %v1095 = vsub.s32 %v1092, %v1094
      %v1096 = vrot.slane %v1074, %v1095
      %v1098 = vunpack.c.l.s4 1966171168
      %v1099 = vunpack.c.0.s8 %v1098
      %v1100 = vlaneseq
      %v1101 = vshrl.u32 %v1100, 7
      %v1102 = vsub.s32 %v1099, %v1101
      %v1103 = vrot.slane %v1075, %v1102
      %v1104 = vcombine.high %v1082, %v1082
      %v1105 = vcombine.high %v1089, %v1089
      %v1106 = vcombine.high %v1096, %v1096
      %v1107 = vcombine.high %v1103, %v1103
      %v1108 = vcombine.high %v692, %v692
      %v1110 = vunpack.c.l.s4 1966171168
      %v1111 = vunpack.c.0.s8 %v1110
      %v1112 = vlaneseq
      %v1113 = vshrl.u32 %v1112, 7
      %v1114 = vsub.s32 %v1111, %v1113
      %v1115 = vrot.slane %v692, %v1114
      %v1117 = vunpack.c.l.s4 1966171168
      %v1118 = vunpack.c.0.s8 %v1117
      %v1119 = vlaneseq
      %v1120 = vshrl.u32 %v1119, 7
      %v1121 = vsub.s32 %v1118, %v1120
      %v1122 = vrot.slane %v1108, %v1121
      %v1123 = vcombine.high %v1115, %v1115
      %v1124 = vcombine.high %v1122, %v1122
      %v1126 = vunpack.c.l.s4 1966171168
      %v1127 = vunpack.c.0.s8 %v1126
      %v1128 = vlaneseq
      %v1129 = vshrl.u32 %v1128, 7
      %v1130 = vsub.s32 %v1127, %v1129
      %v1131 = vrot.slane %v1115, %v1130
      %v1133 = vunpack.c.l.s4 1966171168
      %v1134 = vunpack.c.0.s8 %v1133
      %v1135 = vlaneseq
      %v1136 = vshrl.u32 %v1135, 7
      %v1137 = vsub.s32 %v1134, %v1136
      %v1138 = vrot.slane %v1122, %v1137
      %v1140 = vunpack.c.l.s4 1966171168
      %v1141 = vunpack.c.0.s8 %v1140
      %v1142 = vlaneseq
      %v1143 = vshrl.u32 %v1142, 7
      %v1144 = vsub.s32 %v1141, %v1143
      %v1145 = vrot.slane %v1123, %v1144
      %v1147 = vunpack.c.l.s4 1966171168
      %v1148 = vunpack.c.0.s8 %v1147
      %v1149 = vlaneseq
      %v1150 = vshrl.u32 %v1149, 7
      %v1151 = vsub.s32 %v1148, %v1150
      %v1152 = vrot.slane %v1124, %v1151
      %v1153 = vcombine.high %v1131, %v1131
      %v1154 = vcombine.high %v1138, %v1138
      %v1155 = vcombine.high %v1145, %v1145
      %v1156 = vcombine.high %v1152, %v1152
      %v1157 = vcombine.high %v693, %v693
      %v1159 = vunpack.c.l.s4 1966171168
      %v1160 = vunpack.c.0.s8 %v1159
      %v1161 = vlaneseq
      %v1162 = vshrl.u32 %v1161, 7
      %v1163 = vsub.s32 %v1160, %v1162
      %v1164 = vrot.slane %v693, %v1163
      %v1166 = vunpack.c.l.s4 1966171168
      %v1167 = vunpack.c.0.s8 %v1166
      %v1168 = vlaneseq
      %v1169 = vshrl.u32 %v1168, 7
      %v1170 = vsub.s32 %v1167, %v1169
      %v1171 = vrot.slane %v1157, %v1170
      %v1172 = vcombine.high %v1164, %v1164
      %v1173 = vcombine.high %v1171, %v1171
      %v1175 = vunpack.c.l.s4 1966171168
      %v1176 = vunpack.c.0.s8 %v1175
      %v1177 = vlaneseq
      %v1178 = vshrl.u32 %v1177, 7
      %v1179 = vsub.s32 %v1176, %v1178
      %v1180 = vrot.slane %v1164, %v1179
      %v1182 = vunpack.c.l.s4 1966171168
      %v1183 = vunpack.c.0.s8 %v1182
      %v1184 = vlaneseq
      %v1185 = vshrl.u32 %v1184, 7
      %v1186 = vsub.s32 %v1183, %v1185
      %v1187 = vrot.slane %v1171, %v1186
      %v1189 = vunpack.c.l.s4 1966171168
      %v1190 = vunpack.c.0.s8 %v1189
      %v1191 = vlaneseq
      %v1192 = vshrl.u32 %v1191, 7
      %v1193 = vsub.s32 %v1190, %v1192
      %v1194 = vrot.slane %v1172, %v1193
      %v1196 = vunpack.c.l.s4 1966171168
      %v1197 = vunpack.c.0.s8 %v1196
      %v1198 = vlaneseq
      %v1199 = vshrl.u32 %v1198, 7
      %v1200 = vsub.s32 %v1197, %v1199
      %v1201 = vrot.slane %v1173, %v1200
      %v1202 = vcombine.high %v1180, %v1180
      %v1203 = vcombine.high %v1187, %v1187
      %v1204 = vcombine.high %v1194, %v1194
      %v1205 = vcombine.high %v1201, %v1201
      %v1206 = vcombine.high %v694, %v694
      %v1208 = vunpack.c.l.s4 1966171168
      %v1209 = vunpack.c.0.s8 %v1208
      %v1210 = vlaneseq
      %v1211 = vshrl.u32 %v1210, 7
      %v1212 = vsub.s32 %v1209, %v1211
      %v1213 = vrot.slane %v694, %v1212
      %v1215 = vunpack.c.l.s4 1966171168
      %v1216 = vunpack.c.0.s8 %v1215
      %v1217 = vlaneseq
      %v1218 = vshrl.u32 %v1217, 7
      %v1219 = vsub.s32 %v1216, %v1218
      %v1220 = vrot.slane %v1206, %v1219
      %v1221 = vcombine.high %v1213, %v1213
      %v1222 = vcombine.high %v1220, %v1220
      %v1224 = vunpack.c.l.s4 1966171168
      %v1225 = vunpack.c.0.s8 %v1224
      %v1226 = vlaneseq
      %v1227 = vshrl.u32 %v1226, 7
      %v1228 = vsub.s32 %v1225, %v1227
      %v1229 = vrot.slane %v1213, %v1228
      %v1231 = vunpack.c.l.s4 1966171168
      %v1232 = vunpack.c.0.s8 %v1231
      %v1233 = vlaneseq
      %v1234 = vshrl.u32 %v1233, 7
      %v1235 = vsub.s32 %v1232, %v1234
      %v1236 = vrot.slane %v1220, %v1235
      %v1238 = vunpack.c.l.s4 1966171168
      %v1239 = vunpack.c.0.s8 %v1238
      %v1240 = vlaneseq
      %v1241 = vshrl.u32 %v1240, 7
      %v1242 = vsub.s32 %v1239, %v1241
      %v1243 = vrot.slane %v1221, %v1242
      %v1245 = vunpack.c.l.s4 1966171168
      %v1246 = vunpack.c.0.s8 %v1245
      %v1247 = vlaneseq
      %v1248 = vshrl.u32 %v1247, 7
      %v1249 = vsub.s32 %v1246, %v1248
      %v1250 = vrot.slane %v1222, %v1249
      %v1251 = vcombine.high %v1229, %v1229
      %v1252 = vcombine.high %v1236, %v1236
      %v1253 = vcombine.high %v1243, %v1243
      %v1254 = vcombine.high %v1250, %v1250
      %v1255 = vcombine.high %v695, %v695
      %v1257 = vunpack.c.l.s4 1966171168
      %v1258 = vunpack.c.0.s8 %v1257
      %v1259 = vlaneseq
      %v1260 = vshrl.u32 %v1259, 7
      %v1261 = vsub.s32 %v1258, %v1260
      %v1262 = vrot.slane %v695, %v1261
      %v1264 = vunpack.c.l.s4 1966171168
      %v1265 = vunpack.c.0.s8 %v1264
      %v1266 = vlaneseq
      %v1267 = vshrl.u32 %v1266, 7
      %v1268 = vsub.s32 %v1265, %v1267
      %v1269 = vrot.slane %v1255, %v1268
      %v1270 = vcombine.high %v1262, %v1262
      %v1271 = vcombine.high %v1269, %v1269
      %v1273 = vunpack.c.l.s4 1966171168
      %v1274 = vunpack.c.0.s8 %v1273
      %v1275 = vlaneseq
      %v1276 = vshrl.u32 %v1275, 7
      %v1277 = vsub.s32 %v1274, %v1276
      %v1278 = vrot.slane %v1262, %v1277
      %v1280 = vunpack.c.l.s4 1966171168
      %v1281 = vunpack.c.0.s8 %v1280
      %v1282 = vlaneseq
      %v1283 = vshrl.u32 %v1282, 7
      %v1284 = vsub.s32 %v1281, %v1283
      %v1285 = vrot.slane %v1269, %v1284
      %v1287 = vunpack.c.l.s4 1966171168
      %v1288 = vunpack.c.0.s8 %v1287
      %v1289 = vlaneseq
      %v1290 = vshrl.u32 %v1289, 7
      %v1291 = vsub.s32 %v1288, %v1290
      %v1292 = vrot.slane %v1270, %v1291
      %v1294 = vunpack.c.l.s4 1966171168
      %v1295 = vunpack.c.0.s8 %v1294
      %v1296 = vlaneseq
      %v1297 = vshrl.u32 %v1296, 7
      %v1298 = vsub.s32 %v1295, %v1297
      %v1299 = vrot.slane %v1271, %v1298
      %v1300 = vcombine.high %v1278, %v1278
      %v1301 = vcombine.high %v1285, %v1285
      %v1302 = vcombine.high %v1292, %v1292
      %v1303 = vcombine.high %v1299, %v1299
      %v1304 = vcombine.high %v696, %v696
      %v1306 = vunpack.c.l.s4 1966171168
      %v1307 = vunpack.c.0.s8 %v1306
      %v1308 = vlaneseq
      %v1309 = vshrl.u32 %v1308, 7
      %v1310 = vsub.s32 %v1307, %v1309
      %v1311 = vrot.slane %v696, %v1310
      %v1313 = vunpack.c.l.s4 1966171168
      %v1314 = vunpack.c.0.s8 %v1313
      %v1315 = vlaneseq
      %v1316 = vshrl.u32 %v1315, 7
      %v1317 = vsub.s32 %v1314, %v1316
      %v1318 = vrot.slane %v1304, %v1317
      %v1319 = vcombine.high %v1311, %v1311
      %v1320 = vcombine.high %v1318, %v1318
      %v1322 = vunpack.c.l.s4 1966171168
      %v1323 = vunpack.c.0.s8 %v1322
      %v1324 = vlaneseq
      %v1325 = vshrl.u32 %v1324, 7
      %v1326 = vsub.s32 %v1323, %v1325
      %v1327 = vrot.slane %v1311, %v1326
      %v1329 = vunpack.c.l.s4 1966171168
      %v1330 = vunpack.c.0.s8 %v1329
      %v1331 = vlaneseq
      %v1332 = vshrl.u32 %v1331, 7
      %v1333 = vsub.s32 %v1330, %v1332
      %v1334 = vrot.slane %v1318, %v1333
      %v1336 = vunpack.c.l.s4 1966171168
      %v1337 = vunpack.c.0.s8 %v1336
      %v1338 = vlaneseq
      %v1339 = vshrl.u32 %v1338, 7
      %v1340 = vsub.s32 %v1337, %v1339
      %v1341 = vrot.slane %v1319, %v1340
      %v1343 = vunpack.c.l.s4 1966171168
      %v1344 = vunpack.c.0.s8 %v1343
      %v1345 = vlaneseq
      %v1346 = vshrl.u32 %v1345, 7
      %v1347 = vsub.s32 %v1344, %v1346
      %v1348 = vrot.slane %v1320, %v1347
      %v1349 = vcombine.high %v1327, %v1327
      %v1350 = vcombine.high %v1334, %v1334
      %v1351 = vcombine.high %v1341, %v1341
      %v1352 = vcombine.high %v1348, %v1348
      %v1353 = vcombine.high %v697, %v697
      %v1355 = vunpack.c.l.s4 1966171168
      %v1356 = vunpack.c.0.s8 %v1355
      %v1357 = vlaneseq
      %v1358 = vshrl.u32 %v1357, 7
      %v1359 = vsub.s32 %v1356, %v1358
      %v1360 = vrot.slane %v697, %v1359
      %v1362 = vunpack.c.l.s4 1966171168
      %v1363 = vunpack.c.0.s8 %v1362
      %v1364 = vlaneseq
      %v1365 = vshrl.u32 %v1364, 7
      %v1366 = vsub.s32 %v1363, %v1365
      %v1367 = vrot.slane %v1353, %v1366
      %v1368 = vcombine.high %v1360, %v1360
      %v1369 = vcombine.high %v1367, %v1367
      %v1371 = vunpack.c.l.s4 1966171168
      %v1372 = vunpack.c.0.s8 %v1371
      %v1373 = vlaneseq
      %v1374 = vshrl.u32 %v1373, 7
      %v1375 = vsub.s32 %v1372, %v1374
      %v1376 = vrot.slane %v1360, %v1375
      %v1378 = vunpack.c.l.s4 1966171168
      %v1379 = vunpack.c.0.s8 %v1378
      %v1380 = vlaneseq
      %v1381 = vshrl.u32 %v1380, 7
      %v1382 = vsub.s32 %v1379, %v1381
      %v1383 = vrot.slane %v1367, %v1382
      %v1385 = vunpack.c.l.s4 1966171168
      %v1386 = vunpack.c.0.s8 %v1385
      %v1387 = vlaneseq
      %v1388 = vshrl.u32 %v1387, 7
      %v1389 = vsub.s32 %v1386, %v1388
      %v1390 = vrot.slane %v1368, %v1389
      %v1392 = vunpack.c.l.s4 1966171168
      %v1393 = vunpack.c.0.s8 %v1392
      %v1394 = vlaneseq
      %v1395 = vshrl.u32 %v1394, 7
      %v1396 = vsub.s32 %v1393, %v1395
      %v1397 = vrot.slane %v1369, %v1396
      %v1398 = vcombine.high %v1376, %v1376
      %v1399 = vcombine.high %v1383, %v1383
      %v1400 = vcombine.high %v1390, %v1390
      %v1401 = vcombine.high %v1397, %v1397
      %v1402 = vcombine.high %v698, %v698
      %v1404 = vunpack.c.l.s4 1966171168
      %v1405 = vunpack.c.0.s8 %v1404
      %v1406 = vlaneseq
      %v1407 = vshrl.u32 %v1406, 7
      %v1408 = vsub.s32 %v1405, %v1407
      %v1409 = vrot.slane %v698, %v1408
      %v1411 = vunpack.c.l.s4 1966171168
      %v1412 = vunpack.c.0.s8 %v1411
      %v1413 = vlaneseq
      %v1414 = vshrl.u32 %v1413, 7
      %v1415 = vsub.s32 %v1412, %v1414
      %v1416 = vrot.slane %v1402, %v1415
      %v1417 = vcombine.high %v1409, %v1409
      %v1418 = vcombine.high %v1416, %v1416
      %v1420 = vunpack.c.l.s4 1966171168
      %v1421 = vunpack.c.0.s8 %v1420
      %v1422 = vlaneseq
      %v1423 = vshrl.u32 %v1422, 7
      %v1424 = vsub.s32 %v1421, %v1423
      %v1425 = vrot.slane %v1409, %v1424
      %v1427 = vunpack.c.l.s4 1966171168
      %v1428 = vunpack.c.0.s8 %v1427
      %v1429 = vlaneseq
      %v1430 = vshrl.u32 %v1429, 7
      %v1431 = vsub.s32 %v1428, %v1430
      %v1432 = vrot.slane %v1416, %v1431
      %v1434 = vunpack.c.l.s4 1966171168
      %v1435 = vunpack.c.0.s8 %v1434
      %v1436 = vlaneseq
      %v1437 = vshrl.u32 %v1436, 7
      %v1438 = vsub.s32 %v1435, %v1437
      %v1439 = vrot.slane %v1417, %v1438
      %v1441 = vunpack.c.l.s4 1966171168
      %v1442 = vunpack.c.0.s8 %v1441
      %v1443 = vlaneseq
      %v1444 = vshrl.u32 %v1443, 7
      %v1445 = vsub.s32 %v1442, %v1444
      %v1446 = vrot.slane %v1418, %v1445
      %v1447 = vcombine.high %v1425, %v1425
      %v1448 = vcombine.high %v1432, %v1432
      %v1449 = vcombine.high %v1439, %v1439
      %v1450 = vcombine.high %v1446, %v1446
      %v1451 = vcombine.high %v699, %v699
      %v1453 = vunpack.c.l.s4 1966171168
      %v1454 = vunpack.c.0.s8 %v1453
      %v1455 = vlaneseq
      %v1456 = vshrl.u32 %v1455, 7
      %v1457 = vsub.s32 %v1454, %v1456
      %v1458 = vrot.slane %v699, %v1457
      %v1460 = vunpack.c.l.s4 1966171168
      %v1461 = vunpack.c.0.s8 %v1460
      %v1462 = vlaneseq
      %v1463 = vshrl.u32 %v1462, 7
      %v1464 = vsub.s32 %v1461, %v1463
      %v1465 = vrot.slane %v1451, %v1464
      %v1466 = vcombine.high %v1458, %v1458
      %v1467 = vcombine.high %v1465, %v1465
      %v1469 = vunpack.c.l.s4 1966171168
      %v1470 = vunpack.c.0.s8 %v1469
      %v1471 = vlaneseq
      %v1472 = vshrl.u32 %v1471, 7
      %v1473 = vsub.s32 %v1470, %v1472
      %v1474 = vrot.slane %v1458, %v1473
      %v1476 = vunpack.c.l.s4 1966171168
      %v1477 = vunpack.c.0.s8 %v1476
      %v1478 = vlaneseq
      %v1479 = vshrl.u32 %v1478, 7
      %v1480 = vsub.s32 %v1477, %v1479
      %v1481 = vrot.slane %v1465, %v1480
      %v1483 = vunpack.c.l.s4 1966171168
      %v1484 = vunpack.c.0.s8 %v1483
      %v1485 = vlaneseq
      %v1486 = vshrl.u32 %v1485, 7
      %v1487 = vsub.s32 %v1484, %v1486
      %v1488 = vrot.slane %v1466, %v1487
      %v1490 = vunpack.c.l.s4 1966171168
      %v1491 = vunpack.c.0.s8 %v1490
      %v1492 = vlaneseq
      %v1493 = vshrl.u32 %v1492, 7
      %v1494 = vsub.s32 %v1491, %v1493
      %v1495 = vrot.slane %v1467, %v1494
      %v1496 = vcombine.high %v1474, %v1474
      %v1497 = vcombine.high %v1481, %v1481
      %v1498 = vcombine.high %v1488, %v1488
      %v1499 = vcombine.high %v1495, %v1495
      %v1501 = vunpack.c.l.s4 1966171168
      %v1502 = vunpack.c.0.s8 %v1501
      %v1503 = vlaneseq
      %v1504 = vshrl.u32 %v1503, 7
      %v1505 = vsub.s32 %v1502, %v1504
      %v1506 = vrot.slane %v788, %v1505
      %v1508 = vunpack.c.l.s4 1966171168
      %v1509 = vunpack.c.0.s8 %v1508
      %v1510 = vlaneseq
      %v1511 = vshrl.u32 %v1510, 7
      %v1512 = vsub.s32 %v1509, %v1511
      %v1513 = vrot.slane %v1506, %v1512
      %v1515 = vunpack.c.l.s4 1966171168
      %v1516 = vunpack.c.0.s8 %v1515
      %v1517 = vlaneseq
      %v1518 = vshrl.u32 %v1517, 7
      %v1519 = vsub.s32 %v1516, %v1518
      %v1520 = vrot.slane %v802, %v1519
      %v1522 = vunpack.c.l.s4 1966171168
      %v1523 = vunpack.c.0.s8 %v1522
      %v1524 = vlaneseq
      %v1525 = vshrl.u32 %v1524, 7
      %v1526 = vsub.s32 %v1523, %v1525
      %v1527 = vrot.slane %v1520, %v1526
      %v1529 = vunpack.c.l.s4 1966171168
      %v1530 = vunpack.c.0.s8 %v1529
      %v1531 = vlaneseq
      %v1532 = vshrl.u32 %v1531, 7
      %v1533 = vsub.s32 %v1530, %v1532
      %v1534 = vrot.slane %v810, %v1533
      %v1536 = vunpack.c.l.s4 1966171168
      %v1537 = vunpack.c.0.s8 %v1536
      %v1538 = vlaneseq
      %v1539 = vshrl.u32 %v1538, 7
      %v1540 = vsub.s32 %v1537, %v1539
      %v1541 = vrot.slane %v1534, %v1540
      %v1543 = vunpack.c.l.s4 1966171168
      %v1544 = vunpack.c.0.s8 %v1543
      %v1545 = vlaneseq
      %v1546 = vshrl.u32 %v1545, 7
      %v1547 = vsub.s32 %v1544, %v1546
      %v1548 = vrot.slane %v812, %v1547
      %v1550 = vunpack.c.l.s4 1966171168
      %v1551 = vunpack.c.0.s8 %v1550
      %v1552 = vlaneseq
      %v1553 = vshrl.u32 %v1552, 7
      %v1554 = vsub.s32 %v1551, %v1553
      %v1555 = vrot.slane %v1548, %v1554
      %v1557 = vunpack.c.l.s4 1966171168
      %v1558 = vunpack.c.0.s8 %v1557
      %v1559 = vlaneseq
      %v1560 = vshrl.u32 %v1559, 7
      %v1561 = vsub.s32 %v1558, %v1560
      %v1562 = vrot.slane %v795, %v1561
      %v1564 = vunpack.c.l.s4 1966171168
      %v1565 = vunpack.c.0.s8 %v1564
      %v1566 = vlaneseq
      %v1567 = vshrl.u32 %v1566, 7
      %v1568 = vsub.s32 %v1565, %v1567
      %v1569 = vrot.slane %v1562, %v1568
      %v1571 = vunpack.c.l.s4 1966171168
      %v1572 = vunpack.c.0.s8 %v1571
      %v1573 = vlaneseq
      %v1574 = vshrl.u32 %v1573, 7
      %v1575 = vsub.s32 %v1572, %v1574
      %v1576 = vrot.slane %v809, %v1575
      %v1578 = vunpack.c.l.s4 1966171168
      %v1579 = vunpack.c.0.s8 %v1578
      %v1580 = vlaneseq
      %v1581 = vshrl.u32 %v1580, 7
      %v1582 = vsub.s32 %v1579, %v1581
      %v1583 = vrot.slane %v1576, %v1582
      %v1585 = vunpack.c.l.s4 1966171168
      %v1586 = vunpack.c.0.s8 %v1585
      %v1587 = vlaneseq
      %v1588 = vshrl.u32 %v1587, 7
      %v1589 = vsub.s32 %v1586, %v1588
      %v1590 = vrot.slane %v811, %v1589
      %v1592 = vunpack.c.l.s4 1966171168
      %v1593 = vunpack.c.0.s8 %v1592
      %v1594 = vlaneseq
      %v1595 = vshrl.u32 %v1594, 7
      %v1596 = vsub.s32 %v1593, %v1595
      %v1597 = vrot.slane %v1590, %v1596
      %v1599 = vunpack.c.l.s4 1966171168
      %v1600 = vunpack.c.0.s8 %v1599
      %v1601 = vlaneseq
      %v1602 = vshrl.u32 %v1601, 7
      %v1603 = vsub.s32 %v1600, %v1602
      %v1604 = vrot.slane %v813, %v1603
      %v1606 = vunpack.c.l.s4 1966171168
      %v1607 = vunpack.c.0.s8 %v1606
      %v1608 = vlaneseq
      %v1609 = vshrl.u32 %v1608, 7
      %v1610 = vsub.s32 %v1607, %v1609
      %v1611 = vrot.slane %v1604, %v1610
      %v1613 = vunpack.c.l.s4 1966171168
      %v1614 = vunpack.c.0.s8 %v1613
      %v1615 = vlaneseq
      %v1616 = vshrl.u32 %v1615, 7
      %v1617 = vsub.s32 %v1614, %v1616
      %v1618 = vrot.slane %v886, %v1617
      %v1620 = vunpack.c.l.s4 1966171168
      %v1621 = vunpack.c.0.s8 %v1620
      %v1622 = vlaneseq
      %v1623 = vshrl.u32 %v1622, 7
      %v1624 = vsub.s32 %v1621, %v1623
      %v1625 = vrot.slane %v1618, %v1624
      %v1627 = vunpack.c.l.s4 1966171168
      %v1628 = vunpack.c.0.s8 %v1627
      %v1629 = vlaneseq
      %v1630 = vshrl.u32 %v1629, 7
      %v1631 = vsub.s32 %v1628, %v1630
      %v1632 = vrot.slane %v900, %v1631
      %v1634 = vunpack.c.l.s4 1966171168
      %v1635 = vunpack.c.0.s8 %v1634
      %v1636 = vlaneseq
      %v1637 = vshrl.u32 %v1636, 7
      %v1638 = vsub.s32 %v1635, %v1637
      %v1639 = vrot.slane %v1632, %v1638
      %v1641 = vunpack.c.l.s4 1966171168
      %v1642 = vunpack.c.0.s8 %v1641
      %v1643 = vlaneseq
      %v1644 = vshrl.u32 %v1643, 7
      %v1645 = vsub.s32 %v1642, %v1644
      %v1646 = vrot.slane %v908, %v1645
      %v1648 = vunpack.c.l.s4 1966171168
      %v1649 = vunpack.c.0.s8 %v1648
      %v1650 = vlaneseq
      %v1651 = vshrl.u32 %v1650, 7
      %v1652 = vsub.s32 %v1649, %v1651
      %v1653 = vrot.slane %v1646, %v1652
      %v1655 = vunpack.c.l.s4 1966171168
      %v1656 = vunpack.c.0.s8 %v1655
      %v1657 = vlaneseq
      %v1658 = vshrl.u32 %v1657, 7
      %v1659 = vsub.s32 %v1656, %v1658
      %v1660 = vrot.slane %v910, %v1659
      %v1662 = vunpack.c.l.s4 1966171168
      %v1663 = vunpack.c.0.s8 %v1662
      %v1664 = vlaneseq
      %v1665 = vshrl.u32 %v1664, 7
      %v1666 = vsub.s32 %v1663, %v1665
      %v1667 = vrot.slane %v1660, %v1666
      %v1669 = vunpack.c.l.s4 1966171168
      %v1670 = vunpack.c.0.s8 %v1669
      %v1671 = vlaneseq
      %v1672 = vshrl.u32 %v1671, 7
      %v1673 = vsub.s32 %v1670, %v1672
      %v1674 = vrot.slane %v893, %v1673
      %v1676 = vunpack.c.l.s4 1966171168
      %v1677 = vunpack.c.0.s8 %v1676
      %v1678 = vlaneseq
      %v1679 = vshrl.u32 %v1678, 7
      %v1680 = vsub.s32 %v1677, %v1679
      %v1681 = vrot.slane %v1674, %v1680
      %v1683 = vunpack.c.l.s4 1966171168
      %v1684 = vunpack.c.0.s8 %v1683
      %v1685 = vlaneseq
      %v1686 = vshrl.u32 %v1685, 7
      %v1687 = vsub.s32 %v1684, %v1686
      %v1688 = vrot.slane %v907, %v1687
      %v1690 = vunpack.c.l.s4 1966171168
      %v1691 = vunpack.c.0.s8 %v1690
      %v1692 = vlaneseq
      %v1693 = vshrl.u32 %v1692, 7
      %v1694 = vsub.s32 %v1691, %v1693
      %v1695 = vrot.slane %v1688, %v1694
      %v1697 = vunpack.c.l.s4 1966171168
      %v1698 = vunpack.c.0.s8 %v1697
      %v1699 = vlaneseq
      %v1700 = vshrl.u32 %v1699, 7
      %v1701 = vsub.s32 %v1698, %v1700
      %v1702 = vrot.slane %v909, %v1701
      %v1704 = vunpack.c.l.s4 1966171168
      %v1705 = vunpack.c.0.s8 %v1704
      %v1706 = vlaneseq
      %v1707 = vshrl.u32 %v1706, 7
      %v1708 = vsub.s32 %v1705, %v1707
      %v1709 = vrot.slane %v1702, %v1708
      %v1711 = vunpack.c.l.s4 1966171168
      %v1712 = vunpack.c.0.s8 %v1711
      %v1713 = vlaneseq
      %v1714 = vshrl.u32 %v1713, 7
      %v1715 = vsub.s32 %v1712, %v1714
      %v1716 = vrot.slane %v911, %v1715
      %v1718 = vunpack.c.l.s4 1966171168
      %v1719 = vunpack.c.0.s8 %v1718
      %v1720 = vlaneseq
      %v1721 = vshrl.u32 %v1720, 7
      %v1722 = vsub.s32 %v1719, %v1721
      %v1723 = vrot.slane %v1716, %v1722
      %v1725 = vunpack.c.l.s4 1966171168
      %v1726 = vunpack.c.0.s8 %v1725
      %v1727 = vlaneseq
      %v1728 = vshrl.u32 %v1727, 7
      %v1729 = vsub.s32 %v1726, %v1728
      %v1730 = vrot.slane %v984, %v1729
      %v1732 = vunpack.c.l.s4 1966171168
      %v1733 = vunpack.c.0.s8 %v1732
      %v1734 = vlaneseq
      %v1735 = vshrl.u32 %v1734, 7
      %v1736 = vsub.s32 %v1733, %v1735
      %v1737 = vrot.slane %v1730, %v1736
      %v1739 = vunpack.c.l.s4 1966171168
      %v1740 = vunpack.c.0.s8 %v1739
      %v1741 = vlaneseq
      %v1742 = vshrl.u32 %v1741, 7
      %v1743 = vsub.s32 %v1740, %v1742
      %v1744 = vrot.slane %v998, %v1743
      %v1746 = vunpack.c.l.s4 1966171168
      %v1747 = vunpack.c.0.s8 %v1746
      %v1748 = vlaneseq
      %v1749 = vshrl.u32 %v1748, 7
      %v1750 = vsub.s32 %v1747, %v1749
      %v1751 = vrot.slane %v1744, %v1750
      %v1753 = vunpack.c.l.s4 1966171168
      %v1754 = vunpack.c.0.s8 %v1753
      %v1755 = vlaneseq
      %v1756 = vshrl.u32 %v1755, 7
      %v1757 = vsub.s32 %v1754, %v1756
      %v1758 = vrot.slane %v1006, %v1757
      %v1760 = vunpack.c.l.s4 1966171168
      %v1761 = vunpack.c.0.s8 %v1760
      %v1762 = vlaneseq
      %v1763 = vshrl.u32 %v1762, 7
      %v1764 = vsub.s32 %v1761, %v1763
      %v1765 = vrot.slane %v1758, %v1764
      %v1767 = vunpack.c.l.s4 1966171168
      %v1768 = vunpack.c.0.s8 %v1767
      %v1769 = vlaneseq
      %v1770 = vshrl.u32 %v1769, 7
      %v1771 = vsub.s32 %v1768, %v1770
      %v1772 = vrot.slane %v1008, %v1771
      %v1774 = vunpack.c.l.s4 1966171168
      %v1775 = vunpack.c.0.s8 %v1774
      %v1776 = vlaneseq
      %v1777 = vshrl.u32 %v1776, 7
      %v1778 = vsub.s32 %v1775, %v1777
      %v1779 = vrot.slane %v1772, %v1778
      %v1781 = vunpack.c.l.s4 1966171168
      %v1782 = vunpack.c.0.s8 %v1781
      %v1783 = vlaneseq
      %v1784 = vshrl.u32 %v1783, 7
      %v1785 = vsub.s32 %v1782, %v1784
      %v1786 = vrot.slane %v991, %v1785
      %v1788 = vunpack.c.l.s4 1966171168
      %v1789 = vunpack.c.0.s8 %v1788
      %v1790 = vlaneseq
      %v1791 = vshrl.u32 %v1790, 7
      %v1792 = vsub.s32 %v1789, %v1791
      %v1793 = vrot.slane %v1786, %v1792
      %v1795 = vunpack.c.l.s4 1966171168
      %v1796 = vunpack.c.0.s8 %v1795
      %v1797 = vlaneseq
      %v1798 = vshrl.u32 %v1797, 7
      %v1799 = vsub.s32 %v1796, %v1798
      %v1800 = vrot.slane %v1005, %v1799
      %v1802 = vunpack.c.l.s4 1966171168
      %v1803 = vunpack.c.0.s8 %v1802
      %v1804 = vlaneseq
      %v1805 = vshrl.u32 %v1804, 7
      %v1806 = vsub.s32 %v1803, %v1805
      %v1807 = vrot.slane %v1800, %v1806
      %v1809 = vunpack.c.l.s4 1966171168
      %v1810 = vunpack.c.0.s8 %v1809
      %v1811 = vlaneseq
      %v1812 = vshrl.u32 %v1811, 7
      %v1813 = vsub.s32 %v1810, %v1812
      %v1814 = vrot.slane %v1007, %v1813
      %v1816 = vunpack.c.l.s4 1966171168
      %v1817 = vunpack.c.0.s8 %v1816
      %v1818 = vlaneseq
      %v1819 = vshrl.u32 %v1818, 7
      %v1820 = vsub.s32 %v1817, %v1819
      %v1821 = vrot.slane %v1814, %v1820
      %v1823 = vunpack.c.l.s4 1966171168
      %v1824 = vunpack.c.0.s8 %v1823
      %v1825 = vlaneseq
      %v1826 = vshrl.u32 %v1825, 7
      %v1827 = vsub.s32 %v1824, %v1826
      %v1828 = vrot.slane %v1009, %v1827
      %v1830 = vunpack.c.l.s4 1966171168
      %v1831 = vunpack.c.0.s8 %v1830
      %v1832 = vlaneseq
      %v1833 = vshrl.u32 %v1832, 7
      %v1834 = vsub.s32 %v1831, %v1833
      %v1835 = vrot.slane %v1828, %v1834
      %v1837 = vunpack.c.l.s4 1966171168
      %v1838 = vunpack.c.0.s8 %v1837
      %v1839 = vlaneseq
      %v1840 = vshrl.u32 %v1839, 7
      %v1841 = vsub.s32 %v1838, %v1840
      %v1842 = vrot.slane %v1082, %v1841
      %v1844 = vunpack.c.l.s4 1966171168
      %v1845 = vunpack.c.0.s8 %v1844
      %v1846 = vlaneseq
      %v1847 = vshrl.u32 %v1846, 7
      %v1848 = vsub.s32 %v1845, %v1847
      %v1849 = vrot.slane %v1842, %v1848
      %v1851 = vunpack.c.l.s4 1966171168
      %v1852 = vunpack.c.0.s8 %v1851
      %v1853 = vlaneseq
      %v1854 = vshrl.u32 %v1853, 7
      %v1855 = vsub.s32 %v1852, %v1854
      %v1856 = vrot.slane %v1096, %v1855
      %v1858 = vunpack.c.l.s4 1966171168
      %v1859 = vunpack.c.0.s8 %v1858
      %v1860 = vlaneseq
      %v1861 = vshrl.u32 %v1860, 7
      %v1862 = vsub.s32 %v1859, %v1861
      %v1863 = vrot.slane %v1856, %v1862
      %v1865 = vunpack.c.l.s4 1966171168
      %v1866 = vunpack.c.0.s8 %v1865
      %v1867 = vlaneseq
      %v1868 = vshrl.u32 %v1867, 7
      %v1869 = vsub.s32 %v1866, %v1868
      %v1870 = vrot.slane %v1104, %v1869
      %v1872 = vunpack.c.l.s4 1966171168
      %v1873 = vunpack.c.0.s8 %v1872
      %v1874 = vlaneseq
      %v1875 = vshrl.u32 %v1874, 7
      %v1876 = vsub.s32 %v1873, %v1875
      %v1877 = vrot.slane %v1870, %v1876
      %v1879 = vunpack.c.l.s4 1966171168
      %v1880 = vunpack.c.0.s8 %v1879
      %v1881 = vlaneseq
      %v1882 = vshrl.u32 %v1881, 7
      %v1883 = vsub.s32 %v1880, %v1882
      %v1884 = vrot.slane %v1106, %v1883
      %v1886 = vunpack.c.l.s4 1966171168
      %v1887 = vunpack.c.0.s8 %v1886
      %v1888 = vlaneseq
      %v1889 = vshrl.u32 %v1888, 7
      %v1890 = vsub.s32 %v1887, %v1889
      %v1891 = vrot.slane %v1884, %v1890
      %v1893 = vunpack.c.l.s4 1966171168
      %v1894 = vunpack.c.0.s8 %v1893
      %v1895 = vlaneseq
      %v1896 = vshrl.u32 %v1895, 7
      %v1897 = vsub.s32 %v1894, %v1896
      %v1898 = vrot.slane %v1089, %v1897
      %v1900 = vunpack.c.l.s4 1966171168
      %v1901 = vunpack.c.0.s8 %v1900
      %v1902 = vlaneseq
      %v1903 = vshrl.u32 %v1902, 7
      %v1904 = vsub.s32 %v1901, %v1903
      %v1905 = vrot.slane %v1898, %v1904
      %v1907 = vunpack.c.l.s4 1966171168
      %v1908 = vunpack.c.0.s8 %v1907
      %v1909 = vlaneseq
      %v1910 = vshrl.u32 %v1909, 7
      %v1911 = vsub.s32 %v1908, %v1910
      %v1912 = vrot.slane %v1103, %v1911
      %v1914 = vunpack.c.l.s4 1966171168
      %v1915 = vunpack.c.0.s8 %v1914
      %v1916 = vlaneseq
      %v1917 = vshrl.u32 %v1916, 7
      %v1918 = vsub.s32 %v1915, %v1917
      %v1919 = vrot.slane %v1912, %v1918
      %v1921 = vunpack.c.l.s4 1966171168
      %v1922 = vunpack.c.0.s8 %v1921
      %v1923 = vlaneseq
      %v1924 = vshrl.u32 %v1923, 7
      %v1925 = vsub.s32 %v1922, %v1924
      %v1926 = vrot.slane %v1105, %v1925
      %v1928 = vunpack.c.l.s4 1966171168
      %v1929 = vunpack.c.0.s8 %v1928
      %v1930 = vlaneseq
      %v1931 = vshrl.u32 %v1930, 7
      %v1932 = vsub.s32 %v1929, %v1931
      %v1933 = vrot.slane %v1926, %v1932
      %v1935 = vunpack.c.l.s4 1966171168
      %v1936 = vunpack.c.0.s8 %v1935
      %v1937 = vlaneseq
      %v1938 = vshrl.u32 %v1937, 7
      %v1939 = vsub.s32 %v1936, %v1938
      %v1940 = vrot.slane %v1107, %v1939
      %v1942 = vunpack.c.l.s4 1966171168
      %v1943 = vunpack.c.0.s8 %v1942
      %v1944 = vlaneseq
      %v1945 = vshrl.u32 %v1944, 7
      %v1946 = vsub.s32 %v1943, %v1945
      %v1947 = vrot.slane %v1940, %v1946
      %v1949 = vunpack.c.l.s4 1966171168
      %v1950 = vunpack.c.0.s8 %v1949
      %v1951 = vlaneseq
      %v1952 = vshrl.u32 %v1951, 7
      %v1953 = vsub.s32 %v1950, %v1952
      %v1954 = vrot.slane %v1180, %v1953
      %v1956 = vunpack.c.l.s4 1966171168
      %v1957 = vunpack.c.0.s8 %v1956
      %v1958 = vlaneseq
      %v1959 = vshrl.u32 %v1958, 7
      %v1960 = vsub.s32 %v1957, %v1959
      %v1961 = vrot.slane %v1954, %v1960
      %v1963 = vunpack.c.l.s4 1966171168
      %v1964 = vunpack.c.0.s8 %v1963
      %v1965 = vlaneseq
      %v1966 = vshrl.u32 %v1965, 7
      %v1967 = vsub.s32 %v1964, %v1966
      %v1968 = vrot.slane %v1194, %v1967
      %v1970 = vunpack.c.l.s4 1966171168
      %v1971 = vunpack.c.0.s8 %v1970
      %v1972 = vlaneseq
      %v1973 = vshrl.u32 %v1972, 7
      %v1974 = vsub.s32 %v1971, %v1973
      %v1975 = vrot.slane %v1968, %v1974
      %v1977 = vunpack.c.l.s4 1966171168
      %v1978 = vunpack.c.0.s8 %v1977
      %v1979 = vlaneseq
      %v1980 = vshrl.u32 %v1979, 7
      %v1981 = vsub.s32 %v1978, %v1980
      %v1982 = vrot.slane %v1202, %v1981
      %v1984 = vunpack.c.l.s4 1966171168
      %v1985 = vunpack.c.0.s8 %v1984
      %v1986 = vlaneseq
      %v1987 = vshrl.u32 %v1986, 7
      %v1988 = vsub.s32 %v1985, %v1987
      %v1989 = vrot.slane %v1982, %v1988
      %v1991 = vunpack.c.l.s4 1966171168
      %v1992 = vunpack.c.0.s8 %v1991
      %v1993 = vlaneseq
      %v1994 = vshrl.u32 %v1993, 7
      %v1995 = vsub.s32 %v1992, %v1994
      %v1996 = vrot.slane %v1204, %v1995
      %v1998 = vunpack.c.l.s4 1966171168
      %v1999 = vunpack.c.0.s8 %v1998
      %v2000 = vlaneseq
      %v2001 = vshrl.u32 %v2000, 7
      %v2002 = vsub.s32 %v1999, %v2001
      %v2003 = vrot.slane %v1996, %v2002
      %v2005 = vunpack.c.l.s4 1966171168
      %v2006 = vunpack.c.0.s8 %v2005
      %v2007 = vlaneseq
      %v2008 = vshrl.u32 %v2007, 7
      %v2009 = vsub.s32 %v2006, %v2008
      %v2010 = vrot.slane %v1187, %v2009
      %v2012 = vunpack.c.l.s4 1966171168
      %v2013 = vunpack.c.0.s8 %v2012
      %v2014 = vlaneseq
      %v2015 = vshrl.u32 %v2014, 7
      %v2016 = vsub.s32 %v2013, %v2015
      %v2017 = vrot.slane %v2010, %v2016
      %v2019 = vunpack.c.l.s4 1966171168
      %v2020 = vunpack.c.0.s8 %v2019
      %v2021 = vlaneseq
      %v2022 = vshrl.u32 %v2021, 7
      %v2023 = vsub.s32 %v2020, %v2022
      %v2024 = vrot.slane %v1201, %v2023
      %v2026 = vunpack.c.l.s4 1966171168
      %v2027 = vunpack.c.0.s8 %v2026
      %v2028 = vlaneseq
      %v2029 = vshrl.u32 %v2028, 7
      %v2030 = vsub.s32 %v2027, %v2029
      %v2031 = vrot.slane %v2024, %v2030
      %v2033 = vunpack.c.l.s4 1966171168
      %v2034 = vunpack.c.0.s8 %v2033
      %v2035 = vlaneseq
      %v2036 = vshrl.u32 %v2035, 7
      %v2037 = vsub.s32 %v2034, %v2036
      %v2038 = vrot.slane %v1203, %v2037
      %v2040 = vunpack.c.l.s4 1966171168
      %v2041 = vunpack.c.0.s8 %v2040
      %v2042 = vlaneseq
      %v2043 = vshrl.u32 %v2042, 7
      %v2044 = vsub.s32 %v2041, %v2043
      %v2045 = vrot.slane %v2038, %v2044
      %v2047 = vunpack.c.l.s4 1966171168
      %v2048 = vunpack.c.0.s8 %v2047
      %v2049 = vlaneseq
      %v2050 = vshrl.u32 %v2049, 7
      %v2051 = vsub.s32 %v2048, %v2050
      %v2052 = vrot.slane %v1205, %v2051
      %v2054 = vunpack.c.l.s4 1966171168
      %v2055 = vunpack.c.0.s8 %v2054
      %v2056 = vlaneseq
      %v2057 = vshrl.u32 %v2056, 7
      %v2058 = vsub.s32 %v2055, %v2057
      %v2059 = vrot.slane %v2052, %v2058
      %v2061 = vunpack.c.l.s4 1966171168
      %v2062 = vunpack.c.0.s8 %v2061
      %v2063 = vlaneseq
      %v2064 = vshrl.u32 %v2063, 7
      %v2065 = vsub.s32 %v2062, %v2064
      %v2066 = vrot.slane %v1278, %v2065
      %v2068 = vunpack.c.l.s4 1966171168
      %v2069 = vunpack.c.0.s8 %v2068
      %v2070 = vlaneseq
      %v2071 = vshrl.u32 %v2070, 7
      %v2072 = vsub.s32 %v2069, %v2071
      %v2073 = vrot.slane %v2066, %v2072
      %v2075 = vunpack.c.l.s4 1966171168
      %v2076 = vunpack.c.0.s8 %v2075
      %v2077 = vlaneseq
      %v2078 = vshrl.u32 %v2077, 7
      %v2079 = vsub.s32 %v2076, %v2078
      %v2080 = vrot.slane %v1292, %v2079
      %v2082 = vunpack.c.l.s4 1966171168
      %v2083 = vunpack.c.0.s8 %v2082
      %v2084 = vlaneseq
      %v2085 = vshrl.u32 %v2084, 7
      %v2086 = vsub.s32 %v2083, %v2085
      %v2087 = vrot.slane %v2080, %v2086
      %v2089 = vunpack.c.l.s4 1966171168
      %v2090 = vunpack.c.0.s8 %v2089
      %v2091 = vlaneseq
      %v2092 = vshrl.u32 %v2091, 7
      %v2093 = vsub.s32 %v2090, %v2092
      %v2094 = vrot.slane %v1300, %v2093
      %v2096 = vunpack.c.l.s4 1966171168
      %v2097 = vunpack.c.0.s8 %v2096
      %v2098 = vlaneseq
      %v2099 = vshrl.u32 %v2098, 7
      %v2100 = vsub.s32 %v2097, %v2099
      %v2101 = vrot.slane %v2094, %v2100
      %v2103 = vunpack.c.l.s4 1966171168
      %v2104 = vunpack.c.0.s8 %v2103
      %v2105 = vlaneseq
      %v2106 = vshrl.u32 %v2105, 7
      %v2107 = vsub.s32 %v2104, %v2106
      %v2108 = vrot.slane %v1302, %v2107
      %v2110 = vunpack.c.l.s4 1966171168
      %v2111 = vunpack.c.0.s8 %v2110
      %v2112 = vlaneseq
      %v2113 = vshrl.u32 %v2112, 7
      %v2114 = vsub.s32 %v2111, %v2113
      %v2115 = vrot.slane %v2108, %v2114
      %v2117 = vunpack.c.l.s4 1966171168
      %v2118 = vunpack.c.0.s8 %v2117
      %v2119 = vlaneseq
      %v2120 = vshrl.u32 %v2119, 7
      %v2121 = vsub.s32 %v2118, %v2120
      %v2122 = vrot.slane %v1285, %v2121
      %v2124 = vunpack.c.l.s4 1966171168
      %v2125 = vunpack.c.0.s8 %v2124
      %v2126 = vlaneseq
      %v2127 = vshrl.u32 %v2126, 7
      %v2128 = vsub.s32 %v2125, %v2127
      %v2129 = vrot.slane %v2122, %v2128
      %v2131 = vunpack.c.l.s4 1966171168
      %v2132 = vunpack.c.0.s8 %v2131
      %v2133 = vlaneseq
      %v2134 = vshrl.u32 %v2133, 7
      %v2135 = vsub.s32 %v2132, %v2134
      %v2136 = vrot.slane %v1299, %v2135
      %v2138 = vunpack.c.l.s4 1966171168
      %v2139 = vunpack.c.0.s8 %v2138
      %v2140 = vlaneseq
      %v2141 = vshrl.u32 %v2140, 7
      %v2142 = vsub.s32 %v2139, %v2141
      %v2143 = vrot.slane %v2136, %v2142
      %v2145 = vunpack.c.l.s4 1966171168
      %v2146 = vunpack.c.0.s8 %v2145
      %v2147 = vlaneseq
      %v2148 = vshrl.u32 %v2147, 7
      %v2149 = vsub.s32 %v2146, %v2148
      %v2150 = vrot.slane %v1301, %v2149
      %v2152 = vunpack.c.l.s4 1966171168
      %v2153 = vunpack.c.0.s8 %v2152
      %v2154 = vlaneseq
      %v2155 = vshrl.u32 %v2154, 7
      %v2156 = vsub.s32 %v2153, %v2155
      %v2157 = vrot.slane %v2150, %v2156
      %v2159 = vunpack.c.l.s4 1966171168
      %v2160 = vunpack.c.0.s8 %v2159
      %v2161 = vlaneseq
      %v2162 = vshrl.u32 %v2161, 7
      %v2163 = vsub.s32 %v2160, %v2162
      %v2164 = vrot.slane %v1303, %v2163
      %v2166 = vunpack.c.l.s4 1966171168
      %v2167 = vunpack.c.0.s8 %v2166
      %v2168 = vlaneseq
      %v2169 = vshrl.u32 %v2168, 7
      %v2170 = vsub.s32 %v2167, %v2169
      %v2171 = vrot.slane %v2164, %v2170
      %v2173 = vunpack.c.l.s4 1966171168
      %v2174 = vunpack.c.0.s8 %v2173
      %v2175 = vlaneseq
      %v2176 = vshrl.u32 %v2175, 7
      %v2177 = vsub.s32 %v2174, %v2176
      %v2178 = vrot.slane %v1376, %v2177
      %v2180 = vunpack.c.l.s4 1966171168
      %v2181 = vunpack.c.0.s8 %v2180
      %v2182 = vlaneseq
      %v2183 = vshrl.u32 %v2182, 7
      %v2184 = vsub.s32 %v2181, %v2183
      %v2185 = vrot.slane %v2178, %v2184
      %v2187 = vunpack.c.l.s4 1966171168
      %v2188 = vunpack.c.0.s8 %v2187
      %v2189 = vlaneseq
      %v2190 = vshrl.u32 %v2189, 7
      %v2191 = vsub.s32 %v2188, %v2190
      %v2192 = vrot.slane %v1390, %v2191
      %v2194 = vunpack.c.l.s4 1966171168
      %v2195 = vunpack.c.0.s8 %v2194
      %v2196 = vlaneseq
      %v2197 = vshrl.u32 %v2196, 7
      %v2198 = vsub.s32 %v2195, %v2197
      %v2199 = vrot.slane %v2192, %v2198
      %v2201 = vunpack.c.l.s4 1966171168
      %v2202 = vunpack.c.0.s8 %v2201
      %v2203 = vlaneseq
      %v2204 = vshrl.u32 %v2203, 7
      %v2205 = vsub.s32 %v2202, %v2204
      %v2206 = vrot.slane %v1398, %v2205
      %v2208 = vunpack.c.l.s4 1966171168
      %v2209 = vunpack.c.0.s8 %v2208
      %v2210 = vlaneseq
      %v2211 = vshrl.u32 %v2210, 7
      %v2212 = vsub.s32 %v2209, %v2211
      %v2213 = vrot.slane %v2206, %v2212
      %v2215 = vunpack.c.l.s4 1966171168
      %v2216 = vunpack.c.0.s8 %v2215
      %v2217 = vlaneseq
      %v2218 = vshrl.u32 %v2217, 7
      %v2219 = vsub.s32 %v2216, %v2218
      %v2220 = vrot.slane %v1400, %v2219
      %v2222 = vunpack.c.l.s4 1966171168
      %v2223 = vunpack.c.0.s8 %v2222
      %v2224 = vlaneseq
      %v2225 = vshrl.u32 %v2224, 7
      %v2226 = vsub.s32 %v2223, %v2225
      %v2227 = vrot.slane %v2220, %v2226
      %v2229 = vunpack.c.l.s4 1966171168
      %v2230 = vunpack.c.0.s8 %v2229
      %v2231 = vlaneseq
      %v2232 = vshrl.u32 %v2231, 7
      %v2233 = vsub.s32 %v2230, %v2232
      %v2234 = vrot.slane %v1383, %v2233
      %v2236 = vunpack.c.l.s4 1966171168
      %v2237 = vunpack.c.0.s8 %v2236
      %v2238 = vlaneseq
      %v2239 = vshrl.u32 %v2238, 7
      %v2240 = vsub.s32 %v2237, %v2239
      %v2241 = vrot.slane %v2234, %v2240
      %v2243 = vunpack.c.l.s4 1966171168
      %v2244 = vunpack.c.0.s8 %v2243
      %v2245 = vlaneseq
      %v2246 = vshrl.u32 %v2245, 7
      %v2247 = vsub.s32 %v2244, %v2246
      %v2248 = vrot.slane %v1397, %v2247
      %v2250 = vunpack.c.l.s4 1966171168
      %v2251 = vunpack.c.0.s8 %v2250
      %v2252 = vlaneseq
      %v2253 = vshrl.u32 %v2252, 7
      %v2254 = vsub.s32 %v2251, %v2253
      %v2255 = vrot.slane %v2248, %v2254
      %v2257 = vunpack.c.l.s4 1966171168
      %v2258 = vunpack.c.0.s8 %v2257
      %v2259 = vlaneseq
      %v2260 = vshrl.u32 %v2259, 7
      %v2261 = vsub.s32 %v2258, %v2260
      %v2262 = vrot.slane %v1399, %v2261
      %v2264 = vunpack.c.l.s4 1966171168
      %v2265 = vunpack.c.0.s8 %v2264
      %v2266 = vlaneseq
      %v2267 = vshrl.u32 %v2266, 7
      %v2268 = vsub.s32 %v2265, %v2267
      %v2269 = vrot.slane %v2262, %v2268
      %v2271 = vunpack.c.l.s4 1966171168
      %v2272 = vunpack.c.0.s8 %v2271
      %v2273 = vlaneseq
      %v2274 = vshrl.u32 %v2273, 7
      %v2275 = vsub.s32 %v2272, %v2274
      %v2276 = vrot.slane %v1401, %v2275
      %v2278 = vunpack.c.l.s4 1966171168
      %v2279 = vunpack.c.0.s8 %v2278
      %v2280 = vlaneseq
      %v2281 = vshrl.u32 %v2280, 7
      %v2282 = vsub.s32 %v2279, %v2281
      %v2283 = vrot.slane %v2276, %v2282
      %v2285 = vunpack.c.l.s4 1966171168
      %v2286 = vunpack.c.0.s8 %v2285
      %v2287 = vlaneseq
      %v2288 = vshrl.u32 %v2287, 7
      %v2289 = vsub.s32 %v2286, %v2288
      %v2290 = vrot.slane %v1474, %v2289
      %v2292 = vunpack.c.l.s4 1966171168
      %v2293 = vunpack.c.0.s8 %v2292
      %v2294 = vlaneseq
      %v2295 = vshrl.u32 %v2294, 7
      %v2296 = vsub.s32 %v2293, %v2295
      %v2297 = vrot.slane %v2290, %v2296
      %v2299 = vunpack.c.l.s4 1966171168
      %v2300 = vunpack.c.0.s8 %v2299
      %v2301 = vlaneseq
      %v2302 = vshrl.u32 %v2301, 7
      %v2303 = vsub.s32 %v2300, %v2302
      %v2304 = vrot.slane %v1488, %v2303
      %v2306 = vunpack.c.l.s4 1966171168
      %v2307 = vunpack.c.0.s8 %v2306
      %v2308 = vlaneseq
      %v2309 = vshrl.u32 %v2308, 7
      %v2310 = vsub.s32 %v2307, %v2309
      %v2311 = vrot.slane %v2304, %v2310
      %v2313 = vunpack.c.l.s4 1966171168
      %v2314 = vunpack.c.0.s8 %v2313
      %v2315 = vlaneseq
      %v2316 = vshrl.u32 %v2315, 7
      %v2317 = vsub.s32 %v2314, %v2316
      %v2318 = vrot.slane %v1496, %v2317
      %v2320 = vunpack.c.l.s4 1966171168
      %v2321 = vunpack.c.0.s8 %v2320
      %v2322 = vlaneseq
      %v2323 = vshrl.u32 %v2322, 7
      %v2324 = vsub.s32 %v2321, %v2323
      %v2325 = vrot.slane %v2318, %v2324
      %v2327 = vunpack.c.l.s4 1966171168
      %v2328 = vunpack.c.0.s8 %v2327
      %v2329 = vlaneseq
      %v2330 = vshrl.u32 %v2329, 7
      %v2331 = vsub.s32 %v2328, %v2330
      %v2332 = vrot.slane %v1498, %v2331
      %v2334 = vunpack.c.l.s4 1966171168
      %v2335 = vunpack.c.0.s8 %v2334
      %v2336 = vlaneseq
      %v2337 = vshrl.u32 %v2336, 7
      %v2338 = vsub.s32 %v2335, %v2337
      %v2339 = vrot.slane %v2332, %v2338
      %v2341 = vunpack.c.l.s4 1966171168
      %v2342 = vunpack.c.0.s8 %v2341
      %v2343 = vlaneseq
      %v2344 = vshrl.u32 %v2343, 7
      %v2345 = vsub.s32 %v2342, %v2344
      %v2346 = vrot.slane %v1481, %v2345
      %v2348 = vunpack.c.l.s4 1966171168
      %v2349 = vunpack.c.0.s8 %v2348
      %v2350 = vlaneseq
      %v2351 = vshrl.u32 %v2350, 7
      %v2352 = vsub.s32 %v2349, %v2351
      %v2353 = vrot.slane %v2346, %v2352
      %v2355 = vunpack.c.l.s4 1966171168
      %v2356 = vunpack.c.0.s8 %v2355
      %v2357 = vlaneseq
      %v2358 = vshrl.u32 %v2357, 7
      %v2359 = vsub.s32 %v2356, %v2358
      %v2360 = vrot.slane %v1495, %v2359
      %v2362 = vunpack.c.l.s4 1966171168
      %v2363 = vunpack.c.0.s8 %v2362
      %v2364 = vlaneseq
      %v2365 = vshrl.u32 %v2364, 7
      %v2366 = vsub.s32 %v2363, %v2365
      %v2367 = vrot.slane %v2360, %v2366
      %v2369 = vunpack.c.l.s4 1966171168
      %v2370 = vunpack.c.0.s8 %v2369
      %v2371 = vlaneseq
      %v2372 = vshrl.u32 %v2371, 7
      %v2373 = vsub.s32 %v2370, %v2372
      %v2374 = vrot.slane %v1497, %v2373
      %v2376 = vunpack.c.l.s4 1966171168
      %v2377 = vunpack.c.0.s8 %v2376
      %v2378 = vlaneseq
      %v2379 = vshrl.u32 %v2378, 7
      %v2380 = vsub.s32 %v2377, %v2379
      %v2381 = vrot.slane %v2374, %v2380
      %v2383 = vunpack.c.l.s4 1966171168
      %v2384 = vunpack.c.0.s8 %v2383
      %v2385 = vlaneseq
      %v2386 = vshrl.u32 %v2385, 7
      %v2387 = vsub.s32 %v2384, %v2386
      %v2388 = vrot.slane %v1499, %v2387
      %v2390 = vunpack.c.l.s4 1966171168
      %v2391 = vunpack.c.0.s8 %v2390
      %v2392 = vlaneseq
      %v2393 = vshrl.u32 %v2392, 7
      %v2394 = vsub.s32 %v2391, %v2393
      %v2395 = vrot.slane %v2388, %v2394
      %v2396 = vunpack.c.l.b16 %v1513
      %v2397 = vunpack.c.l.b16 %v1527
      %v2398 = vunpack.c.l.b16 %v1541
      %v2399 = vunpack.c.l.b16 %v1555
      %v2400 = vunpack.c.l.b16 %v1569
      %v2401 = vunpack.c.l.b16 %v1583
      %v2402 = vunpack.c.l.b16 %v1597
      %v2403 = vunpack.c.l.b16 %v1611
      %v2404 = vunpack.c.l.b16 %v1625
      %v2405 = vunpack.c.l.b16 %v1639
      %v2406 = vunpack.c.l.b16 %v1653
      %v2407 = vunpack.c.l.b16 %v1667
      %v2408 = vunpack.c.l.b16 %v1681
      %v2409 = vunpack.c.l.b16 %v1695
      %v2410 = vunpack.c.l.b16 %v1709
      %v2411 = vunpack.c.l.b16 %v1723
      %v2412 = vunpack.c.l.b16 %v1737
      %v2413 = vunpack.c.l.b16 %v1751
      %v2414 = vunpack.c.l.b16 %v1765
      %v2415 = vunpack.c.l.b16 %v1779
      %v2416 = vunpack.c.l.b16 %v1793
      %v2417 = vunpack.c.l.b16 %v1807
      %v2418 = vunpack.c.l.b16 %v1821
      %v2419 = vunpack.c.l.b16 %v1835
      %v2420 = vunpack.c.l.b16 %v1849
      %v2421 = vunpack.c.l.b16 %v1863
      %v2422 = vunpack.c.l.b16 %v1877
      %v2423 = vunpack.c.l.b16 %v1891
      %v2424 = vunpack.c.l.b16 %v1905
      %v2425 = vunpack.c.l.b16 %v1919
      %v2426 = vunpack.c.l.b16 %v1933
      %v2427 = vunpack.c.l.b16 %v1947
      %v2428 = vunpack.c.l.b16 %v1961
      %v2429 = vunpack.c.l.b16 %v1975
      %v2430 = vunpack.c.l.b16 %v1989
      %v2431 = vunpack.c.l.b16 %v2003
      %v2432 = vunpack.c.l.b16 %v2017
      %v2433 = vunpack.c.l.b16 %v2031
      %v2434 = vunpack.c.l.b16 %v2045
      %v2435 = vunpack.c.l.b16 %v2059
      %v2436 = vunpack.c.l.b16 %v2073
      %v2437 = vunpack.c.l.b16 %v2087
      %v2438 = vunpack.c.l.b16 %v2101
      %v2439 = vunpack.c.l.b16 %v2115
      %v2440 = vunpack.c.l.b16 %v2129
      %v2441 = vunpack.c.l.b16 %v2143
      %v2442 = vunpack.c.l.b16 %v2157
      %v2443 = vunpack.c.l.b16 %v2171
      %v2444 = vunpack.c.l.b16 %v2185
      %v2445 = vunpack.c.l.b16 %v2199
      %v2446 = vunpack.c.l.b16 %v2213
      %v2447 = vunpack.c.l.b16 %v2227
      %v2448 = vunpack.c.l.b16 %v2241
      %v2449 = vunpack.c.l.b16 %v2255
      %v2450 = vunpack.c.l.b16 %v2269
      %v2451 = vunpack.c.l.b16 %v2283
      %v2452 = vunpack.c.l.b16 %v2297
      %v2453 = vunpack.c.l.b16 %v2311
      %v2454 = vunpack.c.l.b16 %v2325
      %v2455 = vunpack.c.l.b16 %v2339
      %v2456 = vunpack.c.l.b16 %v2353
      %v2457 = vunpack.c.l.b16 %v2367
      %v2458 = vunpack.c.l.b16 %v2381
      %v2459 = vunpack.c.l.b16 %v2395
      %v2460 = vrot.slane %v2396, 1
      %vm2461 = vcmask 1041409
      %v2462 = vsel %vm2461, %v2397, %v2460
      %v2463 = vrot.slane %v2398, 7
      %vm2464 = vcmask 1042434
      %v2465 = vsel %vm2464, %v2463, %v2462
      %v2466 = vrot.slane %v2399, 6
      %vm2467 = vcmask 1043459
      %v2468 = vsel %vm2467, %v2466, %v2465
      %v2469 = vrot.slane %v2400, 5
      %vm2470 = vcmask 1044484
      %v2471 = vsel %vm2470, %v2469, %v2468
      %v2472 = vrot.slane %v2401, 4
      %vm2473 = vcmask 1045509
      %v2474 = vsel %vm2473, %v2472, %v2471
      %v2475 = vrot.slane %v2402, 3
      %vm2476 = vcmask 1046534
      %v2477 = vsel %vm2476, %v2475, %v2474
      %v2478 = vrot.slane %v2403, 2
      %vm2479 = vcmask 1047559
      %v2480 = vsel %vm2479, %v2478, %v2477
      %v2481 = vrot.slane %v2404, 1
      %v2482 = vsel %vm2461, %v2405, %v2481
      %v2483 = vrot.slane %v2406, 7
      %v2484 = vsel %vm2464, %v2483, %v2482
      %v2485 = vrot.slane %v2407, 6
      %v2486 = vsel %vm2467, %v2485, %v2484
      %v2487 = vrot.slane %v2408, 5
      %v2488 = vsel %vm2470, %v2487, %v2486
      %v2489 = vrot.slane %v2409, 4
      %v2490 = vsel %vm2473, %v2489, %v2488
      %v2491 = vrot.slane %v2410, 3
      %v2492 = vsel %vm2476, %v2491, %v2490
      %v2493 = vrot.slane %v2411, 2
      %v2494 = vsel %vm2479, %v2493, %v2492
      %v2495 = vrot.slane %v2412, 1
      %v2496 = vsel %vm2461, %v2413, %v2495
      %v2497 = vrot.slane %v2414, 7
      %v2498 = vsel %vm2464, %v2497, %v2496
      %v2499 = vrot.slane %v2415, 6
      %v2500 = vsel %vm2467, %v2499, %v2498
      %v2501 = vrot.slane %v2416, 5
      %v2502 = vsel %vm2470, %v2501, %v2500
      %v2503 = vrot.slane %v2417, 4
      %v2504 = vsel %vm2473, %v2503, %v2502
      %v2505 = vrot.slane %v2418, 3
      %v2506 = vsel %vm2476, %v2505, %v2504
      %v2507 = vrot.slane %v2419, 2
      %v2508 = vsel %vm2479, %v2507, %v2506
      %v2509 = vrot.slane %v2420, 1
      %v2510 = vsel %vm2461, %v2421, %v2509
      %v2511 = vrot.slane %v2422, 7
      %v2512 = vsel %vm2464, %v2511, %v2510
      %v2513 = vrot.slane %v2423, 6
      %v2514 = vsel %vm2467, %v2513, %v2512
      %v2515 = vrot.slane %v2424, 5
      %v2516 = vsel %vm2470, %v2515, %v2514
      %v2517 = vrot.slane %v2425, 4
      %v2518 = vsel %vm2473, %v2517, %v2516
      %v2519 = vrot.slane %v2426, 3
      %v2520 = vsel %vm2476, %v2519, %v2518
      %v2521 = vrot.slane %v2427, 2
      %v2522 = vsel %vm2479, %v2521, %v2520
      %v2523 = vrot.slane %v2428, 1
      %v2524 = vsel %vm2461, %v2429, %v2523
      %v2525 = vrot.slane %v2430, 7
      %v2526 = vsel %vm2464, %v2525, %v2524
      %v2527 = vrot.slane %v2431, 6
      %v2528 = vsel %vm2467, %v2527, %v2526
      %v2529 = vrot.slane %v2432, 5
      %v2530 = vsel %vm2470, %v2529, %v2528
      %v2531 = vrot.slane %v2433, 4
      %v2532 = vsel %vm2473, %v2531, %v2530
      %v2533 = vrot.slane %v2434, 3
      %v2534 = vsel %vm2476, %v2533, %v2532
      %v2535 = vrot.slane %v2435, 2
      %v2536 = vsel %vm2479, %v2535, %v2534
      %v2537 = vrot.slane %v2436, 1
      %v2538 = vsel %vm2461, %v2437, %v2537
      %v2539 = vrot.slane %v2438, 7
      %v2540 = vsel %vm2464, %v2539, %v2538
      %v2541 = vrot.slane %v2439, 6
      %v2542 = vsel %vm2467, %v2541, %v2540
      %v2543 = vrot.slane %v2440, 5
      %v2544 = vsel %vm2470, %v2543, %v2542
      %v2545 = vrot.slane %v2441, 4
      %v2546 = vsel %vm2473, %v2545, %v2544
      %v2547 = vrot.slane %v2442, 3
      %v2548 = vsel %vm2476, %v2547, %v2546
      %v2549 = vrot.slane %v2443, 2
      %v2550 = vsel %vm2479, %v2549, %v2548
      %v2551 = vrot.slane %v2444, 1
      %v2552 = vsel %vm2461, %v2445, %v2551
      %v2553 = vrot.slane %v2446, 7
      %v2554 = vsel %vm2464, %v2553, %v2552
      %v2555 = vrot.slane %v2447, 6
      %v2556 = vsel %vm2467, %v2555, %v2554
      %v2557 = vrot.slane %v2448, 5
      %v2558 = vsel %vm2470, %v2557, %v2556
      %v2559 = vrot.slane %v2449, 4
      %v2560 = vsel %vm2473, %v2559, %v2558
      %v2561 = vrot.slane %v2450, 3
      %v2562 = vsel %vm2476, %v2561, %v2560
      %v2563 = vrot.slane %v2451, 2
      %v2564 = vsel %vm2479, %v2563, %v2562
      %v2565 = vrot.slane %v2452, 1
      %v2566 = vsel %vm2461, %v2453, %v2565
      %v2567 = vrot.slane %v2454, 7
      %v2568 = vsel %vm2464, %v2567, %v2566
      %v2569 = vrot.slane %v2455, 6
      %v2570 = vsel %vm2467, %v2569, %v2568
      %v2571 = vrot.slane %v2456, 5
      %v2572 = vsel %vm2470, %v2571, %v2570
      %v2573 = vrot.slane %v2457, 4
      %v2574 = vsel %vm2473, %v2573, %v2572
      %v2575 = vrot.slane %v2458, 3
      %v2576 = vsel %vm2476, %v2575, %v2574
      %v2577 = vrot.slane %v2459, 2
      %v2578 = vsel %vm2479, %v2577, %v2576
      %v2579 = vpack.c.b16 %v2480, %v2480
      %v2580 = vpack.c.b16 %v2494, %v2494
      %v2581 = vpack.c.b16 %v2508, %v2508
      %v2582 = vpack.c.b16 %v2522, %v2522
      %v2583 = vpack.c.b16 %v2536, %v2536
      %v2584 = vpack.c.b16 %v2550, %v2550
      %v2585 = vpack.c.b16 %v2564, %v2564
      %v2586 = vpack.c.b16 %v2578, %v2578
      %v2588 = vshrl.u32 0, 16
      %v2590 = vrot.slane %v2588, 7
      %v2591 = vshll.u32 0, 16
      %v2593 = vor.u32 %v2590, %v2591
      %v2595 = vshrl.u32 %v2579, 16
      %v2597 = vrot.slane %v2595, 7
      %v2598 = vshll.u32 %v2579, 16
      %v2600 = vor.u32 %v2597, %v2598
      %v2602 = vshrl.u32 %v2580, 16
      %v2604 = vrot.slane %v2602, 7
      %v2605 = vshll.u32 %v2580, 16
      %v2607 = vor.u32 %v2604, %v2605
      %v2609 = vshrl.u32 %v2581, 16
      %v2611 = vrot.slane %v2609, 7
      %v2612 = vshll.u32 %v2581, 16
      %v2614 = vor.u32 %v2611, %v2612
      %v2616 = vshrl.u32 %v2582, 16
      %v2618 = vrot.slane %v2616, 7
      %v2619 = vshll.u32 %v2582, 16
      %v2621 = vor.u32 %v2618, %v2619
      %v2623 = vshrl.u32 %v2583, 16
      %v2625 = vrot.slane %v2623, 7
      %v2626 = vshll.u32 %v2583, 16
      %v2628 = vor.u32 %v2625, %v2626
      %v2630 = vshrl.u32 %v2584, 16
      %v2632 = vrot.slane %v2630, 7
      %v2633 = vshll.u32 %v2584, 16
      %v2635 = vor.u32 %v2632, %v2633
      %v2637 = vshrl.u32 %v2585, 16
      %v2639 = vrot.slane %v2637, 7
      %v2640 = vshll.u32 %v2585, 16
      %v2642 = vor.u32 %v2639, %v2640
      %v2644 = vshrl.u32 %v2586, 16
      %v2646 = vrot.slane %v2644, 7
      %v2647 = vshll.u32 %v2586, 16
      %v2649 = vor.u32 %v2646, %v2647
      %vm2659 = vcmask 1040384
      %vm2660 = vsmask.f32 256
      %vm2661 = vmand %vm2659, %vm2660
      %v2662 = vsel %vm2661, 0, %v2593
      %v2663 = vsel %vm2661, 0, %v2600
      %v2664 = vsel %vm2661, 0, %v2607
      %v2665 = vsel %vm2661, 0, %v2614
      %v2666 = vsel %vm2661, 0, %v2621
      %v2667 = vsel %vm2661, 0, %v2628
      %v2668 = vsel %vm2661, 0, %v2635
      %v2669 = vsel %vm2661, 0, %v2642
      %v2670 = vsel %vm2661, 0, %v2649
      %v2671 = vrot.slane %v2397, 7
      %v2672 = vsel %vm2461, %v2671, %v2396
      %v2673 = vrot.slane %v2398, 6
      %v2674 = vsel %vm2464, %v2673, %v2672
      %v2675 = vrot.slane %v2399, 5
      %v2676 = vsel %vm2467, %v2675, %v2674
      %v2677 = vrot.slane %v2400, 4
      %v2678 = vsel %vm2470, %v2677, %v2676
      %v2679 = vrot.slane %v2401, 3
      %v2680 = vsel %vm2473, %v2679, %v2678
      %v2681 = vrot.slane %v2402, 2
      %v2682 = vsel %vm2476, %v2681, %v2680
      %v2683 = vrot.slane %v2403, 1
      %v2684 = vsel %vm2479, %v2683, %v2682
      %v2685 = vrot.slane %v2405, 7
      %v2686 = vsel %vm2461, %v2685, %v2404
      %v2687 = vrot.slane %v2406, 6
      %v2688 = vsel %vm2464, %v2687, %v2686
      %v2689 = vrot.slane %v2407, 5
      %v2690 = vsel %vm2467, %v2689, %v2688
      %v2691 = vrot.slane %v2408, 4
      %v2692 = vsel %vm2470, %v2691, %v2690
      %v2693 = vrot.slane %v2409, 3
      %v2694 = vsel %vm2473, %v2693, %v2692
      %v2695 = vrot.slane %v2410, 2
      %v2696 = vsel %vm2476, %v2695, %v2694
      %v2697 = vrot.slane %v2411, 1
      %v2698 = vsel %vm2479, %v2697, %v2696
      %v2699 = vrot.slane %v2413, 7
      %v2700 = vsel %vm2461, %v2699, %v2412
      %v2701 = vrot.slane %v2414, 6
      %v2702 = vsel %vm2464, %v2701, %v2700
      %v2703 = vrot.slane %v2415, 5
      %v2704 = vsel %vm2467, %v2703, %v2702
      %v2705 = vrot.slane %v2416, 4
      %v2706 = vsel %vm2470, %v2705, %v2704
      %v2707 = vrot.slane %v2417, 3
      %v2708 = vsel %vm2473, %v2707, %v2706
      %v2709 = vrot.slane %v2418, 2
      %v2710 = vsel %vm2476, %v2709, %v2708
      %v2711 = vrot.slane %v2419, 1
      %v2712 = vsel %vm2479, %v2711, %v2710
      %v2713 = vrot.slane %v2421, 7
      %v2714 = vsel %vm2461, %v2713, %v2420
      %v2715 = vrot.slane %v2422, 6
      %v2716 = vsel %vm2464, %v2715, %v2714
      %v2717 = vrot.slane %v2423, 5
      %v2718 = vsel %vm2467, %v2717, %v2716
      %v2719 = vrot.slane %v2424, 4
      %v2720 = vsel %vm2470, %v2719, %v2718
      %v2721 = vrot.slane %v2425, 3
      %v2722 = vsel %vm2473, %v2721, %v2720
      %v2723 = vrot.slane %v2426, 2
      %v2724 = vsel %vm2476, %v2723, %v2722
      %v2725 = vrot.slane %v2427, 1
      %v2726 = vsel %vm2479, %v2725, %v2724
      %v2727 = vrot.slane %v2429, 7
      %v2728 = vsel %vm2461, %v2727, %v2428
      %v2729 = vrot.slane %v2430, 6
      %v2730 = vsel %vm2464, %v2729, %v2728
      %v2731 = vrot.slane %v2431, 5
      %v2732 = vsel %vm2467, %v2731, %v2730
      %v2733 = vrot.slane %v2432, 4
      %v2734 = vsel %vm2470, %v2733, %v2732
      %v2735 = vrot.slane %v2433, 3
      %v2736 = vsel %vm2473, %v2735, %v2734
      %v2737 = vrot.slane %v2434, 2
      %v2738 = vsel %vm2476, %v2737, %v2736
      %v2739 = vrot.slane %v2435, 1
      %v2740 = vsel %vm2479, %v2739, %v2738
      %v2741 = vrot.slane %v2437, 7
      %v2742 = vsel %vm2461, %v2741, %v2436
      %v2743 = vrot.slane %v2438, 6
      %v2744 = vsel %vm2464, %v2743, %v2742
      %v2745 = vrot.slane %v2439, 5
      %v2746 = vsel %vm2467, %v2745, %v2744
      %v2747 = vrot.slane %v2440, 4
      %v2748 = vsel %vm2470, %v2747, %v2746
      %v2749 = vrot.slane %v2441, 3
      %v2750 = vsel %vm2473, %v2749, %v2748
      %v2751 = vrot.slane %v2442, 2
      %v2752 = vsel %vm2476, %v2751, %v2750
      %v2753 = vrot.slane %v2443, 1
      %v2754 = vsel %vm2479, %v2753, %v2752
      %v2755 = vrot.slane %v2445, 7
      %v2756 = vsel %vm2461, %v2755, %v2444
      %v2757 = vrot.slane %v2446, 6
      %v2758 = vsel %vm2464, %v2757, %v2756
      %v2759 = vrot.slane %v2447, 5
      %v2760 = vsel %vm2467, %v2759, %v2758
      %v2761 = vrot.slane %v2448, 4
      %v2762 = vsel %vm2470, %v2761, %v2760
      %v2763 = vrot.slane %v2449, 3
      %v2764 = vsel %vm2473, %v2763, %v2762
      %v2765 = vrot.slane %v2450, 2
      %v2766 = vsel %vm2476, %v2765, %v2764
      %v2767 = vrot.slane %v2451, 1
      %v2768 = vsel %vm2479, %v2767, %v2766
      %v2769 = vrot.slane %v2453, 7
      %v2770 = vsel %vm2461, %v2769, %v2452
      %v2771 = vrot.slane %v2454, 6
      %v2772 = vsel %vm2464, %v2771, %v2770
      %v2773 = vrot.slane %v2455, 5
      %v2774 = vsel %vm2467, %v2773, %v2772
      %v2775 = vrot.slane %v2456, 4
      %v2776 = vsel %vm2470, %v2775, %v2774
      %v2777 = vrot.slane %v2457, 3
      %v2778 = vsel %vm2473, %v2777, %v2776
      %v2779 = vrot.slane %v2458, 2
      %v2780 = vsel %vm2476, %v2779, %v2778
      %v2781 = vrot.slane %v2459, 1
      %v2782 = vsel %vm2479, %v2781, %v2780
      %v2783 = vpack.c.b16 %v2684, %v2684
      %v2784 = vpack.c.b16 %v2698, %v2698
      %v2785 = vpack.c.b16 %v2712, %v2712
      %v2786 = vpack.c.b16 %v2726, %v2726
      %v2787 = vpack.c.b16 %v2740, %v2740
      %v2788 = vpack.c.b16 %v2754, %v2754
      %v2789 = vpack.c.b16 %v2768, %v2768
      %v2790 = vpack.c.b16 %v2782, %v2782
      %vm2791 = vcmask 1043456
      %v2793 = vsel %vm2791, %v2783, 0
      %v2795 = vsel %vm2791, %v2784, 0
      %v2797 = vsel %vm2791, %v2785, 0
      %v2799 = vsel %vm2791, %v2786, 0
      %v2801 = vsel %vm2791, %v2787, 0
      %v2803 = vsel %vm2791, %v2788, 0
      %v2805 = vsel %vm2791, %v2789, 0
      %v2807 = vsel %vm2791, %v2790, 0
      %v2810 = vunpack.c.l.s4 1966171168
      %v2811 = vunpack.c.0.s8 %v2810
      %v2812 = vlaneseq
      %v2813 = vshrl.u32 %v2812, 7
      %v2814 = vsub.s32 %v2811, %v2813
      %v2815 = vrot.slane %v739, %v2814
      %v2817 = vunpack.c.l.s4 1966171168
      %v2818 = vunpack.c.0.s8 %v2817
      %v2819 = vlaneseq
      %v2820 = vshrl.u32 %v2819, 7
      %v2821 = vsub.s32 %v2818, %v2820
      %v2822 = vrot.slane %v2815, %v2821
      %v2824 = vunpack.c.l.s4 1966171168
      %v2825 = vunpack.c.0.s8 %v2824
      %v2826 = vlaneseq
      %v2827 = vshrl.u32 %v2826, 7
      %v2828 = vsub.s32 %v2825, %v2827
      %v2829 = vrot.slane %v753, %v2828
      %v2831 = vunpack.c.l.s4 1966171168
      %v2832 = vunpack.c.0.s8 %v2831
      %v2833 = vlaneseq
      %v2834 = vshrl.u32 %v2833, 7
      %v2835 = vsub.s32 %v2832, %v2834
      %v2836 = vrot.slane %v2829, %v2835
      %v2838 = vunpack.c.l.s4 1966171168
      %v2839 = vunpack.c.0.s8 %v2838
      %v2840 = vlaneseq
      %v2841 = vshrl.u32 %v2840, 7
      %v2842 = vsub.s32 %v2839, %v2841
      %v2843 = vrot.slane %v761, %v2842
      %v2845 = vunpack.c.l.s4 1966171168
      %v2846 = vunpack.c.0.s8 %v2845
      %v2847 = vlaneseq
      %v2848 = vshrl.u32 %v2847, 7
      %v2849 = vsub.s32 %v2846, %v2848
      %v2850 = vrot.slane %v2843, %v2849
      %v2852 = vunpack.c.l.s4 1966171168
      %v2853 = vunpack.c.0.s8 %v2852
      %v2854 = vlaneseq
      %v2855 = vshrl.u32 %v2854, 7
      %v2856 = vsub.s32 %v2853, %v2855
      %v2857 = vrot.slane %v763, %v2856
      %v2859 = vunpack.c.l.s4 1966171168
      %v2860 = vunpack.c.0.s8 %v2859
      %v2861 = vlaneseq
      %v2862 = vshrl.u32 %v2861, 7
      %v2863 = vsub.s32 %v2860, %v2862
      %v2864 = vrot.slane %v2857, %v2863
      %v2866 = vunpack.c.l.s4 1966171168
      %v2867 = vunpack.c.0.s8 %v2866
      %v2868 = vlaneseq
      %v2869 = vshrl.u32 %v2868, 7
      %v2870 = vsub.s32 %v2867, %v2869
      %v2871 = vrot.slane %v746, %v2870
      %v2873 = vunpack.c.l.s4 1966171168
      %v2874 = vunpack.c.0.s8 %v2873
      %v2875 = vlaneseq
      %v2876 = vshrl.u32 %v2875, 7
      %v2877 = vsub.s32 %v2874, %v2876
      %v2878 = vrot.slane %v2871, %v2877
      %v2880 = vunpack.c.l.s4 1966171168
      %v2881 = vunpack.c.0.s8 %v2880
      %v2882 = vlaneseq
      %v2883 = vshrl.u32 %v2882, 7
      %v2884 = vsub.s32 %v2881, %v2883
      %v2885 = vrot.slane %v760, %v2884
      %v2887 = vunpack.c.l.s4 1966171168
      %v2888 = vunpack.c.0.s8 %v2887
      %v2889 = vlaneseq
      %v2890 = vshrl.u32 %v2889, 7
      %v2891 = vsub.s32 %v2888, %v2890
      %v2892 = vrot.slane %v2885, %v2891
      %v2894 = vunpack.c.l.s4 1966171168
      %v2895 = vunpack.c.0.s8 %v2894
      %v2896 = vlaneseq
      %v2897 = vshrl.u32 %v2896, 7
      %v2898 = vsub.s32 %v2895, %v2897
      %v2899 = vrot.slane %v762, %v2898
      %v2901 = vunpack.c.l.s4 1966171168
      %v2902 = vunpack.c.0.s8 %v2901
      %v2903 = vlaneseq
      %v2904 = vshrl.u32 %v2903, 7
      %v2905 = vsub.s32 %v2902, %v2904
      %v2906 = vrot.slane %v2899, %v2905
      %v2908 = vunpack.c.l.s4 1966171168
      %v2909 = vunpack.c.0.s8 %v2908
      %v2910 = vlaneseq
      %v2911 = vshrl.u32 %v2910, 7
      %v2912 = vsub.s32 %v2909, %v2911
      %v2913 = vrot.slane %v764, %v2912
      %v2915 = vunpack.c.l.s4 1966171168
      %v2916 = vunpack.c.0.s8 %v2915
      %v2917 = vlaneseq
      %v2918 = vshrl.u32 %v2917, 7
      %v2919 = vsub.s32 %v2916, %v2918
      %v2920 = vrot.slane %v2913, %v2919
      %v2922 = vunpack.c.l.s4 1966171168
      %v2923 = vunpack.c.0.s8 %v2922
      %v2924 = vlaneseq
      %v2925 = vshrl.u32 %v2924, 7
      %v2926 = vsub.s32 %v2923, %v2925
      %v2927 = vrot.slane %v837, %v2926
      %v2929 = vunpack.c.l.s4 1966171168
      %v2930 = vunpack.c.0.s8 %v2929
      %v2931 = vlaneseq
      %v2932 = vshrl.u32 %v2931, 7
      %v2933 = vsub.s32 %v2930, %v2932
      %v2934 = vrot.slane %v2927, %v2933
      %v2936 = vunpack.c.l.s4 1966171168
      %v2937 = vunpack.c.0.s8 %v2936
      %v2938 = vlaneseq
      %v2939 = vshrl.u32 %v2938, 7
      %v2940 = vsub.s32 %v2937, %v2939
      %v2941 = vrot.slane %v851, %v2940
      %v2943 = vunpack.c.l.s4 1966171168
      %v2944 = vunpack.c.0.s8 %v2943
      %v2945 = vlaneseq
      %v2946 = vshrl.u32 %v2945, 7
      %v2947 = vsub.s32 %v2944, %v2946
      %v2948 = vrot.slane %v2941, %v2947
      %v2950 = vunpack.c.l.s4 1966171168
      %v2951 = vunpack.c.0.s8 %v2950
      %v2952 = vlaneseq
      %v2953 = vshrl.u32 %v2952, 7
      %v2954 = vsub.s32 %v2951, %v2953
      %v2955 = vrot.slane %v859, %v2954
      %v2957 = vunpack.c.l.s4 1966171168
      %v2958 = vunpack.c.0.s8 %v2957
      %v2959 = vlaneseq
      %v2960 = vshrl.u32 %v2959, 7
      %v2961 = vsub.s32 %v2958, %v2960
      %v2962 = vrot.slane %v2955, %v2961
      %v2964 = vunpack.c.l.s4 1966171168
      %v2965 = vunpack.c.0.s8 %v2964
      %v2966 = vlaneseq
      %v2967 = vshrl.u32 %v2966, 7
      %v2968 = vsub.s32 %v2965, %v2967
      %v2969 = vrot.slane %v861, %v2968
      %v2971 = vunpack.c.l.s4 1966171168
      %v2972 = vunpack.c.0.s8 %v2971
      %v2973 = vlaneseq
      %v2974 = vshrl.u32 %v2973, 7
      %v2975 = vsub.s32 %v2972, %v2974
      %v2976 = vrot.slane %v2969, %v2975
      %v2978 = vunpack.c.l.s4 1966171168
      %v2979 = vunpack.c.0.s8 %v2978
      %v2980 = vlaneseq
      %v2981 = vshrl.u32 %v2980, 7
      %v2982 = vsub.s32 %v2979, %v2981
      %v2983 = vrot.slane %v844, %v2982
      %v2985 = vunpack.c.l.s4 1966171168
      %v2986 = vunpack.c.0.s8 %v2985
      %v2987 = vlaneseq
      %v2988 = vshrl.u32 %v2987, 7
      %v2989 = vsub.s32 %v2986, %v2988
      %v2990 = vrot.slane %v2983, %v2989
      %v2992 = vunpack.c.l.s4 1966171168
      %v2993 = vunpack.c.0.s8 %v2992
      %v2994 = vlaneseq
      %v2995 = vshrl.u32 %v2994, 7
      %v2996 = vsub.s32 %v2993, %v2995
      %v2997 = vrot.slane %v858, %v2996
      %v2999 = vunpack.c.l.s4 1966171168
      %v3000 = vunpack.c.0.s8 %v2999
      %v3001 = vlaneseq
      %v3002 = vshrl.u32 %v3001, 7
      %v3003 = vsub.s32 %v3000, %v3002
      %v3004 = vrot.slane %v2997, %v3003
      %v3006 = vunpack.c.l.s4 1966171168
      %v3007 = vunpack.c.0.s8 %v3006
      %v3008 = vlaneseq
      %v3009 = vshrl.u32 %v3008, 7
      %v3010 = vsub.s32 %v3007, %v3009
      %v3011 = vrot.slane %v860, %v3010
      %v3013 = vunpack.c.l.s4 1966171168
      %v3014 = vunpack.c.0.s8 %v3013
      %v3015 = vlaneseq
      %v3016 = vshrl.u32 %v3015, 7
      %v3017 = vsub.s32 %v3014, %v3016
      %v3018 = vrot.slane %v3011, %v3017
      %v3020 = vunpack.c.l.s4 1966171168
      %v3021 = vunpack.c.0.s8 %v3020
      %v3022 = vlaneseq
      %v3023 = vshrl.u32 %v3022, 7
      %v3024 = vsub.s32 %v3021, %v3023
      %v3025 = vrot.slane %v862, %v3024
      %v3027 = vunpack.c.l.s4 1966171168
      %v3028 = vunpack.c.0.s8 %v3027
      %v3029 = vlaneseq
      %v3030 = vshrl.u32 %v3029, 7
      %v3031 = vsub.s32 %v3028, %v3030
      %v3032 = vrot.slane %v3025, %v3031
      %v3034 = vunpack.c.l.s4 1966171168
      %v3035 = vunpack.c.0.s8 %v3034
      %v3036 = vlaneseq
      %v3037 = vshrl.u32 %v3036, 7
      %v3038 = vsub.s32 %v3035, %v3037
      %v3039 = vrot.slane %v935, %v3038
      %v3041 = vunpack.c.l.s4 1966171168
      %v3042 = vunpack.c.0.s8 %v3041
      %v3043 = vlaneseq
      %v3044 = vshrl.u32 %v3043, 7
      %v3045 = vsub.s32 %v3042, %v3044
      %v3046 = vrot.slane %v3039, %v3045
      %v3048 = vunpack.c.l.s4 1966171168
      %v3049 = vunpack.c.0.s8 %v3048
      %v3050 = vlaneseq
      %v3051 = vshrl.u32 %v3050, 7
      %v3052 = vsub.s32 %v3049, %v3051
      %v3053 = vrot.slane %v949, %v3052
      %v3055 = vunpack.c.l.s4 1966171168
      %v3056 = vunpack.c.0.s8 %v3055
      %v3057 = vlaneseq
      %v3058 = vshrl.u32 %v3057, 7
      %v3059 = vsub.s32 %v3056, %v3058
      %v3060 = vrot.slane %v3053, %v3059
      %v3062 = vunpack.c.l.s4 1966171168
      %v3063 = vunpack.c.0.s8 %v3062
      %v3064 = vlaneseq
      %v3065 = vshrl.u32 %v3064, 7
      %v3066 = vsub.s32 %v3063, %v3065
      %v3067 = vrot.slane %v957, %v3066
      %v3069 = vunpack.c.l.s4 1966171168
      %v3070 = vunpack.c.0.s8 %v3069
      %v3071 = vlaneseq
      %v3072 = vshrl.u32 %v3071, 7
      %v3073 = vsub.s32 %v3070, %v3072
      %v3074 = vrot.slane %v3067, %v3073
      %v3076 = vunpack.c.l.s4 1966171168
      %v3077 = vunpack.c.0.s8 %v3076
      %v3078 = vlaneseq
      %v3079 = vshrl.u32 %v3078, 7
      %v3080 = vsub.s32 %v3077, %v3079
      %v3081 = vrot.slane %v959, %v3080
      %v3083 = vunpack.c.l.s4 1966171168
      %v3084 = vunpack.c.0.s8 %v3083
      %v3085 = vlaneseq
      %v3086 = vshrl.u32 %v3085, 7
      %v3087 = vsub.s32 %v3084, %v3086
      %v3088 = vrot.slane %v3081, %v3087
      %v3090 = vunpack.c.l.s4 1966171168
      %v3091 = vunpack.c.0.s8 %v3090
      %v3092 = vlaneseq
      %v3093 = vshrl.u32 %v3092, 7
      %v3094 = vsub.s32 %v3091, %v3093
      %v3095 = vrot.slane %v942, %v3094
      %v3097 = vunpack.c.l.s4 1966171168
      %v3098 = vunpack.c.0.s8 %v3097
      %v3099 = vlaneseq
      %v3100 = vshrl.u32 %v3099, 7
      %v3101 = vsub.s32 %v3098, %v3100
      %v3102 = vrot.slane %v3095, %v3101
      %v3104 = vunpack.c.l.s4 1966171168
      %v3105 = vunpack.c.0.s8 %v3104
      %v3106 = vlaneseq
      %v3107 = vshrl.u32 %v3106, 7
      %v3108 = vsub.s32 %v3105, %v3107
      %v3109 = vrot.slane %v956, %v3108
      %v3111 = vunpack.c.l.s4 1966171168
      %v3112 = vunpack.c.0.s8 %v3111
      %v3113 = vlaneseq
      %v3114 = vshrl.u32 %v3113, 7
      %v3115 = vsub.s32 %v3112, %v3114
      %v3116 = vrot.slane %v3109, %v3115
      %v3118 = vunpack.c.l.s4 1966171168
      %v3119 = vunpack.c.0.s8 %v3118
      %v3120 = vlaneseq
      %v3121 = vshrl.u32 %v3120, 7
      %v3122 = vsub.s32 %v3119, %v3121
      %v3123 = vrot.slane %v958, %v3122
      %v3125 = vunpack.c.l.s4 1966171168
      %v3126 = vunpack.c.0.s8 %v3125
      %v3127 = vlaneseq
      %v3128 = vshrl.u32 %v3127, 7
      %v3129 = vsub.s32 %v3126, %v3128
      %v3130 = vrot.slane %v3123, %v3129
      %v3132 = vunpack.c.l.s4 1966171168
      %v3133 = vunpack.c.0.s8 %v3132
      %v3134 = vlaneseq
      %v3135 = vshrl.u32 %v3134, 7
      %v3136 = vsub.s32 %v3133, %v3135
      %v3137 = vrot.slane %v960, %v3136
      %v3139 = vunpack.c.l.s4 1966171168
      %v3140 = vunpack.c.0.s8 %v3139
      %v3141 = vlaneseq
      %v3142 = vshrl.u32 %v3141, 7
      %v3143 = vsub.s32 %v3140, %v3142
      %v3144 = vrot.slane %v3137, %v3143
      %v3146 = vunpack.c.l.s4 1966171168
      %v3147 = vunpack.c.0.s8 %v3146
      %v3148 = vlaneseq
      %v3149 = vshrl.u32 %v3148, 7
      %v3150 = vsub.s32 %v3147, %v3149
      %v3151 = vrot.slane %v1033, %v3150
      %v3153 = vunpack.c.l.s4 1966171168
      %v3154 = vunpack.c.0.s8 %v3153
      %v3155 = vlaneseq
      %v3156 = vshrl.u32 %v3155, 7
      %v3157 = vsub.s32 %v3154, %v3156
      %v3158 = vrot.slane %v3151, %v3157
      %v3160 = vunpack.c.l.s4 1966171168
      %v3161 = vunpack.c.0.s8 %v3160
      %v3162 = vlaneseq
      %v3163 = vshrl.u32 %v3162, 7
      %v3164 = vsub.s32 %v3161, %v3163
      %v3165 = vrot.slane %v1047, %v3164
      %v3167 = vunpack.c.l.s4 1966171168
      %v3168 = vunpack.c.0.s8 %v3167
      %v3169 = vlaneseq
      %v3170 = vshrl.u32 %v3169, 7
      %v3171 = vsub.s32 %v3168, %v3170
      %v3172 = vrot.slane %v3165, %v3171
      %v3174 = vunpack.c.l.s4 1966171168
      %v3175 = vunpack.c.0.s8 %v3174
      %v3176 = vlaneseq
      %v3177 = vshrl.u32 %v3176, 7
      %v3178 = vsub.s32 %v3175, %v3177
      %v3179 = vrot.slane %v1055, %v3178
      %v3181 = vunpack.c.l.s4 1966171168
      %v3182 = vunpack.c.0.s8 %v3181
      %v3183 = vlaneseq
      %v3184 = vshrl.u32 %v3183, 7
      %v3185 = vsub.s32 %v3182, %v3184
      %v3186 = vrot.slane %v3179, %v3185
      %v3188 = vunpack.c.l.s4 1966171168
      %v3189 = vunpack.c.0.s8 %v3188
      %v3190 = vlaneseq
      %v3191 = vshrl.u32 %v3190, 7
      %v3192 = vsub.s32 %v3189, %v3191
      %v3193 = vrot.slane %v1057, %v3192
      %v3195 = vunpack.c.l.s4 1966171168
      %v3196 = vunpack.c.0.s8 %v3195
      %v3197 = vlaneseq
      %v3198 = vshrl.u32 %v3197, 7
      %v3199 = vsub.s32 %v3196, %v3198
      %v3200 = vrot.slane %v3193, %v3199
      %v3202 = vunpack.c.l.s4 1966171168
      %v3203 = vunpack.c.0.s8 %v3202
      %v3204 = vlaneseq
      %v3205 = vshrl.u32 %v3204, 7
      %v3206 = vsub.s32 %v3203, %v3205
      %v3207 = vrot.slane %v1040, %v3206
      %v3209 = vunpack.c.l.s4 1966171168
      %v3210 = vunpack.c.0.s8 %v3209
      %v3211 = vlaneseq
      %v3212 = vshrl.u32 %v3211, 7
      %v3213 = vsub.s32 %v3210, %v3212
      %v3214 = vrot.slane %v3207, %v3213
      %v3216 = vunpack.c.l.s4 1966171168
      %v3217 = vunpack.c.0.s8 %v3216
      %v3218 = vlaneseq
      %v3219 = vshrl.u32 %v3218, 7
      %v3220 = vsub.s32 %v3217, %v3219
      %v3221 = vrot.slane %v1054, %v3220
      %v3223 = vunpack.c.l.s4 1966171168
      %v3224 = vunpack.c.0.s8 %v3223
      %v3225 = vlaneseq
      %v3226 = vshrl.u32 %v3225, 7
      %v3227 = vsub.s32 %v3224, %v3226
      %v3228 = vrot.slane %v3221, %v3227
      %v3230 = vunpack.c.l.s4 1966171168
      %v3231 = vunpack.c.0.s8 %v3230
      %v3232 = vlaneseq
      %v3233 = vshrl.u32 %v3232, 7
      %v3234 = vsub.s32 %v3231, %v3233
      %v3235 = vrot.slane %v1056, %v3234
      %v3237 = vunpack.c.l.s4 1966171168
      %v3238 = vunpack.c.0.s8 %v3237
      %v3239 = vlaneseq
      %v3240 = vshrl.u32 %v3239, 7
      %v3241 = vsub.s32 %v3238, %v3240
      %v3242 = vrot.slane %v3235, %v3241
      %v3244 = vunpack.c.l.s4 1966171168
      %v3245 = vunpack.c.0.s8 %v3244
      %v3246 = vlaneseq
      %v3247 = vshrl.u32 %v3246, 7
      %v3248 = vsub.s32 %v3245, %v3247
      %v3249 = vrot.slane %v1058, %v3248
      %v3251 = vunpack.c.l.s4 1966171168
      %v3252 = vunpack.c.0.s8 %v3251
      %v3253 = vlaneseq
      %v3254 = vshrl.u32 %v3253, 7
      %v3255 = vsub.s32 %v3252, %v3254
      %v3256 = vrot.slane %v3249, %v3255
      %v3258 = vunpack.c.l.s4 1966171168
      %v3259 = vunpack.c.0.s8 %v3258
      %v3260 = vlaneseq
      %v3261 = vshrl.u32 %v3260, 7
      %v3262 = vsub.s32 %v3259, %v3261
      %v3263 = vrot.slane %v1131, %v3262
      %v3265 = vunpack.c.l.s4 1966171168
      %v3266 = vunpack.c.0.s8 %v3265
      %v3267 = vlaneseq
      %v3268 = vshrl.u32 %v3267, 7
      %v3269 = vsub.s32 %v3266, %v3268
      %v3270 = vrot.slane %v3263, %v3269
      %v3272 = vunpack.c.l.s4 1966171168
      %v3273 = vunpack.c.0.s8 %v3272
      %v3274 = vlaneseq
      %v3275 = vshrl.u32 %v3274, 7
      %v3276 = vsub.s32 %v3273, %v3275
      %v3277 = vrot.slane %v1145, %v3276
      %v3279 = vunpack.c.l.s4 1966171168
      %v3280 = vunpack.c.0.s8 %v3279
      %v3281 = vlaneseq
      %v3282 = vshrl.u32 %v3281, 7
      %v3283 = vsub.s32 %v3280, %v3282
      %v3284 = vrot.slane %v3277, %v3283
      %v3286 = vunpack.c.l.s4 1966171168
      %v3287 = vunpack.c.0.s8 %v3286
      %v3288 = vlaneseq
      %v3289 = vshrl.u32 %v3288, 7
      %v3290 = vsub.s32 %v3287, %v3289
      %v3291 = vrot.slane %v1153, %v3290
      %v3293 = vunpack.c.l.s4 1966171168
      %v3294 = vunpack.c.0.s8 %v3293
      %v3295 = vlaneseq
      %v3296 = vshrl.u32 %v3295, 7
      %v3297 = vsub.s32 %v3294, %v3296
      %v3298 = vrot.slane %v3291, %v3297
      %v3300 = vunpack.c.l.s4 1966171168
      %v3301 = vunpack.c.0.s8 %v3300
      %v3302 = vlaneseq
      %v3303 = vshrl.u32 %v3302, 7
      %v3304 = vsub.s32 %v3301, %v3303
      %v3305 = vrot.slane %v1155, %v3304
      %v3307 = vunpack.c.l.s4 1966171168
      %v3308 = vunpack.c.0.s8 %v3307
      %v3309 = vlaneseq
      %v3310 = vshrl.u32 %v3309, 7
      %v3311 = vsub.s32 %v3308, %v3310
      %v3312 = vrot.slane %v3305, %v3311
      %v3314 = vunpack.c.l.s4 1966171168
      %v3315 = vunpack.c.0.s8 %v3314
      %v3316 = vlaneseq
      %v3317 = vshrl.u32 %v3316, 7
      %v3318 = vsub.s32 %v3315, %v3317
      %v3319 = vrot.slane %v1138, %v3318
      %v3321 = vunpack.c.l.s4 1966171168
      %v3322 = vunpack.c.0.s8 %v3321
      %v3323 = vlaneseq
      %v3324 = vshrl.u32 %v3323, 7
      %v3325 = vsub.s32 %v3322, %v3324
      %v3326 = vrot.slane %v3319, %v3325
      %v3328 = vunpack.c.l.s4 1966171168
      %v3329 = vunpack.c.0.s8 %v3328
      %v3330 = vlaneseq
      %v3331 = vshrl.u32 %v3330, 7
      %v3332 = vsub.s32 %v3329, %v3331
      %v3333 = vrot.slane %v1152, %v3332
      %v3335 = vunpack.c.l.s4 1966171168
      %v3336 = vunpack.c.0.s8 %v3335
      %v3337 = vlaneseq
      %v3338 = vshrl.u32 %v3337, 7
      %v3339 = vsub.s32 %v3336, %v3338
      %v3340 = vrot.slane %v3333, %v3339
      %v3342 = vunpack.c.l.s4 1966171168
      %v3343 = vunpack.c.0.s8 %v3342
      %v3344 = vlaneseq
      %v3345 = vshrl.u32 %v3344, 7
      %v3346 = vsub.s32 %v3343, %v3345
      %v3347 = vrot.slane %v1154, %v3346
      %v3349 = vunpack.c.l.s4 1966171168
      %v3350 = vunpack.c.0.s8 %v3349
      %v3351 = vlaneseq
      %v3352 = vshrl.u32 %v3351, 7
      %v3353 = vsub.s32 %v3350, %v3352
      %v3354 = vrot.slane %v3347, %v3353
      %v3356 = vunpack.c.l.s4 1966171168
      %v3357 = vunpack.c.0.s8 %v3356
      %v3358 = vlaneseq
      %v3359 = vshrl.u32 %v3358, 7
      %v3360 = vsub.s32 %v3357, %v3359
      %v3361 = vrot.slane %v1156, %v3360
      %v3363 = vunpack.c.l.s4 1966171168
      %v3364 = vunpack.c.0.s8 %v3363
      %v3365 = vlaneseq
      %v3366 = vshrl.u32 %v3365, 7
      %v3367 = vsub.s32 %v3364, %v3366
      %v3368 = vrot.slane %v3361, %v3367
      %v3370 = vunpack.c.l.s4 1966171168
      %v3371 = vunpack.c.0.s8 %v3370
      %v3372 = vlaneseq
      %v3373 = vshrl.u32 %v3372, 7
      %v3374 = vsub.s32 %v3371, %v3373
      %v3375 = vrot.slane %v1229, %v3374
      %v3377 = vunpack.c.l.s4 1966171168
      %v3378 = vunpack.c.0.s8 %v3377
      %v3379 = vlaneseq
      %v3380 = vshrl.u32 %v3379, 7
      %v3381 = vsub.s32 %v3378, %v3380
      %v3382 = vrot.slane %v3375, %v3381
      %v3384 = vunpack.c.l.s4 1966171168
      %v3385 = vunpack.c.0.s8 %v3384
      %v3386 = vlaneseq
      %v3387 = vshrl.u32 %v3386, 7
      %v3388 = vsub.s32 %v3385, %v3387
      %v3389 = vrot.slane %v1243, %v3388
      %v3391 = vunpack.c.l.s4 1966171168
      %v3392 = vunpack.c.0.s8 %v3391
      %v3393 = vlaneseq
      %v3394 = vshrl.u32 %v3393, 7
      %v3395 = vsub.s32 %v3392, %v3394
      %v3396 = vrot.slane %v3389, %v3395
      %v3398 = vunpack.c.l.s4 1966171168
      %v3399 = vunpack.c.0.s8 %v3398
      %v3400 = vlaneseq
      %v3401 = vshrl.u32 %v3400, 7
      %v3402 = vsub.s32 %v3399, %v3401
      %v3403 = vrot.slane %v1251, %v3402
      %v3405 = vunpack.c.l.s4 1966171168
      %v3406 = vunpack.c.0.s8 %v3405
      %v3407 = vlaneseq
      %v3408 = vshrl.u32 %v3407, 7
      %v3409 = vsub.s32 %v3406, %v3408
      %v3410 = vrot.slane %v3403, %v3409
      %v3412 = vunpack.c.l.s4 1966171168
      %v3413 = vunpack.c.0.s8 %v3412
      %v3414 = vlaneseq
      %v3415 = vshrl.u32 %v3414, 7
      %v3416 = vsub.s32 %v3413, %v3415
      %v3417 = vrot.slane %v1253, %v3416
      %v3419 = vunpack.c.l.s4 1966171168
      %v3420 = vunpack.c.0.s8 %v3419
      %v3421 = vlaneseq
      %v3422 = vshrl.u32 %v3421, 7
      %v3423 = vsub.s32 %v3420, %v3422
      %v3424 = vrot.slane %v3417, %v3423
      %v3426 = vunpack.c.l.s4 1966171168
      %v3427 = vunpack.c.0.s8 %v3426
      %v3428 = vlaneseq
      %v3429 = vshrl.u32 %v3428, 7
      %v3430 = vsub.s32 %v3427, %v3429
      %v3431 = vrot.slane %v1236, %v3430
      %v3433 = vunpack.c.l.s4 1966171168
      %v3434 = vunpack.c.0.s8 %v3433
      %v3435 = vlaneseq
      %v3436 = vshrl.u32 %v3435, 7
      %v3437 = vsub.s32 %v3434, %v3436
      %v3438 = vrot.slane %v3431, %v3437
      %v3440 = vunpack.c.l.s4 1966171168
      %v3441 = vunpack.c.0.s8 %v3440
      %v3442 = vlaneseq
      %v3443 = vshrl.u32 %v3442, 7
      %v3444 = vsub.s32 %v3441, %v3443
      %v3445 = vrot.slane %v1250, %v3444
      %v3447 = vunpack.c.l.s4 1966171168
      %v3448 = vunpack.c.0.s8 %v3447
      %v3449 = vlaneseq
      %v3450 = vshrl.u32 %v3449, 7
      %v3451 = vsub.s32 %v3448, %v3450
      %v3452 = vrot.slane %v3445, %v3451
      %v3454 = vunpack.c.l.s4 1966171168
      %v3455 = vunpack.c.0.s8 %v3454
      %v3456 = vlaneseq
      %v3457 = vshrl.u32 %v3456, 7
      %v3458 = vsub.s32 %v3455, %v3457
      %v3459 = vrot.slane %v1252, %v3458
      %v3461 = vunpack.c.l.s4 1966171168
      %v3462 = vunpack.c.0.s8 %v3461
      %v3463 = vlaneseq
      %v3464 = vshrl.u32 %v3463, 7
      %v3465 = vsub.s32 %v3462, %v3464
      %v3466 = vrot.slane %v3459, %v3465
      %v3468 = vunpack.c.l.s4 1966171168
      %v3469 = vunpack.c.0.s8 %v3468
      %v3470 = vlaneseq
      %v3471 = vshrl.u32 %v3470, 7
      %v3472 = vsub.s32 %v3469, %v3471
      %v3473 = vrot.slane %v1254, %v3472
      %v3475 = vunpack.c.l.s4 1966171168
      %v3476 = vunpack.c.0.s8 %v3475
      %v3477 = vlaneseq
      %v3478 = vshrl.u32 %v3477, 7
      %v3479 = vsub.s32 %v3476, %v3478
      %v3480 = vrot.slane %v3473, %v3479
      %v3482 = vunpack.c.l.s4 1966171168
      %v3483 = vunpack.c.0.s8 %v3482
      %v3484 = vlaneseq
      %v3485 = vshrl.u32 %v3484, 7
      %v3486 = vsub.s32 %v3483, %v3485
      %v3487 = vrot.slane %v1327, %v3486
      %v3489 = vunpack.c.l.s4 1966171168
      %v3490 = vunpack.c.0.s8 %v3489
      %v3491 = vlaneseq
      %v3492 = vshrl.u32 %v3491, 7
      %v3493 = vsub.s32 %v3490, %v3492
      %v3494 = vrot.slane %v3487, %v3493
      %v3496 = vunpack.c.l.s4 1966171168
      %v3497 = vunpack.c.0.s8 %v3496
      %v3498 = vlaneseq
      %v3499 = vshrl.u32 %v3498, 7
      %v3500 = vsub.s32 %v3497, %v3499
      %v3501 = vrot.slane %v1341, %v3500
      %v3503 = vunpack.c.l.s4 1966171168
      %v3504 = vunpack.c.0.s8 %v3503
      %v3505 = vlaneseq
      %v3506 = vshrl.u32 %v3505, 7
      %v3507 = vsub.s32 %v3504, %v3506
      %v3508 = vrot.slane %v3501, %v3507
      %v3510 = vunpack.c.l.s4 1966171168
      %v3511 = vunpack.c.0.s8 %v3510
      %v3512 = vlaneseq
      %v3513 = vshrl.u32 %v3512, 7
      %v3514 = vsub.s32 %v3511, %v3513
      %v3515 = vrot.slane %v1349, %v3514
      %v3517 = vunpack.c.l.s4 1966171168
      %v3518 = vunpack.c.0.s8 %v3517
      %v3519 = vlaneseq
      %v3520 = vshrl.u32 %v3519, 7
      %v3521 = vsub.s32 %v3518, %v3520
      %v3522 = vrot.slane %v3515, %v3521
      %v3524 = vunpack.c.l.s4 1966171168
      %v3525 = vunpack.c.0.s8 %v3524
      %v3526 = vlaneseq
      %v3527 = vshrl.u32 %v3526, 7
      %v3528 = vsub.s32 %v3525, %v3527
      %v3529 = vrot.slane %v1351, %v3528
      %v3531 = vunpack.c.l.s4 1966171168
      %v3532 = vunpack.c.0.s8 %v3531
      %v3533 = vlaneseq
      %v3534 = vshrl.u32 %v3533, 7
      %v3535 = vsub.s32 %v3532, %v3534
      %v3536 = vrot.slane %v3529, %v3535
      %v3538 = vunpack.c.l.s4 1966171168
      %v3539 = vunpack.c.0.s8 %v3538
      %v3540 = vlaneseq
      %v3541 = vshrl.u32 %v3540, 7
      %v3542 = vsub.s32 %v3539, %v3541
      %v3543 = vrot.slane %v1334, %v3542
      %v3545 = vunpack.c.l.s4 1966171168
      %v3546 = vunpack.c.0.s8 %v3545
      %v3547 = vlaneseq
      %v3548 = vshrl.u32 %v3547, 7
      %v3549 = vsub.s32 %v3546, %v3548
      %v3550 = vrot.slane %v3543, %v3549
      %v3552 = vunpack.c.l.s4 1966171168
      %v3553 = vunpack.c.0.s8 %v3552
      %v3554 = vlaneseq
      %v3555 = vshrl.u32 %v3554, 7
      %v3556 = vsub.s32 %v3553, %v3555
      %v3557 = vrot.slane %v1348, %v3556
      %v3559 = vunpack.c.l.s4 1966171168
      %v3560 = vunpack.c.0.s8 %v3559
      %v3561 = vlaneseq
      %v3562 = vshrl.u32 %v3561, 7
      %v3563 = vsub.s32 %v3560, %v3562
      %v3564 = vrot.slane %v3557, %v3563
      %v3566 = vunpack.c.l.s4 1966171168
      %v3567 = vunpack.c.0.s8 %v3566
      %v3568 = vlaneseq
      %v3569 = vshrl.u32 %v3568, 7
      %v3570 = vsub.s32 %v3567, %v3569
      %v3571 = vrot.slane %v1350, %v3570
      %v3573 = vunpack.c.l.s4 1966171168
      %v3574 = vunpack.c.0.s8 %v3573
      %v3575 = vlaneseq
      %v3576 = vshrl.u32 %v3575, 7
      %v3577 = vsub.s32 %v3574, %v3576
      %v3578 = vrot.slane %v3571, %v3577
      %v3580 = vunpack.c.l.s4 1966171168
      %v3581 = vunpack.c.0.s8 %v3580
      %v3582 = vlaneseq
      %v3583 = vshrl.u32 %v3582, 7
      %v3584 = vsub.s32 %v3581, %v3583
      %v3585 = vrot.slane %v1352, %v3584
      %v3587 = vunpack.c.l.s4 1966171168
      %v3588 = vunpack.c.0.s8 %v3587
      %v3589 = vlaneseq
      %v3590 = vshrl.u32 %v3589, 7
      %v3591 = vsub.s32 %v3588, %v3590
      %v3592 = vrot.slane %v3585, %v3591
      %v3594 = vunpack.c.l.s4 1966171168
      %v3595 = vunpack.c.0.s8 %v3594
      %v3596 = vlaneseq
      %v3597 = vshrl.u32 %v3596, 7
      %v3598 = vsub.s32 %v3595, %v3597
      %v3599 = vrot.slane %v1425, %v3598
      %v3601 = vunpack.c.l.s4 1966171168
      %v3602 = vunpack.c.0.s8 %v3601
      %v3603 = vlaneseq
      %v3604 = vshrl.u32 %v3603, 7
      %v3605 = vsub.s32 %v3602, %v3604
      %v3606 = vrot.slane %v3599, %v3605
      %v3608 = vunpack.c.l.s4 1966171168
      %v3609 = vunpack.c.0.s8 %v3608
      %v3610 = vlaneseq
      %v3611 = vshrl.u32 %v3610, 7
      %v3612 = vsub.s32 %v3609, %v3611
      %v3613 = vrot.slane %v1439, %v3612
      %v3615 = vunpack.c.l.s4 1966171168
      %v3616 = vunpack.c.0.s8 %v3615
      %v3617 = vlaneseq
      %v3618 = vshrl.u32 %v3617, 7
      %v3619 = vsub.s32 %v3616, %v3618
      %v3620 = vrot.slane %v3613, %v3619
      %v3622 = vunpack.c.l.s4 1966171168
      %v3623 = vunpack.c.0.s8 %v3622
      %v3624 = vlaneseq
      %v3625 = vshrl.u32 %v3624, 7
      %v3626 = vsub.s32 %v3623, %v3625
      %v3627 = vrot.slane %v1447, %v3626
      %v3629 = vunpack.c.l.s4 1966171168
      %v3630 = vunpack.c.0.s8 %v3629
      %v3631 = vlaneseq
      %v3632 = vshrl.u32 %v3631, 7
      %v3633 = vsub.s32 %v3630, %v3632
      %v3634 = vrot.slane %v3627, %v3633
      %v3636 = vunpack.c.l.s4 1966171168
      %v3637 = vunpack.c.0.s8 %v3636
      %v3638 = vlaneseq
      %v3639 = vshrl.u32 %v3638, 7
      %v3640 = vsub.s32 %v3637, %v3639
      %v3641 = vrot.slane %v1449, %v3640
      %v3643 = vunpack.c.l.s4 1966171168
      %v3644 = vunpack.c.0.s8 %v3643
      %v3645 = vlaneseq
      %v3646 = vshrl.u32 %v3645, 7
      %v3647 = vsub.s32 %v3644, %v3646
      %v3648 = vrot.slane %v3641, %v3647
      %v3650 = vunpack.c.l.s4 1966171168
      %v3651 = vunpack.c.0.s8 %v3650
      %v3652 = vlaneseq
      %v3653 = vshrl.u32 %v3652, 7
      %v3654 = vsub.s32 %v3651, %v3653
      %v3655 = vrot.slane %v1432, %v3654
      %v3657 = vunpack.c.l.s4 1966171168
      %v3658 = vunpack.c.0.s8 %v3657
      %v3659 = vlaneseq
      %v3660 = vshrl.u32 %v3659, 7
      %v3661 = vsub.s32 %v3658, %v3660
      %v3662 = vrot.slane %v3655, %v3661
      %v3664 = vunpack.c.l.s4 1966171168
      %v3665 = vunpack.c.0.s8 %v3664
      %v3666 = vlaneseq
      %v3667 = vshrl.u32 %v3666, 7
      %v3668 = vsub.s32 %v3665, %v3667
      %v3669 = vrot.slane %v1446, %v3668
      %v3671 = vunpack.c.l.s4 1966171168
      %v3672 = vunpack.c.0.s8 %v3671
      %v3673 = vlaneseq
      %v3674 = vshrl.u32 %v3673, 7
      %v3675 = vsub.s32 %v3672, %v3674
      %v3676 = vrot.slane %v3669, %v3675
      %v3678 = vunpack.c.l.s4 1966171168
      %v3679 = vunpack.c.0.s8 %v3678
      %v3680 = vlaneseq
      %v3681 = vshrl.u32 %v3680, 7
      %v3682 = vsub.s32 %v3679, %v3681
      %v3683 = vrot.slane %v1448, %v3682
      %v3685 = vunpack.c.l.s4 1966171168
      %v3686 = vunpack.c.0.s8 %v3685
      %v3687 = vlaneseq
      %v3688 = vshrl.u32 %v3687, 7
      %v3689 = vsub.s32 %v3686, %v3688
      %v3690 = vrot.slane %v3683, %v3689
      %v3692 = vunpack.c.l.s4 1966171168
      %v3693 = vunpack.c.0.s8 %v3692
      %v3694 = vlaneseq
      %v3695 = vshrl.u32 %v3694, 7
      %v3696 = vsub.s32 %v3693, %v3695
      %v3697 = vrot.slane %v1450, %v3696
      %v3699 = vunpack.c.l.s4 1966171168
      %v3700 = vunpack.c.0.s8 %v3699
      %v3701 = vlaneseq
      %v3702 = vshrl.u32 %v3701, 7
      %v3703 = vsub.s32 %v3700, %v3702
      %v3704 = vrot.slane %v3697, %v3703
      %v3705 = vunpack.c.l.b16 %v2822
      %v3706 = vunpack.c.l.b16 %v2836
      %v3707 = vunpack.c.l.b16 %v2850
      %v3708 = vunpack.c.l.b16 %v2864
      %v3709 = vunpack.c.l.b16 %v2878
      %v3710 = vunpack.c.l.b16 %v2892
      %v3711 = vunpack.c.l.b16 %v2906
      %v3712 = vunpack.c.l.b16 %v2920
      %v3713 = vunpack.c.l.b16 %v2934
      %v3714 = vunpack.c.l.b16 %v2948
      %v3715 = vunpack.c.l.b16 %v2962
      %v3716 = vunpack.c.l.b16 %v2976
      %v3717 = vunpack.c.l.b16 %v2990
      %v3718 = vunpack.c.l.b16 %v3004
      %v3719 = vunpack.c.l.b16 %v3018
      %v3720 = vunpack.c.l.b16 %v3032
      %v3721 = vunpack.c.l.b16 %v3046
      %v3722 = vunpack.c.l.b16 %v3060
      %v3723 = vunpack.c.l.b16 %v3074
      %v3724 = vunpack.c.l.b16 %v3088
      %v3725 = vunpack.c.l.b16 %v3102
      %v3726 = vunpack.c.l.b16 %v3116
      %v3727 = vunpack.c.l.b16 %v3130
      %v3728 = vunpack.c.l.b16 %v3144
      %v3729 = vunpack.c.l.b16 %v3158
      %v3730 = vunpack.c.l.b16 %v3172
      %v3731 = vunpack.c.l.b16 %v3186
      %v3732 = vunpack.c.l.b16 %v3200
      %v3733 = vunpack.c.l.b16 %v3214
      %v3734 = vunpack.c.l.b16 %v3228
      %v3735 = vunpack.c.l.b16 %v3242
      %v3736 = vunpack.c.l.b16 %v3256
      %v3737 = vunpack.c.l.b16 %v3270
      %v3738 = vunpack.c.l.b16 %v3284
      %v3739 = vunpack.c.l.b16 %v3298
      %v3740 = vunpack.c.l.b16 %v3312
      %v3741 = vunpack.c.l.b16 %v3326
      %v3742 = vunpack.c.l.b16 %v3340
      %v3743 = vunpack.c.l.b16 %v3354
      %v3744 = vunpack.c.l.b16 %v3368
      %v3745 = vunpack.c.l.b16 %v3382
      %v3746 = vunpack.c.l.b16 %v3396
      %v3747 = vunpack.c.l.b16 %v3410
      %v3748 = vunpack.c.l.b16 %v3424
      %v3749 = vunpack.c.l.b16 %v3438
      %v3750 = vunpack.c.l.b16 %v3452
      %v3751 = vunpack.c.l.b16 %v3466
      %v3752 = vunpack.c.l.b16 %v3480
      %v3753 = vunpack.c.l.b16 %v3494
      %v3754 = vunpack.c.l.b16 %v3508
      %v3755 = vunpack.c.l.b16 %v3522
      %v3756 = vunpack.c.l.b16 %v3536
      %v3757 = vunpack.c.l.b16 %v3550
      %v3758 = vunpack.c.l.b16 %v3564
      %v3759 = vunpack.c.l.b16 %v3578
      %v3760 = vunpack.c.l.b16 %v3592
      %v3761 = vunpack.c.l.b16 %v3606
      %v3762 = vunpack.c.l.b16 %v3620
      %v3763 = vunpack.c.l.b16 %v3634
      %v3764 = vunpack.c.l.b16 %v3648
      %v3765 = vunpack.c.l.b16 %v3662
      %v3766 = vunpack.c.l.b16 %v3676
      %v3767 = vunpack.c.l.b16 %v3690
      %v3768 = vunpack.c.l.b16 %v3704
      %v3769 = vrot.slane %v3706, 7
      %v3770 = vsel %vm2464, %v3769, %v3705
      %v3771 = vrot.slane %v3707, 6
      %v3772 = vsel %vm2467, %v3771, %v3770
      %v3773 = vrot.slane %v3708, 5
      %v3774 = vsel %vm2470, %v3773, %v3772
      %v3775 = vrot.slane %v3709, 4
      %v3776 = vsel %vm2473, %v3775, %v3774
      %v3777 = vrot.slane %v3710, 3
      %v3778 = vsel %vm2476, %v3777, %v3776
      %v3779 = vrot.slane %v3711, 2
      %v3780 = vsel %vm2479, %v3779, %v3778
      %v3781 = vrot.slane %v3712, 1
      %v3782 = vrot.slane %v3714, 7
      %v3783 = vsel %vm2464, %v3782, %v3713
      %v3784 = vrot.slane %v3715, 6
      %v3785 = vsel %vm2467, %v3784, %v3783
      %v3786 = vrot.slane %v3716, 5
      %v3787 = vsel %vm2470, %v3786, %v3785
      %v3788 = vrot.slane %v3717, 4
      %v3789 = vsel %vm2473, %v3788, %v3787
      %v3790 = vrot.slane %v3718, 3
      %v3791 = vsel %vm2476, %v3790, %v3789
      %v3792 = vrot.slane %v3719, 2
      %v3793 = vsel %vm2479, %v3792, %v3791
      %v3794 = vrot.slane %v3720, 1
      %v3795 = vrot.slane %v3722, 7
      %v3796 = vsel %vm2464, %v3795, %v3721
      %v3797 = vrot.slane %v3723, 6
      %v3798 = vsel %vm2467, %v3797, %v3796
      %v3799 = vrot.slane %v3724, 5
      %v3800 = vsel %vm2470, %v3799, %v3798
      %v3801 = vrot.slane %v3725, 4
      %v3802 = vsel %vm2473, %v3801, %v3800
      %v3803 = vrot.slane %v3726, 3
      %v3804 = vsel %vm2476, %v3803, %v3802
      %v3805 = vrot.slane %v3727, 2
      %v3806 = vsel %vm2479, %v3805, %v3804
      %v3807 = vrot.slane %v3728, 1
      %v3808 = vrot.slane %v3730, 7
      %v3809 = vsel %vm2464, %v3808, %v3729
      %v3810 = vrot.slane %v3731, 6
      %v3811 = vsel %vm2467, %v3810, %v3809
      %v3812 = vrot.slane %v3732, 5
      %v3813 = vsel %vm2470, %v3812, %v3811
      %v3814 = vrot.slane %v3733, 4
      %v3815 = vsel %vm2473, %v3814, %v3813
      %v3816 = vrot.slane %v3734, 3
      %v3817 = vsel %vm2476, %v3816, %v3815
      %v3818 = vrot.slane %v3735, 2
      %v3819 = vsel %vm2479, %v3818, %v3817
      %v3820 = vrot.slane %v3736, 1
      %v3821 = vrot.slane %v3738, 7
      %v3822 = vsel %vm2464, %v3821, %v3737
      %v3823 = vrot.slane %v3739, 6
      %v3824 = vsel %vm2467, %v3823, %v3822
      %v3825 = vrot.slane %v3740, 5
      %v3826 = vsel %vm2470, %v3825, %v3824
      %v3827 = vrot.slane %v3741, 4
      %v3828 = vsel %vm2473, %v3827, %v3826
      %v3829 = vrot.slane %v3742, 3
      %v3830 = vsel %vm2476, %v3829, %v3828
      %v3831 = vrot.slane %v3743, 2
      %v3832 = vsel %vm2479, %v3831, %v3830
      %v3833 = vrot.slane %v3744, 1
      %v3834 = vrot.slane %v3746, 7
      %v3835 = vsel %vm2464, %v3834, %v3745
      %v3836 = vrot.slane %v3747, 6
      %v3837 = vsel %vm2467, %v3836, %v3835
      %v3838 = vrot.slane %v3748, 5
      %v3839 = vsel %vm2470, %v3838, %v3837
      %v3840 = vrot.slane %v3749, 4
      %v3841 = vsel %vm2473, %v3840, %v3839
      %v3842 = vrot.slane %v3750, 3
      %v3843 = vsel %vm2476, %v3842, %v3841
      %v3844 = vrot.slane %v3751, 2
      %v3845 = vsel %vm2479, %v3844, %v3843
      %v3846 = vrot.slane %v3752, 1
      %v3847 = vrot.slane %v3754, 7
      %v3848 = vsel %vm2464, %v3847, %v3753
      %v3849 = vrot.slane %v3755, 6
      %v3850 = vsel %vm2467, %v3849, %v3848
      %v3851 = vrot.slane %v3756, 5
      %v3852 = vsel %vm2470, %v3851, %v3850
      %v3853 = vrot.slane %v3757, 4
      %v3854 = vsel %vm2473, %v3853, %v3852
      %v3855 = vrot.slane %v3758, 3
      %v3856 = vsel %vm2476, %v3855, %v3854
      %v3857 = vrot.slane %v3759, 2
      %v3858 = vsel %vm2479, %v3857, %v3856
      %v3859 = vrot.slane %v3760, 1
      %v3860 = vrot.slane %v3762, 7
      %v3861 = vsel %vm2464, %v3860, %v3761
      %v3862 = vrot.slane %v3763, 6
      %v3863 = vsel %vm2467, %v3862, %v3861
      %v3864 = vrot.slane %v3764, 5
      %v3865 = vsel %vm2470, %v3864, %v3863
      %v3866 = vrot.slane %v3765, 4
      %v3867 = vsel %vm2473, %v3866, %v3865
      %v3868 = vrot.slane %v3766, 3
      %v3869 = vsel %vm2476, %v3868, %v3867
      %v3870 = vrot.slane %v3767, 2
      %v3871 = vsel %vm2479, %v3870, %v3869
      %v3872 = vrot.slane %v3768, 1
      %v3873 = vpack.c.b16 %v3781, %v3780
      %v3874 = vpack.c.b16 %v3794, %v3793
      %v3875 = vpack.c.b16 %v3807, %v3806
      %v3876 = vpack.c.b16 %v3820, %v3819
      %v3877 = vpack.c.b16 %v3833, %v3832
      %v3878 = vpack.c.b16 %v3846, %v3845
      %v3879 = vpack.c.b16 %v3859, %v3858
      %v3880 = vpack.c.b16 %v3872, %v3871
      %v3889 = vsel %vm2661, 0, %v3873
      %v3890 = vsel %vm2661, 0, %v3874
      %v3891 = vsel %vm2661, 0, %v3875
      %v3892 = vsel %vm2661, 0, %v3876
      %v3893 = vsel %vm2661, 0, %v3877
      %v3894 = vsel %vm2661, 0, %v3878
      %v3895 = vsel %vm2661, 0, %v3879
      %v3896 = vsel %vm2661, 0, %v3880
      %v3897 = vsel %vm2461, %v3769, %v3705
      %v3898 = vsel %vm2464, %v3771, %v3897
      %v3899 = vsel %vm2467, %v3773, %v3898
      %v3900 = vsel %vm2470, %v3775, %v3899
      %v3901 = vsel %vm2473, %v3777, %v3900
      %v3902 = vsel %vm2476, %v3779, %v3901
      %v3903 = vsel %vm2479, %v3781, %v3902
      %v3904 = vsel %vm2461, %v3782, %v3713
      %v3905 = vsel %vm2464, %v3784, %v3904
      %v3906 = vsel %vm2467, %v3786, %v3905
      %v3907 = vsel %vm2470, %v3788, %v3906
      %v3908 = vsel %vm2473, %v3790, %v3907
      %v3909 = vsel %vm2476, %v3792, %v3908
      %v3910 = vsel %vm2479, %v3794, %v3909
      %v3911 = vsel %vm2461, %v3795, %v3721
      %v3912 = vsel %vm2464, %v3797, %v3911
      %v3913 = vsel %vm2467, %v3799, %v3912
      %v3914 = vsel %vm2470, %v3801, %v3913
      %v3915 = vsel %vm2473, %v3803, %v3914
      %v3916 = vsel %vm2476, %v3805, %v3915
      %v3917 = vsel %vm2479, %v3807, %v3916
      %v3918 = vsel %vm2461, %v3808, %v3729
      %v3919 = vsel %vm2464, %v3810, %v3918
      %v3920 = vsel %vm2467, %v3812, %v3919
      %v3921 = vsel %vm2470, %v3814, %v3920
      %v3922 = vsel %vm2473, %v3816, %v3921
      %v3923 = vsel %vm2476, %v3818, %v3922
      %v3924 = vsel %vm2479, %v3820, %v3923
      %v3925 = vsel %vm2461, %v3821, %v3737
      %v3926 = vsel %vm2464, %v3823, %v3925
      %v3927 = vsel %vm2467, %v3825, %v3926
      %v3928 = vsel %vm2470, %v3827, %v3927
      %v3929 = vsel %vm2473, %v3829, %v3928
      %v3930 = vsel %vm2476, %v3831, %v3929
      %v3931 = vsel %vm2479, %v3833, %v3930
      %v3932 = vsel %vm2461, %v3834, %v3745
      %v3933 = vsel %vm2464, %v3836, %v3932
      %v3934 = vsel %vm2467, %v3838, %v3933
      %v3935 = vsel %vm2470, %v3840, %v3934
      %v3936 = vsel %vm2473, %v3842, %v3935
      %v3937 = vsel %vm2476, %v3844, %v3936
      %v3938 = vsel %vm2479, %v3846, %v3937
      %v3939 = vsel %vm2461, %v3847, %v3753
      %v3940 = vsel %vm2464, %v3849, %v3939
      %v3941 = vsel %vm2467, %v3851, %v3940
      %v3942 = vsel %vm2470, %v3853, %v3941
      %v3943 = vsel %vm2473, %v3855, %v3942
      %v3944 = vsel %vm2476, %v3857, %v3943
      %v3945 = vsel %vm2479, %v3859, %v3944
      %v3946 = vsel %vm2461, %v3860, %v3761
      %v3947 = vsel %vm2464, %v3862, %v3946
      %v3948 = vsel %vm2467, %v3864, %v3947
      %v3949 = vsel %vm2470, %v3866, %v3948
      %v3950 = vsel %vm2473, %v3868, %v3949
      %v3951 = vsel %vm2476, %v3870, %v3950
      %v3952 = vsel %vm2479, %v3872, %v3951
      %v3953 = vpack.c.b16 %v3903, %v3903
      %v3954 = vpack.c.b16 %v3910, %v3910
      %v3955 = vpack.c.b16 %v3917, %v3917
      %v3956 = vpack.c.b16 %v3924, %v3924
      %v3957 = vpack.c.b16 %v3931, %v3931
      %v3958 = vpack.c.b16 %v3938, %v3938
      %v3959 = vpack.c.b16 %v3945, %v3945
      %v3960 = vpack.c.b16 %v3952, %v3952
      %v3962 = vsel %vm2791, %v3953, 0
      %v3964 = vsel %vm2791, %v3954, 0
      %v3966 = vsel %vm2791, %v3955, 0
      %v3968 = vsel %vm2791, %v3956, 0
      %v3970 = vsel %vm2791, %v3957, 0
      %v3972 = vsel %vm2791, %v3958, 0
      %v3974 = vsel %vm2791, %v3959, 0
      %v3976 = vsel %vm2791, %v3960, 0
      %v3977 = vld [vmem:[%s3] sm:$0xf]
      %v3978 = vld [vmem:[%s3 + $0x4] sm:$0xf]
      %v3979 = vld [vmem:[%s3 + $0x8] sm:$0xf]
      %v3980 = vld [vmem:[%s3 + $0xc] sm:$0xf]
      %v3981 = vld [vmem:[%s3 + $0x10] sm:$0xf]
      %v3982 = vld [vmem:[%s3 + $0x14] sm:$0xf]
      %v3983 = vld [vmem:[%s3 + $0x18] sm:$0xf]
      %v3984 = vld [vmem:[%s3 + $0x1c] sm:$0xf]
      %v3985 = vld [vmem:[%s3 + $0x20] sm:$0xf]
      %v3986 = vld [vmem:[%s3 + $0x24] sm:$0xf]
      %v3987 = vld [vmem:[%s3 + $0x28] sm:$0xf]
      %v3988 = vld [vmem:[%s3 + $0x2c] sm:$0xf]
      %v3989 = vld [vmem:[%s3 + $0x30] sm:$0xf]
      %v3990 = vld [vmem:[%s3 + $0x34] sm:$0xf]
      %v3991 = vld [vmem:[%s3 + $0x38] sm:$0xf]
      %v3992 = vld [vmem:[%s3 + $0x3c] sm:$0xf]
      %v4001 = vunpack.c.l.b16 0
      %v4002 = vunpack.c.l.b16 %v2793
      %v4003 = vunpack.c.l.b16 %v2795
      %v4004 = vunpack.c.l.b16 %v2797
      %v4005 = vunpack.c.l.b16 %v2799
      %v4006 = vunpack.c.l.b16 %v2801
      %v4007 = vunpack.c.l.b16 %v2803
      %v4008 = vunpack.c.l.b16 %v2805
      %v4009 = vpack.c.b16 %v4002, %v4001
      %v4010 = vpack.c.b16 %v4004, %v4003
      %v4011 = vpack.c.b16 %v4006, %v4005
      %v4012 = vpack.c.b16 %v4008, %v4007
      %v4021 = vunpack.c.l.b16 %v3985
      %v4022 = vunpack.c.l.b16 %v3986
      %v4023 = vunpack.c.l.b16 %v3987
      %v4024 = vunpack.c.l.b16 %v3988
      %v4025 = vunpack.c.l.b16 %v3989
      %v4026 = vunpack.c.l.b16 %v3990
      %v4027 = vunpack.c.l.b16 %v3991
      %v4028 = vunpack.c.l.b16 %v3992
      %v4029 = vpack.c.b16 %v4022, %v4021
      %v4030 = vpack.c.b16 %v4024, %v4023
      %v4031 = vpack.c.b16 %v4026, %v4025
      %v4032 = vpack.c.b16 %v4028, %v4027
      %vm4037 = vcmask 523264
      %v4039 = vsel %vm4037, %v4009, 0
      %v4042 = vsel %vm4037, %v4010, 0
      %v4045 = vsel %vm4037, %v4011, 0
      %v4048 = vsel %vm4037, %v4012, 0
      %4050 = vmatprep.subr.bf16.mxu0 0
      %4051 = vmatpush1.bf16.msra.mxu0 %v4029
      %4052 = vmatprep.subr.bf16.mxu0 0
      %4053 = vmatpush1.bf16.msra.mxu0 %v4030
      %4054 = vmatprep.subr.bf16.mxu0 0
      %4055 = vmatpush1.bf16.msra.mxu0 %v4031
      %4056 = vmatprep.subr.bf16.mxu0 0
      %4057 = vmatpush1.bf16.msra.mxu0 %v4032
      %4058 = vmatprep.subr.bf16.mxu0 0
      %4059 = vmatpush1.bf16.msra.mxu0 0
      %4060 = vmatprep.subr.bf16.mxu0 0
      %4061 = vmatpush1.bf16.msra.mxu0 0
      %4062 = vmatprep.subr.bf16.mxu0 0
      %4063 = vmatpush1.bf16.msra.mxu0 0
      %4064 = vmatprep.subr.bf16.mxu0 0
      %4065 = vmatpush1.bf16.msra.mxu0 0
      %4066 = vmatprep.subr.bf16.mxu0 0
      %4067 = vmatpush1.bf16.msra.mxu0 0
      %4068 = vmatprep.subr.bf16.mxu0 0
      %4069 = vmatpush1.bf16.msra.mxu0 0
      %4070 = vmatprep.subr.bf16.mxu0 0
      %4071 = vmatpush1.bf16.msra.mxu0 0
      %4072 = vmatprep.subr.bf16.mxu0 0
      %4073 = vmatpush1.bf16.msra.mxu0 0
      %4074 = vmatprep.subr.bf16.mxu0 0
      %4075 = vmatpush1.bf16.msra.mxu0 0
      %4076 = vmatprep.subr.bf16.mxu0 0
      %4077 = vmatpush1.bf16.msra.mxu0 0
      %4078 = vmatprep.subr.bf16.mxu0 0
      %4079 = vmatpush1.bf16.msra.mxu0 0
      %4080 = vmatprep.subr.bf16.mxu0 0
      %4081 = vmatpush1.bf16.msra.mxu0 0
      %4082 = vmatprep.mubr.bf16.mxu0 0
      %4083 = vmatmul.mubr.bf16.gmra.mrb[0].mxu0 %v4039
      %v4084 = vpop.f32.mrb[0].mxu0
      %v4085 = vadd.f32 0.0, %v4084
      %v4086 = vpop.f32.mrb[0].mxu0
      %v4087 = vpop.f32.mrb[0].mxu0
      %v4088 = vadd.f32 0.0, %v4087
      %v4089 = vpop.f32.mrb[0].mxu0
      %4090 = vmatprep.mubr.bf16.mxu0 0
      %4091 = vmatmul.mubr.bf16.gmra.mrb[0].mxu0 %v4042
      %v4092 = vpop.f32.mrb[0].mxu0
      %v4093 = vadd.f32 0.0, %v4092
      %v4094 = vpop.f32.mrb[0].mxu0
      %v4095 = vpop.f32.mrb[0].mxu0
      %v4096 = vadd.f32 0.0, %v4095
      %v4097 = vpop.f32.mrb[0].mxu0
      %4098 = vmatprep.mubr.bf16.mxu0 0
      %4099 = vmatmul.mubr.bf16.gmra.mrb[0].mxu0 %v4045
      %v4100 = vpop.f32.mrb[0].mxu0
      %v4101 = vadd.f32 0.0, %v4100
      %v4102 = vpop.f32.mrb[0].mxu0
      %v4103 = vpop.f32.mrb[0].mxu0
      %v4104 = vadd.f32 0.0, %v4103
      %v4105 = vpop.f32.mrb[0].mxu0
      %4106 = vmatprep.mubr.bf16.mxu0 0
      %4107 = vmatmul.mubr.bf16.gmra.mrb[0].mxu0 %v4048
      %v4108 = vpop.f32.mrb[0].mxu0
      %v4109 = vadd.f32 0.0, %v4108
      %v4110 = vpop.f32.mrb[0].mxu0
      %v4111 = vpop.f32.mrb[0].mxu0
      %v4112 = vadd.f32 0.0, %v4111
      %v4113 = vpop.f32.mrb[0].mxu0
      %4114 = vdwg.mxu0
      %v4123 = vunpack.c.l.b16 %v2662
      %v4124 = vunpack.c.l.b16 %v2663
      %v4125 = vunpack.c.l.b16 %v2664
      %v4126 = vunpack.c.l.b16 %v2665
      %v4127 = vunpack.c.l.b16 %v2666
      %v4128 = vunpack.c.l.b16 %v2667
      %v4129 = vunpack.c.l.b16 %v2668
      %v4130 = vunpack.c.l.b16 %v2669
      %v4131 = vpack.c.b16 %v4124, %v4123
      %v4132 = vpack.c.b16 %v4126, %v4125
      %v4133 = vpack.c.b16 %v4128, %v4127
      %v4134 = vpack.c.b16 %v4130, %v4129
      %v4143 = vunpack.c.l.b16 %v3977
      %v4144 = vunpack.c.l.b16 %v3978
      %v4145 = vunpack.c.l.b16 %v3979
      %v4146 = vunpack.c.l.b16 %v3980
      %v4147 = vunpack.c.l.b16 %v3981
      %v4148 = vunpack.c.l.b16 %v3982
      %v4149 = vunpack.c.l.b16 %v3983
      %v4150 = vunpack.c.l.b16 %v3984
      %v4151 = vpack.c.b16 %v4144, %v4143
      %v4152 = vpack.c.b16 %v4146, %v4145
      %v4153 = vpack.c.b16 %v4148, %v4147
      %v4154 = vpack.c.b16 %v4150, %v4149
      %v4160 = vsel %vm4037, %v4131, 0
      %v4163 = vsel %vm4037, %v4132, 0
      %v4166 = vsel %vm4037, %v4133, 0
      %v4169 = vsel %vm4037, %v4134, 0
      %4171 = vmatprep.subr.bf16.mxu0 0
      %4172 = vmatpush1.bf16.msra.mxu0 %v4151
      %4173 = vmatprep.subr.bf16.mxu0 0
      %4174 = vmatpush1.bf16.msra.mxu0 %v4152
      %4175 = vmatprep.subr.bf16.mxu0 0
      %4176 = vmatpush1.bf16.msra.mxu0 %v4153
      %4177 = vmatprep.subr.bf16.mxu0 0
      %4178 = vmatpush1.bf16.msra.mxu0 %v4154
      %4179 = vmatprep.subr.bf16.mxu0 0
      %4180 = vmatpush1.bf16.msra.mxu0 0
      %4181 = vmatprep.subr.bf16.mxu0 0
      %4182 = vmatpush1.bf16.msra.mxu0 0
      %4183 = vmatprep.subr.bf16.mxu0 0
      %4184 = vmatpush1.bf16.msra.mxu0 0
      %4185 = vmatprep.subr.bf16.mxu0 0
      %4186 = vmatpush1.bf16.msra.mxu0 0
      %4187 = vmatprep.subr.bf16.mxu0 0
      %4188 = vmatpush1.bf16.msra.mxu0 0
      %4189 = vmatprep.subr.bf16.mxu0 0
      %4190 = vmatpush1.bf16.msra.mxu0 0
      %4191 = vmatprep.subr.bf16.mxu0 0
      %4192 = vmatpush1.bf16.msra.mxu0 0
      %4193 = vmatprep.subr.bf16.mxu0 0
      %4194 = vmatpush1.bf16.msra.mxu0 0
      %4195 = vmatprep.subr.bf16.mxu0 0
      %4196 = vmatpush1.bf16.msra.mxu0 0
      %4197 = vmatprep.subr.bf16.mxu0 0
      %4198 = vmatpush1.bf16.msra.mxu0 0
      %4199 = vmatprep.subr.bf16.mxu0 0
      %4200 = vmatpush1.bf16.msra.mxu0 0
      %4201 = vmatprep.subr.bf16.mxu0 0
      %4202 = vmatpush1.bf16.msra.mxu0 0
      %4203 = vmatprep.mubr.bf16.mxu0 0
      %4204 = vmatmul.mubr.bf16.gmra.mrb[0].mxu0 %v4160
      %v4205 = vpop.f32.mrb[0].mxu0
      %v4206 = vadd.f32 %v4085, %v4205
      %v4207 = vpop.f32.mrb[0].mxu0
      %v4208 = vpop.f32.mrb[0].mxu0
      %v4209 = vadd.f32 %v4088, %v4208
      %v4210 = vpop.f32.mrb[0].mxu0
      %4211 = vmatprep.mubr.bf16.mxu0 0
      %4212 = vmatmul.mubr.bf16.gmra.mrb[0].mxu0 %v4163
      %v4213 = vpop.f32.mrb[0].mxu0
      %v4214 = vadd.f32 %v4093, %v4213
      %v4215 = vpop.f32.mrb[0].mxu0
      %v4216 = vpop.f32.mrb[0].mxu0
      %v4217 = vadd.f32 %v4096, %v4216
      %v4218 = vpop.f32.mrb[0].mxu0
      %4219 = vmatprep.mubr.bf16.mxu0 0
      %4220 = vmatmul.mubr.bf16.gmra.mrb[0].mxu0 %v4166
      %v4221 = vpop.f32.mrb[0].mxu0
      %v4222 = vadd.f32 %v4101, %v4221
      %v4223 = vpop.f32.mrb[0].mxu0
      %v4224 = vpop.f32.mrb[0].mxu0
      %v4225 = vadd.f32 %v4104, %v4224
      %v4226 = vpop.f32.mrb[0].mxu0
      %4227 = vmatprep.mubr.bf16.mxu0 0
      %4228 = vmatmul.mubr.bf16.gmra.mrb[0].mxu0 %v4169
      %v4229 = vpop.f32.mrb[0].mxu0
      %v4230 = vadd.f32 %v4109, %v4229
      %v4231 = vpop.f32.mrb[0].mxu0
      %v4232 = vpop.f32.mrb[0].mxu0
      %v4233 = vadd.f32 %v4112, %v4232
      %v4234 = vpop.f32.mrb[0].mxu0
      %4235 = vdwg.mxu0
      %v4236 = vunpack.c.h.b16 %v2662
      %v4237 = vunpack.c.h.b16 %v2663
      %v4238 = vunpack.c.h.b16 %v2664
      %v4239 = vunpack.c.h.b16 %v2665
      %v4240 = vunpack.c.h.b16 %v2666
      %v4241 = vunpack.c.h.b16 %v2667
      %v4242 = vunpack.c.h.b16 %v2668
      %v4243 = vunpack.c.h.b16 %v2669
      %v4244 = vpack.c.b16 %v4123, %v4123
      %v4245 = vpack.c.b16 %v4236, %v4236
      %v4246 = vpack.c.b16 %v4124, %v4124
      %v4247 = vpack.c.b16 %v4237, %v4237
      %v4248 = vpack.c.b16 %v4125, %v4125
      %v4249 = vpack.c.b16 %v4238, %v4238
      %v4250 = vpack.c.b16 %v4126, %v4126
      %v4251 = vpack.c.b16 %v4239, %v4239
      %v4252 = vpack.c.b16 %v4127, %v4127
      %v4253 = vpack.c.b16 %v4240, %v4240
      %v4254 = vpack.c.b16 %v4128, %v4128
      %v4255 = vpack.c.b16 %v4241, %v4241
      %v4256 = vpack.c.b16 %v4129, %v4129
      %v4257 = vpack.c.b16 %v4242, %v4242
      %v4258 = vpack.c.b16 %v4130, %v4130
      %v4259 = vpack.c.b16 %v4243, %v4243
      %vm4260 = vsmask.f32 3328
      %vm4261 = vsmask.f32 7440
      %vm4262 = vmor %vm4260, %vm4261
      %v4264 = vshrl.u32 %v4244, 16
      %v4266 = vrot.slane %v4264, 4
      %v4267 = vshll.u32 %v4244, 16
      %v4269 = vrot.slane %v4267, 5
      %v4270 = vor.u32 %v4266, %v4269
      %v4271 = vrot.slane %v4270, 4
      %v4273 = vshll.u32 %v4245, 16
      %v4275 = vrot.slane %v4273, 5
      %v4276 = vsel %vm4262, %v4271, %v4275
      %v4278 = vshrl.u32 %v4246, 16
      %v4280 = vrot.slane %v4278, 4
      %v4281 = vshll.u32 %v4246, 16
      %v4283 = vrot.slane %v4281, 5
      %v4284 = vor.u32 %v4280, %v4283
      %v4285 = vrot.slane %v4284, 4
      %v4287 = vshll.u32 %v4247, 16
      %v4289 = vrot.slane %v4287, 5
      %v4290 = vsel %vm4262, %v4285, %v4289
      %v4292 = vshrl.u32 %v4248, 16
      %v4294 = vrot.slane %v4292, 4
      %v4295 = vshll.u32 %v4248, 16
      %v4297 = vrot.slane %v4295, 5
      %v4298 = vor.u32 %v4294, %v4297
      %v4299 = vrot.slane %v4298, 4
      %v4301 = vshll.u32 %v4249, 16
      %v4303 = vrot.slane %v4301, 5
      %v4304 = vsel %vm4262, %v4299, %v4303
      %v4306 = vshrl.u32 %v4250, 16
      %v4308 = vrot.slane %v4306, 4
      %v4309 = vshll.u32 %v4250, 16
      %v4311 = vrot.slane %v4309, 5
      %v4312 = vor.u32 %v4308, %v4311
      %v4313 = vrot.slane %v4312, 4
      %v4315 = vshll.u32 %v4251, 16
      %v4317 = vrot.slane %v4315, 5
      %v4318 = vsel %vm4262, %v4313, %v4317
      %v4320 = vshrl.u32 %v4252, 16
      %v4322 = vrot.slane %v4320, 4
      %v4323 = vshll.u32 %v4252, 16
      %v4325 = vrot.slane %v4323, 5
      %v4326 = vor.u32 %v4322, %v4325
      %v4327 = vrot.slane %v4326, 4
      %v4329 = vshll.u32 %v4253, 16
      %v4331 = vrot.slane %v4329, 5
      %v4332 = vsel %vm4262, %v4327, %v4331
      %v4334 = vshrl.u32 %v4254, 16
      %v4336 = vrot.slane %v4334, 4
      %v4337 = vshll.u32 %v4254, 16
      %v4339 = vrot.slane %v4337, 5
      %v4340 = vor.u32 %v4336, %v4339
      %v4341 = vrot.slane %v4340, 4
      %v4343 = vshll.u32 %v4255, 16
      %v4345 = vrot.slane %v4343, 5
      %v4346 = vsel %vm4262, %v4341, %v4345
      %v4348 = vshrl.u32 %v4256, 16
      %v4350 = vrot.slane %v4348, 4
      %v4351 = vshll.u32 %v4256, 16
      %v4353 = vrot.slane %v4351, 5
      %v4354 = vor.u32 %v4350, %v4353
      %v4355 = vrot.slane %v4354, 4
      %v4357 = vshll.u32 %v4257, 16
      %v4359 = vrot.slane %v4357, 5
      %v4360 = vsel %vm4262, %v4355, %v4359
      %v4362 = vshrl.u32 %v4258, 16
      %v4364 = vrot.slane %v4362, 4
      %v4365 = vshll.u32 %v4258, 16
      %v4367 = vrot.slane %v4365, 5
      %v4368 = vor.u32 %v4364, %v4367
      %v4369 = vrot.slane %v4368, 4
      %v4371 = vshll.u32 %v4259, 16
      %v4373 = vrot.slane %v4371, 5
      %v4374 = vsel %vm4262, %v4369, %v4373
      %v4375 = vld [vmem:[%s3 + $0x40] sm:$0xf]
      %v4376 = vld [vmem:[%s3 + $0x44] sm:$0xf]
      %v4377 = vld [vmem:[%s3 + $0x48] sm:$0xf]
      %v4378 = vld [vmem:[%s3 + $0x4c] sm:$0xf]
      %v4379 = vld [vmem:[%s3 + $0x50] sm:$0xf]
      %v4380 = vld [vmem:[%s3 + $0x54] sm:$0xf]
      %v4381 = vld [vmem:[%s3 + $0x58] sm:$0xf]
      %v4382 = vld [vmem:[%s3 + $0x5c] sm:$0xf]
      %v4383 = vunpack.c.l.b16 %v4276
      %v4384 = vunpack.c.l.b16 %v4290
      %v4385 = vunpack.c.l.b16 %v4304
      %v4386 = vunpack.c.l.b16 %v4318
      %v4387 = vunpack.c.l.b16 %v4332
      %v4388 = vunpack.c.l.b16 %v4346
      %v4389 = vunpack.c.l.b16 %v4360
      %v4390 = vunpack.c.l.b16 %v4374
      %v4391 = vpack.c.b16 %v4384, %v4383
      %v4392 = vpack.c.b16 %v4386, %v4385
      %v4393 = vpack.c.b16 %v4388, %v4387
      %v4394 = vpack.c.b16 %v4390, %v4389
      %v4403 = vunpack.c.l.b16 %v4375
      %v4404 = vunpack.c.l.b16 %v4376
      %v4405 = vunpack.c.l.b16 %v4377
      %v4406 = vunpack.c.l.b16 %v4378
      %v4407 = vunpack.c.l.b16 %v4379
      %v4408 = vunpack.c.l.b16 %v4380
      %v4409 = vunpack.c.l.b16 %v4381
      %v4410 = vunpack.c.l.b16 %v4382
      %v4411 = vpack.c.b16 %v4404, %v4403
      %v4412 = vpack.c.b16 %v4406, %v4405
      %v4413 = vpack.c.b16 %v4408, %v4407
      %v4414 = vpack.c.b16 %v4410, %v4409
      %v4420 = vsel %vm4037, %v4391, 0
      %v4423 = vsel %vm4037, %v4392, 0
      %v4426 = vsel %vm4037, %v4393, 0
      %v4429 = vsel %vm4037, %v4394, 0
      %4431 = vmatprep.subr.bf16.mxu0 0
      %4432 = vmatpush1.bf16.msra.mxu0 %v4411
      %4433 = vmatprep.subr.bf16.mxu0 0
      %4434 = vmatpush1.bf16.msra.mxu0 %v4412
      %4435 = vmatprep.subr.bf16.mxu0 0
      %4436 = vmatpush1.bf16.msra.mxu0 %v4413
      %4437 = vmatprep.subr.bf16.mxu0 0
      %4438 = vmatpush1.bf16.msra.mxu0 %v4414
      %4439 = vmatprep.subr.bf16.mxu0 0
      %4440 = vmatpush1.bf16.msra.mxu0 0
      %4441 = vmatprep.subr.bf16.mxu0 0
      %4442 = vmatpush1.bf16.msra.mxu0 0
      %4443 = vmatprep.subr.bf16.mxu0 0
      %4444 = vmatpush1.bf16.msra.mxu0 0
      %4445 = vmatprep.subr.bf16.mxu0 0
      %4446 = vmatpush1.bf16.msra.mxu0 0
      %4447 = vmatprep.subr.bf16.mxu0 0
      %4448 = vmatpush1.bf16.msra.mxu0 0
      %4449 = vmatprep.subr.bf16.mxu0 0
      %4450 = vmatpush1.bf16.msra.mxu0 0
      %4451 = vmatprep.subr.bf16.mxu0 0
      %4452 = vmatpush1.bf16.msra.mxu0 0
      %4453 = vmatprep.subr.bf16.mxu0 0
      %4454 = vmatpush1.bf16.msra.mxu0 0
      %4455 = vmatprep.subr.bf16.mxu0 0
      %4456 = vmatpush1.bf16.msra.mxu0 0
      %4457 = vmatprep.subr.bf16.mxu0 0
      %4458 = vmatpush1.bf16.msra.mxu0 0
      %4459 = vmatprep.subr.bf16.mxu0 0
      %4460 = vmatpush1.bf16.msra.mxu0 0
      %4461 = vmatprep.subr.bf16.mxu0 0
      %4462 = vmatpush1.bf16.msra.mxu0 0
      %4463 = vmatprep.mubr.bf16.mxu0 0
      %4464 = vmatmul.mubr.bf16.gmra.mrb[0].mxu0 %v4420
      %v4465 = vpop.f32.mrb[0].mxu0
      %v4466 = vadd.f32 0.0, %v4465
      %v4467 = vpop.f32.mrb[0].mxu0
      %v4468 = vpop.f32.mrb[0].mxu0
      %v4469 = vadd.f32 0.0, %v4468
      %v4470 = vpop.f32.mrb[0].mxu0
      %4471 = vmatprep.mubr.bf16.mxu0 0
      %4472 = vmatmul.mubr.bf16.gmra.mrb[0].mxu0 %v4423
      %v4473 = vpop.f32.mrb[0].mxu0
      %v4474 = vadd.f32 0.0, %v4473
      %v4475 = vpop.f32.mrb[0].mxu0
      %v4476 = vpop.f32.mrb[0].mxu0
      %v4477 = vadd.f32 0.0, %v4476
      %v4478 = vpop.f32.mrb[0].mxu0
      %4479 = vmatprep.mubr.bf16.mxu0 0
      %4480 = vmatmul.mubr.bf16.gmra.mrb[0].mxu0 %v4426
      %v4481 = vpop.f32.mrb[0].mxu0
      %v4482 = vadd.f32 0.0, %v4481
      %v4483 = vpop.f32.mrb[0].mxu0
      %v4484 = vpop.f32.mrb[0].mxu0
      %v4485 = vadd.f32 0.0, %v4484
      %v4486 = vpop.f32.mrb[0].mxu0
      %4487 = vmatprep.mubr.bf16.mxu0 0
      %4488 = vmatmul.mubr.bf16.gmra.mrb[0].mxu0 %v4429
      %v4489 = vpop.f32.mrb[0].mxu0
      %v4490 = vadd.f32 0.0, %v4489
      %v4491 = vpop.f32.mrb[0].mxu0
      %v4492 = vpop.f32.mrb[0].mxu0
      %v4493 = vadd.f32 0.0, %v4492
      %v4494 = vpop.f32.mrb[0].mxu0
      %4495 = vdwg.mxu0
      %v4496 = vadd.f32 %v4206, %v4466
      %v4497 = vadd.f32 %v4209, %v4469
      %v4498 = vadd.f32 %v4214, %v4474
      %v4499 = vadd.f32 %v4217, %v4477
      %v4500 = vadd.f32 %v4222, %v4482
      %v4501 = vadd.f32 %v4225, %v4485
      %v4502 = vadd.f32 %v4230, %v4490
      %v4503 = vadd.f32 %v4233, %v4493
      %v4504 = vld [vmem:[%s3 + $0x60] sm:$0xf]
      %v4505 = vld [vmem:[%s3 + $0x64] sm:$0xf]
      %v4506 = vld [vmem:[%s3 + $0x68] sm:$0xf]
      %v4507 = vld [vmem:[%s3 + $0x6c] sm:$0xf]
      %v4508 = vld [vmem:[%s3 + $0x70] sm:$0xf]
      %v4509 = vld [vmem:[%s3 + $0x74] sm:$0xf]
      %v4510 = vld [vmem:[%s3 + $0x78] sm:$0xf]
      %v4511 = vld [vmem:[%s3 + $0x7c] sm:$0xf]
      %v4520 = vunpack.c.l.b16 %v3889
      %v4521 = vunpack.c.l.b16 %v3890
      %v4522 = vunpack.c.l.b16 %v3891
      %v4523 = vunpack.c.l.b16 %v3892
      %v4524 = vunpack.c.l.b16 %v3893
      %v4525 = vunpack.c.l.b16 %v3894
      %v4526 = vunpack.c.l.b16 %v3895
      %v4527 = vunpack.c.l.b16 %v3896
      %v4528 = vpack.c.b16 %v4521, %v4520
      %v4529 = vpack.c.b16 %v4523, %v4522
      %v4530 = vpack.c.b16 %v4525, %v4524
      %v4531 = vpack.c.b16 %v4527, %v4526
      %v4540 = vunpack.c.l.b16 %v4504
      %v4541 = vunpack.c.l.b16 %v4505
      %v4542 = vunpack.c.l.b16 %v4506
      %v4543 = vunpack.c.l.b16 %v4507
      %v4544 = vunpack.c.l.b16 %v4508
      %v4545 = vunpack.c.l.b16 %v4509
      %v4546 = vunpack.c.l.b16 %v4510
      %v4547 = vunpack.c.l.b16 %v4511
      %v4548 = vpack.c.b16 %v4541, %v4540
      %v4549 = vpack.c.b16 %v4543, %v4542
      %v4550 = vpack.c.b16 %v4545, %v4544
      %v4551 = vpack.c.b16 %v4547, %v4546
      %v4557 = vsel %vm4037, %v4528, 0
      %v4560 = vsel %vm4037, %v4529, 0
      %v4563 = vsel %vm4037, %v4530, 0
      %v4566 = vsel %vm4037, %v4531, 0
      %4568 = vmatprep.subr.bf16.mxu0 0
      %4569 = vmatpush1.bf16.msra.mxu0 %v4548
      %4570 = vmatprep.subr.bf16.mxu0 0
      %4571 = vmatpush1.bf16.msra.mxu0 %v4549
      %4572 = vmatprep.subr.bf16.mxu0 0
      %4573 = vmatpush1.bf16.msra.mxu0 %v4550
      %4574 = vmatprep.subr.bf16.mxu0 0
      %4575 = vmatpush1.bf16.msra.mxu0 %v4551
      %4576 = vmatprep.subr.bf16.mxu0 0
      %4577 = vmatpush1.bf16.msra.mxu0 0
      %4578 = vmatprep.subr.bf16.mxu0 0
      %4579 = vmatpush1.bf16.msra.mxu0 0
      %4580 = vmatprep.subr.bf16.mxu0 0
      %4581 = vmatpush1.bf16.msra.mxu0 0
      %4582 = vmatprep.subr.bf16.mxu0 0
      %4583 = vmatpush1.bf16.msra.mxu0 0
      %4584 = vmatprep.subr.bf16.mxu0 0
      %4585 = vmatpush1.bf16.msra.mxu0 0
      %4586 = vmatprep.subr.bf16.mxu0 0
      %4587 = vmatpush1.bf16.msra.mxu0 0
      %4588 = vmatprep.subr.bf16.mxu0 0
      %4589 = vmatpush1.bf16.msra.mxu0 0
      %4590 = vmatprep.subr.bf16.mxu0 0
      %4591 = vmatpush1.bf16.msra.mxu0 0
      %4592 = vmatprep.subr.bf16.mxu0 0
      %4593 = vmatpush1.bf16.msra.mxu0 0
      %4594 = vmatprep.subr.bf16.mxu0 0
      %4595 = vmatpush1.bf16.msra.mxu0 0
      %4596 = vmatprep.subr.bf16.mxu0 0
      %4597 = vmatpush1.bf16.msra.mxu0 0
      %4598 = vmatprep.subr.bf16.mxu0 0
      %4599 = vmatpush1.bf16.msra.mxu0 0
      %4600 = vmatprep.mubr.bf16.mxu0 0
      %4601 = vmatmul.mubr.bf16.gmra.mrb[0].mxu0 %v4557
      %v4602 = vpop.f32.mrb[0].mxu0
      %v4603 = vadd.f32 0.0, %v4602
      %v4604 = vpop.f32.mrb[0].mxu0
      %v4605 = vpop.f32.mrb[0].mxu0
      %v4606 = vadd.f32 0.0, %v4605
      %v4607 = vpop.f32.mrb[0].mxu0
      %4608 = vmatprep.mubr.bf16.mxu0 0
      %4609 = vmatmul.mubr.bf16.gmra.mrb[0].mxu0 %v4560
      %v4610 = vpop.f32.mrb[0].mxu0
      %v4611 = vadd.f32 0.0, %v4610
      %v4612 = vpop.f32.mrb[0].mxu0
      %v4613 = vpop.f32.mrb[0].mxu0
      %v4614 = vadd.f32 0.0, %v4613
      %v4615 = vpop.f32.mrb[0].mxu0
      %4616 = vmatprep.mubr.bf16.mxu0 0
      %4617 = vmatmul.mubr.bf16.gmra.mrb[0].mxu0 %v4563
      %v4618 = vpop.f32.mrb[0].mxu0
      %v4619 = vadd.f32 0.0, %v4618
      %v4620 = vpop.f32.mrb[0].mxu0
      %v4621 = vpop.f32.mrb[0].mxu0
      %v4622 = vadd.f32 0.0, %v4621
      %v4623 = vpop.f32.mrb[0].mxu0
      %4624 = vmatprep.mubr.bf16.mxu0 0
      %4625 = vmatmul.mubr.bf16.gmra.mrb[0].mxu0 %v4566
      %v4626 = vpop.f32.mrb[0].mxu0
      %v4627 = vadd.f32 0.0, %v4626
      %v4628 = vpop.f32.mrb[0].mxu0
      %v4629 = vpop.f32.mrb[0].mxu0
      %v4630 = vadd.f32 0.0, %v4629
      %v4631 = vpop.f32.mrb[0].mxu0
      %4632 = vdwg.mxu0
      %v4633 = vadd.f32 %v4496, %v4603
      %v4634 = vadd.f32 %v4497, %v4606
      %v4635 = vadd.f32 %v4498, %v4611
      %v4636 = vadd.f32 %v4499, %v4614
      %v4637 = vadd.f32 %v4500, %v4619
      %v4638 = vadd.f32 %v4501, %v4622
      %v4639 = vadd.f32 %v4502, %v4627
      %v4640 = vadd.f32 %v4503, %v4630
      %v4641 = vld [vmem:[%s3 + $0x80] sm:$0xf]
      %v4642 = vld [vmem:[%s3 + $0x84] sm:$0xf]
      %v4643 = vld [vmem:[%s3 + $0x88] sm:$0xf]
      %v4644 = vld [vmem:[%s3 + $0x8c] sm:$0xf]
      %v4645 = vld [vmem:[%s3 + $0x90] sm:$0xf]
      %v4646 = vld [vmem:[%s3 + $0x94] sm:$0xf]
      %v4647 = vld [vmem:[%s3 + $0x98] sm:$0xf]
      %v4648 = vld [vmem:[%s3 + $0x9c] sm:$0xf]
      %v4657 = vunpack.c.l.b16 %v3962
      %v4658 = vunpack.c.l.b16 %v3964
      %v4659 = vunpack.c.l.b16 %v3966
      %v4660 = vunpack.c.l.b16 %v3968
      %v4661 = vunpack.c.l.b16 %v3970
      %v4662 = vunpack.c.l.b16 %v3972
      %v4663 = vunpack.c.l.b16 %v3974
      %v4664 = vunpack.c.l.b16 %v3976
      %v4665 = vpack.c.b16 %v4658, %v4657
      %v4666 = vpack.c.b16 %v4660, %v4659
      %v4667 = vpack.c.b16 %v4662, %v4661
      %v4668 = vpack.c.b16 %v4664, %v4663
      %v4677 = vunpack.c.l.b16 %v4641
      %v4678 = vunpack.c.l.b16 %v4642
      %v4679 = vunpack.c.l.b16 %v4643
      %v4680 = vunpack.c.l.b16 %v4644
      %v4681 = vunpack.c.l.b16 %v4645
      %v4682 = vunpack.c.l.b16 %v4646
      %v4683 = vunpack.c.l.b16 %v4647
      %v4684 = vunpack.c.l.b16 %v4648
      %v4685 = vpack.c.b16 %v4678, %v4677
      %v4686 = vpack.c.b16 %v4680, %v4679
      %v4687 = vpack.c.b16 %v4682, %v4681
      %v4688 = vpack.c.b16 %v4684, %v4683
      %v4694 = vsel %vm4037, %v4665, 0
      %v4697 = vsel %vm4037, %v4666, 0
      %v4700 = vsel %vm4037, %v4667, 0
      %v4703 = vsel %vm4037, %v4668, 0
      %4705 = vmatprep.subr.bf16.mxu0 0
      %4706 = vmatpush1.bf16.msra.mxu0 %v4685
      %4707 = vmatprep.subr.bf16.mxu0 0
      %4708 = vmatpush1.bf16.msra.mxu0 %v4686
      %4709 = vmatprep.subr.bf16.mxu0 0
      %4710 = vmatpush1.bf16.msra.mxu0 %v4687
      %4711 = vmatprep.subr.bf16.mxu0 0
      %4712 = vmatpush1.bf16.msra.mxu0 %v4688
      %4713 = vmatprep.subr.bf16.mxu0 0
      %4714 = vmatpush1.bf16.msra.mxu0 0
      %4715 = vmatprep.subr.bf16.mxu0 0
      %4716 = vmatpush1.bf16.msra.mxu0 0
      %4717 = vmatprep.subr.bf16.mxu0 0
      %4718 = vmatpush1.bf16.msra.mxu0 0
      %4719 = vmatprep.subr.bf16.mxu0 0
      %4720 = vmatpush1.bf16.msra.mxu0 0
      %4721 = vmatprep.subr.bf16.mxu0 0
      %4722 = vmatpush1.bf16.msra.mxu0 0
      %4723 = vmatprep.subr.bf16.mxu0 0
      %4724 = vmatpush1.bf16.msra.mxu0 0
      %4725 = vmatprep.subr.bf16.mxu0 0
      %4726 = vmatpush1.bf16.msra.mxu0 0
      %4727 = vmatprep.subr.bf16.mxu0 0
      %4728 = vmatpush1.bf16.msra.mxu0 0
      %4729 = vmatprep.subr.bf16.mxu0 0
      %4730 = vmatpush1.bf16.msra.mxu0 0
      %4731 = vmatprep.subr.bf16.mxu0 0
      %4732 = vmatpush1.bf16.msra.mxu0 0
      %4733 = vmatprep.subr.bf16.mxu0 0
      %4734 = vmatpush1.bf16.msra.mxu0 0
      %4735 = vmatprep.subr.bf16.mxu0 0
      %4736 = vmatpush1.bf16.msra.mxu0 0
      %4737 = vmatprep.mubr.bf16.mxu0 0
      %4738 = vmatmul.mubr.bf16.gmra.mrb[0].mxu0 %v4694
      %v4739 = vpop.f32.mrb[0].mxu0
      %v4740 = vadd.f32 0.0, %v4739
      %v4741 = vpop.f32.mrb[0].mxu0
      %v4742 = vpop.f32.mrb[0].mxu0
      %v4743 = vadd.f32 0.0, %v4742
      %v4744 = vpop.f32.mrb[0].mxu0
      %4745 = vmatprep.mubr.bf16.mxu0 0
      %4746 = vmatmul.mubr.bf16.gmra.mrb[0].mxu0 %v4697
      %v4747 = vpop.f32.mrb[0].mxu0
      %v4748 = vadd.f32 0.0, %v4747
      %v4749 = vpop.f32.mrb[0].mxu0
      %v4750 = vpop.f32.mrb[0].mxu0
      %v4751 = vadd.f32 0.0, %v4750
      %v4752 = vpop.f32.mrb[0].mxu0
      %4753 = vmatprep.mubr.bf16.mxu0 0
      %4754 = vmatmul.mubr.bf16.gmra.mrb[0].mxu0 %v4700
      %v4755 = vpop.f32.mrb[0].mxu0
      %v4756 = vadd.f32 0.0, %v4755
      %v4757 = vpop.f32.mrb[0].mxu0
      %v4758 = vpop.f32.mrb[0].mxu0
      %v4759 = vadd.f32 0.0, %v4758
      %v4760 = vpop.f32.mrb[0].mxu0
      %4761 = vmatprep.mubr.bf16.mxu0 0
      %4762 = vmatmul.mubr.bf16.gmra.mrb[0].mxu0 %v4703
      %v4763 = vpop.f32.mrb[0].mxu0
      %v4764 = vadd.f32 0.0, %v4763
      %v4765 = vpop.f32.mrb[0].mxu0
      %v4766 = vpop.f32.mrb[0].mxu0
      %v4767 = vadd.f32 0.0, %v4766
      %v4768 = vpop.f32.mrb[0].mxu0
      %4769 = vdwg.mxu0
      %v4770 = vadd.f32 %v4633, %v4740
      %v4771 = vadd.f32 %v4634, %v4743
      %v4772 = vadd.f32 %v4635, %v4748
      %v4773 = vadd.f32 %v4636, %v4751
      %v4774 = vadd.f32 %v4637, %v4756
      %v4775 = vadd.f32 %v4638, %v4759
      %v4776 = vadd.f32 %v4639, %v4764
      %v4777 = vadd.f32 %v4640, %v4767
      %v4778 = vunpack.c.h.b16 %v3889
      %v4779 = vunpack.c.h.b16 %v3890
      %v4780 = vunpack.c.h.b16 %v3891
      %v4781 = vunpack.c.h.b16 %v3892
      %v4782 = vunpack.c.h.b16 %v3893
      %v4783 = vunpack.c.h.b16 %v3894
      %v4784 = vunpack.c.h.b16 %v3895
      %v4785 = vunpack.c.h.b16 %v3896
      %v4786 = vpack.c.b16 %v4520, %v4520
      %v4787 = vpack.c.b16 %v4778, %v4778
      %v4788 = vpack.c.b16 %v4521, %v4521
      %v4789 = vpack.c.b16 %v4779, %v4779
      %v4790 = vpack.c.b16 %v4522, %v4522
      %v4791 = vpack.c.b16 %v4780, %v4780
      %v4792 = vpack.c.b16 %v4523, %v4523
      %v4793 = vpack.c.b16 %v4781, %v4781
      %v4794 = vpack.c.b16 %v4524, %v4524
      %v4795 = vpack.c.b16 %v4782, %v4782
      %v4796 = vpack.c.b16 %v4525, %v4525
      %v4797 = vpack.c.b16 %v4783, %v4783
      %v4798 = vpack.c.b16 %v4526, %v4526
      %v4799 = vpack.c.b16 %v4784, %v4784
      %v4800 = vpack.c.b16 %v4527, %v4527
      %v4801 = vpack.c.b16 %v4785, %v4785
      %v4803 = vshrl.u32 %v4786, 16
      %v4805 = vrot.slane %v4803, 4
      %v4806 = vshll.u32 %v4786, 16
      %v4808 = vrot.slane %v4806, 5
      %v4809 = vor.u32 %v4805, %v4808
      %v4810 = vrot.slane %v4809, 4
      %v4812 = vshll.u32 %v4787, 16
      %v4814 = vrot.slane %v4812, 5
      %v4815 = vsel %vm4262, %v4810, %v4814
      %v4817 = vshrl.u32 %v4788, 16
      %v4819 = vrot.slane %v4817, 4
      %v4820 = vshll.u32 %v4788, 16
      %v4822 = vrot.slane %v4820, 5
      %v4823 = vor.u32 %v4819, %v4822
      %v4824 = vrot.slane %v4823, 4
      %v4826 = vshll.u32 %v4789, 16
      %v4828 = vrot.slane %v4826, 5
      %v4829 = vsel %vm4262, %v4824, %v4828
      %v4831 = vshrl.u32 %v4790, 16
      %v4833 = vrot.slane %v4831, 4
      %v4834 = vshll.u32 %v4790, 16
      %v4836 = vrot.slane %v4834, 5
      %v4837 = vor.u32 %v4833, %v4836
      %v4838 = vrot.slane %v4837, 4
      %v4840 = vshll.u32 %v4791, 16
      %v4842 = vrot.slane %v4840, 5
      %v4843 = vsel %vm4262, %v4838, %v4842
      %v4845 = vshrl.u32 %v4792, 16
      %v4847 = vrot.slane %v4845, 4
      %v4848 = vshll.u32 %v4792, 16
      %v4850 = vrot.slane %v4848, 5
      %v4851 = vor.u32 %v4847, %v4850
      %v4852 = vrot.slane %v4851, 4
      %v4854 = vshll.u32 %v4793, 16
      %v4856 = vrot.slane %v4854, 5
      %v4857 = vsel %vm4262, %v4852, %v4856
      %v4859 = vshrl.u32 %v4794, 16
      %v4861 = vrot.slane %v4859, 4
      %v4862 = vshll.u32 %v4794, 16
      %v4864 = vrot.slane %v4862, 5
      %v4865 = vor.u32 %v4861, %v4864
      %v4866 = vrot.slane %v4865, 4
      %v4868 = vshll.u32 %v4795, 16
      %v4870 = vrot.slane %v4868, 5
      %v4871 = vsel %vm4262, %v4866, %v4870
      %v4873 = vshrl.u32 %v4796, 16
      %v4875 = vrot.slane %v4873, 4
      %v4876 = vshll.u32 %v4796, 16
      %v4878 = vrot.slane %v4876, 5
      %v4879 = vor.u32 %v4875, %v4878
      %v4880 = vrot.slane %v4879, 4
      %v4882 = vshll.u32 %v4797, 16
      %v4884 = vrot.slane %v4882, 5
      %v4885 = vsel %vm4262, %v4880, %v4884
      %v4887 = vshrl.u32 %v4798, 16
      %v4889 = vrot.slane %v4887, 4
      %v4890 = vshll.u32 %v4798, 16
      %v4892 = vrot.slane %v4890, 5
      %v4893 = vor.u32 %v4889, %v4892
      %v4894 = vrot.slane %v4893, 4
      %v4896 = vshll.u32 %v4799, 16
      %v4898 = vrot.slane %v4896, 5
      %v4899 = vsel %vm4262, %v4894, %v4898
      %v4901 = vshrl.u32 %v4800, 16
      %v4903 = vrot.slane %v4901, 4
      %v4904 = vshll.u32 %v4800, 16
      %v4906 = vrot.slane %v4904, 5
      %v4907 = vor.u32 %v4903, %v4906
      %v4908 = vrot.slane %v4907, 4
      %v4910 = vshll.u32 %v4801, 16
      %v4912 = vrot.slane %v4910, 5
      %v4913 = vsel %vm4262, %v4908, %v4912
      %v4914 = vld [vmem:[%s3 + $0xa0] sm:$0xf]
      %v4915 = vld [vmem:[%s3 + $0xa4] sm:$0xf]
      %v4916 = vld [vmem:[%s3 + $0xa8] sm:$0xf]
      %v4917 = vld [vmem:[%s3 + $0xac] sm:$0xf]
      %v4918 = vld [vmem:[%s3 + $0xb0] sm:$0xf]
      %v4919 = vld [vmem:[%s3 + $0xb4] sm:$0xf]
      %v4920 = vld [vmem:[%s3 + $0xb8] sm:$0xf]
      %v4921 = vld [vmem:[%s3 + $0xbc] sm:$0xf]
      %v4922 = vunpack.c.l.b16 %v4815
      %v4923 = vunpack.c.l.b16 %v4829
      %v4924 = vunpack.c.l.b16 %v4843
      %v4925 = vunpack.c.l.b16 %v4857
      %v4926 = vunpack.c.l.b16 %v4871
      %v4927 = vunpack.c.l.b16 %v4885
      %v4928 = vunpack.c.l.b16 %v4899
      %v4929 = vunpack.c.l.b16 %v4913
      %v4930 = vpack.c.b16 %v4923, %v4922
      %v4931 = vpack.c.b16 %v4925, %v4924
      %v4932 = vpack.c.b16 %v4927, %v4926
      %v4933 = vpack.c.b16 %v4929, %v4928
      %v4942 = vunpack.c.l.b16 %v4914
      %v4943 = vunpack.c.l.b16 %v4915
      %v4944 = vunpack.c.l.b16 %v4916
      %v4945 = vunpack.c.l.b16 %v4917
      %v4946 = vunpack.c.l.b16 %v4918
      %v4947 = vunpack.c.l.b16 %v4919
      %v4948 = vunpack.c.l.b16 %v4920
      %v4949 = vunpack.c.l.b16 %v4921
      %v4950 = vpack.c.b16 %v4943, %v4942
      %v4951 = vpack.c.b16 %v4945, %v4944
      %v4952 = vpack.c.b16 %v4947, %v4946
      %v4953 = vpack.c.b16 %v4949, %v4948
      %v4959 = vsel %vm4037, %v4930, 0
      %v4962 = vsel %vm4037, %v4931, 0
      %v4965 = vsel %vm4037, %v4932, 0
      %v4968 = vsel %vm4037, %v4933, 0
      %4970 = vmatprep.subr.bf16.mxu0 0
      %4971 = vmatpush1.bf16.msra.mxu0 %v4950
      %4972 = vmatprep.subr.bf16.mxu0 0
      %4973 = vmatpush1.bf16.msra.mxu0 %v4951
      %4974 = vmatprep.subr.bf16.mxu0 0
      %4975 = vmatpush1.bf16.msra.mxu0 %v4952
      %4976 = vmatprep.subr.bf16.mxu0 0
      %4977 = vmatpush1.bf16.msra.mxu0 %v4953
      %4978 = vmatprep.subr.bf16.mxu0 0
      %4979 = vmatpush1.bf16.msra.mxu0 0
      %4980 = vmatprep.subr.bf16.mxu0 0
      %4981 = vmatpush1.bf16.msra.mxu0 0
      %4982 = vmatprep.subr.bf16.mxu0 0
      %4983 = vmatpush1.bf16.msra.mxu0 0
      %4984 = vmatprep.subr.bf16.mxu0 0
      %4985 = vmatpush1.bf16.msra.mxu0 0
      %4986 = vmatprep.subr.bf16.mxu0 0
      %4987 = vmatpush1.bf16.msra.mxu0 0
      %4988 = vmatprep.subr.bf16.mxu0 0
      %4989 = vmatpush1.bf16.msra.mxu0 0
      %4990 = vmatprep.subr.bf16.mxu0 0
      %4991 = vmatpush1.bf16.msra.mxu0 0
      %4992 = vmatprep.subr.bf16.mxu0 0
      %4993 = vmatpush1.bf16.msra.mxu0 0
      %4994 = vmatprep.subr.bf16.mxu0 0
      %4995 = vmatpush1.bf16.msra.mxu0 0
      %4996 = vmatprep.subr.bf16.mxu0 0
      %4997 = vmatpush1.bf16.msra.mxu0 0
      %4998 = vmatprep.subr.bf16.mxu0 0
      %4999 = vmatpush1.bf16.msra.mxu0 0
      %5000 = vmatprep.subr.bf16.mxu0 0
      %5001 = vmatpush1.bf16.msra.mxu0 0
      %5002 = vmatprep.mubr.bf16.mxu0 0
      %5003 = vmatmul.mubr.bf16.gmra.mrb[0].mxu0 %v4959
      %v5004 = vpop.f32.mrb[0].mxu0
      %v5005 = vadd.f32 0.0, %v5004
      %v5006 = vpop.f32.mrb[0].mxu0
      %v5007 = vpop.f32.mrb[0].mxu0
      %v5008 = vadd.f32 0.0, %v5007
      %v5009 = vpop.f32.mrb[0].mxu0
      %5010 = vmatprep.mubr.bf16.mxu0 0
      %5011 = vmatmul.mubr.bf16.gmra.mrb[0].mxu0 %v4962
      %v5012 = vpop.f32.mrb[0].mxu0
      %v5013 = vadd.f32 0.0, %v5012
      %v5014 = vpop.f32.mrb[0].mxu0
      %v5015 = vpop.f32.mrb[0].mxu0
      %v5016 = vadd.f32 0.0, %v5015
      %v5017 = vpop.f32.mrb[0].mxu0
      %5018 = vmatprep.mubr.bf16.mxu0 0
      %5019 = vmatmul.mubr.bf16.gmra.mrb[0].mxu0 %v4965
      %v5020 = vpop.f32.mrb[0].mxu0
      %v5021 = vadd.f32 0.0, %v5020
      %v5022 = vpop.f32.mrb[0].mxu0
      %v5023 = vpop.f32.mrb[0].mxu0
      %v5024 = vadd.f32 0.0, %v5023
      %v5025 = vpop.f32.mrb[0].mxu0
      %5026 = vmatprep.mubr.bf16.mxu0 0
      %5027 = vmatmul.mubr.bf16.gmra.mrb[0].mxu0 %v4968
      %v5028 = vpop.f32.mrb[0].mxu0
      %v5029 = vadd.f32 0.0, %v5028
      %v5030 = vpop.f32.mrb[0].mxu0
      %v5031 = vpop.f32.mrb[0].mxu0
      %v5032 = vadd.f32 0.0, %v5031
      %v5033 = vpop.f32.mrb[0].mxu0
      %5034 = vdwg.mxu0
      %v5035 = vadd.f32 %v4770, %v5005
      %v5036 = vadd.f32 %v4771, %v5008
      %v5037 = vadd.f32 %v4772, %v5013
      %v5038 = vadd.f32 %v4773, %v5016
      %v5039 = vadd.f32 %v4774, %v5021
      %v5040 = vadd.f32 %v4775, %v5024
      %v5041 = vadd.f32 %v4776, %v5029
      %v5042 = vadd.f32 %v4777, %v5032
      %v5043 = vld [vmem:[%s3 + $0xc0] sm:$0xf]
      %v5044 = vld [vmem:[%s3 + $0xc4] sm:$0xf]
      %v5045 = vld [vmem:[%s3 + $0xc8] sm:$0xf]
      %v5046 = vld [vmem:[%s3 + $0xcc] sm:$0xf]
      %v5047 = vld [vmem:[%s3 + $0xd0] sm:$0xf]
      %v5048 = vld [vmem:[%s3 + $0xd4] sm:$0xf]
      %v5049 = vld [vmem:[%s3 + $0xd8] sm:$0xf]
      %v5050 = vld [vmem:[%s3 + $0xdc] sm:$0xf]
      %v5052 = vunpack.c.l.b16 %v2670
      %v5053 = vpack.c.b16 %v4125, %v4124
      %v5054 = vpack.c.b16 %v4127, %v4126
      %v5055 = vpack.c.b16 %v4129, %v4128
      %v5056 = vpack.c.b16 %v5052, %v4130
      %v5065 = vunpack.c.l.b16 %v5043
      %v5066 = vunpack.c.l.b16 %v5044
      %v5067 = vunpack.c.l.b16 %v5045
      %v5068 = vunpack.c.l.b16 %v5046
      %v5069 = vunpack.c.l.b16 %v5047
      %v5070 = vunpack.c.l.b16 %v5048
      %v5071 = vunpack.c.l.b16 %v5049
      %v5072 = vunpack.c.l.b16 %v5050
      %v5073 = vpack.c.b16 %v5066, %v5065
      %v5074 = vpack.c.b16 %v5068, %v5067
      %v5075 = vpack.c.b16 %v5070, %v5069
      %v5076 = vpack.c.b16 %v5072, %v5071
      %v5082 = vsel %vm4037, %v5053, 0
      %v5085 = vsel %vm4037, %v5054, 0
      %v5088 = vsel %vm4037, %v5055, 0
      %v5091 = vsel %vm4037, %v5056, 0
      %5093 = vmatprep.subr.bf16.mxu0 0
      %5094 = vmatpush1.bf16.msra.mxu0 %v5073
      %5095 = vmatprep.subr.bf16.mxu0 0
      %5096 = vmatpush1.bf16.msra.mxu0 %v5074
      %5097 = vmatprep.subr.bf16.mxu0 0
      %5098 = vmatpush1.bf16.msra.mxu0 %v5075
      %5099 = vmatprep.subr.bf16.mxu0 0
      %5100 = vmatpush1.bf16.msra.mxu0 %v5076
      %5101 = vmatprep.subr.bf16.mxu0 0
      %5102 = vmatpush1.bf16.msra.mxu0 0
      %5103 = vmatprep.subr.bf16.mxu0 0
      %5104 = vmatpush1.bf16.msra.mxu0 0
      %5105 = vmatprep.subr.bf16.mxu0 0
      %5106 = vmatpush1.bf16.msra.mxu0 0
      %5107 = vmatprep.subr.bf16.mxu0 0
      %5108 = vmatpush1.bf16.msra.mxu0 0
      %5109 = vmatprep.subr.bf16.mxu0 0
      %5110 = vmatpush1.bf16.msra.mxu0 0
      %5111 = vmatprep.subr.bf16.mxu0 0
      %5112 = vmatpush1.bf16.msra.mxu0 0
      %5113 = vmatprep.subr.bf16.mxu0 0
      %5114 = vmatpush1.bf16.msra.mxu0 0
      %5115 = vmatprep.subr.bf16.mxu0 0
      %5116 = vmatpush1.bf16.msra.mxu0 0
      %5117 = vmatprep.subr.bf16.mxu0 0
      %5118 = vmatpush1.bf16.msra.mxu0 0
      %5119 = vmatprep.subr.bf16.mxu0 0
      %5120 = vmatpush1.bf16.msra.mxu0 0
      %5121 = vmatprep.subr.bf16.mxu0 0
      %5122 = vmatpush1.bf16.msra.mxu0 0
      %5123 = vmatprep.subr.bf16.mxu0 0
      %5124 = vmatpush1.bf16.msra.mxu0 0
      %5125 = vmatprep.mubr.bf16.mxu0 0
      %5126 = vmatmul.mubr.bf16.gmra.mrb[0].mxu0 %v5082
      %v5127 = vpop.f32.mrb[0].mxu0
      %v5128 = vadd.f32 0.0, %v5127
      %v5129 = vpop.f32.mrb[0].mxu0
      %v5130 = vpop.f32.mrb[0].mxu0
      %v5131 = vadd.f32 0.0, %v5130
      %v5132 = vpop.f32.mrb[0].mxu0
      %5133 = vmatprep.mubr.bf16.mxu0 0
      %5134 = vmatmul.mubr.bf16.gmra.mrb[0].mxu0 %v5085
      %v5135 = vpop.f32.mrb[0].mxu0
      %v5136 = vadd.f32 0.0, %v5135
      %v5137 = vpop.f32.mrb[0].mxu0
      %v5138 = vpop.f32.mrb[0].mxu0
      %v5139 = vadd.f32 0.0, %v5138
      %v5140 = vpop.f32.mrb[0].mxu0
      %5141 = vmatprep.mubr.bf16.mxu0 0
      %5142 = vmatmul.mubr.bf16.gmra.mrb[0].mxu0 %v5088
      %v5143 = vpop.f32.mrb[0].mxu0
      %v5144 = vadd.f32 0.0, %v5143
      %v5145 = vpop.f32.mrb[0].mxu0
      %v5146 = vpop.f32.mrb[0].mxu0
      %v5147 = vadd.f32 0.0, %v5146
      %v5148 = vpop.f32.mrb[0].mxu0
      %5149 = vmatprep.mubr.bf16.mxu0 0
      %5150 = vmatmul.mubr.bf16.gmra.mrb[0].mxu0 %v5091
      %v5151 = vpop.f32.mrb[0].mxu0
      %v5152 = vadd.f32 0.0, %v5151
      %v5153 = vpop.f32.mrb[0].mxu0
      %v5154 = vpop.f32.mrb[0].mxu0
      %v5155 = vadd.f32 0.0, %v5154
      %v5156 = vpop.f32.mrb[0].mxu0
      %5157 = vdwg.mxu0
      %v5158 = vadd.f32 %v5035, %v5128
      %v5159 = vadd.f32 %v5036, %v5131
      %v5160 = vadd.f32 %v5037, %v5136
      %v5161 = vadd.f32 %v5038, %v5139
      %v5162 = vadd.f32 %v5039, %v5144
      %v5163 = vadd.f32 %v5040, %v5147
      %v5164 = vadd.f32 %v5041, %v5152
      %v5165 = vadd.f32 %v5042, %v5155
      %v5166 = vld [vmem:[%s3 + $0xe0] sm:$0xf]
      %v5167 = vld [vmem:[%s3 + $0xe4] sm:$0xf]
      %v5168 = vld [vmem:[%s3 + $0xe8] sm:$0xf]
      %v5169 = vld [vmem:[%s3 + $0xec] sm:$0xf]
      %v5170 = vld [vmem:[%s3 + $0xf0] sm:$0xf]
      %v5171 = vld [vmem:[%s3 + $0xf4] sm:$0xf]
      %v5172 = vld [vmem:[%s3 + $0xf8] sm:$0xf]
      %v5173 = vld [vmem:[%s3 + $0xfc] sm:$0xf]
      %v5175 = vunpack.c.l.b16 %v2807
      %v5176 = vpack.c.b16 %v4003, %v4002
      %v5177 = vpack.c.b16 %v4005, %v4004
      %v5178 = vpack.c.b16 %v4007, %v4006
      %v5179 = vpack.c.b16 %v5175, %v4008
      %v5188 = vunpack.c.l.b16 %v5166
      %v5189 = vunpack.c.l.b16 %v5167
      %v5190 = vunpack.c.l.b16 %v5168
      %v5191 = vunpack.c.l.b16 %v5169
      %v5192 = vunpack.c.l.b16 %v5170
      %v5193 = vunpack.c.l.b16 %v5171
      %v5194 = vunpack.c.l.b16 %v5172
      %v5195 = vunpack.c.l.b16 %v5173
      %v5196 = vpack.c.b16 %v5189, %v5188
      %v5197 = vpack.c.b16 %v5191, %v5190
      %v5198 = vpack.c.b16 %v5193, %v5192
      %v5199 = vpack.c.b16 %v5195, %v5194
      %v5205 = vsel %vm4037, %v5176, 0
      %v5208 = vsel %vm4037, %v5177, 0
      %v5211 = vsel %vm4037, %v5178, 0
      %v5214 = vsel %vm4037, %v5179, 0
      %5216 = vmatprep.subr.bf16.mxu0 0
      %5217 = vmatpush1.bf16.msra.mxu0 %v5196
      %5218 = vmatprep.subr.bf16.mxu0 0
      %5219 = vmatpush1.bf16.msra.mxu0 %v5197
      %5220 = vmatprep.subr.bf16.mxu0 0
      %5221 = vmatpush1.bf16.msra.mxu0 %v5198
      %5222 = vmatprep.subr.bf16.mxu0 0
      %5223 = vmatpush1.bf16.msra.mxu0 %v5199
      %5224 = vmatprep.subr.bf16.mxu0 0
      %5225 = vmatpush1.bf16.msra.mxu0 0
      %5226 = vmatprep.subr.bf16.mxu0 0
      %5227 = vmatpush1.bf16.msra.mxu0 0
      %5228 = vmatprep.subr.bf16.mxu0 0
      %5229 = vmatpush1.bf16.msra.mxu0 0
      %5230 = vmatprep.subr.bf16.mxu0 0
      %5231 = vmatpush1.bf16.msra.mxu0 0
      %5232 = vmatprep.subr.bf16.mxu0 0
      %5233 = vmatpush1.bf16.msra.mxu0 0
      %5234 = vmatprep.subr.bf16.mxu0 0
      %5235 = vmatpush1.bf16.msra.mxu0 0
      %5236 = vmatprep.subr.bf16.mxu0 0
      %5237 = vmatpush1.bf16.msra.mxu0 0
      %5238 = vmatprep.subr.bf16.mxu0 0
      %5239 = vmatpush1.bf16.msra.mxu0 0
      %5240 = vmatprep.subr.bf16.mxu0 0
      %5241 = vmatpush1.bf16.msra.mxu0 0
      %5242 = vmatprep.subr.bf16.mxu0 0
      %5243 = vmatpush1.bf16.msra.mxu0 0
      %5244 = vmatprep.subr.bf16.mxu0 0
      %5245 = vmatpush1.bf16.msra.mxu0 0
      %5246 = vmatprep.subr.bf16.mxu0 0
      %5247 = vmatpush1.bf16.msra.mxu0 0
      %5248 = vmatprep.mubr.bf16.mxu0 0
      %5249 = vmatmul.mubr.bf16.gmra.mrb[0].mxu0 %v5205
      %v5250 = vpop.f32.mrb[0].mxu0
      %v5251 = vadd.f32 0.0, %v5250
      %v5252 = vpop.f32.mrb[0].mxu0
      %v5253 = vpop.f32.mrb[0].mxu0
      %v5254 = vadd.f32 0.0, %v5253
      %v5255 = vpop.f32.mrb[0].mxu0
      %5256 = vmatprep.mubr.bf16.mxu0 0
      %5257 = vmatmul.mubr.bf16.gmra.mrb[0].mxu0 %v5208
      %v5258 = vpop.f32.mrb[0].mxu0
      %v5259 = vadd.f32 0.0, %v5258
      %v5260 = vpop.f32.mrb[0].mxu0
      %v5261 = vpop.f32.mrb[0].mxu0
      %v5262 = vadd.f32 0.0, %v5261
      %v5263 = vpop.f32.mrb[0].mxu0
      %5264 = vmatprep.mubr.bf16.mxu0 0
      %5265 = vmatmul.mubr.bf16.gmra.mrb[0].mxu0 %v5211
      %v5266 = vpop.f32.mrb[0].mxu0
      %v5267 = vadd.f32 0.0, %v5266
      %v5268 = vpop.f32.mrb[0].mxu0
      %v5269 = vpop.f32.mrb[0].mxu0
      %v5270 = vadd.f32 0.0, %v5269
      %v5271 = vpop.f32.mrb[0].mxu0
      %5272 = vmatprep.mubr.bf16.mxu0 0
      %5273 = vmatmul.mubr.bf16.gmra.mrb[0].mxu0 %v5214
      %v5274 = vpop.f32.mrb[0].mxu0
      %v5275 = vadd.f32 0.0, %v5274
      %v5276 = vpop.f32.mrb[0].mxu0
      %v5277 = vpop.f32.mrb[0].mxu0
      %v5278 = vadd.f32 0.0, %v5277
      %v5279 = vpop.f32.mrb[0].mxu0
      %5280 = vdwg.mxu0
      %v5281 = vadd.f32 %v5158, %v5251
      %v5282 = vadd.f32 %v5159, %v5254
      %v5283 = vadd.f32 %v5160, %v5259
      %v5284 = vadd.f32 %v5161, %v5262
      %v5285 = vadd.f32 %v5162, %v5267
      %v5286 = vadd.f32 %v5163, %v5270
      %v5287 = vadd.f32 %v5164, %v5275
      %v5288 = vadd.f32 %v5165, %v5278
      %v5289 = vunpack.c.h.b16 %v2670
      %v5290 = vpack.c.b16 %v5052, %v5052
      %v5291 = vpack.c.b16 %v5289, %v5289
      %v5293 = vshrl.u32 %v5290, 16
      %v5295 = vrot.slane %v5293, 4
      %v5296 = vshll.u32 %v5290, 16
      %v5298 = vrot.slane %v5296, 5
      %v5299 = vor.u32 %v5295, %v5298
      %v5300 = vrot.slane %v5299, 4
      %v5302 = vshll.u32 %v5291, 16
      %v5304 = vrot.slane %v5302, 5
      %v5305 = vsel %vm4262, %v5300, %v5304
      %v5306 = vld [vmem:[%s3 + $0x100] sm:$0xf]
      %v5307 = vld [vmem:[%s3 + $0x104] sm:$0xf]
      %v5308 = vld [vmem:[%s3 + $0x108] sm:$0xf]
      %v5309 = vld [vmem:[%s3 + $0x10c] sm:$0xf]
      %v5310 = vld [vmem:[%s3 + $0x110] sm:$0xf]
      %v5311 = vld [vmem:[%s3 + $0x114] sm:$0xf]
      %v5312 = vld [vmem:[%s3 + $0x118] sm:$0xf]
      %v5313 = vld [vmem:[%s3 + $0x11c] sm:$0xf]
      %v5314 = vunpack.c.l.b16 %v5305
      %v5315 = vpack.c.b16 %v4385, %v4384
      %v5316 = vpack.c.b16 %v4387, %v4386
      %v5317 = vpack.c.b16 %v4389, %v4388
      %v5318 = vpack.c.b16 %v5314, %v4390
      %v5327 = vunpack.c.l.b16 %v5306
      %v5328 = vunpack.c.l.b16 %v5307
      %v5329 = vunpack.c.l.b16 %v5308
      %v5330 = vunpack.c.l.b16 %v5309
      %v5331 = vunpack.c.l.b16 %v5310
      %v5332 = vunpack.c.l.b16 %v5311
      %v5333 = vunpack.c.l.b16 %v5312
      %v5334 = vunpack.c.l.b16 %v5313
      %v5335 = vpack.c.b16 %v5328, %v5327
      %v5336 = vpack.c.b16 %v5330, %v5329
      %v5337 = vpack.c.b16 %v5332, %v5331
      %v5338 = vpack.c.b16 %v5334, %v5333
      %v5344 = vsel %vm4037, %v5315, 0
      %v5347 = vsel %vm4037, %v5316, 0
      %v5350 = vsel %vm4037, %v5317, 0
      %v5353 = vsel %vm4037, %v5318, 0
      %5355 = vmatprep.subr.bf16.mxu0 0
      %5356 = vmatpush1.bf16.msra.mxu0 %v5335
      %5357 = vmatprep.subr.bf16.mxu0 0
      %5358 = vmatpush1.bf16.msra.mxu0 %v5336
      %5359 = vmatprep.subr.bf16.mxu0 0
      %5360 = vmatpush1.bf16.msra.mxu0 %v5337
      %5361 = vmatprep.subr.bf16.mxu0 0
      %5362 = vmatpush1.bf16.msra.mxu0 %v5338
      %5363 = vmatprep.subr.bf16.mxu0 0
      %5364 = vmatpush1.bf16.msra.mxu0 0
      %5365 = vmatprep.subr.bf16.mxu0 0
      %5366 = vmatpush1.bf16.msra.mxu0 0
      %5367 = vmatprep.subr.bf16.mxu0 0
      %5368 = vmatpush1.bf16.msra.mxu0 0
      %5369 = vmatprep.subr.bf16.mxu0 0
      %5370 = vmatpush1.bf16.msra.mxu0 0
      %5371 = vmatprep.subr.bf16.mxu0 0
      %5372 = vmatpush1.bf16.msra.mxu0 0
      %5373 = vmatprep.subr.bf16.mxu0 0
      %5374 = vmatpush1.bf16.msra.mxu0 0
      %5375 = vmatprep.subr.bf16.mxu0 0
      %5376 = vmatpush1.bf16.msra.mxu0 0
      %5377 = vmatprep.subr.bf16.mxu0 0
      %5378 = vmatpush1.bf16.msra.mxu0 0
      %5379 = vmatprep.subr.bf16.mxu0 0
      %5380 = vmatpush1.bf16.msra.mxu0 0
      %5381 = vmatprep.subr.bf16.mxu0 0
      %5382 = vmatpush1.bf16.msra.mxu0 0
      %5383 = vmatprep.subr.bf16.mxu0 0
      %5384 = vmatpush1.bf16.msra.mxu0 0
      %5385 = vmatprep.subr.bf16.mxu0 0
      %5386 = vmatpush1.bf16.msra.mxu0 0
      %5387 = vmatprep.mubr.bf16.mxu0 0
      %5388 = vmatmul.mubr.bf16.gmra.mrb[0].mxu0 %v5344
      %v5389 = vpop.f32.mrb[0].mxu0
      %v5390 = vadd.f32 0.0, %v5389
      %v5391 = vpop.f32.mrb[0].mxu0
      %v5392 = vpop.f32.mrb[0].mxu0
      %v5393 = vadd.f32 0.0, %v5392
      %v5394 = vpop.f32.mrb[0].mxu0
      %5395 = vmatprep.mubr.bf16.mxu0 0
      %5396 = vmatmul.mubr.bf16.gmra.mrb[0].mxu0 %v5347
      %v5397 = vpop.f32.mrb[0].mxu0
      %v5398 = vadd.f32 0.0, %v5397
      %v5399 = vpop.f32.mrb[0].mxu0
      %v5400 = vpop.f32.mrb[0].mxu0
      %v5401 = vadd.f32 0.0, %v5400
      %v5402 = vpop.f32.mrb[0].mxu0
      %5403 = vmatprep.mubr.bf16.mxu0 0
      %5404 = vmatmul.mubr.bf16.gmra.mrb[0].mxu0 %v5350
      %v5405 = vpop.f32.mrb[0].mxu0
      %v5406 = vadd.f32 0.0, %v5405
      %v5407 = vpop.f32.mrb[0].mxu0
      %v5408 = vpop.f32.mrb[0].mxu0
      %v5409 = vadd.f32 0.0, %v5408
      %v5410 = vpop.f32.mrb[0].mxu0
      %5411 = vmatprep.mubr.bf16.mxu0 0
      %5412 = vmatmul.mubr.bf16.gmra.mrb[0].mxu0 %v5353
      %v5413 = vpop.f32.mrb[0].mxu0
      %v5414 = vadd.f32 0.0, %v5413
      %v5415 = vpop.f32.mrb[0].mxu0
      %v5416 = vpop.f32.mrb[0].mxu0
      %v5417 = vadd.f32 0.0, %v5416
      %v5418 = vpop.f32.mrb[0].mxu0
      %5419 = vdwg.mxu0
      %v5420 = vadd.f32 %v5281, %v5390
      %v5421 = vadd.f32 %v5282, %v5393
      %v5422 = vadd.f32 %v5283, %v5398
      %v5423 = vadd.f32 %v5284, %v5401
      %v5424 = vadd.f32 %v5285, %v5406
      %v5425 = vadd.f32 %v5286, %v5409
      %v5426 = vadd.f32 %v5287, %v5414
      %v5427 = vadd.f32 %v5288, %v5417
      %v5428 = vld [vmem:[%s4] sm:$0x1]
      %v5430 = vlaneseq
      %v5431 = vshrl.u32 %v5430, 7
      %v5432 = vsub.s32 0, %v5431
      %v5433 = vrot.slane %v5428, %v5432
      %v5435 = vadd.f32 %v5420, %v5433
      %v5436 = vadd.f32 %v5421, %v5433
      %v5437 = vadd.f32 %v5422, %v5433
      %v5438 = vadd.f32 %v5423, %v5433
      %v5439 = vadd.f32 %v5424, %v5433
      %v5440 = vadd.f32 %v5425, %v5433
      %v5441 = vadd.f32 %v5426, %v5433
      %v5442 = vadd.f32 %v5427, %v5433
      %v5443 = vmax.f32 %v5435, 0.0
      %v5444 = vmax.f32 %v5436, 0.0
      %v5445 = vmax.f32 %v5437, 0.0
      %v5446 = vmax.f32 %v5438, 0.0
      %v5447 = vmax.f32 %v5439, 0.0
      %v5448 = vmax.f32 %v5440, 0.0
      %v5449 = vmax.f32 %v5441, 0.0
      %v5450 = vmax.f32 %v5442, 0.0
      %v5451 = vpack.c.bf16 %v5444, %v5443
      %v5452 = vpack.c.bf16 %v5446, %v5445
      %v5453 = vpack.c.bf16 %v5448, %v5447
      %v5454 = vpack.c.bf16 %v5450, %v5449
      %v5459 = vcombine.high %v5451, %v5451
      %v5461 = vunpack.c.l.s4 1966171168
      %v5462 = vunpack.c.0.s8 %v5461
      %v5463 = vlaneseq
      %v5464 = vshrl.u32 %v5463, 7
      %v5465 = vsub.s32 %v5462, %v5464
      %v5466 = vrot.slane %v5451, %v5465
      %v5468 = vunpack.c.l.s4 1966171168
      %v5469 = vunpack.c.0.s8 %v5468
      %v5470 = vlaneseq
      %v5471 = vshrl.u32 %v5470, 7
      %v5472 = vsub.s32 %v5469, %v5471
      %v5473 = vrot.slane %v5459, %v5472
      %v5474 = vcombine.high %v5466, %v5466
      %v5475 = vcombine.high %v5473, %v5473
      %v5477 = vunpack.c.l.s4 1966171168
      %v5478 = vunpack.c.0.s8 %v5477
      %v5479 = vlaneseq
      %v5480 = vshrl.u32 %v5479, 7
      %v5481 = vsub.s32 %v5478, %v5480
      %v5482 = vrot.slane %v5466, %v5481
      %v5484 = vunpack.c.l.s4 1966171168
      %v5485 = vunpack.c.0.s8 %v5484
      %v5486 = vlaneseq
      %v5487 = vshrl.u32 %v5486, 7
      %v5488 = vsub.s32 %v5485, %v5487
      %v5489 = vrot.slane %v5473, %v5488
      %v5491 = vunpack.c.l.s4 1966171168
      %v5492 = vunpack.c.0.s8 %v5491
      %v5493 = vlaneseq
      %v5494 = vshrl.u32 %v5493, 7
      %v5495 = vsub.s32 %v5492, %v5494
      %v5496 = vrot.slane %v5474, %v5495
      %v5498 = vunpack.c.l.s4 1966171168
      %v5499 = vunpack.c.0.s8 %v5498
      %v5500 = vlaneseq
      %v5501 = vshrl.u32 %v5500, 7
      %v5502 = vsub.s32 %v5499, %v5501
      %v5503 = vrot.slane %v5475, %v5502
      %v5504 = vcombine.high %v5482, %v5482
      %v5505 = vcombine.high %v5489, %v5489
      %v5506 = vcombine.high %v5496, %v5496
      %v5507 = vcombine.high %v5503, %v5503
      %v5508 = vcombine.high %v5452, %v5452
      %v5510 = vunpack.c.l.s4 1966171168
      %v5511 = vunpack.c.0.s8 %v5510
      %v5512 = vlaneseq
      %v5513 = vshrl.u32 %v5512, 7
      %v5514 = vsub.s32 %v5511, %v5513
      %v5515 = vrot.slane %v5452, %v5514
      %v5517 = vunpack.c.l.s4 1966171168
      %v5518 = vunpack.c.0.s8 %v5517
      %v5519 = vlaneseq
      %v5520 = vshrl.u32 %v5519, 7
      %v5521 = vsub.s32 %v5518, %v5520
      %v5522 = vrot.slane %v5508, %v5521
      %v5523 = vcombine.high %v5515, %v5515
      %v5524 = vcombine.high %v5522, %v5522
      %v5526 = vunpack.c.l.s4 1966171168
      %v5527 = vunpack.c.0.s8 %v5526
      %v5528 = vlaneseq
      %v5529 = vshrl.u32 %v5528, 7
      %v5530 = vsub.s32 %v5527, %v5529
      %v5531 = vrot.slane %v5515, %v5530
      %v5533 = vunpack.c.l.s4 1966171168
      %v5534 = vunpack.c.0.s8 %v5533
      %v5535 = vlaneseq
      %v5536 = vshrl.u32 %v5535, 7
      %v5537 = vsub.s32 %v5534, %v5536
      %v5538 = vrot.slane %v5522, %v5537
      %v5540 = vunpack.c.l.s4 1966171168
      %v5541 = vunpack.c.0.s8 %v5540
      %v5542 = vlaneseq
      %v5543 = vshrl.u32 %v5542, 7
      %v5544 = vsub.s32 %v5541, %v5543
      %v5545 = vrot.slane %v5523, %v5544
      %v5547 = vunpack.c.l.s4 1966171168
      %v5548 = vunpack.c.0.s8 %v5547
      %v5549 = vlaneseq
      %v5550 = vshrl.u32 %v5549, 7
      %v5551 = vsub.s32 %v5548, %v5550
      %v5552 = vrot.slane %v5524, %v5551
      %v5553 = vcombine.high %v5531, %v5531
      %v5554 = vcombine.high %v5538, %v5538
      %v5555 = vcombine.high %v5545, %v5545
      %v5556 = vcombine.high %v5552, %v5552
      %v5557 = vcombine.high %v5453, %v5453
      %v5559 = vunpack.c.l.s4 1966171168
      %v5560 = vunpack.c.0.s8 %v5559
      %v5561 = vlaneseq
      %v5562 = vshrl.u32 %v5561, 7
      %v5563 = vsub.s32 %v5560, %v5562
      %v5564 = vrot.slane %v5453, %v5563
      %v5566 = vunpack.c.l.s4 1966171168
      %v5567 = vunpack.c.0.s8 %v5566
      %v5568 = vlaneseq
      %v5569 = vshrl.u32 %v5568, 7
      %v5570 = vsub.s32 %v5567, %v5569
      %v5571 = vrot.slane %v5557, %v5570
      %v5572 = vcombine.high %v5564, %v5564
      %v5573 = vcombine.high %v5571, %v5571
      %v5575 = vunpack.c.l.s4 1966171168
      %v5576 = vunpack.c.0.s8 %v5575
      %v5577 = vlaneseq
      %v5578 = vshrl.u32 %v5577, 7
      %v5579 = vsub.s32 %v5576, %v5578
      %v5580 = vrot.slane %v5564, %v5579
      %v5582 = vunpack.c.l.s4 1966171168
      %v5583 = vunpack.c.0.s8 %v5582
      %v5584 = vlaneseq
      %v5585 = vshrl.u32 %v5584, 7
      %v5586 = vsub.s32 %v5583, %v5585
      %v5587 = vrot.slane %v5571, %v5586
      %v5589 = vunpack.c.l.s4 1966171168
      %v5590 = vunpack.c.0.s8 %v5589
      %v5591 = vlaneseq
      %v5592 = vshrl.u32 %v5591, 7
      %v5593 = vsub.s32 %v5590, %v5592
      %v5594 = vrot.slane %v5572, %v5593
      %v5596 = vunpack.c.l.s4 1966171168
      %v5597 = vunpack.c.0.s8 %v5596
      %v5598 = vlaneseq
      %v5599 = vshrl.u32 %v5598, 7
      %v5600 = vsub.s32 %v5597, %v5599
      %v5601 = vrot.slane %v5573, %v5600
      %v5602 = vcombine.high %v5580, %v5580
      %v5603 = vcombine.high %v5587, %v5587
      %v5604 = vcombine.high %v5594, %v5594
      %v5605 = vcombine.high %v5601, %v5601
      %v5606 = vcombine.high %v5454, %v5454
      %v5608 = vunpack.c.l.s4 1966171168
      %v5609 = vunpack.c.0.s8 %v5608
      %v5610 = vlaneseq
      %v5611 = vshrl.u32 %v5610, 7
      %v5612 = vsub.s32 %v5609, %v5611
      %v5613 = vrot.slane %v5454, %v5612
      %v5615 = vunpack.c.l.s4 1966171168
      %v5616 = vunpack.c.0.s8 %v5615
      %v5617 = vlaneseq
      %v5618 = vshrl.u32 %v5617, 7
      %v5619 = vsub.s32 %v5616, %v5618
      %v5620 = vrot.slane %v5606, %v5619
      %v5621 = vcombine.high %v5613, %v5613
      %v5622 = vcombine.high %v5620, %v5620
      %v5624 = vunpack.c.l.s4 1966171168
      %v5625 = vunpack.c.0.s8 %v5624
      %v5626 = vlaneseq
      %v5627 = vshrl.u32 %v5626, 7
      %v5628 = vsub.s32 %v5625, %v5627
      %v5629 = vrot.slane %v5613, %v5628
      %v5631 = vunpack.c.l.s4 1966171168
      %v5632 = vunpack.c.0.s8 %v5631
      %v5633 = vlaneseq
      %v5634 = vshrl.u32 %v5633, 7
      %v5635 = vsub.s32 %v5632, %v5634
      %v5636 = vrot.slane %v5620, %v5635
      %v5638 = vunpack.c.l.s4 1966171168
      %v5639 = vunpack.c.0.s8 %v5638
      %v5640 = vlaneseq
      %v5641 = vshrl.u32 %v5640, 7
      %v5642 = vsub.s32 %v5639, %v5641
      %v5643 = vrot.slane %v5621, %v5642
      %v5645 = vunpack.c.l.s4 1966171168
      %v5646 = vunpack.c.0.s8 %v5645
      %v5647 = vlaneseq
      %v5648 = vshrl.u32 %v5647, 7
      %v5649 = vsub.s32 %v5646, %v5648
      %v5650 = vrot.slane %v5622, %v5649
      %v5651 = vcombine.high %v5629, %v5629
      %v5652 = vcombine.high %v5636, %v5636
      %v5653 = vcombine.high %v5643, %v5643
      %v5654 = vcombine.high %v5650, %v5650
      %v5656 = vunpack.c.l.s4 1966171168
      %v5657 = vunpack.c.0.s8 %v5656
      %v5658 = vlaneseq
      %v5659 = vshrl.u32 %v5658, 7
      %v5660 = vsub.s32 %v5657, %v5659
      %v5661 = vrot.slane %v5489, %v5660
      %v5663 = vunpack.c.l.s4 1966171168
      %v5664 = vunpack.c.0.s8 %v5663
      %v5665 = vlaneseq
      %v5666 = vshrl.u32 %v5665, 7
      %v5667 = vsub.s32 %v5664, %v5666
      %v5668 = vrot.slane %v5661, %v5667
      %v5670 = vunpack.c.l.s4 1966171168
      %v5671 = vunpack.c.0.s8 %v5670
      %v5672 = vlaneseq
      %v5673 = vshrl.u32 %v5672, 7
      %v5674 = vsub.s32 %v5671, %v5673
      %v5675 = vrot.slane %v5503, %v5674
      %v5677 = vunpack.c.l.s4 1966171168
      %v5678 = vunpack.c.0.s8 %v5677
      %v5679 = vlaneseq
      %v5680 = vshrl.u32 %v5679, 7
      %v5681 = vsub.s32 %v5678, %v5680
      %v5682 = vrot.slane %v5675, %v5681
      %v5684 = vunpack.c.l.s4 1966171168
      %v5685 = vunpack.c.0.s8 %v5684
      %v5686 = vlaneseq
      %v5687 = vshrl.u32 %v5686, 7
      %v5688 = vsub.s32 %v5685, %v5687
      %v5689 = vrot.slane %v5505, %v5688
      %v5691 = vunpack.c.l.s4 1966171168
      %v5692 = vunpack.c.0.s8 %v5691
      %v5693 = vlaneseq
      %v5694 = vshrl.u32 %v5693, 7
      %v5695 = vsub.s32 %v5692, %v5694
      %v5696 = vrot.slane %v5689, %v5695
      %v5698 = vunpack.c.l.s4 1966171168
      %v5699 = vunpack.c.0.s8 %v5698
      %v5700 = vlaneseq
      %v5701 = vshrl.u32 %v5700, 7
      %v5702 = vsub.s32 %v5699, %v5701
      %v5703 = vrot.slane %v5507, %v5702
      %v5705 = vunpack.c.l.s4 1966171168
      %v5706 = vunpack.c.0.s8 %v5705
      %v5707 = vlaneseq
      %v5708 = vshrl.u32 %v5707, 7
      %v5709 = vsub.s32 %v5706, %v5708
      %v5710 = vrot.slane %v5703, %v5709
      %v5712 = vunpack.c.l.s4 1966171168
      %v5713 = vunpack.c.0.s8 %v5712
      %v5714 = vlaneseq
      %v5715 = vshrl.u32 %v5714, 7
      %v5716 = vsub.s32 %v5713, %v5715
      %v5717 = vrot.slane %v5538, %v5716
      %v5719 = vunpack.c.l.s4 1966171168
      %v5720 = vunpack.c.0.s8 %v5719
      %v5721 = vlaneseq
      %v5722 = vshrl.u32 %v5721, 7
      %v5723 = vsub.s32 %v5720, %v5722
      %v5724 = vrot.slane %v5717, %v5723
      %v5726 = vunpack.c.l.s4 1966171168
      %v5727 = vunpack.c.0.s8 %v5726
      %v5728 = vlaneseq
      %v5729 = vshrl.u32 %v5728, 7
      %v5730 = vsub.s32 %v5727, %v5729
      %v5731 = vrot.slane %v5552, %v5730
      %v5733 = vunpack.c.l.s4 1966171168
      %v5734 = vunpack.c.0.s8 %v5733
      %v5735 = vlaneseq
      %v5736 = vshrl.u32 %v5735, 7
      %v5737 = vsub.s32 %v5734, %v5736
      %v5738 = vrot.slane %v5731, %v5737
      %v5740 = vunpack.c.l.s4 1966171168
      %v5741 = vunpack.c.0.s8 %v5740
      %v5742 = vlaneseq
      %v5743 = vshrl.u32 %v5742, 7
      %v5744 = vsub.s32 %v5741, %v5743
      %v5745 = vrot.slane %v5554, %v5744
      %v5747 = vunpack.c.l.s4 1966171168
      %v5748 = vunpack.c.0.s8 %v5747
      %v5749 = vlaneseq
      %v5750 = vshrl.u32 %v5749, 7
      %v5751 = vsub.s32 %v5748, %v5750
      %v5752 = vrot.slane %v5745, %v5751
      %v5754 = vunpack.c.l.s4 1966171168
      %v5755 = vunpack.c.0.s8 %v5754
      %v5756 = vlaneseq
      %v5757 = vshrl.u32 %v5756, 7
      %v5758 = vsub.s32 %v5755, %v5757
      %v5759 = vrot.slane %v5556, %v5758
      %v5761 = vunpack.c.l.s4 1966171168
      %v5762 = vunpack.c.0.s8 %v5761
      %v5763 = vlaneseq
      %v5764 = vshrl.u32 %v5763, 7
      %v5765 = vsub.s32 %v5762, %v5764
      %v5766 = vrot.slane %v5759, %v5765
      %v5768 = vunpack.c.l.s4 1966171168
      %v5769 = vunpack.c.0.s8 %v5768
      %v5770 = vlaneseq
      %v5771 = vshrl.u32 %v5770, 7
      %v5772 = vsub.s32 %v5769, %v5771
      %v5773 = vrot.slane %v5587, %v5772
      %v5775 = vunpack.c.l.s4 1966171168
      %v5776 = vunpack.c.0.s8 %v5775
      %v5777 = vlaneseq
      %v5778 = vshrl.u32 %v5777, 7
      %v5779 = vsub.s32 %v5776, %v5778
      %v5780 = vrot.slane %v5773, %v5779
      %v5782 = vunpack.c.l.s4 1966171168
      %v5783 = vunpack.c.0.s8 %v5782
      %v5784 = vlaneseq
      %v5785 = vshrl.u32 %v5784, 7
      %v5786 = vsub.s32 %v5783, %v5785
      %v5787 = vrot.slane %v5601, %v5786
      %v5789 = vunpack.c.l.s4 1966171168
      %v5790 = vunpack.c.0.s8 %v5789
      %v5791 = vlaneseq
      %v5792 = vshrl.u32 %v5791, 7
      %v5793 = vsub.s32 %v5790, %v5792
      %v5794 = vrot.slane %v5787, %v5793
      %v5796 = vunpack.c.l.s4 1966171168
      %v5797 = vunpack.c.0.s8 %v5796
      %v5798 = vlaneseq
      %v5799 = vshrl.u32 %v5798, 7
      %v5800 = vsub.s32 %v5797, %v5799
      %v5801 = vrot.slane %v5603, %v5800
      %v5803 = vunpack.c.l.s4 1966171168
      %v5804 = vunpack.c.0.s8 %v5803
      %v5805 = vlaneseq
      %v5806 = vshrl.u32 %v5805, 7
      %v5807 = vsub.s32 %v5804, %v5806
      %v5808 = vrot.slane %v5801, %v5807
      %v5810 = vunpack.c.l.s4 1966171168
      %v5811 = vunpack.c.0.s8 %v5810
      %v5812 = vlaneseq
      %v5813 = vshrl.u32 %v5812, 7
      %v5814 = vsub.s32 %v5811, %v5813
      %v5815 = vrot.slane %v5605, %v5814
      %v5817 = vunpack.c.l.s4 1966171168
      %v5818 = vunpack.c.0.s8 %v5817
      %v5819 = vlaneseq
      %v5820 = vshrl.u32 %v5819, 7
      %v5821 = vsub.s32 %v5818, %v5820
      %v5822 = vrot.slane %v5815, %v5821
      %v5824 = vunpack.c.l.s4 1966171168
      %v5825 = vunpack.c.0.s8 %v5824
      %v5826 = vlaneseq
      %v5827 = vshrl.u32 %v5826, 7
      %v5828 = vsub.s32 %v5825, %v5827
      %v5829 = vrot.slane %v5636, %v5828
      %v5831 = vunpack.c.l.s4 1966171168
      %v5832 = vunpack.c.0.s8 %v5831
      %v5833 = vlaneseq
      %v5834 = vshrl.u32 %v5833, 7
      %v5835 = vsub.s32 %v5832, %v5834
      %v5836 = vrot.slane %v5829, %v5835
      %v5838 = vunpack.c.l.s4 1966171168
      %v5839 = vunpack.c.0.s8 %v5838
      %v5840 = vlaneseq
      %v5841 = vshrl.u32 %v5840, 7
      %v5842 = vsub.s32 %v5839, %v5841
      %v5843 = vrot.slane %v5650, %v5842
      %v5845 = vunpack.c.l.s4 1966171168
      %v5846 = vunpack.c.0.s8 %v5845
      %v5847 = vlaneseq
      %v5848 = vshrl.u32 %v5847, 7
      %v5849 = vsub.s32 %v5846, %v5848
      %v5850 = vrot.slane %v5843, %v5849
      %v5852 = vunpack.c.l.s4 1966171168
      %v5853 = vunpack.c.0.s8 %v5852
      %v5854 = vlaneseq
      %v5855 = vshrl.u32 %v5854, 7
      %v5856 = vsub.s32 %v5853, %v5855
      %v5857 = vrot.slane %v5652, %v5856
      %v5859 = vunpack.c.l.s4 1966171168
      %v5860 = vunpack.c.0.s8 %v5859
      %v5861 = vlaneseq
      %v5862 = vshrl.u32 %v5861, 7
      %v5863 = vsub.s32 %v5860, %v5862
      %v5864 = vrot.slane %v5857, %v5863
      %v5866 = vunpack.c.l.s4 1966171168
      %v5867 = vunpack.c.0.s8 %v5866
      %v5868 = vlaneseq
      %v5869 = vshrl.u32 %v5868, 7
      %v5870 = vsub.s32 %v5867, %v5869
      %v5871 = vrot.slane %v5654, %v5870
      %v5873 = vunpack.c.l.s4 1966171168
      %v5874 = vunpack.c.0.s8 %v5873
      %v5875 = vlaneseq
      %v5876 = vshrl.u32 %v5875, 7
      %v5877 = vsub.s32 %v5874, %v5876
      %v5878 = vrot.slane %v5871, %v5877
      %v5879 = vunpack.c.l.b16 %v5668
      %v5880 = vunpack.c.l.b16 %v5682
      %v5881 = vunpack.c.l.b16 %v5696
      %v5882 = vunpack.c.l.b16 %v5710
      %v5883 = vunpack.c.l.b16 %v5724
      %v5884 = vunpack.c.l.b16 %v5738
      %v5885 = vunpack.c.l.b16 %v5752
      %v5886 = vunpack.c.l.b16 %v5766
      %v5887 = vunpack.c.l.b16 %v5780
      %v5888 = vunpack.c.l.b16 %v5794
      %v5889 = vunpack.c.l.b16 %v5808
      %v5890 = vunpack.c.l.b16 %v5822
      %v5891 = vunpack.c.l.b16 %v5836
      %v5892 = vunpack.c.l.b16 %v5850
      %v5893 = vunpack.c.l.b16 %v5864
      %v5894 = vunpack.c.l.b16 %v5878
      %v5895 = vrot.slane %v5879, 1
      %v5896 = vsel %vm2461, %v5880, %v5895
      %v5897 = vrot.slane %v5881, 7
      %v5898 = vsel %vm2464, %v5897, %v5896
      %v5899 = vrot.slane %v5882, 6
      %v5900 = vsel %vm2467, %v5899, %v5898
      %v5901 = vrot.slane %v5883, 1
      %v5902 = vsel %vm2461, %v5884, %v5901
      %v5903 = vrot.slane %v5885, 7
      %v5904 = vsel %vm2464, %v5903, %v5902
      %v5905 = vrot.slane %v5886, 6
      %v5906 = vsel %vm2467, %v5905, %v5904
      %v5907 = vrot.slane %v5887, 1
      %v5908 = vsel %vm2461, %v5888, %v5907
      %v5909 = vrot.slane %v5889, 7
      %v5910 = vsel %vm2464, %v5909, %v5908
      %v5911 = vrot.slane %v5890, 6
      %v5912 = vsel %vm2467, %v5911, %v5910
      %v5913 = vrot.slane %v5891, 1
      %v5914 = vsel %vm2461, %v5892, %v5913
      %v5915 = vrot.slane %v5893, 7
      %v5916 = vsel %vm2464, %v5915, %v5914
      %v5917 = vrot.slane %v5894, 6
      %v5918 = vsel %vm2467, %v5917, %v5916
      %v5919 = vpack.c.b16 %v5900, %v5900
      %v5920 = vpack.c.b16 %v5906, %v5906
      %v5921 = vpack.c.b16 %v5912, %v5912
      %v5922 = vpack.c.b16 %v5918, %v5918
      %v5924 = vshrl.u32 %v5919, 16
      %v5926 = vrot.slane %v5924, 7
      %v5927 = vshll.u32 %v5919, 16
      %v5929 = vor.u32 %v5926, %v5927
      %v5931 = vshrl.u32 %v5920, 16
      %v5933 = vrot.slane %v5931, 7
      %v5934 = vshll.u32 %v5920, 16
      %v5936 = vor.u32 %v5933, %v5934
      %v5938 = vshrl.u32 %v5921, 16
      %v5940 = vrot.slane %v5938, 7
      %v5941 = vshll.u32 %v5921, 16
      %v5943 = vor.u32 %v5940, %v5941
      %v5945 = vshrl.u32 %v5922, 16
      %v5947 = vrot.slane %v5945, 7
      %v5948 = vshll.u32 %v5922, 16
      %v5950 = vor.u32 %v5947, %v5948
      %v5955 = vsel %vm2661, 0, %v5929
      %v5956 = vsel %vm2661, 0, %v5936
      %v5957 = vsel %vm2661, 0, %v5943
      %v5958 = vsel %vm2661, 0, %v5950
      %v5959 = vrot.slane %v5880, 7
      %v5960 = vsel %vm2461, %v5959, %v5879
      %v5961 = vrot.slane %v5881, 6
      %v5962 = vsel %vm2464, %v5961, %v5960
      %v5963 = vrot.slane %v5882, 5
      %v5964 = vsel %vm2467, %v5963, %v5962
      %v5965 = vrot.slane %v5884, 7
      %v5966 = vsel %vm2461, %v5965, %v5883
      %v5967 = vrot.slane %v5885, 6
      %v5968 = vsel %vm2464, %v5967, %v5966
      %v5969 = vrot.slane %v5886, 5
      %v5970 = vsel %vm2467, %v5969, %v5968
      %v5971 = vrot.slane %v5888, 7
      %v5972 = vsel %vm2461, %v5971, %v5887
      %v5973 = vrot.slane %v5889, 6
      %v5974 = vsel %vm2464, %v5973, %v5972
      %v5975 = vrot.slane %v5890, 5
      %v5976 = vsel %vm2467, %v5975, %v5974
      %v5977 = vrot.slane %v5892, 7
      %v5978 = vsel %vm2461, %v5977, %v5891
      %v5979 = vrot.slane %v5893, 6
      %v5980 = vsel %vm2464, %v5979, %v5978
      %v5981 = vrot.slane %v5894, 5
      %v5982 = vsel %vm2467, %v5981, %v5980
      %v5983 = vpack.c.b16 %v5964, %v5964
      %v5984 = vpack.c.b16 %v5970, %v5970
      %v5985 = vpack.c.b16 %v5976, %v5976
      %v5986 = vpack.c.b16 %v5982, %v5982
      %vm5987 = vcmask 1041408
      %v5989 = vsel %vm5987, %v5983, 0
      %v5991 = vsel %vm5987, %v5984, 0
      %v5993 = vsel %vm5987, %v5985, 0
      %v5995 = vsel %vm5987, %v5986, 0
      %v5997 = vunpack.c.l.s4 1966171168
      %v5998 = vunpack.c.0.s8 %v5997
      %v5999 = vlaneseq
      %v6000 = vshrl.u32 %v5999, 7
      %v6001 = vsub.s32 %v5998, %v6000
      %v6002 = vrot.slane %v5482, %v6001
      %v6004 = vunpack.c.l.s4 1966171168
      %v6005 = vunpack.c.0.s8 %v6004
      %v6006 = vlaneseq
      %v6007 = vshrl.u32 %v6006, 7
      %v6008 = vsub.s32 %v6005, %v6007
      %v6009 = vrot.slane %v6002, %v6008
      %v6011 = vunpack.c.l.s4 1966171168
      %v6012 = vunpack.c.0.s8 %v6011
      %v6013 = vlaneseq
      %v6014 = vshrl.u32 %v6013, 7
      %v6015 = vsub.s32 %v6012, %v6014
      %v6016 = vrot.slane %v5496, %v6015
      %v6018 = vunpack.c.l.s4 1966171168
      %v6019 = vunpack.c.0.s8 %v6018
      %v6020 = vlaneseq
      %v6021 = vshrl.u32 %v6020, 7
      %v6022 = vsub.s32 %v6019, %v6021
      %v6023 = vrot.slane %v6016, %v6022
      %v6025 = vunpack.c.l.s4 1966171168
      %v6026 = vunpack.c.0.s8 %v6025
      %v6027 = vlaneseq
      %v6028 = vshrl.u32 %v6027, 7
      %v6029 = vsub.s32 %v6026, %v6028
      %v6030 = vrot.slane %v5504, %v6029
      %v6032 = vunpack.c.l.s4 1966171168
      %v6033 = vunpack.c.0.s8 %v6032
      %v6034 = vlaneseq
      %v6035 = vshrl.u32 %v6034, 7
      %v6036 = vsub.s32 %v6033, %v6035
      %v6037 = vrot.slane %v6030, %v6036
      %v6039 = vunpack.c.l.s4 1966171168
      %v6040 = vunpack.c.0.s8 %v6039
      %v6041 = vlaneseq
      %v6042 = vshrl.u32 %v6041, 7
      %v6043 = vsub.s32 %v6040, %v6042
      %v6044 = vrot.slane %v5506, %v6043
      %v6046 = vunpack.c.l.s4 1966171168
      %v6047 = vunpack.c.0.s8 %v6046
      %v6048 = vlaneseq
      %v6049 = vshrl.u32 %v6048, 7
      %v6050 = vsub.s32 %v6047, %v6049
      %v6051 = vrot.slane %v6044, %v6050
      %v6053 = vunpack.c.l.s4 1966171168
      %v6054 = vunpack.c.0.s8 %v6053
      %v6055 = vlaneseq
      %v6056 = vshrl.u32 %v6055, 7
      %v6057 = vsub.s32 %v6054, %v6056
      %v6058 = vrot.slane %v5531, %v6057
      %v6060 = vunpack.c.l.s4 1966171168
      %v6061 = vunpack.c.0.s8 %v6060
      %v6062 = vlaneseq
      %v6063 = vshrl.u32 %v6062, 7
      %v6064 = vsub.s32 %v6061, %v6063
      %v6065 = vrot.slane %v6058, %v6064
      %v6067 = vunpack.c.l.s4 1966171168
      %v6068 = vunpack.c.0.s8 %v6067
      %v6069 = vlaneseq
      %v6070 = vshrl.u32 %v6069, 7
      %v6071 = vsub.s32 %v6068, %v6070
      %v6072 = vrot.slane %v5545, %v6071
      %v6074 = vunpack.c.l.s4 1966171168
      %v6075 = vunpack.c.0.s8 %v6074
      %v6076 = vlaneseq
      %v6077 = vshrl.u32 %v6076, 7
      %v6078 = vsub.s32 %v6075, %v6077
      %v6079 = vrot.slane %v6072, %v6078
      %v6081 = vunpack.c.l.s4 1966171168
      %v6082 = vunpack.c.0.s8 %v6081
      %v6083 = vlaneseq
      %v6084 = vshrl.u32 %v6083, 7
      %v6085 = vsub.s32 %v6082, %v6084
      %v6086 = vrot.slane %v5553, %v6085
      %v6088 = vunpack.c.l.s4 1966171168
      %v6089 = vunpack.c.0.s8 %v6088
      %v6090 = vlaneseq
      %v6091 = vshrl.u32 %v6090, 7
      %v6092 = vsub.s32 %v6089, %v6091
      %v6093 = vrot.slane %v6086, %v6092
      %v6095 = vunpack.c.l.s4 1966171168
      %v6096 = vunpack.c.0.s8 %v6095
      %v6097 = vlaneseq
      %v6098 = vshrl.u32 %v6097, 7
      %v6099 = vsub.s32 %v6096, %v6098
      %v6100 = vrot.slane %v5555, %v6099
      %v6102 = vunpack.c.l.s4 1966171168
      %v6103 = vunpack.c.0.s8 %v6102
      %v6104 = vlaneseq
      %v6105 = vshrl.u32 %v6104, 7
      %v6106 = vsub.s32 %v6103, %v6105
      %v6107 = vrot.slane %v6100, %v6106
      %v6109 = vunpack.c.l.s4 1966171168
      %v6110 = vunpack.c.0.s8 %v6109
      %v6111 = vlaneseq
      %v6112 = vshrl.u32 %v6111, 7
      %v6113 = vsub.s32 %v6110, %v6112
      %v6114 = vrot.slane %v5580, %v6113
      %v6116 = vunpack.c.l.s4 1966171168
      %v6117 = vunpack.c.0.s8 %v6116
      %v6118 = vlaneseq
      %v6119 = vshrl.u32 %v6118, 7
      %v6120 = vsub.s32 %v6117, %v6119
      %v6121 = vrot.slane %v6114, %v6120
      %v6123 = vunpack.c.l.s4 1966171168
      %v6124 = vunpack.c.0.s8 %v6123
      %v6125 = vlaneseq
      %v6126 = vshrl.u32 %v6125, 7
      %v6127 = vsub.s32 %v6124, %v6126
      %v6128 = vrot.slane %v5594, %v6127
      %v6130 = vunpack.c.l.s4 1966171168
      %v6131 = vunpack.c.0.s8 %v6130
      %v6132 = vlaneseq
      %v6133 = vshrl.u32 %v6132, 7
      %v6134 = vsub.s32 %v6131, %v6133
      %v6135 = vrot.slane %v6128, %v6134
      %v6137 = vunpack.c.l.s4 1966171168
      %v6138 = vunpack.c.0.s8 %v6137
      %v6139 = vlaneseq
      %v6140 = vshrl.u32 %v6139, 7
      %v6141 = vsub.s32 %v6138, %v6140
      %v6142 = vrot.slane %v5602, %v6141
      %v6144 = vunpack.c.l.s4 1966171168
      %v6145 = vunpack.c.0.s8 %v6144
      %v6146 = vlaneseq
      %v6147 = vshrl.u32 %v6146, 7
      %v6148 = vsub.s32 %v6145, %v6147
      %v6149 = vrot.slane %v6142, %v6148
      %v6151 = vunpack.c.l.s4 1966171168
      %v6152 = vunpack.c.0.s8 %v6151
      %v6153 = vlaneseq
      %v6154 = vshrl.u32 %v6153, 7
      %v6155 = vsub.s32 %v6152, %v6154
      %v6156 = vrot.slane %v5604, %v6155
      %v6158 = vunpack.c.l.s4 1966171168
      %v6159 = vunpack.c.0.s8 %v6158
      %v6160 = vlaneseq
      %v6161 = vshrl.u32 %v6160, 7
      %v6162 = vsub.s32 %v6159, %v6161
      %v6163 = vrot.slane %v6156, %v6162
      %v6165 = vunpack.c.l.s4 1966171168
      %v6166 = vunpack.c.0.s8 %v6165
      %v6167 = vlaneseq
      %v6168 = vshrl.u32 %v6167, 7
      %v6169 = vsub.s32 %v6166, %v6168
      %v6170 = vrot.slane %v5629, %v6169
      %v6172 = vunpack.c.l.s4 1966171168
      %v6173 = vunpack.c.0.s8 %v6172
      %v6174 = vlaneseq
      %v6175 = vshrl.u32 %v6174, 7
      %v6176 = vsub.s32 %v6173, %v6175
      %v6177 = vrot.slane %v6170, %v6176
      %v6179 = vunpack.c.l.s4 1966171168
      %v6180 = vunpack.c.0.s8 %v6179
      %v6181 = vlaneseq
      %v6182 = vshrl.u32 %v6181, 7
      %v6183 = vsub.s32 %v6180, %v6182
      %v6184 = vrot.slane %v5643, %v6183
      %v6186 = vunpack.c.l.s4 1966171168
      %v6187 = vunpack.c.0.s8 %v6186
      %v6188 = vlaneseq
      %v6189 = vshrl.u32 %v6188, 7
      %v6190 = vsub.s32 %v6187, %v6189
      %v6191 = vrot.slane %v6184, %v6190
      %v6193 = vunpack.c.l.s4 1966171168
      %v6194 = vunpack.c.0.s8 %v6193
      %v6195 = vlaneseq
      %v6196 = vshrl.u32 %v6195, 7
      %v6197 = vsub.s32 %v6194, %v6196
      %v6198 = vrot.slane %v5651, %v6197
      %v6200 = vunpack.c.l.s4 1966171168
      %v6201 = vunpack.c.0.s8 %v6200
      %v6202 = vlaneseq
      %v6203 = vshrl.u32 %v6202, 7
      %v6204 = vsub.s32 %v6201, %v6203
      %v6205 = vrot.slane %v6198, %v6204
      %v6207 = vunpack.c.l.s4 1966171168
      %v6208 = vunpack.c.0.s8 %v6207
      %v6209 = vlaneseq
      %v6210 = vshrl.u32 %v6209, 7
      %v6211 = vsub.s32 %v6208, %v6210
      %v6212 = vrot.slane %v5653, %v6211
      %v6214 = vunpack.c.l.s4 1966171168
      %v6215 = vunpack.c.0.s8 %v6214
      %v6216 = vlaneseq
      %v6217 = vshrl.u32 %v6216, 7
      %v6218 = vsub.s32 %v6215, %v6217
      %v6219 = vrot.slane %v6212, %v6218
      %v6220 = vunpack.c.l.b16 %v6009
      %v6221 = vunpack.c.l.b16 %v6023
      %v6222 = vunpack.c.l.b16 %v6037
      %v6223 = vunpack.c.l.b16 %v6051
      %v6224 = vunpack.c.l.b16 %v6065
      %v6225 = vunpack.c.l.b16 %v6079
      %v6226 = vunpack.c.l.b16 %v6093
      %v6227 = vunpack.c.l.b16 %v6107
      %v6228 = vunpack.c.l.b16 %v6121
      %v6229 = vunpack.c.l.b16 %v6135
      %v6230 = vunpack.c.l.b16 %v6149
      %v6231 = vunpack.c.l.b16 %v6163
      %v6232 = vunpack.c.l.b16 %v6177
      %v6233 = vunpack.c.l.b16 %v6191
      %v6234 = vunpack.c.l.b16 %v6205
      %v6235 = vunpack.c.l.b16 %v6219
      %v6236 = vrot.slane %v6221, 7
      %v6237 = vsel %vm2464, %v6236, %v6220
      %v6238 = vrot.slane %v6222, 6
      %v6239 = vsel %vm2467, %v6238, %v6237
      %v6240 = vrot.slane %v6223, 5
      %v6241 = vsel %vm2470, %v6240, %v6239
      %v6242 = vrot.slane %v6225, 7
      %v6243 = vsel %vm2464, %v6242, %v6224
      %v6244 = vrot.slane %v6226, 6
      %v6245 = vsel %vm2467, %v6244, %v6243
      %v6246 = vrot.slane %v6227, 5
      %v6247 = vsel %vm2470, %v6246, %v6245
      %v6248 = vrot.slane %v6229, 7
      %v6249 = vsel %vm2464, %v6248, %v6228
      %v6250 = vrot.slane %v6230, 6
      %v6251 = vsel %vm2467, %v6250, %v6249
      %v6252 = vrot.slane %v6231, 5
      %v6253 = vsel %vm2470, %v6252, %v6251
      %v6254 = vrot.slane %v6233, 7
      %v6255 = vsel %vm2464, %v6254, %v6232
      %v6256 = vrot.slane %v6234, 6
      %v6257 = vsel %vm2467, %v6256, %v6255
      %v6258 = vrot.slane %v6235, 5
      %v6259 = vsel %vm2470, %v6258, %v6257
      %v6260 = vpack.c.b16 %v6241, %v6241
      %v6261 = vpack.c.b16 %v6247, %v6247
      %v6262 = vpack.c.b16 %v6253, %v6253
      %v6263 = vpack.c.b16 %v6259, %v6259
      %v6268 = vsel %vm2661, 0, %v6260
      %v6269 = vsel %vm2661, 0, %v6261
      %v6270 = vsel %vm2661, 0, %v6262
      %v6271 = vsel %vm2661, 0, %v6263
      %v6272 = vsel %vm2461, %v6236, %v6220
      %v6273 = vsel %vm2464, %v6238, %v6272
      %v6274 = vsel %vm2467, %v6240, %v6273
      %v6275 = vsel %vm2461, %v6242, %v6224
      %v6276 = vsel %vm2464, %v6244, %v6275
      %v6277 = vsel %vm2467, %v6246, %v6276
      %v6278 = vsel %vm2461, %v6248, %v6228
      %v6279 = vsel %vm2464, %v6250, %v6278
      %v6280 = vsel %vm2467, %v6252, %v6279
      %v6281 = vsel %vm2461, %v6254, %v6232
      %v6282 = vsel %vm2464, %v6256, %v6281
      %v6283 = vsel %vm2467, %v6258, %v6282
      %v6284 = vpack.c.b16 %v6274, %v6274
      %v6285 = vpack.c.b16 %v6277, %v6277
      %v6286 = vpack.c.b16 %v6280, %v6280
      %v6287 = vpack.c.b16 %v6283, %v6283
      %v6289 = vsel %vm5987, %v6284, 0
      %v6291 = vsel %vm5987, %v6285, 0
      %v6293 = vsel %vm5987, %v6286, 0
      %v6295 = vsel %vm5987, %v6287, 0
      %v6296 = vld [vmem:[%s5] sm:$0xf]
      %v6297 = vld [vmem:[%s5 + $0x4] sm:$0xf]
      %v6298 = vld [vmem:[%s5 + $0x8] sm:$0xf]
      %v6299 = vld [vmem:[%s5 + $0xc] sm:$0xf]
      %v6300 = vld [vmem:[%s5 + $0x10] sm:$0xf]
      %v6301 = vld [vmem:[%s5 + $0x14] sm:$0xf]
      %v6302 = vld [vmem:[%s5 + $0x18] sm:$0xf]
      %v6303 = vld [vmem:[%s5 + $0x1c] sm:$0xf]
      %v6304 = vld [vmem:[%s5 + $0x20] sm:$0xf]
      %v6305 = vld [vmem:[%s5 + $0x24] sm:$0xf]
      %v6306 = vld [vmem:[%s5 + $0x28] sm:$0xf]
      %v6307 = vld [vmem:[%s5 + $0x2c] sm:$0xf]
      %v6308 = vld [vmem:[%s5 + $0x30] sm:$0xf]
      %v6309 = vld [vmem:[%s5 + $0x34] sm:$0xf]
      %v6310 = vld [vmem:[%s5 + $0x38] sm:$0xf]
      %v6311 = vld [vmem:[%s5 + $0x3c] sm:$0xf]
      %v6312 = vld [vmem:[%s5 + $0x40] sm:$0xf]
      %v6313 = vld [vmem:[%s5 + $0x44] sm:$0xf]
      %v6314 = vld [vmem:[%s5 + $0x48] sm:$0xf]
      %v6315 = vld [vmem:[%s5 + $0x4c] sm:$0xf]
      %v6316 = vld [vmem:[%s5 + $0x50] sm:$0xf]
      %v6317 = vld [vmem:[%s5 + $0x54] sm:$0xf]
      %v6318 = vld [vmem:[%s5 + $0x58] sm:$0xf]
      %v6319 = vld [vmem:[%s5 + $0x5c] sm:$0xf]
      %v6320 = vld [vmem:[%s5 + $0x60] sm:$0xf]
      %v6321 = vld [vmem:[%s5 + $0x64] sm:$0xf]
      %v6322 = vld [vmem:[%s5 + $0x68] sm:$0xf]
      %v6323 = vld [vmem:[%s5 + $0x6c] sm:$0xf]
      %v6324 = vld [vmem:[%s5 + $0x70] sm:$0xf]
      %v6325 = vld [vmem:[%s5 + $0x74] sm:$0xf]
      %v6326 = vld [vmem:[%s5 + $0x78] sm:$0xf]
      %v6327 = vld [vmem:[%s5 + $0x7c] sm:$0xf]
      %v6331 = vcombine.low 0, %v5989
      %v6332 = vcombine.low %v5991, %v5993
      %v6334 = vunpack.c.l.s4 1983009808
      %v6335 = vunpack.c.0.s8 %v6334
      %v6336 = vlaneseq
      %v6337 = vshrl.u32 %v6336, 7
      %v6338 = vsub.s32 %v6335, %v6337
      %v6339 = vrot.slane %v6331, %v6338
      %v6341 = vunpack.c.l.s4 1983009808
      %v6342 = vunpack.c.0.s8 %v6341
      %v6343 = vlaneseq
      %v6344 = vshrl.u32 %v6343, 7
      %v6345 = vsub.s32 %v6342, %v6344
      %v6346 = vrot.slane %v6332, %v6345
      %v6347 = vcombine.low %v6339, %v6346
      %v6365 = vunpack.c.l.b16 %v6312
      %v6366 = vunpack.c.l.b16 %v6313
      %v6367 = vunpack.c.l.b16 %v6314
      %v6368 = vunpack.c.l.b16 %v6315
      %v6369 = vunpack.c.l.b16 %v6316
      %v6370 = vunpack.c.l.b16 %v6317
      %v6371 = vunpack.c.l.b16 %v6318
      %v6372 = vunpack.c.l.b16 %v6319
      %v6373 = vunpack.c.l.b16 %v6320
      %v6374 = vunpack.c.l.b16 %v6321
      %v6375 = vunpack.c.l.b16 %v6322
      %v6376 = vunpack.c.l.b16 %v6323
      %v6377 = vunpack.c.l.b16 %v6324
      %v6378 = vunpack.c.l.b16 %v6325
      %v6379 = vunpack.c.l.b16 %v6326
      %v6380 = vunpack.c.l.b16 %v6327
      %v6381 = vpack.c.b16 %v6366, %v6365
      %v6382 = vpack.c.b16 %v6368, %v6367
      %v6383 = vpack.c.b16 %v6370, %v6369
      %v6384 = vpack.c.b16 %v6372, %v6371
      %v6385 = vpack.c.b16 %v6374, %v6373
      %v6386 = vpack.c.b16 %v6376, %v6375
      %v6387 = vpack.c.b16 %v6378, %v6377
      %v6388 = vpack.c.b16 %v6380, %v6379
      %6397 = vmatprep.subr.bf16.mxu0 0
      %6398 = vmatpush1.bf16.msra.mxu0 %v6381
      %6399 = vmatprep.subr.bf16.mxu0 0
      %6400 = vmatpush1.bf16.msra.mxu0 %v6382
      %6401 = vmatprep.subr.bf16.mxu0 0
      %6402 = vmatpush1.bf16.msra.mxu0 %v6383
      %6403 = vmatprep.subr.bf16.mxu0 0
      %6404 = vmatpush1.bf16.msra.mxu0 %v6384
      %6405 = vmatprep.subr.bf16.mxu0 0
      %6406 = vmatpush1.bf16.msra.mxu0 %v6385
      %6407 = vmatprep.subr.bf16.mxu0 0
      %6408 = vmatpush1.bf16.msra.mxu0 %v6386
      %6409 = vmatprep.subr.bf16.mxu0 0
      %6410 = vmatpush1.bf16.msra.mxu0 %v6387
      %6411 = vmatprep.subr.bf16.mxu0 0
      %6412 = vmatpush1.bf16.msra.mxu0 %v6388
      %6413 = vmatprep.subr.bf16.mxu0 0
      %6414 = vmatpush1.bf16.msra.mxu0 0
      %6415 = vmatprep.subr.bf16.mxu0 0
      %6416 = vmatpush1.bf16.msra.mxu0 0
      %6417 = vmatprep.subr.bf16.mxu0 0
      %6418 = vmatpush1.bf16.msra.mxu0 0
      %6419 = vmatprep.subr.bf16.mxu0 0
      %6420 = vmatpush1.bf16.msra.mxu0 0
      %6421 = vmatprep.subr.bf16.mxu0 0
      %6422 = vmatpush1.bf16.msra.mxu0 0
      %6423 = vmatprep.subr.bf16.mxu0 0
      %6424 = vmatpush1.bf16.msra.mxu0 0
      %6425 = vmatprep.subr.bf16.mxu0 0
      %6426 = vmatpush1.bf16.msra.mxu0 0
      %6427 = vmatprep.subr.bf16.mxu0 0
      %6428 = vmatpush1.bf16.msra.mxu0 0
      %6429 = vmatprep.mubr.bf16.mxu0 0
      %6430 = vmatmul.mubr.bf16.gmra.mrb[0].mxu0 %v6347
      %v6431 = vpop.f32.mrb[0].mxu0
      %v6432 = vadd.f32 0.0, %v6431
      %v6433 = vpop.f32.mrb[0].mxu0
      %v6434 = vpop.f32.mrb[0].mxu0
      %v6435 = vadd.f32 0.0, %v6434
      %v6436 = vpop.f32.mrb[0].mxu0
      %6437 = vdwg.mxu0
      %v6441 = vcombine.low %v2662, %v5955
      %v6442 = vcombine.low %v5956, %v5957
      %v6444 = vunpack.c.l.s4 1983009808
      %v6445 = vunpack.c.0.s8 %v6444
      %v6446 = vlaneseq
      %v6447 = vshrl.u32 %v6446, 7
      %v6448 = vsub.s32 %v6445, %v6447
      %v6449 = vrot.slane %v6441, %v6448
      %v6451 = vunpack.c.l.s4 1983009808
      %v6452 = vunpack.c.0.s8 %v6451
      %v6453 = vlaneseq
      %v6454 = vshrl.u32 %v6453, 7
      %v6455 = vsub.s32 %v6452, %v6454
      %v6456 = vrot.slane %v6442, %v6455
      %v6457 = vcombine.low %v6449, %v6456
      %v6475 = vunpack.c.l.b16 %v6296
      %v6476 = vunpack.c.l.b16 %v6297
      %v6477 = vunpack.c.l.b16 %v6298
      %v6478 = vunpack.c.l.b16 %v6299
      %v6479 = vunpack.c.l.b16 %v6300
      %v6480 = vunpack.c.l.b16 %v6301
      %v6481 = vunpack.c.l.b16 %v6302
      %v6482 = vunpack.c.l.b16 %v6303
      %v6483 = vunpack.c.l.b16 %v6304
      %v6484 = vunpack.c.l.b16 %v6305
      %v6485 = vunpack.c.l.b16 %v6306
      %v6486 = vunpack.c.l.b16 %v6307
      %v6487 = vunpack.c.l.b16 %v6308
      %v6488 = vunpack.c.l.b16 %v6309
      %v6489 = vunpack.c.l.b16 %v6310
      %v6490 = vunpack.c.l.b16 %v6311
      %v6491 = vpack.c.b16 %v6476, %v6475
      %v6492 = vpack.c.b16 %v6478, %v6477
      %v6493 = vpack.c.b16 %v6480, %v6479
      %v6494 = vpack.c.b16 %v6482, %v6481
      %v6495 = vpack.c.b16 %v6484, %v6483
      %v6496 = vpack.c.b16 %v6486, %v6485
      %v6497 = vpack.c.b16 %v6488, %v6487
      %v6498 = vpack.c.b16 %v6490, %v6489
      %6507 = vmatprep.subr.bf16.mxu0 0
      %6508 = vmatpush1.bf16.msra.mxu0 %v6491
      %6509 = vmatprep.subr.bf16.mxu0 0
      %6510 = vmatpush1.bf16.msra.mxu0 %v6492
      %6511 = vmatprep.subr.bf16.mxu0 0
      %6512 = vmatpush1.bf16.msra.mxu0 %v6493
      %6513 = vmatprep.subr.bf16.mxu0 0
      %6514 = vmatpush1.bf16.msra.mxu0 %v6494
      %6515 = vmatprep.subr.bf16.mxu0 0
      %6516 = vmatpush1.bf16.msra.mxu0 %v6495
      %6517 = vmatprep.subr.bf16.mxu0 0
      %6518 = vmatpush1.bf16.msra.mxu0 %v6496
      %6519 = vmatprep.subr.bf16.mxu0 0
      %6520 = vmatpush1.bf16.msra.mxu0 %v6497
      %6521 = vmatprep.subr.bf16.mxu0 0
      %6522 = vmatpush1.bf16.msra.mxu0 %v6498
      %6523 = vmatprep.subr.bf16.mxu0 0
      %6524 = vmatpush1.bf16.msra.mxu0 0
      %6525 = vmatprep.subr.bf16.mxu0 0
      %6526 = vmatpush1.bf16.msra.mxu0 0
      %6527 = vmatprep.subr.bf16.mxu0 0
      %6528 = vmatpush1.bf16.msra.mxu0 0
      %6529 = vmatprep.subr.bf16.mxu0 0
      %6530 = vmatpush1.bf16.msra.mxu0 0
      %6531 = vmatprep.subr.bf16.mxu0 0
      %6532 = vmatpush1.bf16.msra.mxu0 0
      %6533 = vmatprep.subr.bf16.mxu0 0
      %6534 = vmatpush1.bf16.msra.mxu0 0
      %6535 = vmatprep.subr.bf16.mxu0 0
      %6536 = vmatpush1.bf16.msra.mxu0 0
      %6537 = vmatprep.subr.bf16.mxu0 0
      %6538 = vmatpush1.bf16.msra.mxu0 0
      %6539 = vmatprep.mubr.bf16.mxu0 0
      %6540 = vmatmul.mubr.bf16.gmra.mrb[0].mxu0 %v6457
      %v6541 = vpop.f32.mrb[0].mxu0
      %v6542 = vadd.f32 %v6432, %v6541
      %v6543 = vpop.f32.mrb[0].mxu0
      %v6544 = vpop.f32.mrb[0].mxu0
      %v6545 = vadd.f32 %v6435, %v6544
      %v6546 = vpop.f32.mrb[0].mxu0
      %6547 = vdwg.mxu0
      %v6549 = vunpack.c.l.s4 1983009808
      %v6550 = vunpack.c.0.s8 %v6549
      %v6551 = vlaneseq
      %v6552 = vshrl.u32 %v6551, 7
      %v6553 = vsub.s32 %v6550, %v6552
      %v6554 = vrot.slane %v2662, %v6553
      %v6555 = vcombine.high %v6554, %v6554
      %v6557 = vunpack.c.l.s4 1983009808
      %v6558 = vunpack.c.0.s8 %v6557
      %v6559 = vlaneseq
      %v6560 = vshrl.u32 %v6559, 7
      %v6561 = vsub.s32 %v6558, %v6560
      %v6562 = vrot.slane %v5955, %v6561
      %v6563 = vcombine.high %v6562, %v6562
      %v6565 = vunpack.c.l.s4 1983009808
      %v6566 = vunpack.c.0.s8 %v6565
      %v6567 = vlaneseq
      %v6568 = vshrl.u32 %v6567, 7
      %v6569 = vsub.s32 %v6566, %v6568
      %v6570 = vrot.slane %v5956, %v6569
      %v6571 = vcombine.high %v6570, %v6570
      %v6573 = vunpack.c.l.s4 1983009808
      %v6574 = vunpack.c.0.s8 %v6573
      %v6575 = vlaneseq
      %v6576 = vshrl.u32 %v6575, 7
      %v6577 = vsub.s32 %v6574, %v6576
      %v6578 = vrot.slane %v5957, %v6577
      %v6579 = vcombine.high %v6578, %v6578
      %vm6580 = vsmask.f32 1280
      %vm6581 = vsmask.f32 3336
      %vm6582 = vmor %vm6580, %vm6581
      %vm6583 = vsmask.f32 5392
      %vm6584 = vmor %vm6582, %vm6583
      %vm6585 = vsmask.f32 7448
      %vm6586 = vmor %vm6584, %vm6585
      %v6588 = vshrl.u32 %v6554, 16
      %v6590 = vrot.slane %v6588, 6
      %v6591 = vshll.u32 %v6554, 16
      %v6593 = vrot.slane %v6591, 7
      %v6594 = vor.u32 %v6590, %v6593
      %v6595 = vrot.slane %v6594, 2
      %v6597 = vshll.u32 %v6555, 16
      %v6599 = vrot.slane %v6597, 7
      %v6600 = vsel %vm6586, %v6595, %v6599
      %v6602 = vshrl.u32 %v6562, 16
      %v6604 = vrot.slane %v6602, 6
      %v6605 = vshll.u32 %v6562, 16
      %v6607 = vrot.slane %v6605, 7
      %v6608 = vor.u32 %v6604, %v6607
      %v6609 = vrot.slane %v6608, 2
      %v6611 = vshll.u32 %v6563, 16
      %v6613 = vrot.slane %v6611, 7
      %v6614 = vsel %vm6586, %v6609, %v6613
      %v6616 = vshrl.u32 %v6570, 16
      %v6618 = vrot.slane %v6616, 6
      %v6619 = vshll.u32 %v6570, 16
      %v6621 = vrot.slane %v6619, 7
      %v6622 = vor.u32 %v6618, %v6621
      %v6623 = vrot.slane %v6622, 2
      %v6625 = vshll.u32 %v6571, 16
      %v6627 = vrot.slane %v6625, 7
      %v6628 = vsel %vm6586, %v6623, %v6627
      %v6630 = vshrl.u32 %v6578, 16
      %v6632 = vrot.slane %v6630, 6
      %v6633 = vshll.u32 %v6578, 16
      %v6635 = vrot.slane %v6633, 7
      %v6636 = vor.u32 %v6632, %v6635
      %v6637 = vrot.slane %v6636, 2
      %v6639 = vshll.u32 %v6579, 16
      %v6641 = vrot.slane %v6639, 7
      %v6642 = vsel %vm6586, %v6637, %v6641
      %v6643 = vld [vmem:[%s5 + $0x80] sm:$0xf]
      %v6644 = vld [vmem:[%s5 + $0x84] sm:$0xf]
      %v6645 = vld [vmem:[%s5 + $0x88] sm:$0xf]
      %v6646 = vld [vmem:[%s5 + $0x8c] sm:$0xf]
      %v6647 = vld [vmem:[%s5 + $0x90] sm:$0xf]
      %v6648 = vld [vmem:[%s5 + $0x94] sm:$0xf]
      %v6649 = vld [vmem:[%s5 + $0x98] sm:$0xf]
      %v6650 = vld [vmem:[%s5 + $0x9c] sm:$0xf]
      %v6651 = vld [vmem:[%s5 + $0xa0] sm:$0xf]
      %v6652 = vld [vmem:[%s5 + $0xa4] sm:$0xf]
      %v6653 = vld [vmem:[%s5 + $0xa8] sm:$0xf]
      %v6654 = vld [vmem:[%s5 + $0xac] sm:$0xf]
      %v6655 = vld [vmem:[%s5 + $0xb0] sm:$0xf]
      %v6656 = vld [vmem:[%s5 + $0xb4] sm:$0xf]
      %v6657 = vld [vmem:[%s5 + $0xb8] sm:$0xf]
      %v6658 = vld [vmem:[%s5 + $0xbc] sm:$0xf]
      %v6659 = vcombine.low %v6600, %v6614
      %v6660 = vcombine.low %v6628, %v6642
      %v6662 = vunpack.c.l.s4 1983009808
      %v6663 = vunpack.c.0.s8 %v6662
      %v6664 = vlaneseq
      %v6665 = vshrl.u32 %v6664, 7
      %v6666 = vsub.s32 %v6663, %v6665
      %v6667 = vrot.slane %v6659, %v6666
      %v6669 = vunpack.c.l.s4 1983009808
      %v6670 = vunpack.c.0.s8 %v6669
      %v6671 = vlaneseq
      %v6672 = vshrl.u32 %v6671, 7
      %v6673 = vsub.s32 %v6670, %v6672
      %v6674 = vrot.slane %v6660, %v6673
      %v6675 = vcombine.low %v6667, %v6674
      %v6693 = vunpack.c.l.b16 %v6643
      %v6694 = vunpack.c.l.b16 %v6644
      %v6695 = vunpack.c.l.b16 %v6645
      %v6696 = vunpack.c.l.b16 %v6646
      %v6697 = vunpack.c.l.b16 %v6647
      %v6698 = vunpack.c.l.b16 %v6648
      %v6699 = vunpack.c.l.b16 %v6649
      %v6700 = vunpack.c.l.b16 %v6650
      %v6701 = vunpack.c.l.b16 %v6651
      %v6702 = vunpack.c.l.b16 %v6652
      %v6703 = vunpack.c.l.b16 %v6653
      %v6704 = vunpack.c.l.b16 %v6654
      %v6705 = vunpack.c.l.b16 %v6655
      %v6706 = vunpack.c.l.b16 %v6656
      %v6707 = vunpack.c.l.b16 %v6657
      %v6708 = vunpack.c.l.b16 %v6658
      %v6709 = vpack.c.b16 %v6694, %v6693
      %v6710 = vpack.c.b16 %v6696, %v6695
      %v6711 = vpack.c.b16 %v6698, %v6697
      %v6712 = vpack.c.b16 %v6700, %v6699
      %v6713 = vpack.c.b16 %v6702, %v6701
      %v6714 = vpack.c.b16 %v6704, %v6703
      %v6715 = vpack.c.b16 %v6706, %v6705
      %v6716 = vpack.c.b16 %v6708, %v6707
      %6725 = vmatprep.subr.bf16.mxu0 0
      %6726 = vmatpush1.bf16.msra.mxu0 %v6709
      %6727 = vmatprep.subr.bf16.mxu0 0
      %6728 = vmatpush1.bf16.msra.mxu0 %v6710
      %6729 = vmatprep.subr.bf16.mxu0 0
      %6730 = vmatpush1.bf16.msra.mxu0 %v6711
      %6731 = vmatprep.subr.bf16.mxu0 0
      %6732 = vmatpush1.bf16.msra.mxu0 %v6712
      %6733 = vmatprep.subr.bf16.mxu0 0
      %6734 = vmatpush1.bf16.msra.mxu0 %v6713
      %6735 = vmatprep.subr.bf16.mxu0 0
      %6736 = vmatpush1.bf16.msra.mxu0 %v6714
      %6737 = vmatprep.subr.bf16.mxu0 0
      %6738 = vmatpush1.bf16.msra.mxu0 %v6715
      %6739 = vmatprep.subr.bf16.mxu0 0
      %6740 = vmatpush1.bf16.msra.mxu0 %v6716
      %6741 = vmatprep.subr.bf16.mxu0 0
      %6742 = vmatpush1.bf16.msra.mxu0 0
      %6743 = vmatprep.subr.bf16.mxu0 0
      %6744 = vmatpush1.bf16.msra.mxu0 0
      %6745 = vmatprep.subr.bf16.mxu0 0
      %6746 = vmatpush1.bf16.msra.mxu0 0
      %6747 = vmatprep.subr.bf16.mxu0 0
      %6748 = vmatpush1.bf16.msra.mxu0 0
      %6749 = vmatprep.subr.bf16.mxu0 0
      %6750 = vmatpush1.bf16.msra.mxu0 0
      %6751 = vmatprep.subr.bf16.mxu0 0
      %6752 = vmatpush1.bf16.msra.mxu0 0
      %6753 = vmatprep.subr.bf16.mxu0 0
      %6754 = vmatpush1.bf16.msra.mxu0 0
      %6755 = vmatprep.subr.bf16.mxu0 0
      %6756 = vmatpush1.bf16.msra.mxu0 0
      %6757 = vmatprep.mubr.bf16.mxu0 0
      %6758 = vmatmul.mubr.bf16.gmra.mrb[0].mxu0 %v6675
      %v6759 = vpop.f32.mrb[0].mxu0
      %v6760 = vadd.f32 0.0, %v6759
      %v6761 = vpop.f32.mrb[0].mxu0
      %v6762 = vpop.f32.mrb[0].mxu0
      %v6763 = vadd.f32 0.0, %v6762
      %v6764 = vpop.f32.mrb[0].mxu0
      %6765 = vdwg.mxu0
      %v6766 = vadd.f32 %v6542, %v6760
      %v6767 = vadd.f32 %v6545, %v6763
      %v6768 = vld [vmem:[%s5 + $0xc0] sm:$0xf]
      %v6769 = vld [vmem:[%s5 + $0xc4] sm:$0xf]
      %v6770 = vld [vmem:[%s5 + $0xc8] sm:$0xf]
      %v6771 = vld [vmem:[%s5 + $0xcc] sm:$0xf]
      %v6772 = vld [vmem:[%s5 + $0xd0] sm:$0xf]
      %v6773 = vld [vmem:[%s5 + $0xd4] sm:$0xf]
      %v6774 = vld [vmem:[%s5 + $0xd8] sm:$0xf]
      %v6775 = vld [vmem:[%s5 + $0xdc] sm:$0xf]
      %v6776 = vld [vmem:[%s5 + $0xe0] sm:$0xf]
      %v6777 = vld [vmem:[%s5 + $0xe4] sm:$0xf]
      %v6778 = vld [vmem:[%s5 + $0xe8] sm:$0xf]
      %v6779 = vld [vmem:[%s5 + $0xec] sm:$0xf]
      %v6780 = vld [vmem:[%s5 + $0xf0] sm:$0xf]
      %v6781 = vld [vmem:[%s5 + $0xf4] sm:$0xf]
      %v6782 = vld [vmem:[%s5 + $0xf8] sm:$0xf]
      %v6783 = vld [vmem:[%s5 + $0xfc] sm:$0xf]
      %v6788 = vcombine.low %v6268, %v6269
      %v6789 = vcombine.low %v6270, %v6271
      %v6791 = vunpack.c.l.s4 1983009808
      %v6792 = vunpack.c.0.s8 %v6791
      %v6793 = vlaneseq
      %v6794 = vshrl.u32 %v6793, 7
      %v6795 = vsub.s32 %v6792, %v6794
      %v6796 = vrot.slane %v6788, %v6795
      %v6798 = vunpack.c.l.s4 1983009808
      %v6799 = vunpack.c.0.s8 %v6798
      %v6800 = vlaneseq
      %v6801 = vshrl.u32 %v6800, 7
      %v6802 = vsub.s32 %v6799, %v6801
      %v6803 = vrot.slane %v6789, %v6802
      %v6804 = vcombine.low %v6796, %v6803
      %v6822 = vunpack.c.l.b16 %v6768
      %v6823 = vunpack.c.l.b16 %v6769
      %v6824 = vunpack.c.l.b16 %v6770
      %v6825 = vunpack.c.l.b16 %v6771
      %v6826 = vunpack.c.l.b16 %v6772
      %v6827 = vunpack.c.l.b16 %v6773
      %v6828 = vunpack.c.l.b16 %v6774
      %v6829 = vunpack.c.l.b16 %v6775
      %v6830 = vunpack.c.l.b16 %v6776
      %v6831 = vunpack.c.l.b16 %v6777
      %v6832 = vunpack.c.l.b16 %v6778
      %v6833 = vunpack.c.l.b16 %v6779
      %v6834 = vunpack.c.l.b16 %v6780
      %v6835 = vunpack.c.l.b16 %v6781
      %v6836 = vunpack.c.l.b16 %v6782
      %v6837 = vunpack.c.l.b16 %v6783
      %v6838 = vpack.c.b16 %v6823, %v6822
      %v6839 = vpack.c.b16 %v6825, %v6824
      %v6840 = vpack.c.b16 %v6827, %v6826
      %v6841 = vpack.c.b16 %v6829, %v6828
      %v6842 = vpack.c.b16 %v6831, %v6830
      %v6843 = vpack.c.b16 %v6833, %v6832
      %v6844 = vpack.c.b16 %v6835, %v6834
      %v6845 = vpack.c.b16 %v6837, %v6836
      %6854 = vmatprep.subr.bf16.mxu0 0
      %6855 = vmatpush1.bf16.msra.mxu0 %v6838
      %6856 = vmatprep.subr.bf16.mxu0 0
      %6857 = vmatpush1.bf16.msra.mxu0 %v6839
      %6858 = vmatprep.subr.bf16.mxu0 0
      %6859 = vmatpush1.bf16.msra.mxu0 %v6840
      %6860 = vmatprep.subr.bf16.mxu0 0
      %6861 = vmatpush1.bf16.msra.mxu0 %v6841
      %6862 = vmatprep.subr.bf16.mxu0 0
      %6863 = vmatpush1.bf16.msra.mxu0 %v6842
      %6864 = vmatprep.subr.bf16.mxu0 0
      %6865 = vmatpush1.bf16.msra.mxu0 %v6843
      %6866 = vmatprep.subr.bf16.mxu0 0
      %6867 = vmatpush1.bf16.msra.mxu0 %v6844
      %6868 = vmatprep.subr.bf16.mxu0 0
      %6869 = vmatpush1.bf16.msra.mxu0 %v6845
      %6870 = vmatprep.subr.bf16.mxu0 0
      %6871 = vmatpush1.bf16.msra.mxu0 0
      %6872 = vmatprep.subr.bf16.mxu0 0
      %6873 = vmatpush1.bf16.msra.mxu0 0
      %6874 = vmatprep.subr.bf16.mxu0 0
      %6875 = vmatpush1.bf16.msra.mxu0 0
      %6876 = vmatprep.subr.bf16.mxu0 0
      %6877 = vmatpush1.bf16.msra.mxu0 0
      %6878 = vmatprep.subr.bf16.mxu0 0
      %6879 = vmatpush1.bf16.msra.mxu0 0
      %6880 = vmatprep.subr.bf16.mxu0 0
      %6881 = vmatpush1.bf16.msra.mxu0 0
      %6882 = vmatprep.subr.bf16.mxu0 0
      %6883 = vmatpush1.bf16.msra.mxu0 0
      %6884 = vmatprep.subr.bf16.mxu0 0
      %6885 = vmatpush1.bf16.msra.mxu0 0
      %6886 = vmatprep.mubr.bf16.mxu0 0
      %6887 = vmatmul.mubr.bf16.gmra.mrb[0].mxu0 %v6804
      %v6888 = vpop.f32.mrb[0].mxu0
      %v6889 = vadd.f32 0.0, %v6888
      %v6890 = vpop.f32.mrb[0].mxu0
      %v6891 = vpop.f32.mrb[0].mxu0
      %v6892 = vadd.f32 0.0, %v6891
      %v6893 = vpop.f32.mrb[0].mxu0
      %6894 = vdwg.mxu0
      %v6895 = vadd.f32 %v6766, %v6889
      %v6896 = vadd.f32 %v6767, %v6892
      %v6897 = vld [vmem:[%s5 + $0x100] sm:$0xf]
      %v6898 = vld [vmem:[%s5 + $0x104] sm:$0xf]
      %v6899 = vld [vmem:[%s5 + $0x108] sm:$0xf]
      %v6900 = vld [vmem:[%s5 + $0x10c] sm:$0xf]
      %v6901 = vld [vmem:[%s5 + $0x110] sm:$0xf]
      %v6902 = vld [vmem:[%s5 + $0x114] sm:$0xf]
      %v6903 = vld [vmem:[%s5 + $0x118] sm:$0xf]
      %v6904 = vld [vmem:[%s5 + $0x11c] sm:$0xf]
      %v6905 = vld [vmem:[%s5 + $0x120] sm:$0xf]
      %v6906 = vld [vmem:[%s5 + $0x124] sm:$0xf]
      %v6907 = vld [vmem:[%s5 + $0x128] sm:$0xf]
      %v6908 = vld [vmem:[%s5 + $0x12c] sm:$0xf]
      %v6909 = vld [vmem:[%s5 + $0x130] sm:$0xf]
      %v6910 = vld [vmem:[%s5 + $0x134] sm:$0xf]
      %v6911 = vld [vmem:[%s5 + $0x138] sm:$0xf]
      %v6912 = vld [vmem:[%s5 + $0x13c] sm:$0xf]
      %v6917 = vcombine.low %v6289, %v6291
      %v6918 = vcombine.low %v6293, %v6295
      %v6920 = vunpack.c.l.s4 1983009808
      %v6921 = vunpack.c.0.s8 %v6920
      %v6922 = vlaneseq
      %v6923 = vshrl.u32 %v6922, 7
      %v6924 = vsub.s32 %v6921, %v6923
      %v6925 = vrot.slane %v6917, %v6924
      %v6927 = vunpack.c.l.s4 1983009808
      %v6928 = vunpack.c.0.s8 %v6927
      %v6929 = vlaneseq
      %v6930 = vshrl.u32 %v6929, 7
      %v6931 = vsub.s32 %v6928, %v6930
      %v6932 = vrot.slane %v6918, %v6931
      %v6933 = vcombine.low %v6925, %v6932
      %v6951 = vunpack.c.l.b16 %v6897
      %v6952 = vunpack.c.l.b16 %v6898
      %v6953 = vunpack.c.l.b16 %v6899
      %v6954 = vunpack.c.l.b16 %v6900
      %v6955 = vunpack.c.l.b16 %v6901
      %v6956 = vunpack.c.l.b16 %v6902
      %v6957 = vunpack.c.l.b16 %v6903
      %v6958 = vunpack.c.l.b16 %v6904
      %v6959 = vunpack.c.l.b16 %v6905
      %v6960 = vunpack.c.l.b16 %v6906
      %v6961 = vunpack.c.l.b16 %v6907
      %v6962 = vunpack.c.l.b16 %v6908
      %v6963 = vunpack.c.l.b16 %v6909
      %v6964 = vunpack.c.l.b16 %v6910
      %v6965 = vunpack.c.l.b16 %v6911
      %v6966 = vunpack.c.l.b16 %v6912
      %v6967 = vpack.c.b16 %v6952, %v6951
      %v6968 = vpack.c.b16 %v6954, %v6953
      %v6969 = vpack.c.b16 %v6956, %v6955
      %v6970 = vpack.c.b16 %v6958, %v6957
      %v6971 = vpack.c.b16 %v6960, %v6959
      %v6972 = vpack.c.b16 %v6962, %v6961
      %v6973 = vpack.c.b16 %v6964, %v6963
      %v6974 = vpack.c.b16 %v6966, %v6965
      %6983 = vmatprep.subr.bf16.mxu0 0
      %6984 = vmatpush1.bf16.msra.mxu0 %v6967
      %6985 = vmatprep.subr.bf16.mxu0 0
      %6986 = vmatpush1.bf16.msra.mxu0 %v6968
      %6987 = vmatprep.subr.bf16.mxu0 0
      %6988 = vmatpush1.bf16.msra.mxu0 %v6969
      %6989 = vmatprep.subr.bf16.mxu0 0
      %6990 = vmatpush1.bf16.msra.mxu0 %v6970
      %6991 = vmatprep.subr.bf16.mxu0 0
      %6992 = vmatpush1.bf16.msra.mxu0 %v6971
      %6993 = vmatprep.subr.bf16.mxu0 0
      %6994 = vmatpush1.bf16.msra.mxu0 %v6972
      %6995 = vmatprep.subr.bf16.mxu0 0
      %6996 = vmatpush1.bf16.msra.mxu0 %v6973
      %6997 = vmatprep.subr.bf16.mxu0 0
      %6998 = vmatpush1.bf16.msra.mxu0 %v6974
      %6999 = vmatprep.subr.bf16.mxu0 0
      %7000 = vmatpush1.bf16.msra.mxu0 0
      %7001 = vmatprep.subr.bf16.mxu0 0
      %7002 = vmatpush1.bf16.msra.mxu0 0
      %7003 = vmatprep.subr.bf16.mxu0 0
      %7004 = vmatpush1.bf16.msra.mxu0 0
      %7005 = vmatprep.subr.bf16.mxu0 0
      %7006 = vmatpush1.bf16.msra.mxu0 0
      %7007 = vmatprep.subr.bf16.mxu0 0
      %7008 = vmatpush1.bf16.msra.mxu0 0
      %7009 = vmatprep.subr.bf16.mxu0 0
      %7010 = vmatpush1.bf16.msra.mxu0 0
      %7011 = vmatprep.subr.bf16.mxu0 0
      %7012 = vmatpush1.bf16.msra.mxu0 0
      %7013 = vmatprep.subr.bf16.mxu0 0
      %7014 = vmatpush1.bf16.msra.mxu0 0
      %7015 = vmatprep.mubr.bf16.mxu0 0
      %7016 = vmatmul.mubr.bf16.gmra.mrb[0].mxu0 %v6933
      %v7017 = vpop.f32.mrb[0].mxu0
      %v7018 = vadd.f32 0.0, %v7017
      %v7019 = vpop.f32.mrb[0].mxu0
      %v7020 = vpop.f32.mrb[0].mxu0
      %v7021 = vadd.f32 0.0, %v7020
      %v7022 = vpop.f32.mrb[0].mxu0
      %7023 = vdwg.mxu0
      %v7024 = vadd.f32 %v6895, %v7018
      %v7025 = vadd.f32 %v6896, %v7021
      %v7027 = vunpack.c.l.s4 1983009808
      %v7028 = vunpack.c.0.s8 %v7027
      %v7029 = vlaneseq
      %v7030 = vshrl.u32 %v7029, 7
      %v7031 = vsub.s32 %v7028, %v7030
      %v7032 = vrot.slane %v6268, %v7031
      %v7033 = vcombine.high %v7032, %v7032
      %v7035 = vunpack.c.l.s4 1983009808
      %v7036 = vunpack.c.0.s8 %v7035
      %v7037 = vlaneseq
      %v7038 = vshrl.u32 %v7037, 7
      %v7039 = vsub.s32 %v7036, %v7038
      %v7040 = vrot.slane %v6269, %v7039
      %v7041 = vcombine.high %v7040, %v7040
      %v7043 = vunpack.c.l.s4 1983009808
      %v7044 = vunpack.c.0.s8 %v7043
      %v7045 = vlaneseq
      %v7046 = vshrl.u32 %v7045, 7
      %v7047 = vsub.s32 %v7044, %v7046
      %v7048 = vrot.slane %v6270, %v7047
      %v7049 = vcombine.high %v7048, %v7048
      %v7051 = vunpack.c.l.s4 1983009808
      %v7052 = vunpack.c.0.s8 %v7051
      %v7053 = vlaneseq
      %v7054 = vshrl.u32 %v7053, 7
      %v7055 = vsub.s32 %v7052, %v7054
      %v7056 = vrot.slane %v6271, %v7055
      %v7057 = vcombine.high %v7056, %v7056
      %v7059 = vshrl.u32 %v7032, 16
      %v7061 = vrot.slane %v7059, 6
      %v7062 = vshll.u32 %v7032, 16
      %v7064 = vrot.slane %v7062, 7
      %v7065 = vor.u32 %v7061, %v7064
      %v7066 = vrot.slane %v7065, 2
      %v7068 = vshll.u32 %v7033, 16
      %v7070 = vrot.slane %v7068, 7
      %v7071 = vsel %vm6586, %v7066, %v7070
      %v7073 = vshrl.u32 %v7040, 16
      %v7075 = vrot.slane %v7073, 6
      %v7076 = vshll.u32 %v7040, 16
      %v7078 = vrot.slane %v7076, 7
      %v7079 = vor.u32 %v7075, %v7078
      %v7080 = vrot.slane %v7079, 2
      %v7082 = vshll.u32 %v7041, 16
      %v7084 = vrot.slane %v7082, 7
      %v7085 = vsel %vm6586, %v7080, %v7084
      %v7087 = vshrl.u32 %v7048, 16
      %v7089 = vrot.slane %v7087, 6
      %v7090 = vshll.u32 %v7048, 16
      %v7092 = vrot.slane %v7090, 7
      %v7093 = vor.u32 %v7089, %v7092
      %v7094 = vrot.slane %v7093, 2
      %v7096 = vshll.u32 %v7049, 16
      %v7098 = vrot.slane %v7096, 7
      %v7099 = vsel %vm6586, %v7094, %v7098
      %v7101 = vshrl.u32 %v7056, 16
      %v7103 = vrot.slane %v7101, 6
      %v7104 = vshll.u32 %v7056, 16
      %v7106 = vrot.slane %v7104, 7
      %v7107 = vor.u32 %v7103, %v7106
      %v7108 = vrot.slane %v7107, 2
      %v7110 = vshll.u32 %v7057, 16
      %v7112 = vrot.slane %v7110, 7
      %v7113 = vsel %vm6586, %v7108, %v7112
      %v7114 = vld [vmem:[%s5 + $0x140] sm:$0xf]
      %v7115 = vld [vmem:[%s5 + $0x144] sm:$0xf]
      %v7116 = vld [vmem:[%s5 + $0x148] sm:$0xf]
      %v7117 = vld [vmem:[%s5 + $0x14c] sm:$0xf]
      %v7118 = vld [vmem:[%s5 + $0x150] sm:$0xf]
      %v7119 = vld [vmem:[%s5 + $0x154] sm:$0xf]
      %v7120 = vld [vmem:[%s5 + $0x158] sm:$0xf]
      %v7121 = vld [vmem:[%s5 + $0x15c] sm:$0xf]
      %v7122 = vld [vmem:[%s5 + $0x160] sm:$0xf]
      %v7123 = vld [vmem:[%s5 + $0x164] sm:$0xf]
      %v7124 = vld [vmem:[%s5 + $0x168] sm:$0xf]
      %v7125 = vld [vmem:[%s5 + $0x16c] sm:$0xf]
      %v7126 = vld [vmem:[%s5 + $0x170] sm:$0xf]
      %v7127 = vld [vmem:[%s5 + $0x174] sm:$0xf]
      %v7128 = vld [vmem:[%s5 + $0x178] sm:$0xf]
      %v7129 = vld [vmem:[%s5 + $0x17c] sm:$0xf]
      %v7130 = vcombine.low %v7071, %v7085
      %v7131 = vcombine.low %v7099, %v7113
      %v7133 = vunpack.c.l.s4 1983009808
      %v7134 = vunpack.c.0.s8 %v7133
      %v7135 = vlaneseq
      %v7136 = vshrl.u32 %v7135, 7
      %v7137 = vsub.s32 %v7134, %v7136
      %v7138 = vrot.slane %v7130, %v7137
      %v7140 = vunpack.c.l.s4 1983009808
      %v7141 = vunpack.c.0.s8 %v7140
      %v7142 = vlaneseq
      %v7143 = vshrl.u32 %v7142, 7
      %v7144 = vsub.s32 %v7141, %v7143
      %v7145 = vrot.slane %v7131, %v7144
      %v7146 = vcombine.low %v7138, %v7145
      %v7164 = vunpack.c.l.b16 %v7114
      %v7165 = vunpack.c.l.b16 %v7115
      %v7166 = vunpack.c.l.b16 %v7116
      %v7167 = vunpack.c.l.b16 %v7117
      %v7168 = vunpack.c.l.b16 %v7118
      %v7169 = vunpack.c.l.b16 %v7119
      %v7170 = vunpack.c.l.b16 %v7120
      %v7171 = vunpack.c.l.b16 %v7121
      %v7172 = vunpack.c.l.b16 %v7122
      %v7173 = vunpack.c.l.b16 %v7123
      %v7174 = vunpack.c.l.b16 %v7124
      %v7175 = vunpack.c.l.b16 %v7125
      %v7176 = vunpack.c.l.b16 %v7126
      %v7177 = vunpack.c.l.b16 %v7127
      %v7178 = vunpack.c.l.b16 %v7128
      %v7179 = vunpack.c.l.b16 %v7129
      %v7180 = vpack.c.b16 %v7165, %v7164
      %v7181 = vpack.c.b16 %v7167, %v7166
      %v7182 = vpack.c.b16 %v7169, %v7168
      %v7183 = vpack.c.b16 %v7171, %v7170
      %v7184 = vpack.c.b16 %v7173, %v7172
      %v7185 = vpack.c.b16 %v7175, %v7174
      %v7186 = vpack.c.b16 %v7177, %v7176
      %v7187 = vpack.c.b16 %v7179, %v7178
      %7196 = vmatprep.subr.bf16.mxu0 0
      %7197 = vmatpush1.bf16.msra.mxu0 %v7180
      %7198 = vmatprep.subr.bf16.mxu0 0
      %7199 = vmatpush1.bf16.msra.mxu0 %v7181
      %7200 = vmatprep.subr.bf16.mxu0 0
      %7201 = vmatpush1.bf16.msra.mxu0 %v7182
      %7202 = vmatprep.subr.bf16.mxu0 0
      %7203 = vmatpush1.bf16.msra.mxu0 %v7183
      %7204 = vmatprep.subr.bf16.mxu0 0
      %7205 = vmatpush1.bf16.msra.mxu0 %v7184
      %7206 = vmatprep.subr.bf16.mxu0 0
      %7207 = vmatpush1.bf16.msra.mxu0 %v7185
      %7208 = vmatprep.subr.bf16.mxu0 0
      %7209 = vmatpush1.bf16.msra.mxu0 %v7186
      %7210 = vmatprep.subr.bf16.mxu0 0
      %7211 = vmatpush1.bf16.msra.mxu0 %v7187
      %7212 = vmatprep.subr.bf16.mxu0 0
      %7213 = vmatpush1.bf16.msra.mxu0 0
      %7214 = vmatprep.subr.bf16.mxu0 0
      %7215 = vmatpush1.bf16.msra.mxu0 0
      %7216 = vmatprep.subr.bf16.mxu0 0
      %7217 = vmatpush1.bf16.msra.mxu0 0
      %7218 = vmatprep.subr.bf16.mxu0 0
      %7219 = vmatpush1.bf16.msra.mxu0 0
      %7220 = vmatprep.subr.bf16.mxu0 0
      %7221 = vmatpush1.bf16.msra.mxu0 0
      %7222 = vmatprep.subr.bf16.mxu0 0
      %7223 = vmatpush1.bf16.msra.mxu0 0
      %7224 = vmatprep.subr.bf16.mxu0 0
      %7225 = vmatpush1.bf16.msra.mxu0 0
      %7226 = vmatprep.subr.bf16.mxu0 0
      %7227 = vmatpush1.bf16.msra.mxu0 0
      %7228 = vmatprep.mubr.bf16.mxu0 0
      %7229 = vmatmul.mubr.bf16.gmra.mrb[0].mxu0 %v7146
      %v7230 = vpop.f32.mrb[0].mxu0
      %v7231 = vadd.f32 0.0, %v7230
      %v7232 = vpop.f32.mrb[0].mxu0
      %v7233 = vpop.f32.mrb[0].mxu0
      %v7234 = vadd.f32 0.0, %v7233
      %v7235 = vpop.f32.mrb[0].mxu0
      %7236 = vdwg.mxu0
      %v7237 = vadd.f32 %v7024, %v7231
      %v7238 = vadd.f32 %v7025, %v7234
      %v7239 = vld [vmem:[%s5 + $0x180] sm:$0xf]
      %v7240 = vld [vmem:[%s5 + $0x184] sm:$0xf]
      %v7241 = vld [vmem:[%s5 + $0x188] sm:$0xf]
      %v7242 = vld [vmem:[%s5 + $0x18c] sm:$0xf]
      %v7243 = vld [vmem:[%s5 + $0x190] sm:$0xf]
      %v7244 = vld [vmem:[%s5 + $0x194] sm:$0xf]
      %v7245 = vld [vmem:[%s5 + $0x198] sm:$0xf]
      %v7246 = vld [vmem:[%s5 + $0x19c] sm:$0xf]
      %v7247 = vld [vmem:[%s5 + $0x1a0] sm:$0xf]
      %v7248 = vld [vmem:[%s5 + $0x1a4] sm:$0xf]
      %v7249 = vld [vmem:[%s5 + $0x1a8] sm:$0xf]
      %v7250 = vld [vmem:[%s5 + $0x1ac] sm:$0xf]
      %v7251 = vld [vmem:[%s5 + $0x1b0] sm:$0xf]
      %v7252 = vld [vmem:[%s5 + $0x1b4] sm:$0xf]
      %v7253 = vld [vmem:[%s5 + $0x1b8] sm:$0xf]
      %v7254 = vld [vmem:[%s5 + $0x1bc] sm:$0xf]
      %v7256 = vcombine.low %v5955, %v5956
      %v7257 = vcombine.low %v5957, %v5958
      %v7259 = vunpack.c.l.s4 1983009808
      %v7260 = vunpack.c.0.s8 %v7259
      %v7261 = vlaneseq
      %v7262 = vshrl.u32 %v7261, 7
      %v7263 = vsub.s32 %v7260, %v7262
      %v7264 = vrot.slane %v7256, %v7263
      %v7266 = vunpack.c.l.s4 1983009808
      %v7267 = vunpack.c.0.s8 %v7266
      %v7268 = vlaneseq
      %v7269 = vshrl.u32 %v7268, 7
      %v7270 = vsub.s32 %v7267, %v7269
      %v7271 = vrot.slane %v7257, %v7270
      %v7272 = vcombine.low %v7264, %v7271
      %v7290 = vunpack.c.l.b16 %v7239
      %v7291 = vunpack.c.l.b16 %v7240
      %v7292 = vunpack.c.l.b16 %v7241
      %v7293 = vunpack.c.l.b16 %v7242
      %v7294 = vunpack.c.l.b16 %v7243
      %v7295 = vunpack.c.l.b16 %v7244
      %v7296 = vunpack.c.l.b16 %v7245
      %v7297 = vunpack.c.l.b16 %v7246
      %v7298 = vunpack.c.l.b16 %v7247
      %v7299 = vunpack.c.l.b16 %v7248
      %v7300 = vunpack.c.l.b16 %v7249
      %v7301 = vunpack.c.l.b16 %v7250
      %v7302 = vunpack.c.l.b16 %v7251
      %v7303 = vunpack.c.l.b16 %v7252
      %v7304 = vunpack.c.l.b16 %v7253
      %v7305 = vunpack.c.l.b16 %v7254
      %v7306 = vpack.c.b16 %v7291, %v7290
      %v7307 = vpack.c.b16 %v7293, %v7292
      %v7308 = vpack.c.b16 %v7295, %v7294
      %v7309 = vpack.c.b16 %v7297, %v7296
      %v7310 = vpack.c.b16 %v7299, %v7298
      %v7311 = vpack.c.b16 %v7301, %v7300
      %v7312 = vpack.c.b16 %v7303, %v7302
      %v7313 = vpack.c.b16 %v7305, %v7304
      %7322 = vmatprep.subr.bf16.mxu0 0
      %7323 = vmatpush1.bf16.msra.mxu0 %v7306
      %7324 = vmatprep.subr.bf16.mxu0 0
      %7325 = vmatpush1.bf16.msra.mxu0 %v7307
      %7326 = vmatprep.subr.bf16.mxu0 0
      %7327 = vmatpush1.bf16.msra.mxu0 %v7308
      %7328 = vmatprep.subr.bf16.mxu0 0
      %7329 = vmatpush1.bf16.msra.mxu0 %v7309
      %7330 = vmatprep.subr.bf16.mxu0 0
      %7331 = vmatpush1.bf16.msra.mxu0 %v7310
      %7332 = vmatprep.subr.bf16.mxu0 0
      %7333 = vmatpush1.bf16.msra.mxu0 %v7311
      %7334 = vmatprep.subr.bf16.mxu0 0
      %7335 = vmatpush1.bf16.msra.mxu0 %v7312
      %7336 = vmatprep.subr.bf16.mxu0 0
      %7337 = vmatpush1.bf16.msra.mxu0 %v7313
      %7338 = vmatprep.subr.bf16.mxu0 0
      %7339 = vmatpush1.bf16.msra.mxu0 0
      %7340 = vmatprep.subr.bf16.mxu0 0
      %7341 = vmatpush1.bf16.msra.mxu0 0
      %7342 = vmatprep.subr.bf16.mxu0 0
      %7343 = vmatpush1.bf16.msra.mxu0 0
      %7344 = vmatprep.subr.bf16.mxu0 0
      %7345 = vmatpush1.bf16.msra.mxu0 0
      %7346 = vmatprep.subr.bf16.mxu0 0
      %7347 = vmatpush1.bf16.msra.mxu0 0
      %7348 = vmatprep.subr.bf16.mxu0 0
      %7349 = vmatpush1.bf16.msra.mxu0 0
      %7350 = vmatprep.subr.bf16.mxu0 0
      %7351 = vmatpush1.bf16.msra.mxu0 0
      %7352 = vmatprep.subr.bf16.mxu0 0
      %7353 = vmatpush1.bf16.msra.mxu0 0
      %7354 = vmatprep.mubr.bf16.mxu0 0
      %7355 = vmatmul.mubr.bf16.gmra.mrb[0].mxu0 %v7272
      %v7356 = vpop.f32.mrb[0].mxu0
      %v7357 = vadd.f32 0.0, %v7356
      %v7358 = vpop.f32.mrb[0].mxu0
      %v7359 = vpop.f32.mrb[0].mxu0
      %v7360 = vadd.f32 0.0, %v7359
      %v7361 = vpop.f32.mrb[0].mxu0
      %7362 = vdwg.mxu0
      %v7363 = vadd.f32 %v7237, %v7357
      %v7364 = vadd.f32 %v7238, %v7360
      %v7365 = vld [vmem:[%s5 + $0x1c0] sm:$0xf]
      %v7366 = vld [vmem:[%s5 + $0x1c4] sm:$0xf]
      %v7367 = vld [vmem:[%s5 + $0x1c8] sm:$0xf]
      %v7368 = vld [vmem:[%s5 + $0x1cc] sm:$0xf]
      %v7369 = vld [vmem:[%s5 + $0x1d0] sm:$0xf]
      %v7370 = vld [vmem:[%s5 + $0x1d4] sm:$0xf]
      %v7371 = vld [vmem:[%s5 + $0x1d8] sm:$0xf]
      %v7372 = vld [vmem:[%s5 + $0x1dc] sm:$0xf]
      %v7373 = vld [vmem:[%s5 + $0x1e0] sm:$0xf]
      %v7374 = vld [vmem:[%s5 + $0x1e4] sm:$0xf]
      %v7375 = vld [vmem:[%s5 + $0x1e8] sm:$0xf]
      %v7376 = vld [vmem:[%s5 + $0x1ec] sm:$0xf]
      %v7377 = vld [vmem:[%s5 + $0x1f0] sm:$0xf]
      %v7378 = vld [vmem:[%s5 + $0x1f4] sm:$0xf]
      %v7379 = vld [vmem:[%s5 + $0x1f8] sm:$0xf]
      %v7380 = vld [vmem:[%s5 + $0x1fc] sm:$0xf]
      %v7382 = vcombine.low %v5989, %v5991
      %v7383 = vcombine.low %v5993, %v5995
      %v7385 = vunpack.c.l.s4 1983009808
      %v7386 = vunpack.c.0.s8 %v7385
      %v7387 = vlaneseq
      %v7388 = vshrl.u32 %v7387, 7
      %v7389 = vsub.s32 %v7386, %v7388
      %v7390 = vrot.slane %v7382, %v7389
      %v7392 = vunpack.c.l.s4 1983009808
      %v7393 = vunpack.c.0.s8 %v7392
      %v7394 = vlaneseq
      %v7395 = vshrl.u32 %v7394, 7
      %v7396 = vsub.s32 %v7393, %v7395
      %v7397 = vrot.slane %v7383, %v7396
      %v7398 = vcombine.low %v7390, %v7397
      %v7416 = vunpack.c.l.b16 %v7365
      %v7417 = vunpack.c.l.b16 %v7366
      %v7418 = vunpack.c.l.b16 %v7367
      %v7419 = vunpack.c.l.b16 %v7368
      %v7420 = vunpack.c.l.b16 %v7369
      %v7421 = vunpack.c.l.b16 %v7370
      %v7422 = vunpack.c.l.b16 %v7371
      %v7423 = vunpack.c.l.b16 %v7372
      %v7424 = vunpack.c.l.b16 %v7373
      %v7425 = vunpack.c.l.b16 %v7374
      %v7426 = vunpack.c.l.b16 %v7375
      %v7427 = vunpack.c.l.b16 %v7376
      %v7428 = vunpack.c.l.b16 %v7377
      %v7429 = vunpack.c.l.b16 %v7378
      %v7430 = vunpack.c.l.b16 %v7379
      %v7431 = vunpack.c.l.b16 %v7380
      %v7432 = vpack.c.b16 %v7417, %v7416
      %v7433 = vpack.c.b16 %v7419, %v7418
      %v7434 = vpack.c.b16 %v7421, %v7420
      %v7435 = vpack.c.b16 %v7423, %v7422
      %v7436 = vpack.c.b16 %v7425, %v7424
      %v7437 = vpack.c.b16 %v7427, %v7426
      %v7438 = vpack.c.b16 %v7429, %v7428
      %v7439 = vpack.c.b16 %v7431, %v7430
      %7448 = vmatprep.subr.bf16.mxu0 0
      %7449 = vmatpush1.bf16.msra.mxu0 %v7432
      %7450 = vmatprep.subr.bf16.mxu0 0
      %7451 = vmatpush1.bf16.msra.mxu0 %v7433
      %7452 = vmatprep.subr.bf16.mxu0 0
      %7453 = vmatpush1.bf16.msra.mxu0 %v7434
      %7454 = vmatprep.subr.bf16.mxu0 0
      %7455 = vmatpush1.bf16.msra.mxu0 %v7435
      %7456 = vmatprep.subr.bf16.mxu0 0
      %7457 = vmatpush1.bf16.msra.mxu0 %v7436
      %7458 = vmatprep.subr.bf16.mxu0 0
      %7459 = vmatpush1.bf16.msra.mxu0 %v7437
      %7460 = vmatprep.subr.bf16.mxu0 0
      %7461 = vmatpush1.bf16.msra.mxu0 %v7438
      %7462 = vmatprep.subr.bf16.mxu0 0
      %7463 = vmatpush1.bf16.msra.mxu0 %v7439
      %7464 = vmatprep.subr.bf16.mxu0 0
      %7465 = vmatpush1.bf16.msra.mxu0 0
      %7466 = vmatprep.subr.bf16.mxu0 0
      %7467 = vmatpush1.bf16.msra.mxu0 0
      %7468 = vmatprep.subr.bf16.mxu0 0
      %7469 = vmatpush1.bf16.msra.mxu0 0
      %7470 = vmatprep.subr.bf16.mxu0 0
      %7471 = vmatpush1.bf16.msra.mxu0 0
      %7472 = vmatprep.subr.bf16.mxu0 0
      %7473 = vmatpush1.bf16.msra.mxu0 0
      %7474 = vmatprep.subr.bf16.mxu0 0
      %7475 = vmatpush1.bf16.msra.mxu0 0
      %7476 = vmatprep.subr.bf16.mxu0 0
      %7477 = vmatpush1.bf16.msra.mxu0 0
      %7478 = vmatprep.subr.bf16.mxu0 0
      %7479 = vmatpush1.bf16.msra.mxu0 0
      %7480 = vmatprep.mubr.bf16.mxu0 0
      %7481 = vmatmul.mubr.bf16.gmra.mrb[0].mxu0 %v7398
      %v7482 = vpop.f32.mrb[0].mxu0
      %v7483 = vadd.f32 0.0, %v7482
      %v7484 = vpop.f32.mrb[0].mxu0
      %v7485 = vpop.f32.mrb[0].mxu0
      %v7486 = vadd.f32 0.0, %v7485
      %v7487 = vpop.f32.mrb[0].mxu0
      %7488 = vdwg.mxu0
      %v7489 = vadd.f32 %v7363, %v7483
      %v7490 = vadd.f32 %v7364, %v7486
      %v7492 = vunpack.c.l.s4 1983009808
      %v7493 = vunpack.c.0.s8 %v7492
      %v7494 = vlaneseq
      %v7495 = vshrl.u32 %v7494, 7
      %v7496 = vsub.s32 %v7493, %v7495
      %v7497 = vrot.slane %v5958, %v7496
      %v7498 = vcombine.high %v7497, %v7497
      %v7500 = vshrl.u32 %v7497, 16
      %v7502 = vrot.slane %v7500, 6
      %v7503 = vshll.u32 %v7497, 16
      %v7505 = vrot.slane %v7503, 7
      %v7506 = vor.u32 %v7502, %v7505
      %v7507 = vrot.slane %v7506, 2
      %v7509 = vshll.u32 %v7498, 16
      %v7511 = vrot.slane %v7509, 7
      %v7512 = vsel %vm6586, %v7507, %v7511
      %v7513 = vld [vmem:[%s5 + $0x200] sm:$0xf]
      %v7514 = vld [vmem:[%s5 + $0x204] sm:$0xf]
      %v7515 = vld [vmem:[%s5 + $0x208] sm:$0xf]
      %v7516 = vld [vmem:[%s5 + $0x20c] sm:$0xf]
      %v7517 = vld [vmem:[%s5 + $0x210] sm:$0xf]
      %v7518 = vld [vmem:[%s5 + $0x214] sm:$0xf]
      %v7519 = vld [vmem:[%s5 + $0x218] sm:$0xf]
      %v7520 = vld [vmem:[%s5 + $0x21c] sm:$0xf]
      %v7521 = vld [vmem:[%s5 + $0x220] sm:$0xf]
      %v7522 = vld [vmem:[%s5 + $0x224] sm:$0xf]
      %v7523 = vld [vmem:[%s5 + $0x228] sm:$0xf]
      %v7524 = vld [vmem:[%s5 + $0x22c] sm:$0xf]
      %v7525 = vld [vmem:[%s5 + $0x230] sm:$0xf]
      %v7526 = vld [vmem:[%s5 + $0x234] sm:$0xf]
      %v7527 = vld [vmem:[%s5 + $0x238] sm:$0xf]
      %v7528 = vld [vmem:[%s5 + $0x23c] sm:$0xf]
      %v7529 = vcombine.low %v6614, %v6628
      %v7530 = vcombine.low %v6642, %v7512
      %v7532 = vunpack.c.l.s4 1983009808
      %v7533 = vunpack.c.0.s8 %v7532
      %v7534 = vlaneseq
      %v7535 = vshrl.u32 %v7534, 7
      %v7536 = vsub.s32 %v7533, %v7535
      %v7537 = vrot.slane %v7529, %v7536
      %v7539 = vunpack.c.l.s4 1983009808
      %v7540 = vunpack.c.0.s8 %v7539
      %v7541 = vlaneseq
      %v7542 = vshrl.u32 %v7541, 7
      %v7543 = vsub.s32 %v7540, %v7542
      %v7544 = vrot.slane %v7530, %v7543
      %v7545 = vcombine.low %v7537, %v7544
      %v7563 = vunpack.c.l.b16 %v7513
      %v7564 = vunpack.c.l.b16 %v7514
      %v7565 = vunpack.c.l.b16 %v7515
      %v7566 = vunpack.c.l.b16 %v7516
      %v7567 = vunpack.c.l.b16 %v7517
      %v7568 = vunpack.c.l.b16 %v7518
      %v7569 = vunpack.c.l.b16 %v7519
      %v7570 = vunpack.c.l.b16 %v7520
      %v7571 = vunpack.c.l.b16 %v7521
      %v7572 = vunpack.c.l.b16 %v7522
      %v7573 = vunpack.c.l.b16 %v7523
      %v7574 = vunpack.c.l.b16 %v7524
      %v7575 = vunpack.c.l.b16 %v7525
      %v7576 = vunpack.c.l.b16 %v7526
      %v7577 = vunpack.c.l.b16 %v7527
      %v7578 = vunpack.c.l.b16 %v7528
      %v7579 = vpack.c.b16 %v7564, %v7563
      %v7580 = vpack.c.b16 %v7566, %v7565
      %v7581 = vpack.c.b16 %v7568, %v7567
      %v7582 = vpack.c.b16 %v7570, %v7569
      %v7583 = vpack.c.b16 %v7572, %v7571
      %v7584 = vpack.c.b16 %v7574, %v7573
      %v7585 = vpack.c.b16 %v7576, %v7575
      %v7586 = vpack.c.b16 %v7578, %v7577
      %7595 = vmatprep.subr.bf16.mxu0 0
      %7596 = vmatpush1.bf16.msra.mxu0 %v7579
      %7597 = vmatprep.subr.bf16.mxu0 0
      %7598 = vmatpush1.bf16.msra.mxu0 %v7580
      %7599 = vmatprep.subr.bf16.mxu0 0
      %7600 = vmatpush1.bf16.msra.mxu0 %v7581
      %7601 = vmatprep.subr.bf16.mxu0 0
      %7602 = vmatpush1.bf16.msra.mxu0 %v7582
      %7603 = vmatprep.subr.bf16.mxu0 0
      %7604 = vmatpush1.bf16.msra.mxu0 %v7583
      %7605 = vmatprep.subr.bf16.mxu0 0
      %7606 = vmatpush1.bf16.msra.mxu0 %v7584
      %7607 = vmatprep.subr.bf16.mxu0 0
      %7608 = vmatpush1.bf16.msra.mxu0 %v7585
      %7609 = vmatprep.subr.bf16.mxu0 0
      %7610 = vmatpush1.bf16.msra.mxu0 %v7586
      %7611 = vmatprep.subr.bf16.mxu0 0
      %7612 = vmatpush1.bf16.msra.mxu0 0
      %7613 = vmatprep.subr.bf16.mxu0 0
      %7614 = vmatpush1.bf16.msra.mxu0 0
      %7615 = vmatprep.subr.bf16.mxu0 0
      %7616 = vmatpush1.bf16.msra.mxu0 0
      %7617 = vmatprep.subr.bf16.mxu0 0
      %7618 = vmatpush1.bf16.msra.mxu0 0
      %7619 = vmatprep.subr.bf16.mxu0 0
      %7620 = vmatpush1.bf16.msra.mxu0 0
      %7621 = vmatprep.subr.bf16.mxu0 0
      %7622 = vmatpush1.bf16.msra.mxu0 0
      %7623 = vmatprep.subr.bf16.mxu0 0
      %7624 = vmatpush1.bf16.msra.mxu0 0
      %7625 = vmatprep.subr.bf16.mxu0 0
      %7626 = vmatpush1.bf16.msra.mxu0 0
      %7627 = vmatprep.mubr.bf16.mxu0 0
      %7628 = vmatmul.mubr.bf16.gmra.mrb[0].mxu0 %v7545
      %v7629 = vpop.f32.mrb[0].mxu0
      %v7630 = vadd.f32 0.0, %v7629
      %v7631 = vpop.f32.mrb[0].mxu0
      %v7632 = vpop.f32.mrb[0].mxu0
      %v7633 = vadd.f32 0.0, %v7632
      %v7634 = vpop.f32.mrb[0].mxu0
      %7635 = vdwg.mxu0
      %v7636 = vadd.f32 %v7489, %v7630
      %v7637 = vadd.f32 %v7490, %v7633
      %v7638 = vld [vmem:[%s6] sm:$0x1]
      %v7640 = vlaneseq
      %v7641 = vshrl.u32 %v7640, 7
      %v7642 = vsub.s32 0, %v7641
      %v7643 = vrot.slane %v7638, %v7642
      %v7645 = vadd.f32 %v7636, %v7643
      %v7646 = vadd.f32 %v7637, %v7643
      %v7647 = vmax.f32 %v7645, 0.0
      %v7648 = vmax.f32 %v7646, 0.0
      %v7649 = vpack.c.bf16 %v7648, %v7647
      %v7651 = vcombine.high %v7649, %v7649
      %v7653 = vunpack.c.l.s4 1983009808
      %v7654 = vunpack.c.0.s8 %v7653
      %v7655 = vlaneseq
      %v7656 = vshrl.u32 %v7655, 7
      %v7657 = vsub.s32 %v7654, %v7656
      %v7658 = vrot.slane %v7649, %v7657
      %v7660 = vunpack.c.l.s4 1983009808
      %v7661 = vunpack.c.0.s8 %v7660
      %v7662 = vlaneseq
      %v7663 = vshrl.u32 %v7662, 7
      %v7664 = vsub.s32 %v7661, %v7663
      %v7665 = vrot.slane %v7651, %v7664
      %v7666 = vcombine.high %v7658, %v7658
      %v7667 = vcombine.high %v7665, %v7665
      %v7669 = vunpack.c.l.s4 1983009808
      %v7670 = vunpack.c.0.s8 %v7669
      %v7671 = vlaneseq
      %v7672 = vshrl.u32 %v7671, 7
      %v7673 = vsub.s32 %v7670, %v7672
      %v7674 = vrot.slane %v7658, %v7673
      %v7676 = vunpack.c.l.s4 1983009808
      %v7677 = vunpack.c.0.s8 %v7676
      %v7678 = vlaneseq
      %v7679 = vshrl.u32 %v7678, 7
      %v7680 = vsub.s32 %v7677, %v7679
      %v7681 = vrot.slane %v7666, %v7680
      %v7683 = vunpack.c.l.s4 1983009808
      %v7684 = vunpack.c.0.s8 %v7683
      %v7685 = vlaneseq
      %v7686 = vshrl.u32 %v7685, 7
      %v7687 = vsub.s32 %v7684, %v7686
      %v7688 = vrot.slane %v7665, %v7687
      %v7690 = vunpack.c.l.s4 1983009808
      %v7691 = vunpack.c.0.s8 %v7690
      %v7692 = vlaneseq
      %v7693 = vshrl.u32 %v7692, 7
      %v7694 = vsub.s32 %v7691, %v7693
      %v7695 = vrot.slane %v7667, %v7694
      %v7697 = vshrl.u32 %v7674, 16
      %v7699 = vrot.slane %v7697, 7
      %v7700 = vshll.u32 %v7674, 16
      %v7702 = vor.u32 %v7699, %v7700
      %v7704 = vshrl.u32 %v7681, 16
      %v7706 = vrot.slane %v7704, 7
      %v7707 = vshll.u32 %v7681, 16
      %v7709 = vor.u32 %v7706, %v7707
      %v7711 = vshrl.u32 %v7688, 16
      %v7713 = vrot.slane %v7711, 7
      %v7714 = vshll.u32 %v7688, 16
      %v7716 = vor.u32 %v7713, %v7714
      %v7718 = vshrl.u32 %v7695, 16
      %v7720 = vrot.slane %v7718, 7
      %v7721 = vshll.u32 %v7695, 16
      %v7723 = vor.u32 %v7720, %v7721
      %v7728 = vsel %vm2661, 0, %v7702
      %v7729 = vsel %vm2661, 0, %v7709
      %v7730 = vsel %vm2661, 0, %v7716
      %v7731 = vsel %vm2661, 0, %v7723
      %vm7732 = vcmask 1042432
      %vm7733 = vsmask.f32 2304
      %vm7734 = vmand %vm7732, %vm7733
      %v7735 = vsel %vm7734, %v7728, 0
      %v7736 = vsel %vm7734, %v7729, 0
      %v7737 = vsel %vm7734, %v7730, 0
      %v7738 = vsel %vm7734, %v7731, 0
      %v7739 = vld [vmem:[%s7] sm:$0xf]
      %v7740 = vld [vmem:[%s7 + $0x4] sm:$0xf]
      %v7741 = vld [vmem:[%s7 + $0x8] sm:$0xf]
      %v7742 = vld [vmem:[%s7 + $0xc] sm:$0xf]
      %v7743 = vld [vmem:[%s7 + $0x10] sm:$0xf]
      %v7744 = vld [vmem:[%s7 + $0x14] sm:$0xf]
      %v7745 = vld [vmem:[%s7 + $0x18] sm:$0xf]
      %v7746 = vld [vmem:[%s7 + $0x1c] sm:$0xf]
      %v7751 = vunpack.c.l.s4 1983009808
      %v7752 = vunpack.c.0.s8 %v7751
      %v7753 = vlaneseq
      %v7754 = vshrl.u32 %v7753, 7
      %v7755 = vsub.s32 %v7752, %v7754
      %v7756 = vrot.slane 0, %v7755
      %v7757 = vcombine.high %v7756, %v7756
      %v7759 = vunpack.c.l.s4 1983009808
      %v7760 = vunpack.c.0.s8 %v7759
      %v7761 = vlaneseq
      %v7762 = vshrl.u32 %v7761, 7
      %v7763 = vsub.s32 %v7760, %v7762
      %v7764 = vrot.slane %v7735, %v7763
      %v7765 = vcombine.high %v7764, %v7764
      %v7767 = vunpack.c.l.s4 1983009808
      %v7768 = vunpack.c.0.s8 %v7767
      %v7769 = vlaneseq
      %v7770 = vshrl.u32 %v7769, 7
      %v7771 = vsub.s32 %v7768, %v7770
      %v7772 = vrot.slane %v7736, %v7771
      %v7773 = vcombine.high %v7772, %v7772
      %v7775 = vunpack.c.l.s4 1983009808
      %v7776 = vunpack.c.0.s8 %v7775
      %v7777 = vlaneseq
      %v7778 = vshrl.u32 %v7777, 7
      %v7779 = vsub.s32 %v7776, %v7778
      %v7780 = vrot.slane %v7737, %v7779
      %v7781 = vcombine.high %v7780, %v7780
      %v7783 = vshrl.u32 %v7756, 16
      %v7785 = vrot.slane %v7783, 6
      %v7786 = vshll.u32 %v7756, 16
      %v7788 = vrot.slane %v7786, 7
      %v7789 = vor.u32 %v7785, %v7788
      %v7790 = vrot.slane %v7789, 2
      %v7792 = vshll.u32 %v7757, 16
      %v7794 = vrot.slane %v7792, 7
      %v7795 = vsel %vm6586, %v7790, %v7794
      %v7797 = vshrl.u32 %v7764, 16
      %v7799 = vrot.slane %v7797, 6
      %v7800 = vshll.u32 %v7764, 16
      %v7802 = vrot.slane %v7800, 7
      %v7803 = vor.u32 %v7799, %v7802
      %v7804 = vrot.slane %v7803, 2
      %v7806 = vshll.u32 %v7765, 16
      %v7808 = vrot.slane %v7806, 7
      %v7809 = vsel %vm6586, %v7804, %v7808
      %v7811 = vshrl.u32 %v7772, 16
      %v7813 = vrot.slane %v7811, 6
      %v7814 = vshll.u32 %v7772, 16
      %v7816 = vrot.slane %v7814, 7
      %v7817 = vor.u32 %v7813, %v7816
      %v7818 = vrot.slane %v7817, 2
      %v7820 = vshll.u32 %v7773, 16
      %v7822 = vrot.slane %v7820, 7
      %v7823 = vsel %vm6586, %v7818, %v7822
      %v7825 = vshrl.u32 %v7780, 16
      %v7827 = vrot.slane %v7825, 6
      %v7828 = vshll.u32 %v7780, 16
      %v7830 = vrot.slane %v7828, 7
      %v7831 = vor.u32 %v7827, %v7830
      %v7832 = vrot.slane %v7831, 2
      %v7834 = vshll.u32 %v7781, 16
      %v7836 = vrot.slane %v7834, 7
      %v7837 = vsel %vm6586, %v7832, %v7836
      %v7838 = vld [vmem:[%s7 + $0x20] sm:$0xf]
      %v7839 = vld [vmem:[%s7 + $0x24] sm:$0xf]
      %v7840 = vld [vmem:[%s7 + $0x28] sm:$0xf]
      %v7841 = vld [vmem:[%s7 + $0x2c] sm:$0xf]
      %v7842 = vld [vmem:[%s7 + $0x30] sm:$0xf]
      %v7843 = vld [vmem:[%s7 + $0x34] sm:$0xf]
      %v7844 = vld [vmem:[%s7 + $0x38] sm:$0xf]
      %v7845 = vld [vmem:[%s7 + $0x3c] sm:$0xf]
      %v7846 = vcombine.low %v7795, %v7809
      %v7847 = vcombine.low %v7823, %v7837
      %v7849 = vunpack.c.l.s4 1983009808
      %v7850 = vunpack.c.0.s8 %v7849
      %v7851 = vlaneseq
      %v7852 = vshrl.u32 %v7851, 7
      %v7853 = vsub.s32 %v7850, %v7852
      %v7854 = vrot.slane %v7846, %v7853
      %v7856 = vunpack.c.l.s4 1983009808
      %v7857 = vunpack.c.0.s8 %v7856
      %v7858 = vlaneseq
      %v7859 = vshrl.u32 %v7858, 7
      %v7860 = vsub.s32 %v7857, %v7859
      %v7861 = vrot.slane %v7847, %v7860
      %v7862 = vcombine.low %v7854, %v7861
      %v7871 = vunpack.c.l.b16 %v7838
      %v7872 = vunpack.c.l.b16 %v7839
      %v7873 = vunpack.c.l.b16 %v7840
      %v7874 = vunpack.c.l.b16 %v7841
      %v7875 = vunpack.c.l.b16 %v7842
      %v7876 = vunpack.c.l.b16 %v7843
      %v7877 = vunpack.c.l.b16 %v7844
      %v7878 = vunpack.c.l.b16 %v7845
      %v7879 = vpack.c.b16 %v7872, %v7871
      %v7880 = vpack.c.b16 %v7874, %v7873
      %v7881 = vpack.c.b16 %v7876, %v7875
      %v7882 = vpack.c.b16 %v7878, %v7877
      %v7888 = vsel %vm4037, %v7862, 0
      %7890 = vmatprep.subr.bf16.mxu0 0
      %7891 = vmatpush1.bf16.msra.mxu0 %v7879
      %7892 = vmatprep.subr.bf16.mxu0 0
      %7893 = vmatpush1.bf16.msra.mxu0 %v7880
      %7894 = vmatprep.subr.bf16.mxu0 0
      %7895 = vmatpush1.bf16.msra.mxu0 %v7881
      %7896 = vmatprep.subr.bf16.mxu0 0
      %7897 = vmatpush1.bf16.msra.mxu0 %v7882
      %7898 = vmatprep.subr.bf16.mxu0 0
      %7899 = vmatpush1.bf16.msra.mxu0 0
      %7900 = vmatprep.subr.bf16.mxu0 0
      %7901 = vmatpush1.bf16.msra.mxu0 0
      %7902 = vmatprep.subr.bf16.mxu0 0
      %7903 = vmatpush1.bf16.msra.mxu0 0
      %7904 = vmatprep.subr.bf16.mxu0 0
      %7905 = vmatpush1.bf16.msra.mxu0 0
      %7906 = vmatprep.subr.bf16.mxu0 0
      %7907 = vmatpush1.bf16.msra.mxu0 0
      %7908 = vmatprep.subr.bf16.mxu0 0
      %7909 = vmatpush1.bf16.msra.mxu0 0
      %7910 = vmatprep.subr.bf16.mxu0 0
      %7911 = vmatpush1.bf16.msra.mxu0 0
      %7912 = vmatprep.subr.bf16.mxu0 0
      %7913 = vmatpush1.bf16.msra.mxu0 0
      %7914 = vmatprep.subr.bf16.mxu0 0
      %7915 = vmatpush1.bf16.msra.mxu0 0
      %7916 = vmatprep.subr.bf16.mxu0 0
      %7917 = vmatpush1.bf16.msra.mxu0 0
      %7918 = vmatprep.subr.bf16.mxu0 0
      %7919 = vmatpush1.bf16.msra.mxu0 0
      %7920 = vmatprep.subr.bf16.mxu0 0
      %7921 = vmatpush1.bf16.msra.mxu0 0
      %7922 = vmatprep.mubr.bf16.mxu0 0
      %7923 = vmatmul.mubr.bf16.gmra.mrb[0].mxu0 %v7888
      %v7924 = vpop.f32.mrb[0].mxu0
      %v7925 = vadd.f32 0.0, %v7924
      %v7926 = vpop.f32.mrb[0].mxu0
      %v7927 = vpop.f32.mrb[0].mxu0
      %v7928 = vadd.f32 0.0, %v7927
      %v7929 = vpop.f32.mrb[0].mxu0
      %7930 = vdwg.mxu0
      %v7931 = vcombine.low 0, %v7735
      %v7932 = vcombine.low %v7736, %v7737
      %v7934 = vunpack.c.l.s4 1983009808
      %v7935 = vunpack.c.0.s8 %v7934
      %v7936 = vlaneseq
      %v7937 = vshrl.u32 %v7936, 7
      %v7938 = vsub.s32 %v7935, %v7937
      %v7939 = vrot.slane %v7931, %v7938
      %v7941 = vunpack.c.l.s4 1983009808
      %v7942 = vunpack.c.0.s8 %v7941
      %v7943 = vlaneseq
      %v7944 = vshrl.u32 %v7943, 7
      %v7945 = vsub.s32 %v7942, %v7944
      %v7946 = vrot.slane %v7932, %v7945
      %v7947 = vcombine.low %v7939, %v7946
      %v7956 = vunpack.c.l.b16 %v7739
      %v7957 = vunpack.c.l.b16 %v7740
      %v7958 = vunpack.c.l.b16 %v7741
      %v7959 = vunpack.c.l.b16 %v7742
      %v7960 = vunpack.c.l.b16 %v7743
      %v7961 = vunpack.c.l.b16 %v7744
      %v7962 = vunpack.c.l.b16 %v7745
      %v7963 = vunpack.c.l.b16 %v7746
      %v7964 = vpack.c.b16 %v7957, %v7956
      %v7965 = vpack.c.b16 %v7959, %v7958
      %v7966 = vpack.c.b16 %v7961, %v7960
      %v7967 = vpack.c.b16 %v7963, %v7962
      %v7973 = vsel %vm4037, %v7947, 0
      %7975 = vmatprep.subr.bf16.mxu0 0
      %7976 = vmatpush1.bf16.msra.mxu0 %v7964
      %7977 = vmatprep.subr.bf16.mxu0 0
      %7978 = vmatpush1.bf16.msra.mxu0 %v7965
      %7979 = vmatprep.subr.bf16.mxu0 0
      %7980 = vmatpush1.bf16.msra.mxu0 %v7966
      %7981 = vmatprep.subr.bf16.mxu0 0
      %7982 = vmatpush1.bf16.msra.mxu0 %v7967
      %7983 = vmatprep.subr.bf16.mxu0 0
      %7984 = vmatpush1.bf16.msra.mxu0 0
      %7985 = vmatprep.subr.bf16.mxu0 0
      %7986 = vmatpush1.bf16.msra.mxu0 0
      %7987 = vmatprep.subr.bf16.mxu0 0
      %7988 = vmatpush1.bf16.msra.mxu0 0
      %7989 = vmatprep.subr.bf16.mxu0 0
      %7990 = vmatpush1.bf16.msra.mxu0 0
      %7991 = vmatprep.subr.bf16.mxu0 0
      %7992 = vmatpush1.bf16.msra.mxu0 0
      %7993 = vmatprep.subr.bf16.mxu0 0
      %7994 = vmatpush1.bf16.msra.mxu0 0
      %7995 = vmatprep.subr.bf16.mxu0 0
      %7996 = vmatpush1.bf16.msra.mxu0 0
      %7997 = vmatprep.subr.bf16.mxu0 0
      %7998 = vmatpush1.bf16.msra.mxu0 0
      %7999 = vmatprep.subr.bf16.mxu0 0
      %8000 = vmatpush1.bf16.msra.mxu0 0
      %8001 = vmatprep.subr.bf16.mxu0 0
      %8002 = vmatpush1.bf16.msra.mxu0 0
      %8003 = vmatprep.subr.bf16.mxu0 0
      %8004 = vmatpush1.bf16.msra.mxu0 0
      %8005 = vmatprep.subr.bf16.mxu0 0
      %8006 = vmatpush1.bf16.msra.mxu0 0
      %8007 = vmatprep.mubr.bf16.mxu0 0
      %8008 = vmatmul.mubr.bf16.gmra.mrb[0].mxu0 %v7973
      %v8009 = vpop.f32.mrb[0].mxu0
      %v8010 = vadd.f32 %v7925, %v8009
      %v8011 = vpop.f32.mrb[0].mxu0
      %v8012 = vpop.f32.mrb[0].mxu0
      %v8013 = vadd.f32 %v7928, %v8012
      %v8014 = vpop.f32.mrb[0].mxu0
      %8015 = vdwg.mxu0
      %vm8016 = vcmask 1042434
      %vm8017 = vmor %vm2659, %vm8016
      %vm8018 = vcmask 1044484
      %vm8019 = vmor %vm8017, %vm8018
      %vm8020 = vcmask 1046534
      %vm8021 = vmor %vm8019, %vm8020
      %v8022 = vrot.slane %v7756, 7
      %v8023 = vrot.slane %v8022, 2
      %v8024 = vrot.slane %v7757, 7
      %v8025 = vsel %vm8021, %v8023, %v8024
      %v8026 = vrot.slane %v7764, 7
      %v8027 = vrot.slane %v8026, 2
      %v8028 = vrot.slane %v7765, 7
      %v8029 = vsel %vm8021, %v8027, %v8028
      %v8030 = vrot.slane %v7772, 7
      %v8031 = vrot.slane %v8030, 2
      %v8032 = vrot.slane %v7773, 7
      %v8033 = vsel %vm8021, %v8031, %v8032
      %v8034 = vrot.slane %v7780, 7
      %v8035 = vrot.slane %v8034, 2
      %v8036 = vrot.slane %v7781, 7
      %v8037 = vsel %vm8021, %v8035, %v8036
      %v8038 = vld [vmem:[%s7 + $0x40] sm:$0xf]
      %v8039 = vld [vmem:[%s7 + $0x44] sm:$0xf]
      %v8040 = vld [vmem:[%s7 + $0x48] sm:$0xf]
      %v8041 = vld [vmem:[%s7 + $0x4c] sm:$0xf]
      %v8042 = vld [vmem:[%s7 + $0x50] sm:$0xf]
      %v8043 = vld [vmem:[%s7 + $0x54] sm:$0xf]
      %v8044 = vld [vmem:[%s7 + $0x58] sm:$0xf]
      %v8045 = vld [vmem:[%s7 + $0x5c] sm:$0xf]
      %v8046 = vcombine.low %v8025, %v8029
      %v8047 = vcombine.low %v8033, %v8037
      %v8049 = vunpack.c.l.s4 1983009808
      %v8050 = vunpack.c.0.s8 %v8049
      %v8051 = vlaneseq
      %v8052 = vshrl.u32 %v8051, 7
      %v8053 = vsub.s32 %v8050, %v8052
      %v8054 = vrot.slane %v8046, %v8053
      %v8056 = vunpack.c.l.s4 1983009808
      %v8057 = vunpack.c.0.s8 %v8056
      %v8058 = vlaneseq
      %v8059 = vshrl.u32 %v8058, 7
      %v8060 = vsub.s32 %v8057, %v8059
      %v8061 = vrot.slane %v8047, %v8060
      %v8062 = vcombine.low %v8054, %v8061
      %v8071 = vunpack.c.l.b16 %v8038
      %v8072 = vunpack.c.l.b16 %v8039
      %v8073 = vunpack.c.l.b16 %v8040
      %v8074 = vunpack.c.l.b16 %v8041
      %v8075 = vunpack.c.l.b16 %v8042
      %v8076 = vunpack.c.l.b16 %v8043
      %v8077 = vunpack.c.l.b16 %v8044
      %v8078 = vunpack.c.l.b16 %v8045
      %v8079 = vpack.c.b16 %v8072, %v8071
      %v8080 = vpack.c.b16 %v8074, %v8073
      %v8081 = vpack.c.b16 %v8076, %v8075
      %v8082 = vpack.c.b16 %v8078, %v8077
      %v8088 = vsel %vm4037, %v8062, 0
      %8090 = vmatprep.subr.bf16.mxu0 0
      %8091 = vmatpush1.bf16.msra.mxu0 %v8079
      %8092 = vmatprep.subr.bf16.mxu0 0
      %8093 = vmatpush1.bf16.msra.mxu0 %v8080
      %8094 = vmatprep.subr.bf16.mxu0 0
      %8095 = vmatpush1.bf16.msra.mxu0 %v8081
      %8096 = vmatprep.subr.bf16.mxu0 0
      %8097 = vmatpush1.bf16.msra.mxu0 %v8082
      %8098 = vmatprep.subr.bf16.mxu0 0
      %8099 = vmatpush1.bf16.msra.mxu0 0
      %8100 = vmatprep.subr.bf16.mxu0 0
      %8101 = vmatpush1.bf16.msra.mxu0 0
      %8102 = vmatprep.subr.bf16.mxu0 0
      %8103 = vmatpush1.bf16.msra.mxu0 0
      %8104 = vmatprep.subr.bf16.mxu0 0
      %8105 = vmatpush1.bf16.msra.mxu0 0
      %8106 = vmatprep.subr.bf16.mxu0 0
      %8107 = vmatpush1.bf16.msra.mxu0 0
      %8108 = vmatprep.subr.bf16.mxu0 0
      %8109 = vmatpush1.bf16.msra.mxu0 0
      %8110 = vmatprep.subr.bf16.mxu0 0
      %8111 = vmatpush1.bf16.msra.mxu0 0
      %8112 = vmatprep.subr.bf16.mxu0 0
      %8113 = vmatpush1.bf16.msra.mxu0 0
      %8114 = vmatprep.subr.bf16.mxu0 0
      %8115 = vmatpush1.bf16.msra.mxu0 0
      %8116 = vmatprep.subr.bf16.mxu0 0
      %8117 = vmatpush1.bf16.msra.mxu0 0
      %8118 = vmatprep.subr.bf16.mxu0 0
      %8119 = vmatpush1.bf16.msra.mxu0 0
      %8120 = vmatprep.subr.bf16.mxu0 0
      %8121 = vmatpush1.bf16.msra.mxu0 0
      %8122 = vmatprep.mubr.bf16.mxu0 0
      %8123 = vmatmul.mubr.bf16.gmra.mrb[0].mxu0 %v8088
      %v8124 = vpop.f32.mrb[0].mxu0
      %v8125 = vadd.f32 0.0, %v8124
      %v8126 = vpop.f32.mrb[0].mxu0
      %v8127 = vpop.f32.mrb[0].mxu0
      %v8128 = vadd.f32 0.0, %v8127
      %v8129 = vpop.f32.mrb[0].mxu0
      %8130 = vdwg.mxu0
      %v8131 = vadd.f32 %v8010, %v8125
      %v8132 = vadd.f32 %v8013, %v8128
      %v8133 = vld [vmem:[%s7 + $0x60] sm:$0xf]
      %v8134 = vld [vmem:[%s7 + $0x64] sm:$0xf]
      %v8135 = vld [vmem:[%s7 + $0x68] sm:$0xf]
      %v8136 = vld [vmem:[%s7 + $0x6c] sm:$0xf]
      %v8137 = vld [vmem:[%s7 + $0x70] sm:$0xf]
      %v8138 = vld [vmem:[%s7 + $0x74] sm:$0xf]
      %v8139 = vld [vmem:[%s7 + $0x78] sm:$0xf]
      %v8140 = vld [vmem:[%s7 + $0x7c] sm:$0xf]
      %v8142 = vcombine.low %v7735, %v7736
      %v8143 = vcombine.low %v7737, %v7738
      %v8145 = vunpack.c.l.s4 1983009808
      %v8146 = vunpack.c.0.s8 %v8145
      %v8147 = vlaneseq
      %v8148 = vshrl.u32 %v8147, 7
      %v8149 = vsub.s32 %v8146, %v8148
      %v8150 = vrot.slane %v8142, %v8149
      %v8152 = vunpack.c.l.s4 1983009808
      %v8153 = vunpack.c.0.s8 %v8152
      %v8154 = vlaneseq
      %v8155 = vshrl.u32 %v8154, 7
      %v8156 = vsub.s32 %v8153, %v8155
      %v8157 = vrot.slane %v8143, %v8156
      %v8158 = vcombine.low %v8150, %v8157
      %v8167 = vunpack.c.l.b16 %v8133
      %v8168 = vunpack.c.l.b16 %v8134
      %v8169 = vunpack.c.l.b16 %v8135
      %v8170 = vunpack.c.l.b16 %v8136
      %v8171 = vunpack.c.l.b16 %v8137
      %v8172 = vunpack.c.l.b16 %v8138
      %v8173 = vunpack.c.l.b16 %v8139
      %v8174 = vunpack.c.l.b16 %v8140
      %v8175 = vpack.c.b16 %v8168, %v8167
      %v8176 = vpack.c.b16 %v8170, %v8169
      %v8177 = vpack.c.b16 %v8172, %v8171
      %v8178 = vpack.c.b16 %v8174, %v8173
      %v8184 = vsel %vm4037, %v8158, 0
      %8186 = vmatprep.subr.bf16.mxu0 0
      %8187 = vmatpush1.bf16.msra.mxu0 %v8175
      %8188 = vmatprep.subr.bf16.mxu0 0
      %8189 = vmatpush1.bf16.msra.mxu0 %v8176
      %8190 = vmatprep.subr.bf16.mxu0 0
      %8191 = vmatpush1.bf16.msra.mxu0 %v8177
      %8192 = vmatprep.subr.bf16.mxu0 0
      %8193 = vmatpush1.bf16.msra.mxu0 %v8178
      %8194 = vmatprep.subr.bf16.mxu0 0
      %8195 = vmatpush1.bf16.msra.mxu0 0
      %8196 = vmatprep.subr.bf16.mxu0 0
      %8197 = vmatpush1.bf16.msra.mxu0 0
      %8198 = vmatprep.subr.bf16.mxu0 0
      %8199 = vmatpush1.bf16.msra.mxu0 0
      %8200 = vmatprep.subr.bf16.mxu0 0
      %8201 = vmatpush1.bf16.msra.mxu0 0
      %8202 = vmatprep.subr.bf16.mxu0 0
      %8203 = vmatpush1.bf16.msra.mxu0 0
      %8204 = vmatprep.subr.bf16.mxu0 0
      %8205 = vmatpush1.bf16.msra.mxu0 0
      %8206 = vmatprep.subr.bf16.mxu0 0
      %8207 = vmatpush1.bf16.msra.mxu0 0
      %8208 = vmatprep.subr.bf16.mxu0 0
      %8209 = vmatpush1.bf16.msra.mxu0 0
      %8210 = vmatprep.subr.bf16.mxu0 0
      %8211 = vmatpush1.bf16.msra.mxu0 0
      %8212 = vmatprep.subr.bf16.mxu0 0
      %8213 = vmatpush1.bf16.msra.mxu0 0
      %8214 = vmatprep.subr.bf16.mxu0 0
      %8215 = vmatpush1.bf16.msra.mxu0 0
      %8216 = vmatprep.subr.bf16.mxu0 0
      %8217 = vmatpush1.bf16.msra.mxu0 0
      %8218 = vmatprep.mubr.bf16.mxu0 0
      %8219 = vmatmul.mubr.bf16.gmra.mrb[0].mxu0 %v8184
      %v8220 = vpop.f32.mrb[0].mxu0
      %v8221 = vadd.f32 0.0, %v8220
      %v8222 = vpop.f32.mrb[0].mxu0
      %v8223 = vpop.f32.mrb[0].mxu0
      %v8224 = vadd.f32 0.0, %v8223
      %v8225 = vpop.f32.mrb[0].mxu0
      %8226 = vdwg.mxu0
      %v8227 = vadd.f32 %v8131, %v8221
      %v8228 = vadd.f32 %v8132, %v8224
      %v8230 = vunpack.c.l.s4 1983009808
      %v8231 = vunpack.c.0.s8 %v8230
      %v8232 = vlaneseq
      %v8233 = vshrl.u32 %v8232, 7
      %v8234 = vsub.s32 %v8231, %v8233
      %v8235 = vrot.slane %v7738, %v8234
      %v8236 = vcombine.high %v8235, %v8235
      %v8238 = vshrl.u32 %v8235, 16
      %v8240 = vrot.slane %v8238, 6
      %v8241 = vshll.u32 %v8235, 16
      %v8243 = vrot.slane %v8241, 7
      %v8244 = vor.u32 %v8240, %v8243
      %v8245 = vrot.slane %v8244, 2
      %v8247 = vshll.u32 %v8236, 16
      %v8249 = vrot.slane %v8247, 7
      %v8250 = vsel %vm6586, %v8245, %v8249
      %v8251 = vld [vmem:[%s7 + $0x80] sm:$0xf]
      %v8252 = vld [vmem:[%s7 + $0x84] sm:$0xf]
      %v8253 = vld [vmem:[%s7 + $0x88] sm:$0xf]
      %v8254 = vld [vmem:[%s7 + $0x8c] sm:$0xf]
      %v8255 = vld [vmem:[%s7 + $0x90] sm:$0xf]
      %v8256 = vld [vmem:[%s7 + $0x94] sm:$0xf]
      %v8257 = vld [vmem:[%s7 + $0x98] sm:$0xf]
      %v8258 = vld [vmem:[%s7 + $0x9c] sm:$0xf]
      %v8259 = vcombine.low %v7809, %v7823
      %v8260 = vcombine.low %v7837, %v8250
      %v8262 = vunpack.c.l.s4 1983009808
      %v8263 = vunpack.c.0.s8 %v8262
      %v8264 = vlaneseq
      %v8265 = vshrl.u32 %v8264, 7
      %v8266 = vsub.s32 %v8263, %v8265
      %v8267 = vrot.slane %v8259, %v8266
      %v8269 = vunpack.c.l.s4 1983009808
      %v8270 = vunpack.c.0.s8 %v8269
      %v8271 = vlaneseq
      %v8272 = vshrl.u32 %v8271, 7
      %v8273 = vsub.s32 %v8270, %v8272
      %v8274 = vrot.slane %v8260, %v8273
      %v8275 = vcombine.low %v8267, %v8274
      %v8284 = vunpack.c.l.b16 %v8251
      %v8285 = vunpack.c.l.b16 %v8252
      %v8286 = vunpack.c.l.b16 %v8253
      %v8287 = vunpack.c.l.b16 %v8254
      %v8288 = vunpack.c.l.b16 %v8255
      %v8289 = vunpack.c.l.b16 %v8256
      %v8290 = vunpack.c.l.b16 %v8257
      %v8291 = vunpack.c.l.b16 %v8258
      %v8292 = vpack.c.b16 %v8285, %v8284
      %v8293 = vpack.c.b16 %v8287, %v8286
      %v8294 = vpack.c.b16 %v8289, %v8288
      %v8295 = vpack.c.b16 %v8291, %v8290
      %v8301 = vsel %vm4037, %v8275, 0
      %8303 = vmatprep.subr.bf16.mxu0 0
      %8304 = vmatpush1.bf16.msra.mxu0 %v8292
      %8305 = vmatprep.subr.bf16.mxu0 0
      %8306 = vmatpush1.bf16.msra.mxu0 %v8293
      %8307 = vmatprep.subr.bf16.mxu0 0
      %8308 = vmatpush1.bf16.msra.mxu0 %v8294
      %8309 = vmatprep.subr.bf16.mxu0 0
      %8310 = vmatpush1.bf16.msra.mxu0 %v8295
      %8311 = vmatprep.subr.bf16.mxu0 0
      %8312 = vmatpush1.bf16.msra.mxu0 0
      %8313 = vmatprep.subr.bf16.mxu0 0
      %8314 = vmatpush1.bf16.msra.mxu0 0
      %8315 = vmatprep.subr.bf16.mxu0 0
      %8316 = vmatpush1.bf16.msra.mxu0 0
      %8317 = vmatprep.subr.bf16.mxu0 0
      %8318 = vmatpush1.bf16.msra.mxu0 0
      %8319 = vmatprep.subr.bf16.mxu0 0
      %8320 = vmatpush1.bf16.msra.mxu0 0
      %8321 = vmatprep.subr.bf16.mxu0 0
      %8322 = vmatpush1.bf16.msra.mxu0 0
      %8323 = vmatprep.subr.bf16.mxu0 0
      %8324 = vmatpush1.bf16.msra.mxu0 0
      %8325 = vmatprep.subr.bf16.mxu0 0
      %8326 = vmatpush1.bf16.msra.mxu0 0
      %8327 = vmatprep.subr.bf16.mxu0 0
      %8328 = vmatpush1.bf16.msra.mxu0 0
      %8329 = vmatprep.subr.bf16.mxu0 0
      %8330 = vmatpush1.bf16.msra.mxu0 0
      %8331 = vmatprep.subr.bf16.mxu0 0
      %8332 = vmatpush1.bf16.msra.mxu0 0
      %8333 = vmatprep.subr.bf16.mxu0 0
      %8334 = vmatpush1.bf16.msra.mxu0 0
      %8335 = vmatprep.mubr.bf16.mxu0 0
      %8336 = vmatmul.mubr.bf16.gmra.mrb[0].mxu0 %v8301
      %v8337 = vpop.f32.mrb[0].mxu0
      %v8338 = vadd.f32 0.0, %v8337
      %v8339 = vpop.f32.mrb[0].mxu0
      %v8340 = vpop.f32.mrb[0].mxu0
      %v8341 = vadd.f32 0.0, %v8340
      %v8342 = vpop.f32.mrb[0].mxu0
      %8343 = vdwg.mxu0
      %v8344 = vadd.f32 %v8227, %v8338
      %v8345 = vadd.f32 %v8228, %v8341
      %v8346 = vrot.slane %v8235, 7
      %v8347 = vrot.slane %v8346, 2
      %v8348 = vrot.slane %v8236, 7
      %v8349 = vsel %vm8021, %v8347, %v8348
      %v8350 = vld [vmem:[%s7 + $0xa0] sm:$0xf]
      %v8351 = vld [vmem:[%s7 + $0xa4] sm:$0xf]
      %v8352 = vld [vmem:[%s7 + $0xa8] sm:$0xf]
      %v8353 = vld [vmem:[%s7 + $0xac] sm:$0xf]
      %v8354 = vld [vmem:[%s7 + $0xb0] sm:$0xf]
      %v8355 = vld [vmem:[%s7 + $0xb4] sm:$0xf]
      %v8356 = vld [vmem:[%s7 + $0xb8] sm:$0xf]
      %v8357 = vld [vmem:[%s7 + $0xbc] sm:$0xf]
      %v8358 = vcombine.low %v8029, %v8033
      %v8359 = vcombine.low %v8037, %v8349
      %v8361 = vunpack.c.l.s4 1983009808
      %v8362 = vunpack.c.0.s8 %v8361
      %v8363 = vlaneseq
      %v8364 = vshrl.u32 %v8363, 7
      %v8365 = vsub.s32 %v8362, %v8364
      %v8366 = vrot.slane %v8358, %v8365
      %v8368 = vunpack.c.l.s4 1983009808
      %v8369 = vunpack.c.0.s8 %v8368
      %v8370 = vlaneseq
      %v8371 = vshrl.u32 %v8370, 7
      %v8372 = vsub.s32 %v8369, %v8371
      %v8373 = vrot.slane %v8359, %v8372
      %v8374 = vcombine.low %v8366, %v8373
      %v8383 = vunpack.c.l.b16 %v8350
      %v8384 = vunpack.c.l.b16 %v8351
      %v8385 = vunpack.c.l.b16 %v8352
      %v8386 = vunpack.c.l.b16 %v8353
      %v8387 = vunpack.c.l.b16 %v8354
      %v8388 = vunpack.c.l.b16 %v8355
      %v8389 = vunpack.c.l.b16 %v8356
      %v8390 = vunpack.c.l.b16 %v8357
      %v8391 = vpack.c.b16 %v8384, %v8383
      %v8392 = vpack.c.b16 %v8386, %v8385
      %v8393 = vpack.c.b16 %v8388, %v8387
      %v8394 = vpack.c.b16 %v8390, %v8389
      %v8400 = vsel %vm4037, %v8374, 0
      %8402 = vmatprep.subr.bf16.mxu0 0
      %8403 = vmatpush1.bf16.msra.mxu0 %v8391
      %8404 = vmatprep.subr.bf16.mxu0 0
      %8405 = vmatpush1.bf16.msra.mxu0 %v8392
      %8406 = vmatprep.subr.bf16.mxu0 0
      %8407 = vmatpush1.bf16.msra.mxu0 %v8393
      %8408 = vmatprep.subr.bf16.mxu0 0
      %8409 = vmatpush1.bf16.msra.mxu0 %v8394
      %8410 = vmatprep.subr.bf16.mxu0 0
      %8411 = vmatpush1.bf16.msra.mxu0 0
      %8412 = vmatprep.subr.bf16.mxu0 0
      %8413 = vmatpush1.bf16.msra.mxu0 0
      %8414 = vmatprep.subr.bf16.mxu0 0
      %8415 = vmatpush1.bf16.msra.mxu0 0
      %8416 = vmatprep.subr.bf16.mxu0 0
      %8417 = vmatpush1.bf16.msra.mxu0 0
      %8418 = vmatprep.subr.bf16.mxu0 0
      %8419 = vmatpush1.bf16.msra.mxu0 0
      %8420 = vmatprep.subr.bf16.mxu0 0
      %8421 = vmatpush1.bf16.msra.mxu0 0
      %8422 = vmatprep.subr.bf16.mxu0 0
      %8423 = vmatpush1.bf16.msra.mxu0 0
      %8424 = vmatprep.subr.bf16.mxu0 0
      %8425 = vmatpush1.bf16.msra.mxu0 0
      %8426 = vmatprep.subr.bf16.mxu0 0
      %8427 = vmatpush1.bf16.msra.mxu0 0
      %8428 = vmatprep.subr.bf16.mxu0 0
      %8429 = vmatpush1.bf16.msra.mxu0 0
      %8430 = vmatprep.subr.bf16.mxu0 0
      %8431 = vmatpush1.bf16.msra.mxu0 0
      %8432 = vmatprep.subr.bf16.mxu0 0
      %8433 = vmatpush1.bf16.msra.mxu0 0
      %8434 = vmatprep.mubr.bf16.mxu0 0
      %8435 = vmatmul.mubr.bf16.gmra.mrb[0].mxu0 %v8400
      %v8436 = vpop.f32.mrb[0].mxu0
      %v8437 = vadd.f32 0.0, %v8436
      %v8438 = vpop.f32.mrb[0].mxu0
      %v8439 = vpop.f32.mrb[0].mxu0
      %v8440 = vadd.f32 0.0, %v8439
      %v8441 = vpop.f32.mrb[0].mxu0
      %8442 = vdwg.mxu0
      %v8443 = vadd.f32 %v8344, %v8437
      %v8444 = vadd.f32 %v8345, %v8440
      %v8445 = vld [vmem:[%s7 + $0xc0] sm:$0xf]
      %v8446 = vld [vmem:[%s7 + $0xc4] sm:$0xf]
      %v8447 = vld [vmem:[%s7 + $0xc8] sm:$0xf]
      %v8448 = vld [vmem:[%s7 + $0xcc] sm:$0xf]
      %v8449 = vld [vmem:[%s7 + $0xd0] sm:$0xf]
      %v8450 = vld [vmem:[%s7 + $0xd4] sm:$0xf]
      %v8451 = vld [vmem:[%s7 + $0xd8] sm:$0xf]
      %v8452 = vld [vmem:[%s7 + $0xdc] sm:$0xf]
      %v8453 = vcombine.low %v7738, 0
      %v8455 = vunpack.c.l.s4 1983009808
      %v8456 = vunpack.c.0.s8 %v8455
      %v8457 = vlaneseq
      %v8458 = vshrl.u32 %v8457, 7
      %v8459 = vsub.s32 %v8456, %v8458
      %v8460 = vrot.slane %v8453, %v8459
      %v8461 = vcombine.low %v7946, %v8460
      %v8470 = vunpack.c.l.b16 %v8445
      %v8471 = vunpack.c.l.b16 %v8446
      %v8472 = vunpack.c.l.b16 %v8447
      %v8473 = vunpack.c.l.b16 %v8448
      %v8474 = vunpack.c.l.b16 %v8449
      %v8475 = vunpack.c.l.b16 %v8450
      %v8476 = vunpack.c.l.b16 %v8451
      %v8477 = vunpack.c.l.b16 %v8452
      %v8478 = vpack.c.b16 %v8471, %v8470
      %v8479 = vpack.c.b16 %v8473, %v8472
      %v8480 = vpack.c.b16 %v8475, %v8474
      %v8481 = vpack.c.b16 %v8477, %v8476
      %v8487 = vsel %vm4037, %v8461, 0
      %8489 = vmatprep.subr.bf16.mxu0 0
      %8490 = vmatpush1.bf16.msra.mxu0 %v8478
      %8491 = vmatprep.subr.bf16.mxu0 0
      %8492 = vmatpush1.bf16.msra.mxu0 %v8479
      %8493 = vmatprep.subr.bf16.mxu0 0
      %8494 = vmatpush1.bf16.msra.mxu0 %v8480
      %8495 = vmatprep.subr.bf16.mxu0 0
      %8496 = vmatpush1.bf16.msra.mxu0 %v8481
      %8497 = vmatprep.subr.bf16.mxu0 0
      %8498 = vmatpush1.bf16.msra.mxu0 0
      %8499 = vmatprep.subr.bf16.mxu0 0
      %8500 = vmatpush1.bf16.msra.mxu0 0
      %8501 = vmatprep.subr.bf16.mxu0 0
      %8502 = vmatpush1.bf16.msra.mxu0 0
      %8503 = vmatprep.subr.bf16.mxu0 0
      %8504 = vmatpush1.bf16.msra.mxu0 0
      %8505 = vmatprep.subr.bf16.mxu0 0
      %8506 = vmatpush1.bf16.msra.mxu0 0
      %8507 = vmatprep.subr.bf16.mxu0 0
      %8508 = vmatpush1.bf16.msra.mxu0 0
      %8509 = vmatprep.subr.bf16.mxu0 0
      %8510 = vmatpush1.bf16.msra.mxu0 0
      %8511 = vmatprep.subr.bf16.mxu0 0
      %8512 = vmatpush1.bf16.msra.mxu0 0
      %8513 = vmatprep.subr.bf16.mxu0 0
      %8514 = vmatpush1.bf16.msra.mxu0 0
      %8515 = vmatprep.subr.bf16.mxu0 0
      %8516 = vmatpush1.bf16.msra.mxu0 0
      %8517 = vmatprep.subr.bf16.mxu0 0
      %8518 = vmatpush1.bf16.msra.mxu0 0
      %8519 = vmatprep.subr.bf16.mxu0 0
      %8520 = vmatpush1.bf16.msra.mxu0 0
      %8521 = vmatprep.mubr.bf16.mxu0 0
      %8522 = vmatmul.mubr.bf16.gmra.mrb[0].mxu0 %v8487
      %v8523 = vpop.f32.mrb[0].mxu0
      %v8524 = vadd.f32 0.0, %v8523
      %v8525 = vpop.f32.mrb[0].mxu0
      %v8526 = vpop.f32.mrb[0].mxu0
      %v8527 = vadd.f32 0.0, %v8526
      %v8528 = vpop.f32.mrb[0].mxu0
      %8529 = vdwg.mxu0
      %v8530 = vadd.f32 %v8443, %v8524
      %v8531 = vadd.f32 %v8444, %v8527
      %v8532 = vld [vmem:[%s7 + $0xe0] sm:$0xf]
      %v8533 = vld [vmem:[%s7 + $0xe4] sm:$0xf]
      %v8534 = vld [vmem:[%s7 + $0xe8] sm:$0xf]
      %v8535 = vld [vmem:[%s7 + $0xec] sm:$0xf]
      %v8536 = vld [vmem:[%s7 + $0xf0] sm:$0xf]
      %v8537 = vld [vmem:[%s7 + $0xf4] sm:$0xf]
      %v8538 = vld [vmem:[%s7 + $0xf8] sm:$0xf]
      %v8539 = vld [vmem:[%s7 + $0xfc] sm:$0xf]
      %v8540 = vcombine.low %v8250, %v7795
      %v8542 = vunpack.c.l.s4 1983009808
      %v8543 = vunpack.c.0.s8 %v8542
      %v8544 = vlaneseq
      %v8545 = vshrl.u32 %v8544, 7
      %v8546 = vsub.s32 %v8543, %v8545
      %v8547 = vrot.slane %v8540, %v8546
      %v8548 = vcombine.low %v7861, %v8547
      %v8557 = vunpack.c.l.b16 %v8532
      %v8558 = vunpack.c.l.b16 %v8533
      %v8559 = vunpack.c.l.b16 %v8534
      %v8560 = vunpack.c.l.b16 %v8535
      %v8561 = vunpack.c.l.b16 %v8536
      %v8562 = vunpack.c.l.b16 %v8537
      %v8563 = vunpack.c.l.b16 %v8538
      %v8564 = vunpack.c.l.b16 %v8539
      %v8565 = vpack.c.b16 %v8558, %v8557
      %v8566 = vpack.c.b16 %v8560, %v8559
      %v8567 = vpack.c.b16 %v8562, %v8561
      %v8568 = vpack.c.b16 %v8564, %v8563
      %v8574 = vsel %vm4037, %v8548, 0
      %8576 = vmatprep.subr.bf16.mxu0 0
      %8577 = vmatpush1.bf16.msra.mxu0 %v8565
      %8578 = vmatprep.subr.bf16.mxu0 0
      %8579 = vmatpush1.bf16.msra.mxu0 %v8566
      %8580 = vmatprep.subr.bf16.mxu0 0
      %8581 = vmatpush1.bf16.msra.mxu0 %v8567
      %8582 = vmatprep.subr.bf16.mxu0 0
      %8583 = vmatpush1.bf16.msra.mxu0 %v8568
      %8584 = vmatprep.subr.bf16.mxu0 0
      %8585 = vmatpush1.bf16.msra.mxu0 0
      %8586 = vmatprep.subr.bf16.mxu0 0
      %8587 = vmatpush1.bf16.msra.mxu0 0
      %8588 = vmatprep.subr.bf16.mxu0 0
      %8589 = vmatpush1.bf16.msra.mxu0 0
      %8590 = vmatprep.subr.bf16.mxu0 0
      %8591 = vmatpush1.bf16.msra.mxu0 0
      %8592 = vmatprep.subr.bf16.mxu0 0
      %8593 = vmatpush1.bf16.msra.mxu0 0
      %8594 = vmatprep.subr.bf16.mxu0 0
      %8595 = vmatpush1.bf16.msra.mxu0 0
      %8596 = vmatprep.subr.bf16.mxu0 0
      %8597 = vmatpush1.bf16.msra.mxu0 0
      %8598 = vmatprep.subr.bf16.mxu0 0
      %8599 = vmatpush1.bf16.msra.mxu0 0
      %8600 = vmatprep.subr.bf16.mxu0 0
      %8601 = vmatpush1.bf16.msra.mxu0 0
      %8602 = vmatprep.subr.bf16.mxu0 0
      %8603 = vmatpush1.bf16.msra.mxu0 0
      %8604 = vmatprep.subr.bf16.mxu0 0
      %8605 = vmatpush1.bf16.msra.mxu0 0
      %8606 = vmatprep.subr.bf16.mxu0 0
      %8607 = vmatpush1.bf16.msra.mxu0 0
      %8608 = vmatprep.mubr.bf16.mxu0 0
      %8609 = vmatmul.mubr.bf16.gmra.mrb[0].mxu0 %v8574
      %v8610 = vpop.f32.mrb[0].mxu0
      %v8611 = vadd.f32 0.0, %v8610
      %v8612 = vpop.f32.mrb[0].mxu0
      %v8613 = vpop.f32.mrb[0].mxu0
      %v8614 = vadd.f32 0.0, %v8613
      %v8615 = vpop.f32.mrb[0].mxu0
      %8616 = vdwg.mxu0
      %v8617 = vadd.f32 %v8530, %v8611
      %v8618 = vadd.f32 %v8531, %v8614
      %v8619 = vld [vmem:[%s7 + $0x100] sm:$0xf]
      %v8620 = vld [vmem:[%s7 + $0x104] sm:$0xf]
      %v8621 = vld [vmem:[%s7 + $0x108] sm:$0xf]
      %v8622 = vld [vmem:[%s7 + $0x10c] sm:$0xf]
      %v8623 = vld [vmem:[%s7 + $0x110] sm:$0xf]
      %v8624 = vld [vmem:[%s7 + $0x114] sm:$0xf]
      %v8625 = vld [vmem:[%s7 + $0x118] sm:$0xf]
      %v8626 = vld [vmem:[%s7 + $0x11c] sm:$0xf]
      %v8627 = vcombine.low %v8349, %v8025
      %v8629 = vunpack.c.l.s4 1983009808
      %v8630 = vunpack.c.0.s8 %v8629
      %v8631 = vlaneseq
      %v8632 = vshrl.u32 %v8631, 7
      %v8633 = vsub.s32 %v8630, %v8632
      %v8634 = vrot.slane %v8627, %v8633
      %v8635 = vcombine.low %v8061, %v8634
      %v8644 = vunpack.c.l.b16 %v8619
      %v8645 = vunpack.c.l.b16 %v8620
      %v8646 = vunpack.c.l.b16 %v8621
      %v8647 = vunpack.c.l.b16 %v8622
      %v8648 = vunpack.c.l.b16 %v8623
      %v8649 = vunpack.c.l.b16 %v8624
      %v8650 = vunpack.c.l.b16 %v8625
      %v8651 = vunpack.c.l.b16 %v8626
      %v8652 = vpack.c.b16 %v8645, %v8644
      %v8653 = vpack.c.b16 %v8647, %v8646
      %v8654 = vpack.c.b16 %v8649, %v8648
      %v8655 = vpack.c.b16 %v8651, %v8650
      %v8661 = vsel %vm4037, %v8635, 0
      %8663 = vmatprep.subr.bf16.mxu0 0
      %8664 = vmatpush1.bf16.msra.mxu0 %v8652
      %8665 = vmatprep.subr.bf16.mxu0 0
      %8666 = vmatpush1.bf16.msra.mxu0 %v8653
      %8667 = vmatprep.subr.bf16.mxu0 0
      %8668 = vmatpush1.bf16.msra.mxu0 %v8654
      %8669 = vmatprep.subr.bf16.mxu0 0
      %8670 = vmatpush1.bf16.msra.mxu0 %v8655
      %8671 = vmatprep.subr.bf16.mxu0 0
      %8672 = vmatpush1.bf16.msra.mxu0 0
      %8673 = vmatprep.subr.bf16.mxu0 0
      %8674 = vmatpush1.bf16.msra.mxu0 0
      %8675 = vmatprep.subr.bf16.mxu0 0
      %8676 = vmatpush1.bf16.msra.mxu0 0
      %8677 = vmatprep.subr.bf16.mxu0 0
      %8678 = vmatpush1.bf16.msra.mxu0 0
      %8679 = vmatprep.subr.bf16.mxu0 0
      %8680 = vmatpush1.bf16.msra.mxu0 0
      %8681 = vmatprep.subr.bf16.mxu0 0
      %8682 = vmatpush1.bf16.msra.mxu0 0
      %8683 = vmatprep.subr.bf16.mxu0 0
      %8684 = vmatpush1.bf16.msra.mxu0 0
      %8685 = vmatprep.subr.bf16.mxu0 0
      %8686 = vmatpush1.bf16.msra.mxu0 0
      %8687 = vmatprep.subr.bf16.mxu0 0
      %8688 = vmatpush1.bf16.msra.mxu0 0
      %8689 = vmatprep.subr.bf16.mxu0 0
      %8690 = vmatpush1.bf16.msra.mxu0 0
      %8691 = vmatprep.subr.bf16.mxu0 0
      %8692 = vmatpush1.bf16.msra.mxu0 0
      %8693 = vmatprep.subr.bf16.mxu0 0
      %8694 = vmatpush1.bf16.msra.mxu0 0
      %8695 = vmatprep.mubr.bf16.mxu0 0
      %8696 = vmatmul.mubr.bf16.gmra.mrb[0].mxu0 %v8661
      %v8697 = vpop.f32.mrb[0].mxu0
      %v8698 = vadd.f32 0.0, %v8697
      %v8699 = vpop.f32.mrb[0].mxu0
      %v8700 = vpop.f32.mrb[0].mxu0
      %v8701 = vadd.f32 0.0, %v8700
      %v8702 = vpop.f32.mrb[0].mxu0
      %8703 = vdwg.mxu0
      %v8704 = vadd.f32 %v8617, %v8698
      %v8705 = vadd.f32 %v8618, %v8701
      %v8706 = vmax.f32 %v8704, 0.0
      %v8707 = vmax.f32 %v8705, 0.0
      %8708 = vst [vmem:[%s305] sm:$0xff] %v8706
      %8709 = vst [vmem:[%s305 + $0x8] sm:$0xff] %v8707
      %p8710 = scmp.lt.s32.totalorder %s19, 1
      %s8711 = scalar_select %p8710, %s19, 1
      %s8712 = smul.addr %s8711, 2
      %s8713 = smul.addr %s8712, 8
      %s8714 = scalar_lea.vmem %s8, %s8713
      // Predicated region
      $region53: #{t_net_forward.1} parent=51 // pred_check
        %p8715 = pneg %p210
      $region54: #{t_net_forward.1} parent=51 // pred_check_branch
        %8717 = sbr.rel (%p8715) target = $region56
      $region55: #{t_net_forward.1} parent=51 // pred_region
        _
      $region56: #{t_net_forward.1} parent=51 // pred_fallthru
        _
    $region52: #{t_net_forward.1} parent=5 // pred_fallthru
      _
    %p8718 = scmp.le.s32.totalorder 2, %s14
    // Predicated region
    $region57: #{t_net_forward.1} parent=5 // pred_check
      %p8719 = pneg %p8718
    $region58: #{t_net_forward.1} parent=5 // pred_check_branch
      %8721 = sbr.rel (%p8719) target = $region60
    $region59: #{t_net_forward.1} parent=5 // pred_region
      %s8722 = ssub.s32 %s14, 2
      // Predicated region
      $region61: #{t_net_forward.1} parent=59 // pred_check
        %p8723 = pneg %p216
      $region62: #{t_net_forward.1} parent=59 // pred_check_branch
        %8725 = sbr.rel (%p8723) target = $region64
      $region63: #{t_net_forward.1} parent=59 // pred_region
        %p8726 = scmp.lt.s32.totalorder %s20, 1
        %s8727 = scalar_select %p8726, %s20, 1
        %s8728 = smul.addr %s8727, 2
        %s8729 = smul.addr %s8728, 8
        %s8730 = scalar_lea.vmem %s8, %s8729
      $region64: #{t_net_forward.1} parent=59 // pred_fallthru
        _
    $region60: #{t_net_forward.1} parent=5 // pred_fallthru
      _
  $region6: #{t_net_forward.1} parent=0 // loop_footer
    %s18 = sadd.s32 1, %s14
  $region7: #{t_net_forward.1} parent=0 // loop_footer_branch
    %13 = sbr.rel target = $region3
  $region8: #{t_net_forward.1} parent=0 // loop_exit
    _

</llo_original>
